<compile_context>
chip_gen: v7x
topology: tpu7x:2x2x1
jax: 0.10.0
libtpu: 0.0.40
codegen_flags: <defaults>
</compile_context>

<pallas_src>
import math

import jax
import jax.numpy as jnp
from jax.experimental import pallas as pl
from jax.experimental.pallas import tpu as pltpu

_LANE = 128       # padded number of classes (lane-dense final store)
_FC1_PAD = 256    # padded fc1 hidden width
_TB = 8           # samples per grid step (batch block, stacked on sublanes)


# -----------------------------------------------------------------------------
# Fused kernel
# -----------------------------------------------------------------------------
def _conv_block(a, selh_ref, wt_ref, brow_ref):
    """relu(conv) for a block of _TB samples, matmul-only.

    a        : (TB*H, W*Cin)          activations, sample b in rows b*H..b*H+H-1
    selh_ref : (kh, TB*Ho, TB*H)      block-diag 0/1 row selection (stride + H pad)
    wt_ref   : (kh, W*Cin, Wo*Cout)   block-Toeplitz weights (kw taps + W pad)
    brow_ref : (1, Wo*Cout)           bias tiled over ow
    returns  : (TB*Ho, Wo*Cout)
    """
    kh = selh_ref.shape[0]
    acc = None
    for ki in range(kh):
        rows = jnp.dot(selh_ref[ki], a, preferred_element_type=jnp.float32)
        part = jnp.dot(rows, wt_ref[ki], preferred_element_type=jnp.float32)
        acc = part if acc is None else acc + part
    return jnp.maximum(acc + brow_ref[...], 0.0)


def _fused_cnn_kernel(x_ref,
                      selh1_ref, wt1_ref, b1_ref,
                      selh2_ref, wt2_ref, b2_ref,
                      selh3_ref, wt3_ref, b3_ref,
                      selfc_ref, w1_ref, fb1_ref, w2_ref, fb2_ref,
                      o_ref):
    a = x_ref[...]                                    # (TB*28, 28) == (TB*H, W*Cin)
    a = _conv_block(a, selh1_ref, wt1_ref, b1_ref)    # (TB*29, 29*6)
    a = _conv_block(a, selh2_ref, wt2_ref, b2_ref)    # (TB*15, 15*12)
    a = _conv_block(a, selh3_ref, wt3_ref, b3_ref)    # (TB*7,  7*24)

    # fc1: sum over the 7 activation rows; selfc[h] picks row b*7+h for every
    # sample b (avoids any lane-merging reshape of the (TB*7, 168) slab).
    acc = None
    for h in range(selfc_ref.shape[0]):
        rows = jnp.dot(selfc_ref[h], a, preferred_element_type=jnp.float32)   # (TB, 168)
        part = jnp.dot(rows, w1_ref[h], preferred_element_type=jnp.float32)   # (TB, 256)
        acc = part if acc is None else acc + part
    h1 = jnp.maximum(acc + fb1_ref[...], 0.0)

    # fc2 + softmax (padded classes have a -1e9 bias -> exp underflows to 0).
    logits = jnp.dot(h1, w2_ref[...], preferred_element_type=jnp.float32) + fb2_ref[...]
    m = jnp.max(logits, axis=-1, keepdims=True)
    e = jnp.exp(logits - m)
    denom = jnp.sum(e, axis=-1, keepdims=True)
    o_ref[...] = e * pl.reciprocal(denom, approx=True)  # (TB, 128)


# -----------------------------------------------------------------------------
# Wrapper-side weight preprocessing (plain JAX, traced once under jit)
# -----------------------------------------------------------------------------
def _conv_out(size, k, s, p):
    return (size + 2 * p - k) // s + 1


def _toeplitz_conv(w, b, H, W, stride, pad):
    """Turn a (Cout,Cin,kh,kw) conv into matmul-only form for the kernel."""
    Cout, Cin, kh, kw = w.shape
    Ho = _conv_out(H, kh, stride, pad)
    Wo = _conv_out(W, kw, stride, pad)

    # SelH[ki, oh, h] = 1  iff  h == stride*oh + ki - pad   (else 0 / padding)
    ki = jnp.arange(kh)[:, None, None]
    oh = jnp.arange(Ho)[None, :, None]
    hh = jnp.arange(H)[None, None, :]
    selh = (hh == stride * oh + ki - pad).astype(jnp.float32)        # (kh, Ho, H)

    # WT[ki, w*Cin+ci, ow*Cout+co] = w[co, ci, ki, kj],  kj = w + pad - stride*ow
    kj = jnp.arange(kw)[:, None, None]
    wwi = jnp.arange(W)[None, :, None]
    ow = jnp.arange(Wo)[None, None, :]
    ind = (wwi == stride * ow + kj - pad).astype(jnp.float32)        # (kw, W, Wo)
    wt = jnp.einsum('jwo,dikj->kwiod', ind, w)                       # (kh, W, Cin, Wo, Cout)
    wt = wt.reshape(kh, W * Cin, Wo * Cout)

    brow = jnp.tile(b, Wo).reshape(1, Wo * Cout)
    return selh, wt, brow, Ho, Wo


def _prepare(params, tb):
    H = W = 28
    selh1, wt1, b1, H, W = _toeplitz_conv(params["conv1_w"], params["conv1_b"], H, W, 1, 3)
    selh2, wt2, b2, H, W = _toeplitz_conv(params["conv2_w"], params["conv2_b"], H, W, 2, 2)
    selh3, wt3, b3, H, W = _toeplitz_conv(params["conv3_w"], params["conv3_b"], H, W, 2, 1)

    # Block-diagonal row selection so a whole batch block is handled with one
    # matmul per kernel row: kron(I_tb, SelH).
    eye = jnp.eye(tb, dtype=jnp.float32)

    def blockdiag(selh):                       # (kh, Ho, Hi) -> (kh, tb*Ho, tb*Hi)
        kh, Ho, Hi = selh.shape
        return jnp.einsum('pq,koh->kpoqh', eye, selh).reshape(kh, tb * Ho, tb * Hi)

    bsel1, bsel2, bsel3 = blockdiag(selh1), blockdiag(selh2), blockdiag(selh3)

    C3 = params["conv3_w"].shape[0]                 # 24; H == W == 7 here
    # fc1: permute from PyTorch NCHW-flatten order (c,h,w) to the kernel's
    # (h, w*C + c) layout, split per activation row, pad hidden dim to 256.
    w1 = params["fc1_w"].reshape(C3, H, W, -1).transpose(1, 2, 0, 3).reshape(H, W * C3, -1)
    nh = w1.shape[-1]                               # 200
    w1 = jnp.pad(w1, ((0, 0), (0, 0), (0, _FC1_PAD - nh)))            # (7, 168, 256)
    fb1 = jnp.pad(params["fc1_b"], (0, _FC1_PAD - nh)).reshape(1, _FC1_PAD)

    # selfc[h, b, r] = 1 iff r == b*H + h  (picks activation row h of sample b)
    hh = jnp.arange(H)[:, None, None]
    bb = jnp.arange(tb)[None, :, None]
    rr = jnp.arange(tb * H)[None, None, :]
    selfc = (rr == bb * H + hh).astype(jnp.float32)                   # (7, tb, tb*7)

    nc = params["fc2_w"].shape[-1]                  # 10
    w2 = jnp.pad(params["fc2_w"], ((0, _FC1_PAD - nh), (0, _LANE - nc)))  # (256, 128)
    fb2 = jnp.concatenate(
        [params["fc2_b"], jnp.full((_LANE - nc,), -1e9, jnp.float32)]).reshape(1, _LANE)

    ops = (bsel1, wt1, b1, bsel2, wt2, b2, bsel3, wt3, b3,
           selfc, w1, fb1, w2, fb2)
    return ops, nc


def cnn_forward(params, x):
    """x: (N, 1, 28, 28) float32 -> (N, 10) softmax probabilities."""
    tb = _TB
    ops, nc = _prepare(params, tb)

    N = x.shape[0]
    n_blocks = pl.cdiv(N, tb)
    Npad = n_blocks * tb

    x2 = x[:, 0, :, :].astype(jnp.float32)          # (N, 28, 28)
    if Npad != N:
        x2 = jnp.pad(x2, ((0, Npad - N), (0, 0), (0, 0)))
    x2 = x2.reshape(Npad * 28, 28)                  # batch stacked on sublanes

    def const_spec(a):
        nd = a.ndim
        return pl.BlockSpec(a.shape, lambda b, _nd=nd: (0,) * _nd)

    in_specs = [pl.BlockSpec((tb * 28, 28), lambda b: (b, 0))]
    in_specs += [const_spec(a) for a in ops]

    out = pl.pallas_call(
        _fused_cnn_kernel,
        out_shape=jax.ShapeDtypeStruct((Npad, _LANE), jnp.float32),
        grid=(n_blocks,),
        in_specs=in_specs,
        out_specs=pl.BlockSpec((tb, _LANE), lambda b: (b, 0)),
        compiler_params=pltpu.CompilerParams(
            dimension_semantics=("parallel",),
            vmem_limit_bytes=32 * 1024 * 1024,
        ),
    )(x2, *ops)
    return out[:N, :nc]


# -----------------------------------------------------------------------------
# Parameter init (PyTorch-default-style uniform(-1/sqrt(fan_in), +1/sqrt(fan_in)))
# -----------------------------------------------------------------------------
def _uniform(key, shape, bound):
    return jax.random.uniform(key, shape, jnp.float32, -bound, bound)


def init_params(key):
    keys = jax.random.split(key, 10)
    params = {}

    def conv_init(kw_, kb_, cout, cin, kh, kw):
        fan_in = cin * kh * kw
        bound = 1.0 / math.sqrt(fan_in)
        return _uniform(kw_, (cout, cin, kh, kw), bound), _uniform(kb_, (cout,), bound)

    def fc_init(kw_, kb_, fin, fout):
        bound = 1.0 / math.sqrt(fin)
        return _uniform(kw_, (fin, fout), bound), _uniform(kb_, (fout,), bound)

    params["conv1_w"], params["conv1_b"] = conv_init(keys[0], keys[1], 6, 1, 6, 6)
    params["conv2_w"], params["conv2_b"] = conv_init(keys[2], keys[3], 12, 6, 5, 5)
    params["conv3_w"], params["conv3_b"] = conv_init(keys[4], keys[5], 24, 12, 4, 4)
    params["fc1_w"], params["fc1_b"] = fc_init(keys[6], keys[7], 24 * 7 * 7, 200)
    params["fc2_w"], params["fc2_b"] = fc_init(keys[8], keys[9], 200, 10)
    return params


# -----------------------------------------------------------------------------
# Plain-JAX reference of the same PyTorch module (for correctness check)
# -----------------------------------------------------------------------------
def _ref_forward(params, x):
    hp = jax.lax.Precision.HIGHEST

    def conv(x, w, b, s, p):
        y = jax.lax.conv_general_dilated(
            x, w, (s, s), ((p, p), (p, p)),
            dimension_numbers=("NCHW", "OIHW", "NCHW"), precision=hp)
        return jax.nn.relu(y + b[None, :, None, None])

    x = conv(x, params["conv1_w"], params["conv1_b"], 1, 3)
    x = conv(x, params["conv2_w"], params["conv2_b"], 2, 2)
    x = conv(x, params["conv3_w"], params["conv3_b"], 2, 1)
    x = x.reshape(x.shape[0], -1)
    x = jax.nn.relu(jnp.dot(x, params["fc1_w"], precision=hp) + params["fc1_b"])
    x = jax.nn.softmax(jnp.dot(x, params["fc2_w"], precision=hp) + params["fc2_b"], axis=-1)
    return x


if __name__ == "__main__":
    key = jax.random.PRNGKey(0)
    pkey, xkey = jax.random.split(key)
    params = init_params(pkey)

    # 13 samples: exercises both the 2-step grid and the batch-padding path.
    batch = 13
    x = jax.random.normal(xkey, (batch, 1, 28, 28), jnp.float32)

    fwd = jax.jit(cnn_forward)
    out = jax.block_until_ready(fwd(params, x))

    assert out.shape == (batch, 10)
    # softmax rows should sum to ~1 (approx reciprocal => slightly loose tol)
    assert bool(jnp.all(jnp.abs(jnp.sum(out, axis=-1) - 1.0) < 1e-2))

    # cross-check against the plain-JAX reference of the PyTorch module
    ref = jax.block_until_ready(jax.jit(_ref_forward)(params, x))
    assert bool(jnp.allclose(out, ref, atol=2e-2)), "mismatch vs reference"

    print("KERNEL_OK")
</pallas_src>

<mosaic_0001>
module attributes {stable_mosaic.version = 11 : i64} {
  func.func @_fused_cnn_kernel(%arg0: i32, %arg1: memref<224x28xf32, #tpu.memory_space<vmem>>, %arg2: memref<6x232x224xf32, #tpu.memory_space<vmem>>, %arg3: memref<6x28x174xf32, #tpu.memory_space<vmem>>, %arg4: memref<1x174xf32, #tpu.memory_space<vmem>>, %arg5: memref<5x120x232xf32, #tpu.memory_space<vmem>>, %arg6: memref<5x174x180xf32, #tpu.memory_space<vmem>>, %arg7: memref<1x180xf32, #tpu.memory_space<vmem>>, %arg8: memref<4x56x120xf32, #tpu.memory_space<vmem>>, %arg9: memref<4x180x168xf32, #tpu.memory_space<vmem>>, %arg10: memref<1x168xf32, #tpu.memory_space<vmem>>, %arg11: memref<7x8x56xf32, #tpu.memory_space<vmem>>, %arg12: memref<7x168x256xf32, #tpu.memory_space<vmem>>, %arg13: memref<1x256xf32, #tpu.memory_space<vmem>>, %arg14: memref<256x128xf32, #tpu.memory_space<vmem>>, %arg15: memref<1x128xf32, #tpu.memory_space<vmem>>, %arg16: memref<8x128xf32, #tpu.memory_space<vmem>>) attributes {dimension_semantics = [#tpu.dimension_semantics<parallel>], iteration_bounds = array<i64: 2>, scalar_prefetch = 0 : i64, scratch_operands = 0 : i64, tpu.core_type = #tpu.core_type<tc>, window_params = [{transform_indices = @transform_0, window_bounds = array<i64: 224, 28>}, {pipeline_mode = #tpu.pipeline_mode<synchronous>, transform_indices = @transform_1, window_bounds = array<i64: 6, 232, 224>}, {pipeline_mode = #tpu.pipeline_mode<synchronous>, transform_indices = @transform_2, window_bounds = array<i64: 6, 28, 174>}, {pipeline_mode = #tpu.pipeline_mode<synchronous>, transform_indices = @transform_3, window_bounds = array<i64: 1, 174>}, {pipeline_mode = #tpu.pipeline_mode<synchronous>, transform_indices = @transform_4, window_bounds = array<i64: 5, 120, 232>}, {pipeline_mode = #tpu.pipeline_mode<synchronous>, transform_indices = @transform_5, window_bounds = array<i64: 5, 174, 180>}, {pipeline_mode = #tpu.pipeline_mode<synchronous>, transform_indices = @transform_6, window_bounds = array<i64: 1, 180>}, {pipeline_mode = #tpu.pipeline_mode<synchronous>, transform_indices = @transform_7, window_bounds = array<i64: 4, 56, 120>}, {pipeline_mode = #tpu.pipeline_mode<synchronous>, transform_indices = @transform_8, window_bounds = array<i64: 4, 180, 168>}, {pipeline_mode = #tpu.pipeline_mode<synchronous>, transform_indices = @transform_9, window_bounds = array<i64: 1, 168>}, {pipeline_mode = #tpu.pipeline_mode<synchronous>, transform_indices = @transform_10, window_bounds = array<i64: 7, 8, 56>}, {pipeline_mode = #tpu.pipeline_mode<synchronous>, transform_indices = @transform_11, window_bounds = array<i64: 7, 168, 256>}, {pipeline_mode = #tpu.pipeline_mode<synchronous>, transform_indices = @transform_12, window_bounds = array<i64: 1, 256>}, {pipeline_mode = #tpu.pipeline_mode<synchronous>, transform_indices = @transform_13, window_bounds = array<i64: 256, 128>}, {pipeline_mode = #tpu.pipeline_mode<synchronous>, transform_indices = @transform_14, window_bounds = array<i64: 1, 128>}, {transform_indices = @transform_15, window_bounds = array<i64: 8, 128>}]} {
    %c0 = arith.constant 0 : index
    %c0_0 = arith.constant 0 : index
    %0 = vector.load %arg1[%c0, %c0_0] : memref<224x28xf32, #tpu.memory_space<vmem>>, vector<224x28xf32>
    %c0_1 = arith.constant 0 : index
    %c0_2 = arith.constant 0 : index
    %c0_3 = arith.constant 0 : index
    %1 = vector.load %arg2[%c0_1, %c0_2, %c0_3] : memref<6x232x224xf32, #tpu.memory_space<vmem>>, vector<1x232x224xf32>
    %2 = vector.shape_cast %1 : vector<1x232x224xf32> to vector<232x224xf32>
    %cst = arith.constant dense<0.000000e+00> : vector<232x28xf32>
    %3 = tpu.matmul %2, %0, %cst {dimension_numbers = #tpu.dot_dimension_numbers<[1], [0], [0], [1], [0, 0, 1, 1], [], []>} : vector<232x224xf32>, vector<224x28xf32>, vector<232x28xf32> -> vector<232x28xf32>
    %c0_4 = arith.constant 0 : index
    %c0_5 = arith.constant 0 : index
    %c0_6 = arith.constant 0 : index
    %4 = vector.load %arg3[%c0_4, %c0_5, %c0_6] : memref<6x28x174xf32, #tpu.memory_space<vmem>>, vector<1x28x174xf32>
    %5 = vector.shape_cast %4 : vector<1x28x174xf32> to vector<28x174xf32>
    %cst_7 = arith.constant dense<0.000000e+00> : vector<232x174xf32>
    %6 = tpu.matmul %3, %5, %cst_7 {dimension_numbers = #tpu.dot_dimension_numbers<[1], [0], [0], [1], [0, 0, 1, 1], [], []>} : vector<232x28xf32>, vector<28x174xf32>, vector<232x174xf32> -> vector<232x174xf32>
    %c1 = arith.constant 1 : index
    %c0_8 = arith.constant 0 : index
    %c0_9 = arith.constant 0 : index
    %7 = vector.load %arg2[%c1, %c0_8, %c0_9] : memref<6x232x224xf32, #tpu.memory_space<vmem>>, vector<1x232x224xf32>
    %8 = vector.shape_cast %7 : vector<1x232x224xf32> to vector<232x224xf32>
    %cst_10 = arith.constant dense<0.000000e+00> : vector<232x28xf32>
    %9 = tpu.matmul %8, %0, %cst_10 {dimension_numbers = #tpu.dot_dimension_numbers<[1], [0], [0], [1], [0, 0, 1, 1], [], []>} : vector<232x224xf32>, vector<224x28xf32>, vector<232x28xf32> -> vector<232x28xf32>
    %c1_11 = arith.constant 1 : index
    %c0_12 = arith.constant 0 : index
    %c0_13 = arith.constant 0 : index
    %10 = vector.load %arg3[%c1_11, %c0_12, %c0_13] : memref<6x28x174xf32, #tpu.memory_space<vmem>>, vector<1x28x174xf32>
    %11 = vector.shape_cast %10 : vector<1x28x174xf32> to vector<28x174xf32>
    %cst_14 = arith.constant dense<0.000000e+00> : vector<232x174xf32>
    %12 = tpu.matmul %9, %11, %cst_14 {dimension_numbers = #tpu.dot_dimension_numbers<[1], [0], [0], [1], [0, 0, 1, 1], [], []>} : vector<232x28xf32>, vector<28x174xf32>, vector<232x174xf32> -> vector<232x174xf32>
    %13 = arith.addf %6, %12 : vector<232x174xf32>
    %c2 = arith.constant 2 : index
    %c0_15 = arith.constant 0 : index
    %c0_16 = arith.constant 0 : index
    %14 = vector.load %arg2[%c2, %c0_15, %c0_16] : memref<6x232x224xf32, #tpu.memory_space<vmem>>, vector<1x232x224xf32>
    %15 = vector.shape_cast %14 : vector<1x232x224xf32> to vector<232x224xf32>
    %cst_17 = arith.constant dense<0.000000e+00> : vector<232x28xf32>
    %16 = tpu.matmul %15, %0, %cst_17 {dimension_numbers = #tpu.dot_dimension_numbers<[1], [0], [0], [1], [0, 0, 1, 1], [], []>} : vector<232x224xf32>, vector<224x28xf32>, vector<232x28xf32> -> vector<232x28xf32>
    %c2_18 = arith.constant 2 : index
    %c0_19 = arith.constant 0 : index
    %c0_20 = arith.constant 0 : index
    %17 = vector.load %arg3[%c2_18, %c0_19, %c0_20] : memref<6x28x174xf32, #tpu.memory_space<vmem>>, vector<1x28x174xf32>
    %18 = vector.shape_cast %17 : vector<1x28x174xf32> to vector<28x174xf32>
    %cst_21 = arith.constant dense<0.000000e+00> : vector<232x174xf32>
    %19 = tpu.matmul %16, %18, %cst_21 {dimension_numbers = #tpu.dot_dimension_numbers<[1], [0], [0], [1], [0, 0, 1, 1], [], []>} : vector<232x28xf32>, vector<28x174xf32>, vector<232x174xf32> -> vector<232x174xf32>
    %20 = arith.addf %13, %19 : vector<232x174xf32>
    %c3 = arith.constant 3 : index
    %c0_22 = arith.constant 0 : index
    %c0_23 = arith.constant 0 : index
    %21 = vector.load %arg2[%c3, %c0_22, %c0_23] : memref<6x232x224xf32, #tpu.memory_space<vmem>>, vector<1x232x224xf32>
    %22 = vector.shape_cast %21 : vector<1x232x224xf32> to vector<232x224xf32>
    %cst_24 = arith.constant dense<0.000000e+00> : vector<232x28xf32>
    %23 = tpu.matmul %22, %0, %cst_24 {dimension_numbers = #tpu.dot_dimension_numbers<[1], [0], [0], [1], [0, 0, 1, 1], [], []>} : vector<232x224xf32>, vector<224x28xf32>, vector<232x28xf32> -> vector<232x28xf32>
    %c3_25 = arith.constant 3 : index
    %c0_26 = arith.constant 0 : index
    %c0_27 = arith.constant 0 : index
    %24 = vector.load %arg3[%c3_25, %c0_26, %c0_27] : memref<6x28x174xf32, #tpu.memory_space<vmem>>, vector<1x28x174xf32>
    %25 = vector.shape_cast %24 : vector<1x28x174xf32> to vector<28x174xf32>
    %cst_28 = arith.constant dense<0.000000e+00> : vector<232x174xf32>
    %26 = tpu.matmul %23, %25, %cst_28 {dimension_numbers = #tpu.dot_dimension_numbers<[1], [0], [0], [1], [0, 0, 1, 1], [], []>} : vector<232x28xf32>, vector<28x174xf32>, vector<232x174xf32> -> vector<232x174xf32>
    %27 = arith.addf %20, %26 : vector<232x174xf32>
    %c4 = arith.constant 4 : index
    %c0_29 = arith.constant 0 : index
    %c0_30 = arith.constant 0 : index
    %28 = vector.load %arg2[%c4, %c0_29, %c0_30] : memref<6x232x224xf32, #tpu.memory_space<vmem>>, vector<1x232x224xf32>
    %29 = vector.shape_cast %28 : vector<1x232x224xf32> to vector<232x224xf32>
    %cst_31 = arith.constant dense<0.000000e+00> : vector<232x28xf32>
    %30 = tpu.matmul %29, %0, %cst_31 {dimension_numbers = #tpu.dot_dimension_numbers<[1], [0], [0], [1], [0, 0, 1, 1], [], []>} : vector<232x224xf32>, vector<224x28xf32>, vector<232x28xf32> -> vector<232x28xf32>
    %c4_32 = arith.constant 4 : index
    %c0_33 = arith.constant 0 : index
    %c0_34 = arith.constant 0 : index
    %31 = vector.load %arg3[%c4_32, %c0_33, %c0_34] : memref<6x28x174xf32, #tpu.memory_space<vmem>>, vector<1x28x174xf32>
    %32 = vector.shape_cast %31 : vector<1x28x174xf32> to vector<28x174xf32>
    %cst_35 = arith.constant dense<0.000000e+00> : vector<232x174xf32>
    %33 = tpu.matmul %30, %32, %cst_35 {dimension_numbers = #tpu.dot_dimension_numbers<[1], [0], [0], [1], [0, 0, 1, 1], [], []>} : vector<232x28xf32>, vector<28x174xf32>, vector<232x174xf32> -> vector<232x174xf32>
    %34 = arith.addf %27, %33 : vector<232x174xf32>
    %c5 = arith.constant 5 : index
    %c0_36 = arith.constant 0 : index
    %c0_37 = arith.constant 0 : index
    %35 = vector.load %arg2[%c5, %c0_36, %c0_37] : memref<6x232x224xf32, #tpu.memory_space<vmem>>, vector<1x232x224xf32>
    %36 = vector.shape_cast %35 : vector<1x232x224xf32> to vector<232x224xf32>
    %cst_38 = arith.constant dense<0.000000e+00> : vector<232x28xf32>
    %37 = tpu.matmul %36, %0, %cst_38 {dimension_numbers = #tpu.dot_dimension_numbers<[1], [0], [0], [1], [0, 0, 1, 1], [], []>} : vector<232x224xf32>, vector<224x28xf32>, vector<232x28xf32> -> vector<232x28xf32>
    %c5_39 = arith.constant 5 : index
    %c0_40 = arith.constant 0 : index
    %c0_41 = arith.constant 0 : index
    %38 = vector.load %arg3[%c5_39, %c0_40, %c0_41] : memref<6x28x174xf32, #tpu.memory_space<vmem>>, vector<1x28x174xf32>
    %39 = vector.shape_cast %38 : vector<1x28x174xf32> to vector<28x174xf32>
    %cst_42 = arith.constant dense<0.000000e+00> : vector<232x174xf32>
    %40 = tpu.matmul %37, %39, %cst_42 {dimension_numbers = #tpu.dot_dimension_numbers<[1], [0], [0], [1], [0, 0, 1, 1], [], []>} : vector<232x28xf32>, vector<28x174xf32>, vector<232x174xf32> -> vector<232x174xf32>
    %41 = arith.addf %34, %40 : vector<232x174xf32>
    %c0_43 = arith.constant 0 : index
    %c0_44 = arith.constant 0 : index
    %42 = vector.load %arg4[%c0_43, %c0_44] : memref<1x174xf32, #tpu.memory_space<vmem>>, vector<1x174xf32>
    %43 = vector.broadcast %42 : vector<1x174xf32> to vector<232x174xf32>
    %44 = arith.addf %41, %43 : vector<232x174xf32>
    %cst_45 = arith.constant 0.000000e+00 : f32
    %45 = vector.broadcast %cst_45 : f32 to vector<232x174xf32>
    %46 = arith.maximumf %44, %45 : vector<232x174xf32>
    %c0_46 = arith.constant 0 : index
    %c0_47 = arith.constant 0 : index
    %c0_48 = arith.constant 0 : index
    %47 = vector.load %arg5[%c0_46, %c0_47, %c0_48] : memref<5x120x232xf32, #tpu.memory_space<vmem>>, vector<1x120x232xf32>
    %48 = vector.shape_cast %47 : vector<1x120x232xf32> to vector<120x232xf32>
    %cst_49 = arith.constant dense<0.000000e+00> : vector<120x174xf32>
    %49 = tpu.matmul %48, %46, %cst_49 {dimension_numbers = #tpu.dot_dimension_numbers<[1], [0], [0], [1], [0, 0, 1, 1], [], []>} : vector<120x232xf32>, vector<232x174xf32>, vector<120x174xf32> -> vector<120x174xf32>
    %c0_50 = arith.constant 0 : index
    %c0_51 = arith.constant 0 : index
    %c0_52 = arith.constant 0 : index
    %50 = vector.load %arg6[%c0_50, %c0_51, %c0_52] : memref<5x174x180xf32, #tpu.memory_space<vmem>>, vector<1x174x180xf32>
    %51 = vector.shape_cast %50 : vector<1x174x180xf32> to vector<174x180xf32>
    %cst_53 = arith.constant dense<0.000000e+00> : vector<120x180xf32>
    %52 = tpu.matmul %49, %51, %cst_53 {dimension_numbers = #tpu.dot_dimension_numbers<[1], [0], [0], [1], [0, 0, 1, 1], [], []>} : vector<120x174xf32>, vector<174x180xf32>, vector<120x180xf32> -> vector<120x180xf32>
    %c1_54 = arith.constant 1 : index
    %c0_55 = arith.constant 0 : index
    %c0_56 = arith.constant 0 : index
    %53 = vector.load %arg5[%c1_54, %c0_55, %c0_56] : memref<5x120x232xf32, #tpu.memory_space<vmem>>, vector<1x120x232xf32>
    %54 = vector.shape_cast %53 : vector<1x120x232xf32> to vector<120x232xf32>
    %cst_57 = arith.constant dense<0.000000e+00> : vector<120x174xf32>
    %55 = tpu.matmul %54, %46, %cst_57 {dimension_numbers = #tpu.dot_dimension_numbers<[1], [0], [0], [1], [0, 0, 1, 1], [], []>} : vector<120x232xf32>, vector<232x174xf32>, vector<120x174xf32> -> vector<120x174xf32>
    %c1_58 = arith.constant 1 : index
    %c0_59 = arith.constant 0 : index
    %c0_60 = arith.constant 0 : index
    %56 = vector.load %arg6[%c1_58, %c0_59, %c0_60] : memref<5x174x180xf32, #tpu.memory_space<vmem>>, vector<1x174x180xf32>
    %57 = vector.shape_cast %56 : vector<1x174x180xf32> to vector<174x180xf32>
    %cst_61 = arith.constant dense<0.000000e+00> : vector<120x180xf32>
    %58 = tpu.matmul %55, %57, %cst_61 {dimension_numbers = #tpu.dot_dimension_numbers<[1], [0], [0], [1], [0, 0, 1, 1], [], []>} : vector<120x174xf32>, vector<174x180xf32>, vector<120x180xf32> -> vector<120x180xf32>
    %59 = arith.addf %52, %58 : vector<120x180xf32>
    %c2_62 = arith.constant 2 : index
    %c0_63 = arith.constant 0 : index
    %c0_64 = arith.constant 0 : index
    %60 = vector.load %arg5[%c2_62, %c0_63, %c0_64] : memref<5x120x232xf32, #tpu.memory_space<vmem>>, vector<1x120x232xf32>
    %61 = vector.shape_cast %60 : vector<1x120x232xf32> to vector<120x232xf32>
    %cst_65 = arith.constant dense<0.000000e+00> : vector<120x174xf32>
    %62 = tpu.matmul %61, %46, %cst_65 {dimension_numbers = #tpu.dot_dimension_numbers<[1], [0], [0], [1], [0, 0, 1, 1], [], []>} : vector<120x232xf32>, vector<232x174xf32>, vector<120x174xf32> -> vector<120x174xf32>
    %c2_66 = arith.constant 2 : index
    %c0_67 = arith.constant 0 : index
    %c0_68 = arith.constant 0 : index
    %63 = vector.load %arg6[%c2_66, %c0_67, %c0_68] : memref<5x174x180xf32, #tpu.memory_space<vmem>>, vector<1x174x180xf32>
    %64 = vector.shape_cast %63 : vector<1x174x180xf32> to vector<174x180xf32>
    %cst_69 = arith.constant dense<0.000000e+00> : vector<120x180xf32>
    %65 = tpu.matmul %62, %64, %cst_69 {dimension_numbers = #tpu.dot_dimension_numbers<[1], [0], [0], [1], [0, 0, 1, 1], [], []>} : vector<120x174xf32>, vector<174x180xf32>, vector<120x180xf32> -> vector<120x180xf32>
    %66 = arith.addf %59, %65 : vector<120x180xf32>
    %c3_70 = arith.constant 3 : index
    %c0_71 = arith.constant 0 : index
    %c0_72 = arith.constant 0 : index
    %67 = vector.load %arg5[%c3_70, %c0_71, %c0_72] : memref<5x120x232xf32, #tpu.memory_space<vmem>>, vector<1x120x232xf32>
    %68 = vector.shape_cast %67 : vector<1x120x232xf32> to vector<120x232xf32>
    %cst_73 = arith.constant dense<0.000000e+00> : vector<120x174xf32>
    %69 = tpu.matmul %68, %46, %cst_73 {dimension_numbers = #tpu.dot_dimension_numbers<[1], [0], [0], [1], [0, 0, 1, 1], [], []>} : vector<120x232xf32>, vector<232x174xf32>, vector<120x174xf32> -> vector<120x174xf32>
    %c3_74 = arith.constant 3 : index
    %c0_75 = arith.constant 0 : index
    %c0_76 = arith.constant 0 : index
    %70 = vector.load %arg6[%c3_74, %c0_75, %c0_76] : memref<5x174x180xf32, #tpu.memory_space<vmem>>, vector<1x174x180xf32>
    %71 = vector.shape_cast %70 : vector<1x174x180xf32> to vector<174x180xf32>
    %cst_77 = arith.constant dense<0.000000e+00> : vector<120x180xf32>
    %72 = tpu.matmul %69, %71, %cst_77 {dimension_numbers = #tpu.dot_dimension_numbers<[1], [0], [0], [1], [0, 0, 1, 1], [], []>} : vector<120x174xf32>, vector<174x180xf32>, vector<120x180xf32> -> vector<120x180xf32>
    %73 = arith.addf %66, %72 : vector<120x180xf32>
    %c4_78 = arith.constant 4 : index
    %c0_79 = arith.constant 0 : index
    %c0_80 = arith.constant 0 : index
    %74 = vector.load %arg5[%c4_78, %c0_79, %c0_80] : memref<5x120x232xf32, #tpu.memory_space<vmem>>, vector<1x120x232xf32>
    %75 = vector.shape_cast %74 : vector<1x120x232xf32> to vector<120x232xf32>
    %cst_81 = arith.constant dense<0.000000e+00> : vector<120x174xf32>
    %76 = tpu.matmul %75, %46, %cst_81 {dimension_numbers = #tpu.dot_dimension_numbers<[1], [0], [0], [1], [0, 0, 1, 1], [], []>} : vector<120x232xf32>, vector<232x174xf32>, vector<120x174xf32> -> vector<120x174xf32>
    %c4_82 = arith.constant 4 : index
    %c0_83 = arith.constant 0 : index
    %c0_84 = arith.constant 0 : index
    %77 = vector.load %arg6[%c4_82, %c0_83, %c0_84] : memref<5x174x180xf32, #tpu.memory_space<vmem>>, vector<1x174x180xf32>
    %78 = vector.shape_cast %77 : vector<1x174x180xf32> to vector<174x180xf32>
    %cst_85 = arith.constant dense<0.000000e+00> : vector<120x180xf32>
    %79 = tpu.matmul %76, %78, %cst_85 {dimension_numbers = #tpu.dot_dimension_numbers<[1], [0], [0], [1], [0, 0, 1, 1], [], []>} : vector<120x174xf32>, vector<174x180xf32>, vector<120x180xf32> -> vector<120x180xf32>
    %80 = arith.addf %73, %79 : vector<120x180xf32>
    %c0_86 = arith.constant 0 : index
    %c0_87 = arith.constant 0 : index
    %81 = vector.load %arg7[%c0_86, %c0_87] : memref<1x180xf32, #tpu.memory_space<vmem>>, vector<1x180xf32>
    %82 = vector.broadcast %81 : vector<1x180xf32> to vector<120x180xf32>
    %83 = arith.addf %80, %82 : vector<120x180xf32>
    %cst_88 = arith.constant 0.000000e+00 : f32
    %84 = vector.broadcast %cst_88 : f32 to vector<120x180xf32>
    %85 = arith.maximumf %83, %84 : vector<120x180xf32>
    %c0_89 = arith.constant 0 : index
    %c0_90 = arith.constant 0 : index
    %c0_91 = arith.constant 0 : index
    %86 = vector.load %arg8[%c0_89, %c0_90, %c0_91] : memref<4x56x120xf32, #tpu.memory_space<vmem>>, vector<1x56x120xf32>
    %87 = vector.shape_cast %86 : vector<1x56x120xf32> to vector<56x120xf32>
    %cst_92 = arith.constant dense<0.000000e+00> : vector<56x180xf32>
    %88 = tpu.matmul %87, %85, %cst_92 {dimension_numbers = #tpu.dot_dimension_numbers<[1], [0], [0], [1], [0, 0, 1, 1], [], []>} : vector<56x120xf32>, vector<120x180xf32>, vector<56x180xf32> -> vector<56x180xf32>
    %c0_93 = arith.constant 0 : index
    %c0_94 = arith.constant 0 : index
    %c0_95 = arith.constant 0 : index
    %89 = vector.load %arg9[%c0_93, %c0_94, %c0_95] : memref<4x180x168xf32, #tpu.memory_space<vmem>>, vector<1x180x168xf32>
    %90 = vector.shape_cast %89 : vector<1x180x168xf32> to vector<180x168xf32>
    %cst_96 = arith.constant dense<0.000000e+00> : vector<56x168xf32>
    %91 = tpu.matmul %88, %90, %cst_96 {dimension_numbers = #tpu.dot_dimension_numbers<[1], [0], [0], [1], [0, 0, 1, 1], [], []>} : vector<56x180xf32>, vector<180x168xf32>, vector<56x168xf32> -> vector<56x168xf32>
    %c1_97 = arith.constant 1 : index
    %c0_98 = arith.constant 0 : index
    %c0_99 = arith.constant 0 : index
    %92 = vector.load %arg8[%c1_97, %c0_98, %c0_99] : memref<4x56x120xf32, #tpu.memory_space<vmem>>, vector<1x56x120xf32>
    %93 = vector.shape_cast %92 : vector<1x56x120xf32> to vector<56x120xf32>
    %cst_100 = arith.constant dense<0.000000e+00> : vector<56x180xf32>
    %94 = tpu.matmul %93, %85, %cst_100 {dimension_numbers = #tpu.dot_dimension_numbers<[1], [0], [0], [1], [0, 0, 1, 1], [], []>} : vector<56x120xf32>, vector<120x180xf32>, vector<56x180xf32> -> vector<56x180xf32>
    %c1_101 = arith.constant 1 : index
    %c0_102 = arith.constant 0 : index
    %c0_103 = arith.constant 0 : index
    %95 = vector.load %arg9[%c1_101, %c0_102, %c0_103] : memref<4x180x168xf32, #tpu.memory_space<vmem>>, vector<1x180x168xf32>
    %96 = vector.shape_cast %95 : vector<1x180x168xf32> to vector<180x168xf32>
    %cst_104 = arith.constant dense<0.000000e+00> : vector<56x168xf32>
    %97 = tpu.matmul %94, %96, %cst_104 {dimension_numbers = #tpu.dot_dimension_numbers<[1], [0], [0], [1], [0, 0, 1, 1], [], []>} : vector<56x180xf32>, vector<180x168xf32>, vector<56x168xf32> -> vector<56x168xf32>
    %98 = arith.addf %91, %97 : vector<56x168xf32>
    %c2_105 = arith.constant 2 : index
    %c0_106 = arith.constant 0 : index
    %c0_107 = arith.constant 0 : index
    %99 = vector.load %arg8[%c2_105, %c0_106, %c0_107] : memref<4x56x120xf32, #tpu.memory_space<vmem>>, vector<1x56x120xf32>
    %100 = vector.shape_cast %99 : vector<1x56x120xf32> to vector<56x120xf32>
    %cst_108 = arith.constant dense<0.000000e+00> : vector<56x180xf32>
    %101 = tpu.matmul %100, %85, %cst_108 {dimension_numbers = #tpu.dot_dimension_numbers<[1], [0], [0], [1], [0, 0, 1, 1], [], []>} : vector<56x120xf32>, vector<120x180xf32>, vector<56x180xf32> -> vector<56x180xf32>
    %c2_109 = arith.constant 2 : index
    %c0_110 = arith.constant 0 : index
    %c0_111 = arith.constant 0 : index
    %102 = vector.load %arg9[%c2_109, %c0_110, %c0_111] : memref<4x180x168xf32, #tpu.memory_space<vmem>>, vector<1x180x168xf32>
    %103 = vector.shape_cast %102 : vector<1x180x168xf32> to vector<180x168xf32>
    %cst_112 = arith.constant dense<0.000000e+00> : vector<56x168xf32>
    %104 = tpu.matmul %101, %103, %cst_112 {dimension_numbers = #tpu.dot_dimension_numbers<[1], [0], [0], [1], [0, 0, 1, 1], [], []>} : vector<56x180xf32>, vector<180x168xf32>, vector<56x168xf32> -> vector<56x168xf32>
    %105 = arith.addf %98, %104 : vector<56x168xf32>
    %c3_113 = arith.constant 3 : index
    %c0_114 = arith.constant 0 : index
    %c0_115 = arith.constant 0 : index
    %106 = vector.load %arg8[%c3_113, %c0_114, %c0_115] : memref<4x56x120xf32, #tpu.memory_space<vmem>>, vector<1x56x120xf32>
    %107 = vector.shape_cast %106 : vector<1x56x120xf32> to vector<56x120xf32>
    %cst_116 = arith.constant dense<0.000000e+00> : vector<56x180xf32>
    %108 = tpu.matmul %107, %85, %cst_116 {dimension_numbers = #tpu.dot_dimension_numbers<[1], [0], [0], [1], [0, 0, 1, 1], [], []>} : vector<56x120xf32>, vector<120x180xf32>, vector<56x180xf32> -> vector<56x180xf32>
    %c3_117 = arith.constant 3 : index
    %c0_118 = arith.constant 0 : index
    %c0_119 = arith.constant 0 : index
    %109 = vector.load %arg9[%c3_117, %c0_118, %c0_119] : memref<4x180x168xf32, #tpu.memory_space<vmem>>, vector<1x180x168xf32>
    %110 = vector.shape_cast %109 : vector<1x180x168xf32> to vector<180x168xf32>
    %cst_120 = arith.constant dense<0.000000e+00> : vector<56x168xf32>
    %111 = tpu.matmul %108, %110, %cst_120 {dimension_numbers = #tpu.dot_dimension_numbers<[1], [0], [0], [1], [0, 0, 1, 1], [], []>} : vector<56x180xf32>, vector<180x168xf32>, vector<56x168xf32> -> vector<56x168xf32>
    %112 = arith.addf %105, %111 : vector<56x168xf32>
    %c0_121 = arith.constant 0 : index
    %c0_122 = arith.constant 0 : index
    %113 = vector.load %arg10[%c0_121, %c0_122] : memref<1x168xf32, #tpu.memory_space<vmem>>, vector<1x168xf32>
    %114 = vector.broadcast %113 : vector<1x168xf32> to vector<56x168xf32>
    %115 = arith.addf %112, %114 : vector<56x168xf32>
    %cst_123 = arith.constant 0.000000e+00 : f32
    %116 = vector.broadcast %cst_123 : f32 to vector<56x168xf32>
    %117 = arith.maximumf %115, %116 : vector<56x168xf32>
    %c0_124 = arith.constant 0 : index
    %c0_125 = arith.constant 0 : index
    %c0_126 = arith.constant 0 : index
    %118 = vector.load %arg11[%c0_124, %c0_125, %c0_126] : memref<7x8x56xf32, #tpu.memory_space<vmem>>, vector<1x8x56xf32>
    %119 = vector.shape_cast %118 : vector<1x8x56xf32> to vector<8x56xf32>
    %cst_127 = arith.constant dense<0.000000e+00> : vector<8x168xf32>
    %120 = tpu.matmul %119, %117, %cst_127 {dimension_numbers = #tpu.dot_dimension_numbers<[1], [0], [0], [1], [0, 0, 1, 1], [], []>} : vector<8x56xf32>, vector<56x168xf32>, vector<8x168xf32> -> vector<8x168xf32>
    %c0_128 = arith.constant 0 : index
    %c0_129 = arith.constant 0 : index
    %c0_130 = arith.constant 0 : index
    %121 = vector.load %arg12[%c0_128, %c0_129, %c0_130] : memref<7x168x256xf32, #tpu.memory_space<vmem>>, vector<1x168x256xf32>
    %122 = vector.shape_cast %121 : vector<1x168x256xf32> to vector<168x256xf32>
    %cst_131 = arith.constant dense<0.000000e+00> : vector<8x256xf32>
    %123 = tpu.matmul %120, %122, %cst_131 {dimension_numbers = #tpu.dot_dimension_numbers<[1], [0], [0], [1], [0, 0, 1, 1], [], []>} : vector<8x168xf32>, vector<168x256xf32>, vector<8x256xf32> -> vector<8x256xf32>
    %c1_132 = arith.constant 1 : index
    %c0_133 = arith.constant 0 : index
    %c0_134 = arith.constant 0 : index
    %124 = vector.load %arg11[%c1_132, %c0_133, %c0_134] : memref<7x8x56xf32, #tpu.memory_space<vmem>>, vector<1x8x56xf32>
    %125 = vector.shape_cast %124 : vector<1x8x56xf32> to vector<8x56xf32>
    %cst_135 = arith.constant dense<0.000000e+00> : vector<8x168xf32>
    %126 = tpu.matmul %125, %117, %cst_135 {dimension_numbers = #tpu.dot_dimension_numbers<[1], [0], [0], [1], [0, 0, 1, 1], [], []>} : vector<8x56xf32>, vector<56x168xf32>, vector<8x168xf32> -> vector<8x168xf32>
    %c1_136 = arith.constant 1 : index
    %c0_137 = arith.constant 0 : index
    %c0_138 = arith.constant 0 : index
    %127 = vector.load %arg12[%c1_136, %c0_137, %c0_138] : memref<7x168x256xf32, #tpu.memory_space<vmem>>, vector<1x168x256xf32>
    %128 = vector.shape_cast %127 : vector<1x168x256xf32> to vector<168x256xf32>
    %cst_139 = arith.constant dense<0.000000e+00> : vector<8x256xf32>
    %129 = tpu.matmul %126, %128, %cst_139 {dimension_numbers = #tpu.dot_dimension_numbers<[1], [0], [0], [1], [0, 0, 1, 1], [], []>} : vector<8x168xf32>, vector<168x256xf32>, vector<8x256xf32> -> vector<8x256xf32>
    %130 = arith.addf %123, %129 : vector<8x256xf32>
    %c2_140 = arith.constant 2 : index
    %c0_141 = arith.constant 0 : index
    %c0_142 = arith.constant 0 : index
    %131 = vector.load %arg11[%c2_140, %c0_141, %c0_142] : memref<7x8x56xf32, #tpu.memory_space<vmem>>, vector<1x8x56xf32>
    %132 = vector.shape_cast %131 : vector<1x8x56xf32> to vector<8x56xf32>
    %cst_143 = arith.constant dense<0.000000e+00> : vector<8x168xf32>
    %133 = tpu.matmul %132, %117, %cst_143 {dimension_numbers = #tpu.dot_dimension_numbers<[1], [0], [0], [1], [0, 0, 1, 1], [], []>} : vector<8x56xf32>, vector<56x168xf32>, vector<8x168xf32> -> vector<8x168xf32>
    %c2_144 = arith.constant 2 : index
    %c0_145 = arith.constant 0 : index
    %c0_146 = arith.constant 0 : index
    %134 = vector.load %arg12[%c2_144, %c0_145, %c0_146] : memref<7x168x256xf32, #tpu.memory_space<vmem>>, vector<1x168x256xf32>
    %135 = vector.shape_cast %134 : vector<1x168x256xf32> to vector<168x256xf32>
    %cst_147 = arith.constant dense<0.000000e+00> : vector<8x256xf32>
    %136 = tpu.matmul %133, %135, %cst_147 {dimension_numbers = #tpu.dot_dimension_numbers<[1], [0], [0], [1], [0, 0, 1, 1], [], []>} : vector<8x168xf32>, vector<168x256xf32>, vector<8x256xf32> -> vector<8x256xf32>
    %137 = arith.addf %130, %136 : vector<8x256xf32>
    %c3_148 = arith.constant 3 : index
    %c0_149 = arith.constant 0 : index
    %c0_150 = arith.constant 0 : index
    %138 = vector.load %arg11[%c3_148, %c0_149, %c0_150] : memref<7x8x56xf32, #tpu.memory_space<vmem>>, vector<1x8x56xf32>
    %139 = vector.shape_cast %138 : vector<1x8x56xf32> to vector<8x56xf32>
    %cst_151 = arith.constant dense<0.000000e+00> : vector<8x168xf32>
    %140 = tpu.matmul %139, %117, %cst_151 {dimension_numbers = #tpu.dot_dimension_numbers<[1], [0], [0], [1], [0, 0, 1, 1], [], []>} : vector<8x56xf32>, vector<56x168xf32>, vector<8x168xf32> -> vector<8x168xf32>
    %c3_152 = arith.constant 3 : index
    %c0_153 = arith.constant 0 : index
    %c0_154 = arith.constant 0 : index
    %141 = vector.load %arg12[%c3_152, %c0_153, %c0_154] : memref<7x168x256xf32, #tpu.memory_space<vmem>>, vector<1x168x256xf32>
    %142 = vector.shape_cast %141 : vector<1x168x256xf32> to vector<168x256xf32>
    %cst_155 = arith.constant dense<0.000000e+00> : vector<8x256xf32>
    %143 = tpu.matmul %140, %142, %cst_155 {dimension_numbers = #tpu.dot_dimension_numbers<[1], [0], [0], [1], [0, 0, 1, 1], [], []>} : vector<8x168xf32>, vector<168x256xf32>, vector<8x256xf32> -> vector<8x256xf32>
    %144 = arith.addf %137, %143 : vector<8x256xf32>
    %c4_156 = arith.constant 4 : index
    %c0_157 = arith.constant 0 : index
    %c0_158 = arith.constant 0 : index
    %145 = vector.load %arg11[%c4_156, %c0_157, %c0_158] : memref<7x8x56xf32, #tpu.memory_space<vmem>>, vector<1x8x56xf32>
    %146 = vector.shape_cast %145 : vector<1x8x56xf32> to vector<8x56xf32>
    %cst_159 = arith.constant dense<0.000000e+00> : vector<8x168xf32>
    %147 = tpu.matmul %146, %117, %cst_159 {dimension_numbers = #tpu.dot_dimension_numbers<[1], [0], [0], [1], [0, 0, 1, 1], [], []>} : vector<8x56xf32>, vector<56x168xf32>, vector<8x168xf32> -> vector<8x168xf32>
    %c4_160 = arith.constant 4 : index
    %c0_161 = arith.constant 0 : index
    %c0_162 = arith.constant 0 : index
    %148 = vector.load %arg12[%c4_160, %c0_161, %c0_162] : memref<7x168x256xf32, #tpu.memory_space<vmem>>, vector<1x168x256xf32>
    %149 = vector.shape_cast %148 : vector<1x168x256xf32> to vector<168x256xf32>
    %cst_163 = arith.constant dense<0.000000e+00> : vector<8x256xf32>
    %150 = tpu.matmul %147, %149, %cst_163 {dimension_numbers = #tpu.dot_dimension_numbers<[1], [0], [0], [1], [0, 0, 1, 1], [], []>} : vector<8x168xf32>, vector<168x256xf32>, vector<8x256xf32> -> vector<8x256xf32>
    %151 = arith.addf %144, %150 : vector<8x256xf32>
    %c5_164 = arith.constant 5 : index
    %c0_165 = arith.constant 0 : index
    %c0_166 = arith.constant 0 : index
    %152 = vector.load %arg11[%c5_164, %c0_165, %c0_166] : memref<7x8x56xf32, #tpu.memory_space<vmem>>, vector<1x8x56xf32>
    %153 = vector.shape_cast %152 : vector<1x8x56xf32> to vector<8x56xf32>
    %cst_167 = arith.constant dense<0.000000e+00> : vector<8x168xf32>
    %154 = tpu.matmul %153, %117, %cst_167 {dimension_numbers = #tpu.dot_dimension_numbers<[1], [0], [0], [1], [0, 0, 1, 1], [], []>} : vector<8x56xf32>, vector<56x168xf32>, vector<8x168xf32> -> vector<8x168xf32>
    %c5_168 = arith.constant 5 : index
    %c0_169 = arith.constant 0 : index
    %c0_170 = arith.constant 0 : index
    %155 = vector.load %arg12[%c5_168, %c0_169, %c0_170] : memref<7x168x256xf32, #tpu.memory_space<vmem>>, vector<1x168x256xf32>
    %156 = vector.shape_cast %155 : vector<1x168x256xf32> to vector<168x256xf32>
    %cst_171 = arith.constant dense<0.000000e+00> : vector<8x256xf32>
    %157 = tpu.matmul %154, %156, %cst_171 {dimension_numbers = #tpu.dot_dimension_numbers<[1], [0], [0], [1], [0, 0, 1, 1], [], []>} : vector<8x168xf32>, vector<168x256xf32>, vector<8x256xf32> -> vector<8x256xf32>
    %158 = arith.addf %151, %157 : vector<8x256xf32>
    %c6 = arith.constant 6 : index
    %c0_172 = arith.constant 0 : index
    %c0_173 = arith.constant 0 : index
    %159 = vector.load %arg11[%c6, %c0_172, %c0_173] : memref<7x8x56xf32, #tpu.memory_space<vmem>>, vector<1x8x56xf32>
    %160 = vector.shape_cast %159 : vector<1x8x56xf32> to vector<8x56xf32>
    %cst_174 = arith.constant dense<0.000000e+00> : vector<8x168xf32>
    %161 = tpu.matmul %160, %117, %cst_174 {dimension_numbers = #tpu.dot_dimension_numbers<[1], [0], [0], [1], [0, 0, 1, 1], [], []>} : vector<8x56xf32>, vector<56x168xf32>, vector<8x168xf32> -> vector<8x168xf32>
    %c6_175 = arith.constant 6 : index
    %c0_176 = arith.constant 0 : index
    %c0_177 = arith.constant 0 : index
    %162 = vector.load %arg12[%c6_175, %c0_176, %c0_177] : memref<7x168x256xf32, #tpu.memory_space<vmem>>, vector<1x168x256xf32>
    %163 = vector.shape_cast %162 : vector<1x168x256xf32> to vector<168x256xf32>
    %cst_178 = arith.constant dense<0.000000e+00> : vector<8x256xf32>
    %164 = tpu.matmul %161, %163, %cst_178 {dimension_numbers = #tpu.dot_dimension_numbers<[1], [0], [0], [1], [0, 0, 1, 1], [], []>} : vector<8x168xf32>, vector<168x256xf32>, vector<8x256xf32> -> vector<8x256xf32>
    %165 = arith.addf %158, %164 : vector<8x256xf32>
    %c0_179 = arith.constant 0 : index
    %c0_180 = arith.constant 0 : index
    %166 = vector.load %arg13[%c0_179, %c0_180] : memref<1x256xf32, #tpu.memory_space<vmem>>, vector<1x256xf32>
    %167 = vector.broadcast %166 : vector<1x256xf32> to vector<8x256xf32>
    %168 = arith.addf %165, %167 : vector<8x256xf32>
    %cst_181 = arith.constant 0.000000e+00 : f32
    %169 = vector.broadcast %cst_181 : f32 to vector<8x256xf32>
    %170 = arith.maximumf %168, %169 : vector<8x256xf32>
    %c0_182 = arith.constant 0 : index
    %c0_183 = arith.constant 0 : index
    %171 = vector.load %arg14[%c0_182, %c0_183] : memref<256x128xf32, #tpu.memory_space<vmem>>, vector<256x128xf32>
    %cst_184 = arith.constant dense<0.000000e+00> : vector<8x128xf32>
    %172 = tpu.matmul %170, %171, %cst_184 {dimension_numbers = #tpu.dot_dimension_numbers<[1], [0], [0], [1], [0, 0, 1, 1], [], []>} : vector<8x256xf32>, vector<256x128xf32>, vector<8x128xf32> -> vector<8x128xf32>
    %c0_185 = arith.constant 0 : index
    %c0_186 = arith.constant 0 : index
    %173 = vector.load %arg15[%c0_185, %c0_186] : memref<1x128xf32, #tpu.memory_space<vmem>>, vector<1x128xf32>
    %174 = vector.broadcast %173 : vector<1x128xf32> to vector<8x128xf32>
    %175 = arith.addf %172, %174 : vector<8x128xf32>
    %cst_187 = arith.constant dense<0xFF800000> : vector<8xf32>
    %176 = vector.multi_reduction <maximumf>, %175, %cst_187 [1] : vector<8x128xf32> to vector<8xf32>
    %177 = vector.shape_cast %176 : vector<8xf32> to vector<8x1xf32>
    %178 = vector.broadcast %177 : vector<8x1xf32> to vector<8x128xf32>
    %179 = arith.subf %175, %178 : vector<8x128xf32>
    %180 = math.exp %179 : vector<8x128xf32>
    %cst_188 = arith.constant dense<0.000000e+00> : vector<8xf32>
    %181 = vector.multi_reduction <add>, %180, %cst_188 [1] : vector<8x128xf32> to vector<8xf32>
    %182 = vector.shape_cast %181 : vector<8xf32> to vector<8x1xf32>
    %183 = tpu.reciprocal %182 {approx = true} : vector<8x1xf32> -> vector<8x1xf32>
    %184 = vector.broadcast %183 : vector<8x1xf32> to vector<8x128xf32>
    %185 = arith.mulf %180, %184 : vector<8x128xf32>
    %c0_189 = arith.constant 0 : index
    %c0_190 = arith.constant 0 : index
    %186 = vector.load %arg16[%c0_189, %c0_190] : memref<8x128xf32, #tpu.memory_space<vmem>>, vector<8x128xf32>
    tpu.vector_store %arg16[%c0_189, %c0_190], %185 {strides = array<i32>} : memref<8x128xf32, #tpu.memory_space<vmem>>, vector<8x128xf32>,
    return
  }
  func.func @transform_0(%arg0: i32) -> (i32, i32) {
    %c0_i32 = arith.constant 0 : i32
    %c0_i32_0 = arith.constant 0 : i32
    return %arg0, %c0_i32 : i32, i32
  }
  func.func @transform_1(%arg0: i32) -> (i32, i32, i32) {
    %c0_i32 = arith.constant 0 : i32
    %c0_i32_0 = arith.constant 0 : i32
    %c0_i32_1 = arith.constant 0 : i32
    %c0_i32_2 = arith.constant 0 : i32
    return %c0_i32, %c0_i32_0, %c0_i32_1 : i32, i32, i32
  }
  func.func @transform_2(%arg0: i32) -> (i32, i32, i32) {
    %c0_i32 = arith.constant 0 : i32
    %c0_i32_0 = arith.constant 0 : i32
    %c0_i32_1 = arith.constant 0 : i32
    %c0_i32_2 = arith.constant 0 : i32
    return %c0_i32, %c0_i32_0, %c0_i32_1 : i32, i32, i32
  }
  func.func @transform_3(%arg0: i32) -> (i32, i32) {
    %c0_i32 = arith.constant 0 : i32
    %c0_i32_0 = arith.constant 0 : i32
    %c0_i32_1 = arith.constant 0 : i32
    return %c0_i32, %c0_i32_0 : i32, i32
  }
  func.func @transform_4(%arg0: i32) -> (i32, i32, i32) {
    %c0_i32 = arith.constant 0 : i32
    %c0_i32_0 = arith.constant 0 : i32
    %c0_i32_1 = arith.constant 0 : i32
    %c0_i32_2 = arith.constant 0 : i32
    return %c0_i32, %c0_i32_0, %c0_i32_1 : i32, i32, i32
  }
  func.func @transform_5(%arg0: i32) -> (i32, i32, i32) {
    %c0_i32 = arith.constant 0 : i32
    %c0_i32_0 = arith.constant 0 : i32
    %c0_i32_1 = arith.constant 0 : i32
    %c0_i32_2 = arith.constant 0 : i32
    return %c0_i32, %c0_i32_0, %c0_i32_1 : i32, i32, i32
  }
  func.func @transform_6(%arg0: i32) -> (i32, i32) {
    %c0_i32 = arith.constant 0 : i32
    %c0_i32_0 = arith.constant 0 : i32
    %c0_i32_1 = arith.constant 0 : i32
    return %c0_i32, %c0_i32_0 : i32, i32
  }
  func.func @transform_7(%arg0: i32) -> (i32, i32, i32) {
    %c0_i32 = arith.constant 0 : i32
    %c0_i32_0 = arith.constant 0 : i32
    %c0_i32_1 = arith.constant 0 : i32
    %c0_i32_2 = arith.constant 0 : i32
    return %c0_i32, %c0_i32_0, %c0_i32_1 : i32, i32, i32
  }
  func.func @transform_8(%arg0: i32) -> (i32, i32, i32) {
    %c0_i32 = arith.constant 0 : i32
    %c0_i32_0 = arith.constant 0 : i32
    %c0_i32_1 = arith.constant 0 : i32
    %c0_i32_2 = arith.constant 0 : i32
    return %c0_i32, %c0_i32_0, %c0_i32_1 : i32, i32, i32
  }
  func.func @transform_9(%arg0: i32) -> (i32, i32) {
    %c0_i32 = arith.constant 0 : i32
    %c0_i32_0 = arith.constant 0 : i32
    %c0_i32_1 = arith.constant 0 : i32
    return %c0_i32, %c0_i32_0 : i32, i32
  }
  func.func @transform_10(%arg0: i32) -> (i32, i32, i32) {
    %c0_i32 = arith.constant 0 : i32
    %c0_i32_0 = arith.constant 0 : i32
    %c0_i32_1 = arith.constant 0 : i32
    %c0_i32_2 = arith.constant 0 : i32
    return %c0_i32, %c0_i32_0, %c0_i32_1 : i32, i32, i32
  }
  func.func @transform_11(%arg0: i32) -> (i32, i32, i32) {
    %c0_i32 = arith.constant 0 : i32
    %c0_i32_0 = arith.constant 0 : i32
    %c0_i32_1 = arith.constant 0 : i32
    %c0_i32_2 = arith.constant 0 : i32
    return %c0_i32, %c0_i32_0, %c0_i32_1 : i32, i32, i32
  }
  func.func @transform_12(%arg0: i32) -> (i32, i32) {
    %c0_i32 = arith.constant 0 : i32
    %c0_i32_0 = arith.constant 0 : i32
    %c0_i32_1 = arith.constant 0 : i32
    return %c0_i32, %c0_i32_0 : i32, i32
  }
  func.func @transform_13(%arg0: i32) -> (i32, i32) {
    %c0_i32 = arith.constant 0 : i32
    %c0_i32_0 = arith.constant 0 : i32
    %c0_i32_1 = arith.constant 0 : i32
    return %c0_i32, %c0_i32_0 : i32, i32
  }
  func.func @transform_14(%arg0: i32) -> (i32, i32) {
    %c0_i32 = arith.constant 0 : i32
    %c0_i32_0 = arith.constant 0 : i32
    %c0_i32_1 = arith.constant 0 : i32
    return %c0_i32, %c0_i32_0 : i32, i32
  }
  func.func @transform_15(%arg0: i32) -> (i32, i32) {
    %c0_i32 = arith.constant 0 : i32
    %c0_i32_0 = arith.constant 0 : i32
    return %arg0, %c0_i32 : i32, i32
  }
}

</mosaic_0001>

<llo_original>
// kernel: tile.18
$region0: #{tile.18}
  #allocation0 [shape = 's32[1]{0}', space=sflag, size = 0x4, scoped, tag = 'scoped memory for tile.18']
  %s0 = inlined_call_operand.vmem [shape: f32[6], index: 0, kind: input, shape index: {}]
  %s1 = inlined_call_operand.vmem [shape: f32[29,6], index: 1, kind: output, shape index: {}]
  // Predicated region
  $region2: #{tile.18} parent=0 // pred_check
    _
  $region3: #{tile.18} parent=0 // pred_check_branch
    %3 = sbr.rel (0) target = $region5
  $region4: #{tile.18} parent=0 // pred_region
    _
  $region5: #{tile.18} parent=0 // pred_fallthru
    _
  %v4 = vld [vmem:[%s0] ss:$0 sm:$0xff]
  %5 = vst [vmem:[%s1] sm:$0xff] %v4
  %s6 = scalar_lea.vmem %s1, 8
  %7 = vst [vmem:[%s6] sm:$0xff] %v4
  %s8 = scalar_lea.vmem %s1, 16
  %9 = vst [vmem:[%s8] sm:$0xff] %v4
  %s10 = scalar_lea.vmem %s1, 24
  %11 = vst [vmem:[%s10] sm:$0xff] %v4

// kernel: tile.19
$region0: #{tile.19}
  %s0 = inlined_call_operand.vmem [shape: f32[29,6], index: 0, kind: input, shape index: {}]
  %s1 = inlined_call_operand.vmem [shape: f32[1,174], index: 1, kind: output, shape index: {}]
  $region1: #{tile.19} parent=0
    #allocation0 [shape = 'u8[8192]{0}', space=vmem, size = 0x2000, scoped, tag = 'scoped mem for output reshape']
    %v2 = vld [vmem:[%s0] sm:$0x1]
    %vm3 = vcmask 48128
    %4 = vst.msk [vmem:[#allocation0] sm:$0x1] %vm3, %v2
    %s5 = scalar_lea.vmem %s0, 21
    %v6 = vld [vmem:[%s5] sm:$0x1]
    %s7 = scalar_lea.vmem %s0, 21
    %v8 = vld [vmem:[%s7] sm:$0x1]
    %vm9 = vcmask 15360
    %v10 = vsel %vm9, %v8, %v6
    %11 = vrot.lane.b32.xlu0 %v10, 126
    %v12 = vpop.permute.xlu0 %11
    %vm13 = vcmask 31744
    %s14 = scalar_lea.vmem [#allocation0], 8
    %15 = vst.msk [vmem:[%s14] sm:$0x1] %vm13, %v12
    %vm16 = vcmask 1048560
    %17 = vst.msk [vmem:[#allocation0] sm:$0x1] %vm16, %v12
    %s18 = scalar_lea.vmem %s0, 20
    %v19 = vld [vmem:[%s18] sm:$0x1]
    %20 = vrot.lane.b32.xlu0 %v19, 120
    %v21 = vpop.permute.xlu0 %20
    %vm22 = vcmask 1032128
    %23 = vst.msk [vmem:[#allocation0] sm:$0x1] %vm22, %v21
    %s24 = scalar_lea.vmem %s0, 19
    %v25 = vld [vmem:[%s24] sm:$0x1]
    %26 = vrot.lane.b32.xlu0 %v25, 114
    %v27 = vpop.permute.xlu0 %26
    %vm28 = vcmask 982928
    %29 = vst.msk [vmem:[#allocation0] sm:$0x1] %vm28, %v27
    %s30 = scalar_lea.vmem %s0, 18
    %v31 = vld [vmem:[%s30] sm:$0x1]
    %32 = vrot.lane.b32.xlu0 %v31, 108
    %v33 = vpop.permute.xlu0 %32
    %vm34 = vcmask 933728
    %35 = vst.msk [vmem:[#allocation0] sm:$0x1] %vm34, %v33
    %s36 = scalar_lea.vmem %s0, 17
    %v37 = vld [vmem:[%s36] sm:$0x1]
    %38 = vrot.lane.b32.xlu0 %v37, 102
    %v39 = vpop.permute.xlu0 %38
    %vm40 = vcmask 884528
    %41 = vst.msk [vmem:[#allocation0] sm:$0x1] %vm40, %v39
    %s42 = scalar_lea.vmem %s0, 16
    %v43 = vld [vmem:[%s42] sm:$0x1]
    %44 = vrot.lane.b32.xlu0 %v43, 96
    %v45 = vpop.permute.xlu0 %44
    %vm46 = vcmask 835328
    %47 = vst.msk [vmem:[#allocation0] sm:$0x1] %vm46, %v45
    %s48 = scalar_lea.vmem %s0, 15
    %v49 = vld [vmem:[%s48] sm:$0x1]
    %50 = vrot.lane.b32.xlu0 %v49, 90
    %v51 = vpop.permute.xlu0 %50
    %vm52 = vcmask 786128
    %53 = vst.msk [vmem:[#allocation0] sm:$0x1] %vm52, %v51
    %s54 = scalar_lea.vmem %s0, 14
    %v55 = vld [vmem:[%s54] sm:$0x1]
    %56 = vrot.lane.b32.xlu0 %v55, 84
    %v57 = vpop.permute.xlu0 %56
    %vm58 = vcmask 736928
    %59 = vst.msk [vmem:[#allocation0] sm:$0x1] %vm58, %v57
    %s60 = scalar_lea.vmem %s0, 13
    %v61 = vld [vmem:[%s60] sm:$0x1]
    %62 = vrot.lane.b32.xlu0 %v61, 78
    %v63 = vpop.permute.xlu0 %62
    %vm64 = vcmask 687728
    %65 = vst.msk [vmem:[#allocation0] sm:$0x1] %vm64, %v63
    %s66 = scalar_lea.vmem %s0, 12
    %v67 = vld [vmem:[%s66] sm:$0x1]
    %68 = vrot.lane.b32.xlu0 %v67, 72
    %v69 = vpop.permute.xlu0 %68
    %vm70 = vcmask 638528
    %71 = vst.msk [vmem:[#allocation0] sm:$0x1] %vm70, %v69
    %s72 = scalar_lea.vmem %s0, 11
    %v73 = vld [vmem:[%s72] sm:$0x1]
    %74 = vrot.lane.b32.xlu0 %v73, 66
    %v75 = vpop.permute.xlu0 %74
    %vm76 = vcmask 589328
    %77 = vst.msk [vmem:[#allocation0] sm:$0x1] %vm76, %v75
    %s78 = scalar_lea.vmem %s0, 10
    %v79 = vld [vmem:[%s78] sm:$0x1]
    %80 = vrot.lane.b32.xlu0 %v79, 60
    %v81 = vpop.permute.xlu0 %80
    %vm82 = vcmask 540128
    %83 = vst.msk [vmem:[#allocation0] sm:$0x1] %vm82, %v81
    %s84 = scalar_lea.vmem %s0, 9
    %v85 = vld [vmem:[%s84] sm:$0x1]
    %86 = vrot.lane.b32.xlu0 %v85, 54
    %v87 = vpop.permute.xlu0 %86
    %vm88 = vcmask 490928
    %89 = vst.msk [vmem:[#allocation0] sm:$0x1] %vm88, %v87
    %s90 = scalar_lea.vmem %s0, 8
    %v91 = vld [vmem:[%s90] sm:$0x1]
    %92 = vrot.lane.b32.xlu0 %v91, 48
    %v93 = vpop.permute.xlu0 %92
    %vm94 = vcmask 441728
    %95 = vst.msk [vmem:[#allocation0] sm:$0x1] %vm94, %v93
    %s96 = scalar_lea.vmem %s0, 7
    %v97 = vld [vmem:[%s96] sm:$0x1]
    %98 = vrot.lane.b32.xlu0 %v97, 42
    %v99 = vpop.permute.xlu0 %98
    %vm100 = vcmask 392528
    %101 = vst.msk [vmem:[#allocation0] sm:$0x1] %vm100, %v99
    %s102 = scalar_lea.vmem %s0, 28
    %v103 = vld [vmem:[%s102] sm:$0x1]
    %104 = vrot.lane.b32.xlu0 %v103, 40
    %v105 = vpop.permute.xlu0 %104
    %vm106 = vcmask 376128
    %s107 = scalar_lea.vmem [#allocation0], 8
    %108 = vst.msk [vmem:[%s107] sm:$0x1] %vm106, %v105
    %s109 = scalar_lea.vmem %s0, 6
    %v110 = vld [vmem:[%s109] sm:$0x1]
    %111 = vrot.lane.b32.xlu0 %v110, 36
    %v112 = vpop.permute.xlu0 %111
    %vm113 = vcmask 343328
    %114 = vst.msk [vmem:[#allocation0] sm:$0x1] %vm113, %v112
    %s115 = scalar_lea.vmem %s0, 27
    %v116 = vld [vmem:[%s115] sm:$0x1]
    %117 = vrot.lane.b32.xlu0 %v116, 34
    %v118 = vpop.permute.xlu0 %117
    %vm119 = vcmask 326928
    %s120 = scalar_lea.vmem [#allocation0], 8
    %121 = vst.msk [vmem:[%s120] sm:$0x1] %vm119, %v118
    %s122 = scalar_lea.vmem %s0, 5
    %v123 = vld [vmem:[%s122] sm:$0x1]
    %124 = vrot.lane.b32.xlu0 %v123, 30
    %v125 = vpop.permute.xlu0 %124
    %vm126 = vcmask 294128
    %127 = vst.msk [vmem:[#allocation0] sm:$0x1] %vm126, %v125
    %s128 = scalar_lea.vmem %s0, 26
    %v129 = vld [vmem:[%s128] sm:$0x1]
    %130 = vrot.lane.b32.xlu0 %v129, 28
    %v131 = vpop.permute.xlu0 %130
    %vm132 = vcmask 277728
    %s133 = scalar_lea.vmem [#allocation0], 8
    %134 = vst.msk [vmem:[%s133] sm:$0x1] %vm132, %v131
    %s135 = scalar_lea.vmem %s0, 4
    %v136 = vld [vmem:[%s135] sm:$0x1]
    %137 = vrot.lane.b32.xlu0 %v136, 24
    %v138 = vpop.permute.xlu0 %137
    %vm139 = vcmask 244928
    %140 = vst.msk [vmem:[#allocation0] sm:$0x1] %vm139, %v138
    %s141 = scalar_lea.vmem %s0, 25
    %v142 = vld [vmem:[%s141] sm:$0x1]
    %143 = vrot.lane.b32.xlu0 %v142, 22
    %v144 = vpop.permute.xlu0 %143
    %vm145 = vcmask 228528
    %s146 = scalar_lea.vmem [#allocation0], 8
    %147 = vst.msk [vmem:[%s146] sm:$0x1] %vm145, %v144
    %s148 = scalar_lea.vmem %s0, 3
    %v149 = vld [vmem:[%s148] sm:$0x1]
    %150 = vrot.lane.b32.xlu0 %v149, 18
    %v151 = vpop.permute.xlu0 %150
    %vm152 = vcmask 195728
    %153 = vst.msk [vmem:[#allocation0] sm:$0x1] %vm152, %v151
    %s154 = scalar_lea.vmem %s0, 24
    %v155 = vld [vmem:[%s154] sm:$0x1]
    %156 = vrot.lane.b32.xlu0 %v155, 16
    %v157 = vpop.permute.xlu0 %156
    %vm158 = vcmask 179328
    %s159 = scalar_lea.vmem [#allocation0], 8
    %160 = vst.msk [vmem:[%s159] sm:$0x1] %vm158, %v157
    %s161 = scalar_lea.vmem %s0, 2
    %v162 = vld [vmem:[%s161] sm:$0x1]
    %163 = vrot.lane.b32.xlu0 %v162, 12
    %v164 = vpop.permute.xlu0 %163
    %vm165 = vcmask 146528
    %166 = vst.msk [vmem:[#allocation0] sm:$0x1] %vm165, %v164
    %s167 = scalar_lea.vmem %s0, 23
    %v168 = vld [vmem:[%s167] sm:$0x1]
    %169 = vrot.lane.b32.xlu0 %v168, 10
    %v170 = vpop.permute.xlu0 %169
    %vm171 = vcmask 130128
    %s172 = scalar_lea.vmem [#allocation0], 8
    %173 = vst.msk [vmem:[%s172] sm:$0x1] %vm171, %v170
    %s174 = scalar_lea.vmem %s0, 1
    %v175 = vld [vmem:[%s174] sm:$0x1]
    %176 = vrot.lane.b32.xlu0 %v175, 6
    %v177 = vpop.permute.xlu0 %176
    %vm178 = vcmask 97328
    %179 = vst.msk [vmem:[#allocation0] sm:$0x1] %vm178, %v177
    %s180 = scalar_lea.vmem %s0, 22
    %v181 = vld [vmem:[%s180] sm:$0x1]
    %182 = vrot.lane.b32.xlu0 %v181, 4
    %v183 = vpop.permute.xlu0 %182
    %vm184 = vcmask 80928
    %s185 = scalar_lea.vmem [#allocation0], 8
    %186 = vst.msk [vmem:[%s185] sm:$0x1] %vm184, %v183
    %s188 = sshllo.u32 0, 1
    %v190 = vld [vmem:[#allocation0] sm:%s188]
    %s191 = sshllo.u32 0, 1
    %192 = vst [vmem:[%s1] sm:%s191] %v190
    %s193 = scalar_lea.vmem [#allocation0], 8
    %v194 = vld [vmem:[%s193] sm:%s188]
    %s195 = sshllo.u32 0, 1
    %s196 = scalar_lea.vmem %s1, 1
    %197 = vst [vmem:[%s196] sm:%s195] %v194

// kernel: tile.23
$region0: #{tile.23}
  #allocation0 [shape = 's32[1]{0}', space=sflag, size = 0x4, scoped, tag = 'scoped memory for tile.23']
  %s0 = inlined_call_operand.vmem [shape: f32[12], index: 0, kind: input, shape index: {}]
  %s1 = inlined_call_operand.vmem [shape: f32[15,12], index: 1, kind: output, shape index: {}]
  // Predicated region
  $region2: #{tile.23} parent=0 // pred_check
    _
  $region3: #{tile.23} parent=0 // pred_check_branch
    %3 = sbr.rel (0) target = $region5
  $region4: #{tile.23} parent=0 // pred_region
    _
  $region5: #{tile.23} parent=0 // pred_fallthru
    _
  %v4 = vld [vmem:[%s0] ss:$0 sm:$0xff]
  %5 = vst [vmem:[%s1] sm:$0xff] %v4
  %s6 = scalar_lea.vmem %s1, 8
  %7 = vst [vmem:[%s6] sm:$0xff] %v4

// kernel: tile.24
$region0: #{tile.24}
  %s0 = inlined_call_operand.vmem [shape: f32[15,12], index: 0, kind: input, shape index: {}]
  %s1 = inlined_call_operand.vmem [shape: f32[1,180], index: 1, kind: output, shape index: {}]
  $region1: #{tile.24} parent=0
    #allocation0 [shape = 'u8[8192]{0}', space=vmem, size = 0x2000, scoped, tag = 'scoped mem for output reshape']
    %v2 = vld [vmem:[%s0] sm:$0x1]
    %vm3 = vcmask 97280
    %4 = vst.msk [vmem:[#allocation0] sm:$0x1] %vm3, %v2
    %s5 = scalar_lea.vmem %s0, 10
    %v6 = vld [vmem:[%s5] sm:$0x1]
    %s7 = scalar_lea.vmem %s0, 10
    %v8 = vld [vmem:[%s7] sm:$0x1]
    %vm9 = vcmask 64512
    %v10 = vsel %vm9, %v8, %v6
    %11 = vrot.lane.b32.xlu0 %v10, 120
    %v12 = vpop.permute.xlu0 %11
    %vm13 = vcmask 31744
    %s14 = scalar_lea.vmem [#allocation0], 8
    %15 = vst.msk [vmem:[%s14] sm:$0x1] %vm13, %v12
    %vm16 = vcmask 1048512
    %17 = vst.msk [vmem:[#allocation0] sm:$0x1] %vm16, %v12
    %s18 = scalar_lea.vmem %s0, 9
    %v19 = vld [vmem:[%s18] sm:$0x1]
    %20 = vrot.lane.b32.xlu0 %v19, 108
    %v21 = vpop.permute.xlu0 %20
    %vm22 = vcmask 982880
    %23 = vst.msk [vmem:[#allocation0] sm:$0x1] %vm22, %v21
    %s24 = scalar_lea.vmem %s0, 8
    %v25 = vld [vmem:[%s24] sm:$0x1]
    %26 = vrot.lane.b32.xlu0 %v25, 96
    %v27 = vpop.permute.xlu0 %26
    %vm28 = vcmask 884480
    %29 = vst.msk [vmem:[#allocation0] sm:$0x1] %vm28, %v27
    %s30 = scalar_lea.vmem %s0, 7
    %v31 = vld [vmem:[%s30] sm:$0x1]
    %32 = vrot.lane.b32.xlu0 %v31, 84
    %v33 = vpop.permute.xlu0 %32
    %vm34 = vcmask 786080
    %35 = vst.msk [vmem:[#allocation0] sm:$0x1] %vm34, %v33
    %s36 = scalar_lea.vmem %s0, 6
    %v37 = vld [vmem:[%s36] sm:$0x1]
    %38 = vrot.lane.b32.xlu0 %v37, 72
    %v39 = vpop.permute.xlu0 %38
    %vm40 = vcmask 687680
    %41 = vst.msk [vmem:[#allocation0] sm:$0x1] %vm40, %v39
    %s42 = scalar_lea.vmem %s0, 5
    %v43 = vld [vmem:[%s42] sm:$0x1]
    %44 = vrot.lane.b32.xlu0 %v43, 60
    %v45 = vpop.permute.xlu0 %44
    %vm46 = vcmask 589280
    %47 = vst.msk [vmem:[#allocation0] sm:$0x1] %vm46, %v45
    %s48 = scalar_lea.vmem %s0, 4
    %v49 = vld [vmem:[%s48] sm:$0x1]
    %50 = vrot.lane.b32.xlu0 %v49, 48
    %v51 = vpop.permute.xlu0 %50
    %vm52 = vcmask 490880
    %53 = vst.msk [vmem:[#allocation0] sm:$0x1] %vm52, %v51
    %s54 = scalar_lea.vmem %s0, 14
    %v55 = vld [vmem:[%s54] sm:$0x1]
    %56 = vrot.lane.b32.xlu0 %v55, 40
    %v57 = vpop.permute.xlu0 %56
    %vm58 = vcmask 425280
    %s59 = scalar_lea.vmem [#allocation0], 8
    %60 = vst.msk [vmem:[%s59] sm:$0x1] %vm58, %v57
    %s61 = scalar_lea.vmem %s0, 3
    %v62 = vld [vmem:[%s61] sm:$0x1]
    %63 = vrot.lane.b32.xlu0 %v62, 36
    %v64 = vpop.permute.xlu0 %63
    %vm65 = vcmask 392480
    %66 = vst.msk [vmem:[#allocation0] sm:$0x1] %vm65, %v64
    %s67 = scalar_lea.vmem %s0, 13
    %v68 = vld [vmem:[%s67] sm:$0x1]
    %69 = vrot.lane.b32.xlu0 %v68, 28
    %v70 = vpop.permute.xlu0 %69
    %vm71 = vcmask 326880
    %s72 = scalar_lea.vmem [#allocation0], 8
    %73 = vst.msk [vmem:[%s72] sm:$0x1] %vm71, %v70
    %s74 = scalar_lea.vmem %s0, 2
    %v75 = vld [vmem:[%s74] sm:$0x1]
    %76 = vrot.lane.b32.xlu0 %v75, 24
    %v77 = vpop.permute.xlu0 %76
    %vm78 = vcmask 294080
    %79 = vst.msk [vmem:[#allocation0] sm:$0x1] %vm78, %v77
    %s80 = scalar_lea.vmem %s0, 12
    %v81 = vld [vmem:[%s80] sm:$0x1]
    %82 = vrot.lane.b32.xlu0 %v81, 16
    %v83 = vpop.permute.xlu0 %82
    %vm84 = vcmask 228480
    %s85 = scalar_lea.vmem [#allocation0], 8
    %86 = vst.msk [vmem:[%s85] sm:$0x1] %vm84, %v83
    %s87 = scalar_lea.vmem %s0, 1
    %v88 = vld [vmem:[%s87] sm:$0x1]
    %89 = vrot.lane.b32.xlu0 %v88, 12
    %v90 = vpop.permute.xlu0 %89
    %vm91 = vcmask 195680
    %92 = vst.msk [vmem:[#allocation0] sm:$0x1] %vm91, %v90
    %s93 = scalar_lea.vmem %s0, 11
    %v94 = vld [vmem:[%s93] sm:$0x1]
    %95 = vrot.lane.b32.xlu0 %v94, 4
    %v96 = vpop.permute.xlu0 %95
    %vm97 = vcmask 130080
    %s98 = scalar_lea.vmem [#allocation0], 8
    %99 = vst.msk [vmem:[%s98] sm:$0x1] %vm97, %v96
    %s101 = sshllo.u32 0, 1
    %v103 = vld [vmem:[#allocation0] sm:%s101]
    %s104 = sshllo.u32 0, 1
    %105 = vst [vmem:[%s1] sm:%s104] %v103
    %s106 = scalar_lea.vmem [#allocation0], 8
    %v107 = vld [vmem:[%s106] sm:%s101]
    %s108 = sshllo.u32 0, 1
    %s109 = scalar_lea.vmem %s1, 1
    %110 = vst [vmem:[%s109] sm:%s108] %v107

// kernel: tile.28
$region0: #{tile.28}
  #allocation0 [shape = 's32[1]{0}', space=sflag, size = 0x4, scoped, tag = 'scoped memory for tile.28']
  %s0 = inlined_call_operand.vmem [shape: f32[24], index: 0, kind: input, shape index: {}]
  %s1 = inlined_call_operand.vmem [shape: f32[7,24], index: 1, kind: output, shape index: {}]
  // Predicated region
  $region2: #{tile.28} parent=0 // pred_check
    _
  $region3: #{tile.28} parent=0 // pred_check_branch
    %3 = sbr.rel (0) target = $region5
  $region4: #{tile.28} parent=0 // pred_region
    _
  $region5: #{tile.28} parent=0 // pred_fallthru
    _
  %v4 = vld [vmem:[%s0] ss:$0 sm:$0xff]
  %5 = vst [vmem:[%s1] sm:$0xff] %v4

// kernel: tile.29
$region0: #{tile.29}
  %s0 = inlined_call_operand.vmem [shape: f32[7,24], index: 0, kind: input, shape index: {}]
  %s1 = inlined_call_operand.vmem [shape: f32[1,168], index: 1, kind: output, shape index: {}]
  $region1: #{tile.29} parent=0
    #allocation0 [shape = 'u8[8192]{0}', space=vmem, size = 0x2000, scoped, tag = 'scoped mem for output reshape']
    %v2 = vld [vmem:[%s0] sm:$0x1]
    %vm3 = vcmask 195584
    %4 = vst.msk [vmem:[#allocation0] sm:$0x1] %vm3, %v2
    %s5 = scalar_lea.vmem %s0, 5
    %v6 = vld [vmem:[%s5] sm:$0x1]
    %s7 = scalar_lea.vmem %s0, 5
    %v8 = vld [vmem:[%s7] sm:$0x1]
    %vm9 = vcmask 64512
    %v10 = vsel %vm9, %v8, %v6
    %11 = vrot.lane.b32.xlu0 %v10, 120
    %v12 = vpop.permute.xlu0 %11
    %vm13 = vcmask 130048
    %s14 = scalar_lea.vmem [#allocation0], 8
    %15 = vst.msk [vmem:[%s14] sm:$0x1] %vm13, %v12
    %vm16 = vcmask 1048512
    %17 = vst.msk [vmem:[#allocation0] sm:$0x1] %vm16, %v12
    %s18 = scalar_lea.vmem %s0, 4
    %v19 = vld [vmem:[%s18] sm:$0x1]
    %20 = vrot.lane.b32.xlu0 %v19, 96
    %v21 = vpop.permute.xlu0 %20
    %vm22 = vcmask 982784
    %23 = vst.msk [vmem:[#allocation0] sm:$0x1] %vm22, %v21
    %s24 = scalar_lea.vmem %s0, 3
    %v25 = vld [vmem:[%s24] sm:$0x1]
    %26 = vrot.lane.b32.xlu0 %v25, 72
    %v27 = vpop.permute.xlu0 %26
    %vm28 = vcmask 785984
    %29 = vst.msk [vmem:[#allocation0] sm:$0x1] %vm28, %v27
    %s30 = scalar_lea.vmem %s0, 2
    %v31 = vld [vmem:[%s30] sm:$0x1]
    %32 = vrot.lane.b32.xlu0 %v31, 48
    %v33 = vpop.permute.xlu0 %32
    %vm34 = vcmask 589184
    %35 = vst.msk [vmem:[#allocation0] sm:$0x1] %vm34, %v33
    %s36 = scalar_lea.vmem %s0, 1
    %v37 = vld [vmem:[%s36] sm:$0x1]
    %38 = vrot.lane.b32.xlu0 %v37, 24
    %v39 = vpop.permute.xlu0 %38
    %vm40 = vcmask 392384
    %41 = vst.msk [vmem:[#allocation0] sm:$0x1] %vm40, %v39
    %s42 = scalar_lea.vmem %s0, 6
    %v43 = vld [vmem:[%s42] sm:$0x1]
    %44 = vrot.lane.b32.xlu0 %v43, 16
    %v45 = vpop.permute.xlu0 %44
    %vm46 = vcmask 326784
    %s47 = scalar_lea.vmem [#allocation0], 8
    %48 = vst.msk [vmem:[%s47] sm:$0x1] %vm46, %v45
    %s50 = sshllo.u32 0, 1
    %v52 = vld [vmem:[#allocation0] sm:%s50]
    %s53 = sshllo.u32 0, 1
    %54 = vst [vmem:[%s1] sm:%s53] %v52
    %s55 = scalar_lea.vmem [#allocation0], 8
    %v56 = vld [vmem:[%s55] sm:%s50]
    %s57 = sshllo.u32 0, 1
    %s58 = scalar_lea.vmem %s1, 1
    %59 = vst [vmem:[%s58] sm:%s57] %v56

// kernel: cnn_forward.1
$region0: #{cnn_forward.1}
  #allocation0 [shape = 'u32[]', space=smem, size = 0x4, offset = 0x4, fixed_abs, tag = 'smem constant byte address 0x4 - core index']
  #allocation1 [shape = 'u32[144,128]{1,0:T(1,128)}', space=vmem, size = 0x12000, scoped, tag = 'internal scratch']
  %s0 = inlined_call_operand.vmem [shape: f32[448,28], index: 0, kind: input, shape index: {}]
  %s1 = inlined_call_operand.vmem [shape: f32[6,232,224], index: 1, kind: input, shape index: {}]
  %s2 = inlined_call_operand.vmem [shape: f32[6,28,174], index: 2, kind: input, shape index: {}]
  %s3 = inlined_call_operand.vmem [shape: f32[1,174], index: 3, kind: input, shape index: {}]
  %s4 = inlined_call_operand.vmem [shape: f32[5,120,232], index: 4, kind: input, shape index: {}]
  %s5 = inlined_call_operand.vmem [shape: f32[5,174,180], index: 5, kind: input, shape index: {}]
  %s6 = inlined_call_operand.vmem [shape: f32[1,180], index: 6, kind: input, shape index: {}]
  %s7 = inlined_call_operand.vmem [shape: f32[4,56,120], index: 7, kind: input, shape index: {}]
  %s8 = inlined_call_operand.vmem [shape: f32[4,180,168], index: 8, kind: input, shape index: {}]
  %s9 = inlined_call_operand.vmem [shape: f32[1,168], index: 9, kind: input, shape index: {}]
  %s10 = inlined_call_operand.vmem [shape: f32[7,8,56], index: 10, kind: input, shape index: {}]
  %s11 = inlined_call_operand.vmem [shape: f32[7,168,256], index: 11, kind: input, shape index: {}]
  %s12 = inlined_call_operand.vmem [shape: f32[1,256], index: 12, kind: input, shape index: {}]
  %s13 = inlined_call_operand.vmem [shape: f32[256,128], index: 13, kind: input, shape index: {}]
  %s14 = inlined_call_operand.vmem [shape: f32[1,128], index: 14, kind: input, shape index: {}]
  %s15 = inlined_call_operand.hbm [shape: f32[16,128], index: 15, kind: output, shape index: {}]
  %s16 = sld [smem:[#allocation0]]
  $region93: #{cnn_forward.1} parent=0
    _
  %s18 = ssub.s32 1, %s16
  %s19 = scalar_select 0, %s18, %s16
  $region1: #{cnn_forward.1} parent=0
    #allocation2 [shape = 'u8[8192]{0}', space=vmem, size = 0x2000, scoped, tag = 'output window, operand 0']
    #allocation3 [shape = 's32[2]{0}', space=sflag, size = 0x8, scoped, tag = 'scoped memory for cnn_forward.1']
    %20 = vsyncpa [#allocation3], 0
    %s21 = scalar_lea.sflag [#allocation3], 1
    %22 = vsyncpa %s21, 0
    loop: start=0, step=1, limit=4
    $region2: #{cnn_forward.1} parent=1 // loop_pre_header
      _
    $region3: #{cnn_forward.1} parent=1 // loop_header
      %s24 = sphi 0, %s28
      %p25 = scmp.ge.s32.totalorder %s24, 4
      %s34 = sphi 0, %s36
      %s37 = sphi 0, %s34
      %s38 = sphi 0, %s37
      %s54 = sphi 0, %s38
      %s58 = sphi 0, %s58
      %s60 = sphi 0, %s58
      %s61 = sphi 0, %s60
      %s75 = sphi 0, %s61
      %s79 = sphi 0, %s79
      %s81 = sphi 0, %s79
      %s82 = sphi 0, %s81
      %s96 = sphi 0, %s82
      %s100 = sphi 0, %s100
      %s102 = sphi 0, %s100
      %s103 = sphi 0, %s102
      %s117 = sphi 0, %s103
      %s121 = sphi 0, %s121
      %s123 = sphi 0, %s121
      %s124 = sphi 0, %s123
      %s138 = sphi 0, %s124
      %s142 = sphi 0, %s142
      %s144 = sphi 0, %s142
      %s145 = sphi 0, %s144
      %s159 = sphi 0, %s145
      %s163 = sphi 0, %s163
      %s165 = sphi 0, %s163
      %s166 = sphi 0, %s165
      %s180 = sphi 0, %s166
      %s184 = sphi 0, %s184
      %s186 = sphi 0, %s184
      %s187 = sphi 0, %s186
      %s201 = sphi 0, %s187
      %s205 = sphi 0, %s205
      %s207 = sphi 0, %s205
      %s208 = sphi 0, %s207
      %s222 = sphi 0, %s208
      %s226 = sphi 0, %s226
      %s228 = sphi 0, %s226
      %s229 = sphi 0, %s228
      %s243 = sphi 0, %s229
      %s247 = sphi 0, %s247
      %s249 = sphi 0, %s247
      %s250 = sphi 0, %s249
      %s264 = sphi 0, %s250
      %s268 = sphi 0, %s268
      %s270 = sphi 0, %s268
      %s271 = sphi 0, %s270
      %s285 = sphi 0, %s271
      %s289 = sphi 0, %s289
      %s291 = sphi 0, %s289
      %s292 = sphi 0, %s291
      %s306 = sphi 0, %s292
      %s310 = sphi 0, %s310
      %s312 = sphi 0, %s310
      %s313 = sphi 0, %s312
      %s327 = sphi 0, %s313
      %s331 = sphi 0, %s331
      %s333 = sphi 0, %s331
      %s334 = sphi 0, %s333
      %s348 = sphi 0, %s334
      %s354 = sphi 0, %s356
      %s357 = sphi 0, %s354
      %s358 = sphi 0, %s357
      %s374 = sphi 0, %s358
    $region4: #{cnn_forward.1} parent=1 // loop_header_branch
      %27 = sbr.rel (%p25) target = $region8
    $region5: #{cnn_forward.1} parent=1 // loop_body
      %s29 = ssub.s32 %s24, 1
      %s30 = ssub.s32 %s24, 2
      %s31 = sadd.s32 %s24, 1
      %s32 = ssub.s32 %s24, %s31
      %p33 = scmp.eq.s32.totalorder %s32, 0
      %s35 = sadd.s32 %s34, 1
      %s36 = scalar_select %p33, %s34, %s35
      %p39 = pneg %p33
      %p40 = scmp.eq.s32.totalorder %s24, 1
      %p41 = por %p39, %p40
      %p42 = scmp.ne.s32.totalorder %s34, %s37
      %p43 = scmp.eq.s32.totalorder %s24, 0
      %p44 = por %p42, %p43
      %p45 = scmp.ne.s32.totalorder %s34, %s37
      %p46 = scmp.eq.s32.totalorder %s29, 1
      %p47 = por %p45, %p46
      %p48 = scmp.ne.s32.totalorder %s37, %s38
      %p49 = scmp.eq.s32.totalorder %s29, 0
      %p50 = por %p48, %p49
      %p51 = scmp.ne.s32.totalorder %s37, %s38
      %p52 = scmp.eq.s32.totalorder %s30, 1
      %p53 = por %p51, %p52
      %p55 = scmp.ne.s32.totalorder %s38, %s54
      %p56 = scmp.eq.s32.totalorder %s30, 0
      %p57 = por %p55, %p56
      %s59 = sadd.s32 %s58, 1
      %p62 = scmp.eq.s32.totalorder %s24, 1
      %p63 = scmp.ne.s32.totalorder %s58, %s60
      %p64 = scmp.eq.s32.totalorder %s24, 0
      %p65 = por %p63, %p64
      %p66 = scmp.ne.s32.totalorder %s58, %s60
      %p67 = scmp.eq.s32.totalorder %s29, 1
      %p68 = por %p66, %p67
      %p69 = scmp.ne.s32.totalorder %s60, %s61
      %p70 = scmp.eq.s32.totalorder %s29, 0
      %p71 = por %p69, %p70
      %p72 = scmp.ne.s32.totalorder %s60, %s61
      %p73 = scmp.eq.s32.totalorder %s30, 1
      %p74 = por %p72, %p73
      %p76 = scmp.ne.s32.totalorder %s61, %s75
      %p77 = scmp.eq.s32.totalorder %s30, 0
      %p78 = por %p76, %p77
      %s80 = sadd.s32 %s79, 1
      %p83 = scmp.eq.s32.totalorder %s24, 1
      %p84 = scmp.ne.s32.totalorder %s79, %s81
      %p85 = scmp.eq.s32.totalorder %s24, 0
      %p86 = por %p84, %p85
      %p87 = scmp.ne.s32.totalorder %s79, %s81
      %p88 = scmp.eq.s32.totalorder %s29, 1
      %p89 = por %p87, %p88
      %p90 = scmp.ne.s32.totalorder %s81, %s82
      %p91 = scmp.eq.s32.totalorder %s29, 0
      %p92 = por %p90, %p91
      %p93 = scmp.ne.s32.totalorder %s81, %s82
      %p94 = scmp.eq.s32.totalorder %s30, 1
      %p95 = por %p93, %p94
      %p97 = scmp.ne.s32.totalorder %s82, %s96
      %p98 = scmp.eq.s32.totalorder %s30, 0
      %p99 = por %p97, %p98
      %s101 = sadd.s32 %s100, 1
      %p104 = scmp.eq.s32.totalorder %s24, 1
      %p105 = scmp.ne.s32.totalorder %s100, %s102
      %p106 = scmp.eq.s32.totalorder %s24, 0
      %p107 = por %p105, %p106
      %p108 = scmp.ne.s32.totalorder %s100, %s102
      %p109 = scmp.eq.s32.totalorder %s29, 1
      %p110 = por %p108, %p109
      %p111 = scmp.ne.s32.totalorder %s102, %s103
      %p112 = scmp.eq.s32.totalorder %s29, 0
      %p113 = por %p111, %p112
      %p114 = scmp.ne.s32.totalorder %s102, %s103
      %p115 = scmp.eq.s32.totalorder %s30, 1
      %p116 = por %p114, %p115
      %p118 = scmp.ne.s32.totalorder %s103, %s117
      %p119 = scmp.eq.s32.totalorder %s30, 0
      %p120 = por %p118, %p119
      %s122 = sadd.s32 %s121, 1
      %p125 = scmp.eq.s32.totalorder %s24, 1
      %p126 = scmp.ne.s32.totalorder %s121, %s123
      %p127 = scmp.eq.s32.totalorder %s24, 0
      %p128 = por %p126, %p127
      %p129 = scmp.ne.s32.totalorder %s121, %s123
      %p130 = scmp.eq.s32.totalorder %s29, 1
      %p131 = por %p129, %p130
      %p132 = scmp.ne.s32.totalorder %s123, %s124
      %p133 = scmp.eq.s32.totalorder %s29, 0
      %p134 = por %p132, %p133
      %p135 = scmp.ne.s32.totalorder %s123, %s124
      %p136 = scmp.eq.s32.totalorder %s30, 1
      %p137 = por %p135, %p136
      %p139 = scmp.ne.s32.totalorder %s124, %s138
      %p140 = scmp.eq.s32.totalorder %s30, 0
      %p141 = por %p139, %p140
      %s143 = sadd.s32 %s142, 1
      %p146 = scmp.eq.s32.totalorder %s24, 1
      %p147 = scmp.ne.s32.totalorder %s142, %s144
      %p148 = scmp.eq.s32.totalorder %s24, 0
      %p149 = por %p147, %p148
      %p150 = scmp.ne.s32.totalorder %s142, %s144
      %p151 = scmp.eq.s32.totalorder %s29, 1
      %p152 = por %p150, %p151
      %p153 = scmp.ne.s32.totalorder %s144, %s145
      %p154 = scmp.eq.s32.totalorder %s29, 0
      %p155 = por %p153, %p154
      %p156 = scmp.ne.s32.totalorder %s144, %s145
      %p157 = scmp.eq.s32.totalorder %s30, 1
      %p158 = por %p156, %p157
      %p160 = scmp.ne.s32.totalorder %s145, %s159
      %p161 = scmp.eq.s32.totalorder %s30, 0
      %p162 = por %p160, %p161
      %s164 = sadd.s32 %s163, 1
      %p167 = scmp.eq.s32.totalorder %s24, 1
      %p168 = scmp.ne.s32.totalorder %s163, %s165
      %p169 = scmp.eq.s32.totalorder %s24, 0
      %p170 = por %p168, %p169
      %p171 = scmp.ne.s32.totalorder %s163, %s165
      %p172 = scmp.eq.s32.totalorder %s29, 1
      %p173 = por %p171, %p172
      %p174 = scmp.ne.s32.totalorder %s165, %s166
      %p175 = scmp.eq.s32.totalorder %s29, 0
      %p176 = por %p174, %p175
      %p177 = scmp.ne.s32.totalorder %s165, %s166
      %p178 = scmp.eq.s32.totalorder %s30, 1
      %p179 = por %p177, %p178
      %p181 = scmp.ne.s32.totalorder %s166, %s180
      %p182 = scmp.eq.s32.totalorder %s30, 0
      %p183 = por %p181, %p182
      %s185 = sadd.s32 %s184, 1
      %p188 = scmp.eq.s32.totalorder %s24, 1
      %p189 = scmp.ne.s32.totalorder %s184, %s186
      %p190 = scmp.eq.s32.totalorder %s24, 0
      %p191 = por %p189, %p190
      %p192 = scmp.ne.s32.totalorder %s184, %s186
      %p193 = scmp.eq.s32.totalorder %s29, 1
      %p194 = por %p192, %p193
      %p195 = scmp.ne.s32.totalorder %s186, %s187
      %p196 = scmp.eq.s32.totalorder %s29, 0
      %p197 = por %p195, %p196
      %p198 = scmp.ne.s32.totalorder %s186, %s187
      %p199 = scmp.eq.s32.totalorder %s30, 1
      %p200 = por %p198, %p199
      %p202 = scmp.ne.s32.totalorder %s187, %s201
      %p203 = scmp.eq.s32.totalorder %s30, 0
      %p204 = por %p202, %p203
      %s206 = sadd.s32 %s205, 1
      %p209 = scmp.eq.s32.totalorder %s24, 1
      %p210 = scmp.ne.s32.totalorder %s205, %s207
      %p211 = scmp.eq.s32.totalorder %s24, 0
      %p212 = por %p210, %p211
      %p213 = scmp.ne.s32.totalorder %s205, %s207
      %p214 = scmp.eq.s32.totalorder %s29, 1
      %p215 = por %p213, %p214
      %p216 = scmp.ne.s32.totalorder %s207, %s208
      %p217 = scmp.eq.s32.totalorder %s29, 0
      %p218 = por %p216, %p217
      %p219 = scmp.ne.s32.totalorder %s207, %s208
      %p220 = scmp.eq.s32.totalorder %s30, 1
      %p221 = por %p219, %p220
      %p223 = scmp.ne.s32.totalorder %s208, %s222
      %p224 = scmp.eq.s32.totalorder %s30, 0
      %p225 = por %p223, %p224
      %s227 = sadd.s32 %s226, 1
      %p230 = scmp.eq.s32.totalorder %s24, 1
      %p231 = scmp.ne.s32.totalorder %s226, %s228
      %p232 = scmp.eq.s32.totalorder %s24, 0
      %p233 = por %p231, %p232
      %p234 = scmp.ne.s32.totalorder %s226, %s228
      %p235 = scmp.eq.s32.totalorder %s29, 1
      %p236 = por %p234, %p235
      %p237 = scmp.ne.s32.totalorder %s228, %s229
      %p238 = scmp.eq.s32.totalorder %s29, 0
      %p239 = por %p237, %p238
      %p240 = scmp.ne.s32.totalorder %s228, %s229
      %p241 = scmp.eq.s32.totalorder %s30, 1
      %p242 = por %p240, %p241
      %p244 = scmp.ne.s32.totalorder %s229, %s243
      %p245 = scmp.eq.s32.totalorder %s30, 0
      %p246 = por %p244, %p245
      %s248 = sadd.s32 %s247, 1
      %p251 = scmp.eq.s32.totalorder %s24, 1
      %p252 = scmp.ne.s32.totalorder %s247, %s249
      %p253 = scmp.eq.s32.totalorder %s24, 0
      %p254 = por %p252, %p253
      %p255 = scmp.ne.s32.totalorder %s247, %s249
      %p256 = scmp.eq.s32.totalorder %s29, 1
      %p257 = por %p255, %p256
      %p258 = scmp.ne.s32.totalorder %s249, %s250
      %p259 = scmp.eq.s32.totalorder %s29, 0
      %p260 = por %p258, %p259
      %p261 = scmp.ne.s32.totalorder %s249, %s250
      %p262 = scmp.eq.s32.totalorder %s30, 1
      %p263 = por %p261, %p262
      %p265 = scmp.ne.s32.totalorder %s250, %s264
      %p266 = scmp.eq.s32.totalorder %s30, 0
      %p267 = por %p265, %p266
      %s269 = sadd.s32 %s268, 1
      %p272 = scmp.eq.s32.totalorder %s24, 1
      %p273 = scmp.ne.s32.totalorder %s268, %s270
      %p274 = scmp.eq.s32.totalorder %s24, 0
      %p275 = por %p273, %p274
      %p276 = scmp.ne.s32.totalorder %s268, %s270
      %p277 = scmp.eq.s32.totalorder %s29, 1
      %p278 = por %p276, %p277
      %p279 = scmp.ne.s32.totalorder %s270, %s271
      %p280 = scmp.eq.s32.totalorder %s29, 0
      %p281 = por %p279, %p280
      %p282 = scmp.ne.s32.totalorder %s270, %s271
      %p283 = scmp.eq.s32.totalorder %s30, 1
      %p284 = por %p282, %p283
      %p286 = scmp.ne.s32.totalorder %s271, %s285
      %p287 = scmp.eq.s32.totalorder %s30, 0
      %p288 = por %p286, %p287
      %s290 = sadd.s32 %s289, 1
      %p293 = scmp.eq.s32.totalorder %s24, 1
      %p294 = scmp.ne.s32.totalorder %s289, %s291
      %p295 = scmp.eq.s32.totalorder %s24, 0
      %p296 = por %p294, %p295
      %p297 = scmp.ne.s32.totalorder %s289, %s291
      %p298 = scmp.eq.s32.totalorder %s29, 1
      %p299 = por %p297, %p298
      %p300 = scmp.ne.s32.totalorder %s291, %s292
      %p301 = scmp.eq.s32.totalorder %s29, 0
      %p302 = por %p300, %p301
      %p303 = scmp.ne.s32.totalorder %s291, %s292
      %p304 = scmp.eq.s32.totalorder %s30, 1
      %p305 = por %p303, %p304
      %p307 = scmp.ne.s32.totalorder %s292, %s306
      %p308 = scmp.eq.s32.totalorder %s30, 0
      %p309 = por %p307, %p308
      %s311 = sadd.s32 %s310, 1
      %p314 = scmp.eq.s32.totalorder %s24, 1
      %p315 = scmp.ne.s32.totalorder %s310, %s312
      %p316 = scmp.eq.s32.totalorder %s24, 0
      %p317 = por %p315, %p316
      %p318 = scmp.ne.s32.totalorder %s310, %s312
      %p319 = scmp.eq.s32.totalorder %s29, 1
      %p320 = por %p318, %p319
      %p321 = scmp.ne.s32.totalorder %s312, %s313
      %p322 = scmp.eq.s32.totalorder %s29, 0
      %p323 = por %p321, %p322
      %p324 = scmp.ne.s32.totalorder %s312, %s313
      %p325 = scmp.eq.s32.totalorder %s30, 1
      %p326 = por %p324, %p325
      %p328 = scmp.ne.s32.totalorder %s313, %s327
      %p329 = scmp.eq.s32.totalorder %s30, 0
      %p330 = por %p328, %p329
      %s332 = sadd.s32 %s331, 1
      %p335 = scmp.eq.s32.totalorder %s24, 1
      %p336 = scmp.ne.s32.totalorder %s331, %s333
      %p337 = scmp.eq.s32.totalorder %s24, 0
      %p338 = por %p336, %p337
      %p339 = scmp.ne.s32.totalorder %s331, %s333
      %p340 = scmp.eq.s32.totalorder %s29, 1
      %p341 = por %p339, %p340
      %p342 = scmp.ne.s32.totalorder %s333, %s334
      %p343 = scmp.eq.s32.totalorder %s29, 0
      %p344 = por %p342, %p343
      %p345 = scmp.ne.s32.totalorder %s333, %s334
      %p346 = scmp.eq.s32.totalorder %s30, 1
      %p347 = por %p345, %p346
      %p349 = scmp.ne.s32.totalorder %s334, %s348
      %p350 = scmp.eq.s32.totalorder %s30, 0
      %p351 = por %p349, %p350
      %s352 = ssub.s32 %s24, %s31
      %p353 = scmp.eq.s32.totalorder %s352, 0
      %s355 = sadd.s32 %s354, 1
      %s356 = scalar_select %p353, %s354, %s355
      %p359 = pneg %p353
      %p360 = scmp.eq.s32.totalorder %s24, 1
      %p361 = por %p359, %p360
      %p362 = scmp.ne.s32.totalorder %s354, %s357
      %p363 = scmp.eq.s32.totalorder %s24, 0
      %p364 = por %p362, %p363
      %p365 = scmp.ne.s32.totalorder %s354, %s357
      %p366 = scmp.eq.s32.totalorder %s29, 1
      %p367 = por %p365, %p366
      %p368 = scmp.ne.s32.totalorder %s357, %s358
      %p369 = scmp.eq.s32.totalorder %s29, 0
      %p370 = por %p368, %p369
      %p371 = scmp.ne.s32.totalorder %s357, %s358
      %p372 = scmp.eq.s32.totalorder %s30, 1
      %p373 = por %p371, %p372
      %p375 = scmp.ne.s32.totalorder %s358, %s374
      %p376 = scmp.eq.s32.totalorder %s30, 0
      %p377 = por %p375, %p376
      %p378 = scmp.le.s32.totalorder 1, %s24
      %p379 = scmp.lt.s32.totalorder %s24, 3
      %p380 = pnand %p378, %p379
      %p381 = pneg %p380
      // Predicated region
      $region9: #{cnn_forward.1} parent=5 // pred_check
        _
      $region10: #{cnn_forward.1} parent=5 // pred_check_branch
        %383 = sbr.rel (%p380) target = $region12
      $region11: #{cnn_forward.1} parent=5 // pred_region
        %s384 = ssub.s32 %s24, 1
        // Predicated region
        $region13: #{cnn_forward.1} parent=11 // pred_check
          %p385 = pneg %p71
        $region14: #{cnn_forward.1} parent=11 // pred_check_branch
          %387 = sbr.rel (%p385) target = $region16
        $region15: #{cnn_forward.1} parent=11 // pred_region
          _
        $region16: #{cnn_forward.1} parent=11 // pred_fallthru
          _
        // Predicated region
        $region17: #{cnn_forward.1} parent=11 // pred_check
          %p388 = pneg %p92
        $region18: #{cnn_forward.1} parent=11 // pred_check_branch
          %390 = sbr.rel (%p388) target = $region20
        $region19: #{cnn_forward.1} parent=11 // pred_region
          _
        $region20: #{cnn_forward.1} parent=11 // pred_fallthru
          _
        // Predicated region
        $region21: #{cnn_forward.1} parent=11 // pred_check
          %p391 = pneg %p113
        $region22: #{cnn_forward.1} parent=11 // pred_check_branch
          %393 = sbr.rel (%p391) target = $region24
        $region23: #{cnn_forward.1} parent=11 // pred_region
          _
        $region24: #{cnn_forward.1} parent=11 // pred_fallthru
          _
        // Predicated region
        $region25: #{cnn_forward.1} parent=11 // pred_check
          %p394 = pneg %p134
        $region26: #{cnn_forward.1} parent=11 // pred_check_branch
          %396 = sbr.rel (%p394) target = $region28
        $region27: #{cnn_forward.1} parent=11 // pred_region
          _
        $region28: #{cnn_forward.1} parent=11 // pred_fallthru
          _
        // Predicated region
        $region29: #{cnn_forward.1} parent=11 // pred_check
          %p397 = pneg %p155
        $region30: #{cnn_forward.1} parent=11 // pred_check_branch
          %399 = sbr.rel (%p397) target = $region32
        $region31: #{cnn_forward.1} parent=11 // pred_region
          _
        $region32: #{cnn_forward.1} parent=11 // pred_fallthru
          _
        // Predicated region
        $region33: #{cnn_forward.1} parent=11 // pred_check
          %p400 = pneg %p176
        $region34: #{cnn_forward.1} parent=11 // pred_check_branch
          %402 = sbr.rel (%p400) target = $region36
        $region35: #{cnn_forward.1} parent=11 // pred_region
          _
        $region36: #{cnn_forward.1} parent=11 // pred_fallthru
          _
        // Predicated region
        $region37: #{cnn_forward.1} parent=11 // pred_check
          %p403 = pneg %p197
        $region38: #{cnn_forward.1} parent=11 // pred_check_branch
          %405 = sbr.rel (%p403) target = $region40
        $region39: #{cnn_forward.1} parent=11 // pred_region
          _
        $region40: #{cnn_forward.1} parent=11 // pred_fallthru
          _
        // Predicated region
        $region41: #{cnn_forward.1} parent=11 // pred_check
          %p406 = pneg %p218
        $region42: #{cnn_forward.1} parent=11 // pred_check_branch
          %408 = sbr.rel (%p406) target = $region44
        $region43: #{cnn_forward.1} parent=11 // pred_region
          _
        $region44: #{cnn_forward.1} parent=11 // pred_fallthru
          _
        // Predicated region
        $region45: #{cnn_forward.1} parent=11 // pred_check
          %p409 = pneg %p239
        $region46: #{cnn_forward.1} parent=11 // pred_check_branch
          %411 = sbr.rel (%p409) target = $region48
        $region47: #{cnn_forward.1} parent=11 // pred_region
          _
        $region48: #{cnn_forward.1} parent=11 // pred_fallthru
          _
        // Predicated region
        $region49: #{cnn_forward.1} parent=11 // pred_check
          %p412 = pneg %p260
        $region50: #{cnn_forward.1} parent=11 // pred_check_branch
          %414 = sbr.rel (%p412) target = $region52
        $region51: #{cnn_forward.1} parent=11 // pred_region
          _
        $region52: #{cnn_forward.1} parent=11 // pred_fallthru
          _
        // Predicated region
        $region53: #{cnn_forward.1} parent=11 // pred_check
          %p415 = pneg %p281
        $region54: #{cnn_forward.1} parent=11 // pred_check_branch
          %417 = sbr.rel (%p415) target = $region56
        $region55: #{cnn_forward.1} parent=11 // pred_region
          _
        $region56: #{cnn_forward.1} parent=11 // pred_fallthru
          _
        // Predicated region
        $region57: #{cnn_forward.1} parent=11 // pred_check
          %p418 = pneg %p302
        $region58: #{cnn_forward.1} parent=11 // pred_check_branch
          %420 = sbr.rel (%p418) target = $region60
        $region59: #{cnn_forward.1} parent=11 // pred_region
          _
        $region60: #{cnn_forward.1} parent=11 // pred_fallthru
          _
        // Predicated region
        $region61: #{cnn_forward.1} parent=11 // pred_check
          %p421 = pneg %p323
        $region62: #{cnn_forward.1} parent=11 // pred_check_branch
          %423 = sbr.rel (%p421) target = $region64
        $region63: #{cnn_forward.1} parent=11 // pred_region
          _
        $region64: #{cnn_forward.1} parent=11 // pred_fallthru
          _
        // Predicated region
        $region65: #{cnn_forward.1} parent=11 // pred_check
          %p424 = pneg %p344
        $region66: #{cnn_forward.1} parent=11 // pred_check_branch
          %426 = sbr.rel (%p424) target = $region68
        $region67: #{cnn_forward.1} parent=11 // pred_region
          _
        $region68: #{cnn_forward.1} parent=11 // pred_fallthru
          _
      $region12: #{cnn_forward.1} parent=5 // pred_fallthru
        _
      %p427 = scmp.lt.s32.totalorder %s24, 2
      // Predicated region
      $region69: #{cnn_forward.1} parent=5 // pred_check
        %p428 = pneg %p427
      $region70: #{cnn_forward.1} parent=5 // pred_check_branch
        %430 = sbr.rel (%p428) target = $region72
      $region71: #{cnn_forward.1} parent=5 // pred_region
        // Predicated region
        $region73: #{cnn_forward.1} parent=71 // pred_check
          %p431 = pneg %p44
        $region74: #{cnn_forward.1} parent=71 // pred_check_branch
          %433 = sbr.rel (%p431) target = $region76
        $region75: #{cnn_forward.1} parent=71 // pred_region
          %s434 = smul.u32 28, %s24
          %p435 = scmp.lt.s32.totalorder %s434, 55
          %s436 = scalar_select %p435, %s434, 55
          %s437 = smul.addr %s436, 8
          %s438 = scalar_lea.vmem %s0, %s437
          %s439 = smul.u32 28, %s24
        $region76: #{cnn_forward.1} parent=71 // pred_fallthru
          _
      $region72: #{cnn_forward.1} parent=5 // pred_fallthru
        _
      %p440 = scmp.le.s32.totalorder 1, %s24
      %p441 = scmp.lt.s32.totalorder %s24, 3
      %p442 = pnand %p440, %p441
      %p443 = pneg %p442
      // Predicated region
      $region77: #{cnn_forward.1} parent=5 // pred_check
        _
      $region78: #{cnn_forward.1} parent=5 // pred_check_branch
        %445 = sbr.rel (%p442) target = $region80
      $region79: #{cnn_forward.1} parent=5 // pred_region
        %s446 = ssub.s32 %s24, 1
        %s447 = smul.u32 28, %s29
        %p448 = scmp.lt.s32.totalorder %s447, 55
        %s449 = scalar_select %p448, %s447, 55
        %s450 = smul.addr %s449, 8
        %s451 = scalar_lea.vmem %s0, %s450
        %p452 = pneg %p50
        %p453 = pneg %p47
        %p454 = pneg %p71
        %p455 = pneg %p68
        %p456 = pneg %p92
        %p457 = pneg %p89
        %p458 = pneg %p113
        %p459 = pneg %p110
        %p460 = pneg %p134
        %p461 = pneg %p131
        %p462 = pneg %p155
        %p463 = pneg %p152
        %p464 = pneg %p176
        %p465 = pneg %p173
        %p466 = pneg %p197
        %p467 = pneg %p194
        %p468 = pneg %p218
        %p469 = pneg %p215
        %p470 = pneg %p239
        %p471 = pneg %p236
        %p472 = pneg %p260
        %p473 = pneg %p257
        %p474 = pneg %p281
        %p475 = pneg %p278
        %p476 = pneg %p302
        %p477 = pneg %p299
        %p478 = pneg %p323
        %p479 = pneg %p320
        %p480 = pneg %p344
        %p481 = pneg %p341
        %p482 = pneg %p370
        %p483 = pneg %p367
        %s484 = sand.u32 %s357, 1
        %s485 = scalar_lea.sflag [#allocation3], %s484
        %s486 = sand.u32 %s357, 1
        %s487 = smul.addr %s486, 8
        %s488 = scalar_lea.vmem [#allocation2], %s487
        %s489 = smul.u32 28, %s29
        %p490 = scmp.lt.s32.totalorder %s489, 55
        %s491 = scalar_select %p490, %s489, 55
        %s492 = smul.addr %s491, 8
        %s493 = scalar_lea.vmem %s0, %s492
        %s494 = smul.u32 28, %s29
        %v495 = vld [vmem:[%s493] sm:$0xff]
        %v496 = vld [vmem:[%s493 + $0x8] sm:$0xff]
        %v497 = vld [vmem:[%s493 + $0x10] sm:$0xff]
        %v498 = vld [vmem:[%s493 + $0x18] sm:$0xff]
        %v499 = vld [vmem:[%s493 + $0x20] sm:$0xff]
        %v500 = vld [vmem:[%s493 + $0x28] sm:$0xff]
        %v501 = vld [vmem:[%s493 + $0x30] sm:$0xff]
        %v502 = vld [vmem:[%s493 + $0x38] sm:$0xff]
        %v503 = vld [vmem:[%s493 + $0x40] sm:$0xff]
        %v504 = vld [vmem:[%s493 + $0x48] sm:$0xff]
        %v505 = vld [vmem:[%s493 + $0x50] sm:$0xff]
        %v506 = vld [vmem:[%s493 + $0x58] sm:$0xff]
        %v507 = vld [vmem:[%s493 + $0x60] sm:$0xff]
        %v508 = vld [vmem:[%s493 + $0x68] sm:$0xff]
        %v509 = vld [vmem:[%s493 + $0x70] sm:$0xff]
        %v510 = vld [vmem:[%s493 + $0x78] sm:$0xff]
        %v511 = vld [vmem:[%s493 + $0x80] sm:$0xff]
        %v512 = vld [vmem:[%s493 + $0x88] sm:$0xff]
        %v513 = vld [vmem:[%s493 + $0x90] sm:$0xff]
        %v514 = vld [vmem:[%s493 + $0x98] sm:$0xff]
        %v515 = vld [vmem:[%s493 + $0xa0] sm:$0xff]
        %v516 = vld [vmem:[%s493 + $0xa8] sm:$0xff]
        %v517 = vld [vmem:[%s493 + $0xb0] sm:$0xff]
        %v518 = vld [vmem:[%s493 + $0xb8] sm:$0xff]
        %v519 = vld [vmem:[%s493 + $0xc0] sm:$0xff]
        %v520 = vld [vmem:[%s493 + $0xc8] sm:$0xff]
        %v521 = vld [vmem:[%s493 + $0xd0] sm:$0xff]
        %v522 = vld [vmem:[%s493 + $0xd8] sm:$0xff]
        %v523 = vld [vmem:[%s1] sm:$0xff]
        %v524 = vld [vmem:[%s1 + $0x8] sm:$0xff]
        %v525 = vld [vmem:[%s1 + $0x10] sm:$0xff]
        %v526 = vld [vmem:[%s1 + $0x18] sm:$0xff]
        %v527 = vld [vmem:[%s1 + $0x20] sm:$0xff]
        %v528 = vld [vmem:[%s1 + $0x28] sm:$0xff]
        %v529 = vld [vmem:[%s1 + $0x30] sm:$0xff]
        %v530 = vld [vmem:[%s1 + $0x38] sm:$0xff]
        %v531 = vld [vmem:[%s1 + $0x40] sm:$0xff]
        %v532 = vld [vmem:[%s1 + $0x48] sm:$0xff]
        %v533 = vld [vmem:[%s1 + $0x50] sm:$0xff]
        %v534 = vld [vmem:[%s1 + $0x58] sm:$0xff]
        %v535 = vld [vmem:[%s1 + $0x60] sm:$0xff]
        %v536 = vld [vmem:[%s1 + $0x68] sm:$0xff]
        %v537 = vld [vmem:[%s1 + $0x70] sm:$0xff]
        %v538 = vld [vmem:[%s1 + $0x78] sm:$0xff]
        %v539 = vld [vmem:[%s1 + $0x80] sm:$0xff]
        %v540 = vld [vmem:[%s1 + $0x88] sm:$0xff]
        %v541 = vld [vmem:[%s1 + $0x90] sm:$0xff]
        %v542 = vld [vmem:[%s1 + $0x98] sm:$0xff]
        %v543 = vld [vmem:[%s1 + $0xa0] sm:$0xff]
        %v544 = vld [vmem:[%s1 + $0xa8] sm:$0xff]
        %v545 = vld [vmem:[%s1 + $0xb0] sm:$0xff]
        %v546 = vld [vmem:[%s1 + $0xb8] sm:$0xff]
        %v547 = vld [vmem:[%s1 + $0xc0] sm:$0xff]
        %v548 = vld [vmem:[%s1 + $0xc8] sm:$0xff]
        %v549 = vld [vmem:[%s1 + $0xd0] sm:$0xff]
        %v550 = vld [vmem:[%s1 + $0xd8] sm:$0xff]
        %v551 = vld [vmem:[%s1 + $0xe0] sm:$0xff]
        %v552 = vld [vmem:[%s1 + $0xe8] sm:$0xff]
        %v553 = vld [vmem:[%s1 + $0xf0] sm:$0xff]
        %v554 = vld [vmem:[%s1 + $0xf8] sm:$0xff]
        %v555 = vld [vmem:[%s1 + $0x100] sm:$0xff]
        %v556 = vld [vmem:[%s1 + $0x108] sm:$0xff]
        %v557 = vld [vmem:[%s1 + $0x110] sm:$0xff]
        %v558 = vld [vmem:[%s1 + $0x118] sm:$0xff]
        %v559 = vld [vmem:[%s1 + $0x120] sm:$0xff]
        %v560 = vld [vmem:[%s1 + $0x128] sm:$0xff]
        %v561 = vld [vmem:[%s1 + $0x130] sm:$0xff]
        %v562 = vld [vmem:[%s1 + $0x138] sm:$0xff]
        %v563 = vld [vmem:[%s1 + $0x140] sm:$0xff]
        %v564 = vld [vmem:[%s1 + $0x148] sm:$0xff]
        %v565 = vld [vmem:[%s1 + $0x150] sm:$0xff]
        %v566 = vld [vmem:[%s1 + $0x158] sm:$0xff]
        %v567 = vld [vmem:[%s1 + $0x160] sm:$0xff]
        %v568 = vld [vmem:[%s1 + $0x168] sm:$0xff]
        %v569 = vld [vmem:[%s1 + $0x170] sm:$0xff]
        %v570 = vld [vmem:[%s1 + $0x178] sm:$0xff]
        %v571 = vld [vmem:[%s1 + $0x180] sm:$0xff]
        %v572 = vld [vmem:[%s1 + $0x188] sm:$0xff]
        %v573 = vld [vmem:[%s1 + $0x190] sm:$0xff]
        %v574 = vld [vmem:[%s1 + $0x198] sm:$0xff]
        %v575 = vld [vmem:[%s1 + $0x1a0] sm:$0xff]
        %v576 = vld [vmem:[%s1 + $0x1a8] sm:$0xff]
        %v577 = vld [vmem:[%s1 + $0x1b0] sm:$0xff]
        %v578 = vld [vmem:[%s1 + $0x1b8] sm:$0xff]
        %v579 = vld [vmem:[%s1 + $0x1c0] sm:$0xff]
        %v580 = vld [vmem:[%s1 + $0x1c8] sm:$0xff]
        %vm581 = vcmask 785408
        %v583 = vsel %vm581, %v524, 0
        %v586 = vsel %vm581, %v526, 0
        %v589 = vsel %vm581, %v528, 0
        %v592 = vsel %vm581, %v530, 0
        %v595 = vsel %vm581, %v532, 0
        %v598 = vsel %vm581, %v534, 0
        %v601 = vsel %vm581, %v536, 0
        %v604 = vsel %vm581, %v538, 0
        %v607 = vsel %vm581, %v540, 0
        %v610 = vsel %vm581, %v542, 0
        %v613 = vsel %vm581, %v544, 0
        %v616 = vsel %vm581, %v546, 0
        %v619 = vsel %vm581, %v548, 0
        %v622 = vsel %vm581, %v550, 0
        %v625 = vsel %vm581, %v552, 0
        %v628 = vsel %vm581, %v554, 0
        %v631 = vsel %vm581, %v556, 0
        %v634 = vsel %vm581, %v558, 0
        %v637 = vsel %vm581, %v560, 0
        %v640 = vsel %vm581, %v562, 0
        %v643 = vsel %vm581, %v564, 0
        %v646 = vsel %vm581, %v566, 0
        %v649 = vsel %vm581, %v568, 0
        %v652 = vsel %vm581, %v570, 0
        %v655 = vsel %vm581, %v572, 0
        %v658 = vsel %vm581, %v574, 0
        %v661 = vsel %vm581, %v576, 0
        %v664 = vsel %vm581, %v578, 0
        %v667 = vsel %vm581, %v580, 0
        %669 = vmatprep.subr.mxu0 0.0
        %670 = vmatpush1.msra.mxu0 %v495
        %671 = vmatprep.subr.mxu0 0.0
        %672 = vmatpush1.msra.mxu0 %v496
        %673 = vmatprep.subr.mxu0 0.0
        %674 = vmatpush1.msra.mxu0 %v497
        %675 = vmatprep.subr.mxu0 0.0
        %676 = vmatpush1.msra.mxu0 %v498
        %677 = vmatprep.subr.mxu0 0.0
        %678 = vmatpush1.msra.mxu0 %v499
        %679 = vmatprep.subr.mxu0 0.0
        %680 = vmatpush1.msra.mxu0 %v500
        %681 = vmatprep.subr.mxu0 0.0
        %682 = vmatpush1.msra.mxu0 %v501
        %683 = vmatprep.subr.mxu0 0.0
        %684 = vmatpush1.msra.mxu0 %v502
        %685 = vmatprep.subr.mxu0 0.0
        %686 = vmatpush1.msra.mxu0 %v503
        %687 = vmatprep.subr.mxu0 0.0
        %688 = vmatpush1.msra.mxu0 %v504
        %689 = vmatprep.subr.mxu0 0.0
        %690 = vmatpush1.msra.mxu0 %v505
        %691 = vmatprep.subr.mxu0 0.0
        %692 = vmatpush1.msra.mxu0 %v506
        %693 = vmatprep.subr.mxu0 0.0
        %694 = vmatpush1.msra.mxu0 %v507
        %695 = vmatprep.subr.mxu0 0.0
        %696 = vmatpush1.msra.mxu0 %v508
        %697 = vmatprep.subr.mxu0 0.0
        %698 = vmatpush1.msra.mxu0 %v509
        %699 = vmatprep.subr.mxu0 0.0
        %700 = vmatpush1.msra.mxu0 %v510
        %701 = vmatprep.subr.mxu0 0.0
        %702 = vmatpush1.msra.mxu0 %v511
        %703 = vmatprep.subr.mxu0 0.0
        %704 = vmatpush1.msra.mxu0 %v512
        %705 = vmatprep.subr.mxu0 0.0
        %706 = vmatpush1.msra.mxu0 %v513
        %707 = vmatprep.subr.mxu0 0.0
        %708 = vmatpush1.msra.mxu0 %v514
        %709 = vmatprep.subr.mxu0 0.0
        %710 = vmatpush1.msra.mxu0 %v515
        %711 = vmatprep.subr.mxu0 0.0
        %712 = vmatpush1.msra.mxu0 %v516
        %713 = vmatprep.subr.mxu0 0.0
        %714 = vmatpush1.msra.mxu0 %v517
        %715 = vmatprep.subr.mxu0 0.0
        %716 = vmatpush1.msra.mxu0 %v518
        %717 = vmatprep.subr.mxu0 0.0
        %718 = vmatpush1.msra.mxu0 %v519
        %719 = vmatprep.subr.mxu0 0.0
        %720 = vmatpush1.msra.mxu0 %v520
        %721 = vmatprep.subr.mxu0 0.0
        %722 = vmatpush1.msra.mxu0 %v521
        %723 = vmatprep.subr.mxu0 0.0
        %724 = vmatpush1.msra.mxu0 %v522
        %725 = vmatprep.subr.mxu0 0.0
        %726 = vmatpush1.msra.mxu0 0.0
        %727 = vmatprep.subr.mxu0 0.0
        %728 = vmatpush1.msra.mxu0 0.0
        %729 = vmatprep.subr.mxu0 0.0
        %730 = vmatpush1.msra.mxu0 0.0
        %731 = vmatprep.subr.mxu0 0.0
        %732 = vmatpush1.msra.mxu0 0.0
        %733 = vmatprep.mubr.f32.mxu0 %v583
        %734 = vmatmul.mubr.f32.gmra.mrb[0].mxu0 %v523
        %v735 = vpop.f32.mrb[0].mxu0
        %v736 = vadd.f32 0.0, %v735
        %v737 = vpop.f32.mrb[0].mxu0
        %738 = vmatprep.mubr.f32.mxu0 %v586
        %739 = vmatmul.mubr.f32.gmra.mrb[0].mxu0 %v525
        %v740 = vpop.f32.mrb[0].mxu0
        %v741 = vadd.f32 0.0, %v740
        %v742 = vpop.f32.mrb[0].mxu0
        %743 = vmatprep.mubr.f32.mxu0 %v589
        %744 = vmatmul.mubr.f32.gmra.mrb[0].mxu0 %v527
        %v745 = vpop.f32.mrb[0].mxu0
        %v746 = vadd.f32 0.0, %v745
        %v747 = vpop.f32.mrb[0].mxu0
        %748 = vmatprep.mubr.f32.mxu0 %v592
        %749 = vmatmul.mubr.f32.gmra.mrb[0].mxu0 %v529
        %v750 = vpop.f32.mrb[0].mxu0
        %v751 = vadd.f32 0.0, %v750
        %v752 = vpop.f32.mrb[0].mxu0
        %753 = vmatprep.mubr.f32.mxu0 %v595
        %754 = vmatmul.mubr.f32.gmra.mrb[0].mxu0 %v531
        %v755 = vpop.f32.mrb[0].mxu0
        %v756 = vadd.f32 0.0, %v755
        %v757 = vpop.f32.mrb[0].mxu0
        %758 = vmatprep.mubr.f32.mxu0 %v598
        %759 = vmatmul.mubr.f32.gmra.mrb[0].mxu0 %v533
        %v760 = vpop.f32.mrb[0].mxu0
        %v761 = vadd.f32 0.0, %v760
        %v762 = vpop.f32.mrb[0].mxu0
        %763 = vmatprep.mubr.f32.mxu0 %v601
        %764 = vmatmul.mubr.f32.gmra.mrb[0].mxu0 %v535
        %v765 = vpop.f32.mrb[0].mxu0
        %v766 = vadd.f32 0.0, %v765
        %v767 = vpop.f32.mrb[0].mxu0
        %768 = vmatprep.mubr.f32.mxu0 %v604
        %769 = vmatmul.mubr.f32.gmra.mrb[0].mxu0 %v537
        %v770 = vpop.f32.mrb[0].mxu0
        %v771 = vadd.f32 0.0, %v770
        %v772 = vpop.f32.mrb[0].mxu0
        %773 = vmatprep.mubr.f32.mxu0 %v607
        %774 = vmatmul.mubr.f32.gmra.mrb[0].mxu0 %v539
        %v775 = vpop.f32.mrb[0].mxu0
        %v776 = vadd.f32 0.0, %v775
        %v777 = vpop.f32.mrb[0].mxu0
        %778 = vmatprep.mubr.f32.mxu0 %v610
        %779 = vmatmul.mubr.f32.gmra.mrb[0].mxu0 %v541
        %v780 = vpop.f32.mrb[0].mxu0
        %v781 = vadd.f32 0.0, %v780
        %v782 = vpop.f32.mrb[0].mxu0
        %783 = vmatprep.mubr.f32.mxu0 %v613
        %784 = vmatmul.mubr.f32.gmra.mrb[0].mxu0 %v543
        %v785 = vpop.f32.mrb[0].mxu0
        %v786 = vadd.f32 0.0, %v785
        %v787 = vpop.f32.mrb[0].mxu0
        %788 = vmatprep.mubr.f32.mxu0 %v616
        %789 = vmatmul.mubr.f32.gmra.mrb[0].mxu0 %v545
        %v790 = vpop.f32.mrb[0].mxu0
        %v791 = vadd.f32 0.0, %v790
        %v792 = vpop.f32.mrb[0].mxu0
        %793 = vmatprep.mubr.f32.mxu0 %v619
        %794 = vmatmul.mubr.f32.gmra.mrb[0].mxu0 %v547
        %v795 = vpop.f32.mrb[0].mxu0
        %v796 = vadd.f32 0.0, %v795
        %v797 = vpop.f32.mrb[0].mxu0
        %798 = vmatprep.mubr.f32.mxu0 %v622
        %799 = vmatmul.mubr.f32.gmra.mrb[0].mxu0 %v549
        %v800 = vpop.f32.mrb[0].mxu0
        %v801 = vadd.f32 0.0, %v800
        %v802 = vpop.f32.mrb[0].mxu0
        %803 = vmatprep.mubr.f32.mxu0 %v625
        %804 = vmatmul.mubr.f32.gmra.mrb[0].mxu0 %v551
        %v805 = vpop.f32.mrb[0].mxu0
        %v806 = vadd.f32 0.0, %v805
        %v807 = vpop.f32.mrb[0].mxu0
        %808 = vmatprep.mubr.f32.mxu0 %v628
        %809 = vmatmul.mubr.f32.gmra.mrb[0].mxu0 %v553
        %v810 = vpop.f32.mrb[0].mxu0
        %v811 = vadd.f32 0.0, %v810
        %v812 = vpop.f32.mrb[0].mxu0
        %813 = vmatprep.mubr.f32.mxu0 %v631
        %814 = vmatmul.mubr.f32.gmra.mrb[0].mxu0 %v555
        %v815 = vpop.f32.mrb[0].mxu0
        %v816 = vadd.f32 0.0, %v815
        %v817 = vpop.f32.mrb[0].mxu0
        %818 = vmatprep.mubr.f32.mxu0 %v634
        %819 = vmatmul.mubr.f32.gmra.mrb[0].mxu0 %v557
        %v820 = vpop.f32.mrb[0].mxu0
        %v821 = vadd.f32 0.0, %v820
        %v822 = vpop.f32.mrb[0].mxu0
        %823 = vmatprep.mubr.f32.mxu0 %v637
        %824 = vmatmul.mubr.f32.gmra.mrb[0].mxu0 %v559
        %v825 = vpop.f32.mrb[0].mxu0
        %v826 = vadd.f32 0.0, %v825
        %v827 = vpop.f32.mrb[0].mxu0
        %828 = vmatprep.mubr.f32.mxu0 %v640
        %829 = vmatmul.mubr.f32.gmra.mrb[0].mxu0 %v561
        %v830 = vpop.f32.mrb[0].mxu0
        %v831 = vadd.f32 0.0, %v830
        %v832 = vpop.f32.mrb[0].mxu0
        %833 = vmatprep.mubr.f32.mxu0 %v643
        %834 = vmatmul.mubr.f32.gmra.mrb[0].mxu0 %v563
        %v835 = vpop.f32.mrb[0].mxu0
        %v836 = vadd.f32 0.0, %v835
        %v837 = vpop.f32.mrb[0].mxu0
        %838 = vmatprep.mubr.f32.mxu0 %v646
        %839 = vmatmul.mubr.f32.gmra.mrb[0].mxu0 %v565
        %v840 = vpop.f32.mrb[0].mxu0
        %v841 = vadd.f32 0.0, %v840
        %v842 = vpop.f32.mrb[0].mxu0
        %843 = vmatprep.mubr.f32.mxu0 %v649
        %844 = vmatmul.mubr.f32.gmra.mrb[0].mxu0 %v567
        %v845 = vpop.f32.mrb[0].mxu0
        %v846 = vadd.f32 0.0, %v845
        %v847 = vpop.f32.mrb[0].mxu0
        %848 = vmatprep.mubr.f32.mxu0 %v652
        %849 = vmatmul.mubr.f32.gmra.mrb[0].mxu0 %v569
        %v850 = vpop.f32.mrb[0].mxu0
        %v851 = vadd.f32 0.0, %v850
        %v852 = vpop.f32.mrb[0].mxu0
        %853 = vmatprep.mubr.f32.mxu0 %v655
        %854 = vmatmul.mubr.f32.gmra.mrb[0].mxu0 %v571
        %v855 = vpop.f32.mrb[0].mxu0
        %v856 = vadd.f32 0.0, %v855
        %v857 = vpop.f32.mrb[0].mxu0
        %858 = vmatprep.mubr.f32.mxu0 %v658
        %859 = vmatmul.mubr.f32.gmra.mrb[0].mxu0 %v573
        %v860 = vpop.f32.mrb[0].mxu0
        %v861 = vadd.f32 0.0, %v860
        %v862 = vpop.f32.mrb[0].mxu0
        %863 = vmatprep.mubr.f32.mxu0 %v661
        %864 = vmatmul.mubr.f32.gmra.mrb[0].mxu0 %v575
        %v865 = vpop.f32.mrb[0].mxu0
        %v866 = vadd.f32 0.0, %v865
        %v867 = vpop.f32.mrb[0].mxu0
        %868 = vmatprep.mubr.f32.mxu0 %v664
        %869 = vmatmul.mubr.f32.gmra.mrb[0].mxu0 %v577
        %v870 = vpop.f32.mrb[0].mxu0
        %v871 = vadd.f32 0.0, %v870
        %v872 = vpop.f32.mrb[0].mxu0
        %873 = vmatprep.mubr.f32.mxu0 %v667
        %874 = vmatmul.mubr.f32.gmra.mrb[0].mxu0 %v579
        %v875 = vpop.f32.mrb[0].mxu0
        %v876 = vadd.f32 0.0, %v875
        %v877 = vpop.f32.mrb[0].mxu0
        %878 = vdwg.mxu0
        %v879 = vld [vmem:[%s2] sm:$0xff]
        %v880 = vld [vmem:[%s2 + $0x8] sm:$0xff]
        %v881 = vld [vmem:[%s2 + $0x10] sm:$0xff]
        %v882 = vld [vmem:[%s2 + $0x18] sm:$0xff]
        %v883 = vld [vmem:[%s2 + $0x20] sm:$0xff]
        %v884 = vld [vmem:[%s2 + $0x28] sm:$0xff]
        %v885 = vld [vmem:[%s2 + $0x30] sm:$0xf]
        %v886 = vld [vmem:[%s2 + $0x38] sm:$0xf]
        %s887 = scalar_lea.vmem %s1, 464
        %v888 = vld [vmem:[%s887] sm:$0xff]
        %v889 = vld [vmem:[%s887 + $0x8] sm:$0xff]
        %v890 = vld [vmem:[%s887 + $0x10] sm:$0xff]
        %v891 = vld [vmem:[%s887 + $0x18] sm:$0xff]
        %v892 = vld [vmem:[%s887 + $0x20] sm:$0xff]
        %v893 = vld [vmem:[%s887 + $0x28] sm:$0xff]
        %v894 = vld [vmem:[%s887 + $0x30] sm:$0xff]
        %v895 = vld [vmem:[%s887 + $0x38] sm:$0xff]
        %v896 = vld [vmem:[%s887 + $0x40] sm:$0xff]
        %v897 = vld [vmem:[%s887 + $0x48] sm:$0xff]
        %v898 = vld [vmem:[%s887 + $0x50] sm:$0xff]
        %v899 = vld [vmem:[%s887 + $0x58] sm:$0xff]
        %v900 = vld [vmem:[%s887 + $0x60] sm:$0xff]
        %v901 = vld [vmem:[%s887 + $0x68] sm:$0xff]
        %v902 = vld [vmem:[%s887 + $0x70] sm:$0xff]
        %v903 = vld [vmem:[%s887 + $0x78] sm:$0xff]
        %v904 = vld [vmem:[%s887 + $0x80] sm:$0xff]
        %v905 = vld [vmem:[%s887 + $0x88] sm:$0xff]
        %v906 = vld [vmem:[%s887 + $0x90] sm:$0xff]
        %v907 = vld [vmem:[%s887 + $0x98] sm:$0xff]
        %v908 = vld [vmem:[%s887 + $0xa0] sm:$0xff]
        %v909 = vld [vmem:[%s887 + $0xa8] sm:$0xff]
        %v910 = vld [vmem:[%s887 + $0xb0] sm:$0xff]
        %v911 = vld [vmem:[%s887 + $0xb8] sm:$0xff]
        %v912 = vld [vmem:[%s887 + $0xc0] sm:$0xff]
        %v913 = vld [vmem:[%s887 + $0xc8] sm:$0xff]
        %v914 = vld [vmem:[%s887 + $0xd0] sm:$0xff]
        %v915 = vld [vmem:[%s887 + $0xd8] sm:$0xff]
        %v916 = vld [vmem:[%s887 + $0xe0] sm:$0xff]
        %v917 = vld [vmem:[%s887 + $0xe8] sm:$0xff]
        %v918 = vld [vmem:[%s887 + $0xf0] sm:$0xff]
        %v919 = vld [vmem:[%s887 + $0xf8] sm:$0xff]
        %v920 = vld [vmem:[%s887 + $0x100] sm:$0xff]
        %v921 = vld [vmem:[%s887 + $0x108] sm:$0xff]
        %v922 = vld [vmem:[%s887 + $0x110] sm:$0xff]
        %v923 = vld [vmem:[%s887 + $0x118] sm:$0xff]
        %v924 = vld [vmem:[%s887 + $0x120] sm:$0xff]
        %v925 = vld [vmem:[%s887 + $0x128] sm:$0xff]
        %v926 = vld [vmem:[%s887 + $0x130] sm:$0xff]
        %v927 = vld [vmem:[%s887 + $0x138] sm:$0xff]
        %v928 = vld [vmem:[%s887 + $0x140] sm:$0xff]
        %v929 = vld [vmem:[%s887 + $0x148] sm:$0xff]
        %v930 = vld [vmem:[%s887 + $0x150] sm:$0xff]
        %v931 = vld [vmem:[%s887 + $0x158] sm:$0xff]
        %v932 = vld [vmem:[%s887 + $0x160] sm:$0xff]
        %v933 = vld [vmem:[%s887 + $0x168] sm:$0xff]
        %v934 = vld [vmem:[%s887 + $0x170] sm:$0xff]
        %v935 = vld [vmem:[%s887 + $0x178] sm:$0xff]
        %v936 = vld [vmem:[%s887 + $0x180] sm:$0xff]
        %v937 = vld [vmem:[%s887 + $0x188] sm:$0xff]
        %v938 = vld [vmem:[%s887 + $0x190] sm:$0xff]
        %v939 = vld [vmem:[%s887 + $0x198] sm:$0xff]
        %v940 = vld [vmem:[%s887 + $0x1a0] sm:$0xff]
        %v941 = vld [vmem:[%s887 + $0x1a8] sm:$0xff]
        %v942 = vld [vmem:[%s887 + $0x1b0] sm:$0xff]
        %v943 = vld [vmem:[%s887 + $0x1b8] sm:$0xff]
        %v944 = vld [vmem:[%s887 + $0x1c0] sm:$0xff]
        %v945 = vld [vmem:[%s887 + $0x1c8] sm:$0xff]
        %v947 = vsel %vm581, %v889, 0
        %v950 = vsel %vm581, %v891, 0
        %v953 = vsel %vm581, %v893, 0
        %v956 = vsel %vm581, %v895, 0
        %v959 = vsel %vm581, %v897, 0
        %v962 = vsel %vm581, %v899, 0
        %v965 = vsel %vm581, %v901, 0
        %v968 = vsel %vm581, %v903, 0
        %v971 = vsel %vm581, %v905, 0
        %v974 = vsel %vm581, %v907, 0
        %v977 = vsel %vm581, %v909, 0
        %v980 = vsel %vm581, %v911, 0
        %v983 = vsel %vm581, %v913, 0
        %v986 = vsel %vm581, %v915, 0
        %v989 = vsel %vm581, %v917, 0
        %v992 = vsel %vm581, %v919, 0
        %v995 = vsel %vm581, %v921, 0
        %v998 = vsel %vm581, %v923, 0
        %v1001 = vsel %vm581, %v925, 0
        %v1004 = vsel %vm581, %v927, 0
        %v1007 = vsel %vm581, %v929, 0
        %v1010 = vsel %vm581, %v931, 0
        %v1013 = vsel %vm581, %v933, 0
        %v1016 = vsel %vm581, %v935, 0
        %v1019 = vsel %vm581, %v937, 0
        %v1022 = vsel %vm581, %v939, 0
        %v1025 = vsel %vm581, %v941, 0
        %v1028 = vsel %vm581, %v943, 0
        %v1031 = vsel %vm581, %v945, 0
        %1033 = vmatprep.subr.mxu0 0.0
        %1034 = vmatpush1.msra.mxu0 %v495
        %1035 = vmatprep.subr.mxu0 0.0
        %1036 = vmatpush1.msra.mxu0 %v496
        %1037 = vmatprep.subr.mxu0 0.0
        %1038 = vmatpush1.msra.mxu0 %v497
        %1039 = vmatprep.subr.mxu0 0.0
        %1040 = vmatpush1.msra.mxu0 %v498
        %1041 = vmatprep.subr.mxu0 0.0
        %1042 = vmatpush1.msra.mxu0 %v499
        %1043 = vmatprep.subr.mxu0 0.0
        %1044 = vmatpush1.msra.mxu0 %v500
        %1045 = vmatprep.subr.mxu0 0.0
        %1046 = vmatpush1.msra.mxu0 %v501
        %1047 = vmatprep.subr.mxu0 0.0
        %1048 = vmatpush1.msra.mxu0 %v502
        %1049 = vmatprep.subr.mxu0 0.0
        %1050 = vmatpush1.msra.mxu0 %v503
        %1051 = vmatprep.subr.mxu0 0.0
        %1052 = vmatpush1.msra.mxu0 %v504
        %1053 = vmatprep.subr.mxu0 0.0
        %1054 = vmatpush1.msra.mxu0 %v505
        %1055 = vmatprep.subr.mxu0 0.0
        %1056 = vmatpush1.msra.mxu0 %v506
        %1057 = vmatprep.subr.mxu0 0.0
        %1058 = vmatpush1.msra.mxu0 %v507
        %1059 = vmatprep.subr.mxu0 0.0
        %1060 = vmatpush1.msra.mxu0 %v508
        %1061 = vmatprep.subr.mxu0 0.0
        %1062 = vmatpush1.msra.mxu0 %v509
        %1063 = vmatprep.subr.mxu0 0.0
        %1064 = vmatpush1.msra.mxu0 %v510
        %1065 = vmatprep.subr.mxu0 0.0
        %1066 = vmatpush1.msra.mxu0 %v511
        %1067 = vmatprep.subr.mxu0 0.0
        %1068 = vmatpush1.msra.mxu0 %v512
        %1069 = vmatprep.subr.mxu0 0.0
        %1070 = vmatpush1.msra.mxu0 %v513
        %1071 = vmatprep.subr.mxu0 0.0
        %1072 = vmatpush1.msra.mxu0 %v514
        %1073 = vmatprep.subr.mxu0 0.0
        %1074 = vmatpush1.msra.mxu0 %v515
        %1075 = vmatprep.subr.mxu0 0.0
        %1076 = vmatpush1.msra.mxu0 %v516
        %1077 = vmatprep.subr.mxu0 0.0
        %1078 = vmatpush1.msra.mxu0 %v517
        %1079 = vmatprep.subr.mxu0 0.0
        %1080 = vmatpush1.msra.mxu0 %v518
        %1081 = vmatprep.subr.mxu0 0.0
        %1082 = vmatpush1.msra.mxu0 %v519
        %1083 = vmatprep.subr.mxu0 0.0
        %1084 = vmatpush1.msra.mxu0 %v520
        %1085 = vmatprep.subr.mxu0 0.0
        %1086 = vmatpush1.msra.mxu0 %v521
        %1087 = vmatprep.subr.mxu0 0.0
        %1088 = vmatpush1.msra.mxu0 %v522
        %1089 = vmatprep.subr.mxu0 0.0
        %1090 = vmatpush1.msra.mxu0 0.0
        %1091 = vmatprep.subr.mxu0 0.0
        %1092 = vmatpush1.msra.mxu0 0.0
        %1093 = vmatprep.subr.mxu0 0.0
        %1094 = vmatpush1.msra.mxu0 0.0
        %1095 = vmatprep.subr.mxu0 0.0
        %1096 = vmatpush1.msra.mxu0 0.0
        %1097 = vmatprep.mubr.f32.mxu0 %v947
        %1098 = vmatmul.mubr.f32.gmra.mrb[0].mxu0 %v888
        %v1099 = vpop.f32.mrb[0].mxu0
        %v1100 = vadd.f32 0.0, %v1099
        %v1101 = vpop.f32.mrb[0].mxu0
        %1102 = vmatprep.mubr.f32.mxu0 %v950
        %1103 = vmatmul.mubr.f32.gmra.mrb[0].mxu0 %v890
        %v1104 = vpop.f32.mrb[0].mxu0
        %v1105 = vadd.f32 0.0, %v1104
        %v1106 = vpop.f32.mrb[0].mxu0
        %1107 = vmatprep.mubr.f32.mxu0 %v953
        %1108 = vmatmul.mubr.f32.gmra.mrb[0].mxu0 %v892
        %v1109 = vpop.f32.mrb[0].mxu0
        %v1110 = vadd.f32 0.0, %v1109
        %v1111 = vpop.f32.mrb[0].mxu0
        %1112 = vmatprep.mubr.f32.mxu0 %v956
        %1113 = vmatmul.mubr.f32.gmra.mrb[0].mxu0 %v894
        %v1114 = vpop.f32.mrb[0].mxu0
        %v1115 = vadd.f32 0.0, %v1114
        %v1116 = vpop.f32.mrb[0].mxu0
        %1117 = vmatprep.mubr.f32.mxu0 %v959
        %1118 = vmatmul.mubr.f32.gmra.mrb[0].mxu0 %v896
        %v1119 = vpop.f32.mrb[0].mxu0
        %v1120 = vadd.f32 0.0, %v1119
        %v1121 = vpop.f32.mrb[0].mxu0
        %1122 = vmatprep.mubr.f32.mxu0 %v962
        %1123 = vmatmul.mubr.f32.gmra.mrb[0].mxu0 %v898
        %v1124 = vpop.f32.mrb[0].mxu0
        %v1125 = vadd.f32 0.0, %v1124
        %v1126 = vpop.f32.mrb[0].mxu0
        %1127 = vmatprep.mubr.f32.mxu0 %v965
        %1128 = vmatmul.mubr.f32.gmra.mrb[0].mxu0 %v900
        %v1129 = vpop.f32.mrb[0].mxu0
        %v1130 = vadd.f32 0.0, %v1129
        %v1131 = vpop.f32.mrb[0].mxu0
        %1132 = vmatprep.mubr.f32.mxu0 %v968
        %1133 = vmatmul.mubr.f32.gmra.mrb[0].mxu0 %v902
        %v1134 = vpop.f32.mrb[0].mxu0
        %v1135 = vadd.f32 0.0, %v1134
        %v1136 = vpop.f32.mrb[0].mxu0
        %1137 = vmatprep.mubr.f32.mxu0 %v971
        %1138 = vmatmul.mubr.f32.gmra.mrb[0].mxu0 %v904
        %v1139 = vpop.f32.mrb[0].mxu0
        %v1140 = vadd.f32 0.0, %v1139
        %v1141 = vpop.f32.mrb[0].mxu0
        %1142 = vmatprep.mubr.f32.mxu0 %v974
        %1143 = vmatmul.mubr.f32.gmra.mrb[0].mxu0 %v906
        %v1144 = vpop.f32.mrb[0].mxu0
        %v1145 = vadd.f32 0.0, %v1144
        %v1146 = vpop.f32.mrb[0].mxu0
        %1147 = vmatprep.mubr.f32.mxu0 %v977
        %1148 = vmatmul.mubr.f32.gmra.mrb[0].mxu0 %v908
        %v1149 = vpop.f32.mrb[0].mxu0
        %v1150 = vadd.f32 0.0, %v1149
        %v1151 = vpop.f32.mrb[0].mxu0
        %1152 = vmatprep.mubr.f32.mxu0 %v980
        %1153 = vmatmul.mubr.f32.gmra.mrb[0].mxu0 %v910
        %v1154 = vpop.f32.mrb[0].mxu0
        %v1155 = vadd.f32 0.0, %v1154
        %v1156 = vpop.f32.mrb[0].mxu0
        %1157 = vmatprep.mubr.f32.mxu0 %v983
        %1158 = vmatmul.mubr.f32.gmra.mrb[0].mxu0 %v912
        %v1159 = vpop.f32.mrb[0].mxu0
        %v1160 = vadd.f32 0.0, %v1159
        %v1161 = vpop.f32.mrb[0].mxu0
        %1162 = vmatprep.mubr.f32.mxu0 %v986
        %1163 = vmatmul.mubr.f32.gmra.mrb[0].mxu0 %v914
        %v1164 = vpop.f32.mrb[0].mxu0
        %v1165 = vadd.f32 0.0, %v1164
        %v1166 = vpop.f32.mrb[0].mxu0
        %1167 = vmatprep.mubr.f32.mxu0 %v989
        %1168 = vmatmul.mubr.f32.gmra.mrb[0].mxu0 %v916
        %v1169 = vpop.f32.mrb[0].mxu0
        %v1170 = vadd.f32 0.0, %v1169
        %v1171 = vpop.f32.mrb[0].mxu0
        %1172 = vmatprep.mubr.f32.mxu0 %v992
        %1173 = vmatmul.mubr.f32.gmra.mrb[0].mxu0 %v918
        %v1174 = vpop.f32.mrb[0].mxu0
        %v1175 = vadd.f32 0.0, %v1174
        %v1176 = vpop.f32.mrb[0].mxu0
        %1177 = vmatprep.mubr.f32.mxu0 %v995
        %1178 = vmatmul.mubr.f32.gmra.mrb[0].mxu0 %v920
        %v1179 = vpop.f32.mrb[0].mxu0
        %v1180 = vadd.f32 0.0, %v1179
        %v1181 = vpop.f32.mrb[0].mxu0
        %1182 = vmatprep.mubr.f32.mxu0 %v998
        %1183 = vmatmul.mubr.f32.gmra.mrb[0].mxu0 %v922
        %v1184 = vpop.f32.mrb[0].mxu0
        %v1185 = vadd.f32 0.0, %v1184
        %v1186 = vpop.f32.mrb[0].mxu0
        %1187 = vmatprep.mubr.f32.mxu0 %v1001
        %1188 = vmatmul.mubr.f32.gmra.mrb[0].mxu0 %v924
        %v1189 = vpop.f32.mrb[0].mxu0
        %v1190 = vadd.f32 0.0, %v1189
        %v1191 = vpop.f32.mrb[0].mxu0
        %1192 = vmatprep.mubr.f32.mxu0 %v1004
        %1193 = vmatmul.mubr.f32.gmra.mrb[0].mxu0 %v926
        %v1194 = vpop.f32.mrb[0].mxu0
        %v1195 = vadd.f32 0.0, %v1194
        %v1196 = vpop.f32.mrb[0].mxu0
        %1197 = vmatprep.mubr.f32.mxu0 %v1007
        %1198 = vmatmul.mubr.f32.gmra.mrb[0].mxu0 %v928
        %v1199 = vpop.f32.mrb[0].mxu0
        %v1200 = vadd.f32 0.0, %v1199
        %v1201 = vpop.f32.mrb[0].mxu0
        %1202 = vmatprep.mubr.f32.mxu0 %v1010
        %1203 = vmatmul.mubr.f32.gmra.mrb[0].mxu0 %v930
        %v1204 = vpop.f32.mrb[0].mxu0
        %v1205 = vadd.f32 0.0, %v1204
        %v1206 = vpop.f32.mrb[0].mxu0
        %1207 = vmatprep.mubr.f32.mxu0 %v1013
        %1208 = vmatmul.mubr.f32.gmra.mrb[0].mxu0 %v932
        %v1209 = vpop.f32.mrb[0].mxu0
        %v1210 = vadd.f32 0.0, %v1209
        %v1211 = vpop.f32.mrb[0].mxu0
        %1212 = vmatprep.mubr.f32.mxu0 %v1016
        %1213 = vmatmul.mubr.f32.gmra.mrb[0].mxu0 %v934
        %v1214 = vpop.f32.mrb[0].mxu0
        %v1215 = vadd.f32 0.0, %v1214
        %v1216 = vpop.f32.mrb[0].mxu0
        %1217 = vmatprep.mubr.f32.mxu0 %v1019
        %1218 = vmatmul.mubr.f32.gmra.mrb[0].mxu0 %v936
        %v1219 = vpop.f32.mrb[0].mxu0
        %v1220 = vadd.f32 0.0, %v1219
        %v1221 = vpop.f32.mrb[0].mxu0
        %1222 = vmatprep.mubr.f32.mxu0 %v1022
        %1223 = vmatmul.mubr.f32.gmra.mrb[0].mxu0 %v938
        %v1224 = vpop.f32.mrb[0].mxu0
        %v1225 = vadd.f32 0.0, %v1224
        %v1226 = vpop.f32.mrb[0].mxu0
        %1227 = vmatprep.mubr.f32.mxu0 %v1025
        %1228 = vmatmul.mubr.f32.gmra.mrb[0].mxu0 %v940
        %v1229 = vpop.f32.mrb[0].mxu0
        %v1230 = vadd.f32 0.0, %v1229
        %v1231 = vpop.f32.mrb[0].mxu0
        %1232 = vmatprep.mubr.f32.mxu0 %v1028
        %1233 = vmatmul.mubr.f32.gmra.mrb[0].mxu0 %v942
        %v1234 = vpop.f32.mrb[0].mxu0
        %v1235 = vadd.f32 0.0, %v1234
        %v1236 = vpop.f32.mrb[0].mxu0
        %1237 = vmatprep.mubr.f32.mxu0 %v1031
        %1238 = vmatmul.mubr.f32.gmra.mrb[0].mxu0 %v944
        %v1239 = vpop.f32.mrb[0].mxu0
        %v1240 = vadd.f32 0.0, %v1239
        %v1241 = vpop.f32.mrb[0].mxu0
        %1242 = vdwg.mxu0
        %s1243 = scalar_lea.vmem %s2, 64
        %v1244 = vld [vmem:[%s1243] sm:$0xff]
        %v1245 = vld [vmem:[%s1243 + $0x8] sm:$0xff]
        %v1246 = vld [vmem:[%s1243 + $0x10] sm:$0xff]
        %v1247 = vld [vmem:[%s1243 + $0x18] sm:$0xff]
        %v1248 = vld [vmem:[%s1243 + $0x20] sm:$0xff]
        %v1249 = vld [vmem:[%s1243 + $0x28] sm:$0xff]
        %v1250 = vld [vmem:[%s1243 + $0x30] sm:$0xf]
        %v1251 = vld [vmem:[%s1243 + $0x38] sm:$0xf]
        %vm1252 = vcmask 228352
        %v1254 = vsel %vm1252, %v1100, 0
        %v1257 = vsel %vm1252, %v1105, 0
        %v1260 = vsel %vm1252, %v1110, 0
        %v1263 = vsel %vm1252, %v1115, 0
        %v1266 = vsel %vm1252, %v1120, 0
        %v1269 = vsel %vm1252, %v1125, 0
        %v1272 = vsel %vm1252, %v1130, 0
        %v1275 = vsel %vm1252, %v1135, 0
        %v1278 = vsel %vm1252, %v1140, 0
        %v1281 = vsel %vm1252, %v1145, 0
        %v1284 = vsel %vm1252, %v1150, 0
        %v1287 = vsel %vm1252, %v1155, 0
        %v1290 = vsel %vm1252, %v1160, 0
        %v1293 = vsel %vm1252, %v1165, 0
        %v1296 = vsel %vm1252, %v1170, 0
        %v1299 = vsel %vm1252, %v1175, 0
        %v1302 = vsel %vm1252, %v1180, 0
        %v1305 = vsel %vm1252, %v1185, 0
        %v1308 = vsel %vm1252, %v1190, 0
        %v1311 = vsel %vm1252, %v1195, 0
        %v1314 = vsel %vm1252, %v1200, 0
        %v1317 = vsel %vm1252, %v1205, 0
        %v1320 = vsel %vm1252, %v1210, 0
        %v1323 = vsel %vm1252, %v1215, 0
        %v1326 = vsel %vm1252, %v1220, 0
        %v1329 = vsel %vm1252, %v1225, 0
        %v1332 = vsel %vm1252, %v1230, 0
        %v1335 = vsel %vm1252, %v1235, 0
        %v1338 = vsel %vm1252, %v1240, 0
        %vm1340 = vcmask 1043456
        %v1342 = vsel %vm1340, %v1250, 0
        %v1345 = vsel %vm1340, %v1251, 0
        %1347 = vmatprep.subr.mxu0 %v1245
        %1348 = vmatpush1.msra.mxu0 %v1244
        %1349 = vmatprep.subr.mxu0 %v1247
        %1350 = vmatpush1.msra.mxu0 %v1246
        %1351 = vmatprep.subr.mxu0 %v1249
        %1352 = vmatpush1.msra.mxu0 %v1248
        %1353 = vmatprep.subr.mxu0 %v1345
        %1354 = vmatpush1.msra.mxu0 %v1342
        %1355 = vmatprep.subr.mxu0 0.0
        %1356 = vmatpush1.msra.mxu0 0.0
        %1357 = vmatprep.subr.mxu0 0.0
        %1358 = vmatpush1.msra.mxu0 0.0
        %1359 = vmatprep.subr.mxu0 0.0
        %1360 = vmatpush1.msra.mxu0 0.0
        %1361 = vmatprep.subr.mxu0 0.0
        %1362 = vmatpush1.msra.mxu0 0.0
        %1363 = vmatprep.subr.mxu0 0.0
        %1364 = vmatpush1.msra.mxu0 0.0
        %1365 = vmatprep.subr.mxu0 0.0
        %1366 = vmatpush1.msra.mxu0 0.0
        %1367 = vmatprep.subr.mxu0 0.0
        %1368 = vmatpush1.msra.mxu0 0.0
        %1369 = vmatprep.subr.mxu0 0.0
        %1370 = vmatpush1.msra.mxu0 0.0
        %1371 = vmatprep.subr.mxu0 0.0
        %1372 = vmatpush1.msra.mxu0 0.0
        %1373 = vmatprep.subr.mxu0 0.0
        %1374 = vmatpush1.msra.mxu0 0.0
        %1375 = vmatprep.subr.mxu0 0.0
        %1376 = vmatpush1.msra.mxu0 0.0
        %1377 = vmatprep.subr.mxu0 0.0
        %1378 = vmatpush1.msra.mxu0 0.0
        %1379 = vmatprep.subr.mxu0 0.0
        %1380 = vmatpush1.msra.mxu0 0.0
        %1381 = vmatprep.subr.mxu0 0.0
        %1382 = vmatpush1.msra.mxu0 0.0
        %1383 = vmatprep.subr.mxu0 0.0
        %1384 = vmatpush1.msra.mxu0 0.0
        %1385 = vmatprep.subr.mxu0 0.0
        %1386 = vmatpush1.msra.mxu0 0.0
        %1387 = vmatprep.subr.mxu0 0.0
        %1388 = vmatpush1.msra.mxu0 0.0
        %1389 = vmatprep.subr.mxu0 0.0
        %1390 = vmatpush1.msra.mxu0 0.0
        %1391 = vmatprep.subr.mxu0 0.0
        %1392 = vmatpush1.msra.mxu0 0.0
        %1393 = vmatprep.subr.mxu0 0.0
        %1394 = vmatpush1.msra.mxu0 0.0
        %1395 = vmatprep.subr.mxu0 0.0
        %1396 = vmatpush1.msra.mxu0 0.0
        %1397 = vmatprep.subr.mxu0 0.0
        %1398 = vmatpush1.msra.mxu0 0.0
        %1399 = vmatprep.subr.mxu0 0.0
        %1400 = vmatpush1.msra.mxu0 0.0
        %1401 = vmatprep.subr.mxu0 0.0
        %1402 = vmatpush1.msra.mxu0 0.0
        %1403 = vmatprep.subr.mxu0 0.0
        %1404 = vmatpush1.msra.mxu0 0.0
        %1405 = vmatprep.subr.mxu0 0.0
        %1406 = vmatpush1.msra.mxu0 0.0
        %1407 = vmatprep.subr.mxu0 0.0
        %1408 = vmatpush1.msra.mxu0 0.0
        %1409 = vmatprep.subr.mxu0 0.0
        %1410 = vmatpush1.msra.mxu0 0.0
        %1411 = vmatprep.mubr.f32.mxu0 0.0
        %1412 = vmatmul.mubr.f32.gmra.mrb[0].mxu0 %v1254
        %v1413 = vpop.f32.mrb[0].mxu0
        %v1414 = vadd.f32 0.0, %v1413
        %v1415 = vpop.f32.mrb[0].mxu0
        %v1416 = vadd.f32 0.0, %v1415
        %1417 = vmatprep.mubr.f32.mxu0 0.0
        %1418 = vmatmul.mubr.f32.gmra.mrb[0].mxu0 %v1257
        %v1419 = vpop.f32.mrb[0].mxu0
        %v1420 = vadd.f32 0.0, %v1419
        %v1421 = vpop.f32.mrb[0].mxu0
        %v1422 = vadd.f32 0.0, %v1421
        %1423 = vmatprep.mubr.f32.mxu0 0.0
        %1424 = vmatmul.mubr.f32.gmra.mrb[0].mxu0 %v1260
        %v1425 = vpop.f32.mrb[0].mxu0
        %v1426 = vadd.f32 0.0, %v1425
        %v1427 = vpop.f32.mrb[0].mxu0
        %v1428 = vadd.f32 0.0, %v1427
        %1429 = vmatprep.mubr.f32.mxu0 0.0
        %1430 = vmatmul.mubr.f32.gmra.mrb[0].mxu0 %v1263
        %v1431 = vpop.f32.mrb[0].mxu0
        %v1432 = vadd.f32 0.0, %v1431
        %v1433 = vpop.f32.mrb[0].mxu0
        %v1434 = vadd.f32 0.0, %v1433
        %1435 = vmatprep.mubr.f32.mxu0 0.0
        %1436 = vmatmul.mubr.f32.gmra.mrb[0].mxu0 %v1266
        %v1437 = vpop.f32.mrb[0].mxu0
        %v1438 = vadd.f32 0.0, %v1437
        %v1439 = vpop.f32.mrb[0].mxu0
        %v1440 = vadd.f32 0.0, %v1439
        %1441 = vmatprep.mubr.f32.mxu0 0.0
        %1442 = vmatmul.mubr.f32.gmra.mrb[0].mxu0 %v1269
        %v1443 = vpop.f32.mrb[0].mxu0
        %v1444 = vadd.f32 0.0, %v1443
        %v1445 = vpop.f32.mrb[0].mxu0
        %v1446 = vadd.f32 0.0, %v1445
        %1447 = vmatprep.mubr.f32.mxu0 0.0
        %1448 = vmatmul.mubr.f32.gmra.mrb[0].mxu0 %v1272
        %v1449 = vpop.f32.mrb[0].mxu0
        %v1450 = vadd.f32 0.0, %v1449
        %v1451 = vpop.f32.mrb[0].mxu0
        %v1452 = vadd.f32 0.0, %v1451
        %1453 = vmatprep.mubr.f32.mxu0 0.0
        %1454 = vmatmul.mubr.f32.gmra.mrb[0].mxu0 %v1275
        %v1455 = vpop.f32.mrb[0].mxu0
        %v1456 = vadd.f32 0.0, %v1455
        %v1457 = vpop.f32.mrb[0].mxu0
        %v1458 = vadd.f32 0.0, %v1457
        %1459 = vmatprep.mubr.f32.mxu0 0.0
        %1460 = vmatmul.mubr.f32.gmra.mrb[0].mxu0 %v1278
        %v1461 = vpop.f32.mrb[0].mxu0
        %v1462 = vadd.f32 0.0, %v1461
        %v1463 = vpop.f32.mrb[0].mxu0
        %v1464 = vadd.f32 0.0, %v1463
        %1465 = vmatprep.mubr.f32.mxu0 0.0
        %1466 = vmatmul.mubr.f32.gmra.mrb[0].mxu0 %v1281
        %v1467 = vpop.f32.mrb[0].mxu0
        %v1468 = vadd.f32 0.0, %v1467
        %v1469 = vpop.f32.mrb[0].mxu0
        %v1470 = vadd.f32 0.0, %v1469
        %1471 = vmatprep.mubr.f32.mxu0 0.0
        %1472 = vmatmul.mubr.f32.gmra.mrb[0].mxu0 %v1284
        %v1473 = vpop.f32.mrb[0].mxu0
        %v1474 = vadd.f32 0.0, %v1473
        %v1475 = vpop.f32.mrb[0].mxu0
        %v1476 = vadd.f32 0.0, %v1475
        %1477 = vmatprep.mubr.f32.mxu0 0.0
        %1478 = vmatmul.mubr.f32.gmra.mrb[0].mxu0 %v1287
        %v1479 = vpop.f32.mrb[0].mxu0
        %v1480 = vadd.f32 0.0, %v1479
        %v1481 = vpop.f32.mrb[0].mxu0
        %v1482 = vadd.f32 0.0, %v1481
        %1483 = vmatprep.mubr.f32.mxu0 0.0
        %1484 = vmatmul.mubr.f32.gmra.mrb[0].mxu0 %v1290
        %v1485 = vpop.f32.mrb[0].mxu0
        %v1486 = vadd.f32 0.0, %v1485
        %v1487 = vpop.f32.mrb[0].mxu0
        %v1488 = vadd.f32 0.0, %v1487
        %1489 = vmatprep.mubr.f32.mxu0 0.0
        %1490 = vmatmul.mubr.f32.gmra.mrb[0].mxu0 %v1293
        %v1491 = vpop.f32.mrb[0].mxu0
        %v1492 = vadd.f32 0.0, %v1491
        %v1493 = vpop.f32.mrb[0].mxu0
        %v1494 = vadd.f32 0.0, %v1493
        %1495 = vmatprep.mubr.f32.mxu0 0.0
        %1496 = vmatmul.mubr.f32.gmra.mrb[0].mxu0 %v1296
        %v1497 = vpop.f32.mrb[0].mxu0
        %v1498 = vadd.f32 0.0, %v1497
        %v1499 = vpop.f32.mrb[0].mxu0
        %v1500 = vadd.f32 0.0, %v1499
        %1501 = vmatprep.mubr.f32.mxu0 0.0
        %1502 = vmatmul.mubr.f32.gmra.mrb[0].mxu0 %v1299
        %v1503 = vpop.f32.mrb[0].mxu0
        %v1504 = vadd.f32 0.0, %v1503
        %v1505 = vpop.f32.mrb[0].mxu0
        %v1506 = vadd.f32 0.0, %v1505
        %1507 = vmatprep.mubr.f32.mxu0 0.0
        %1508 = vmatmul.mubr.f32.gmra.mrb[0].mxu0 %v1302
        %v1509 = vpop.f32.mrb[0].mxu0
        %v1510 = vadd.f32 0.0, %v1509
        %v1511 = vpop.f32.mrb[0].mxu0
        %v1512 = vadd.f32 0.0, %v1511
        %1513 = vmatprep.mubr.f32.mxu0 0.0
        %1514 = vmatmul.mubr.f32.gmra.mrb[0].mxu0 %v1305
        %v1515 = vpop.f32.mrb[0].mxu0
        %v1516 = vadd.f32 0.0, %v1515
        %v1517 = vpop.f32.mrb[0].mxu0
        %v1518 = vadd.f32 0.0, %v1517
        %1519 = vmatprep.mubr.f32.mxu0 0.0
        %1520 = vmatmul.mubr.f32.gmra.mrb[0].mxu0 %v1308
        %v1521 = vpop.f32.mrb[0].mxu0
        %v1522 = vadd.f32 0.0, %v1521
        %v1523 = vpop.f32.mrb[0].mxu0
        %v1524 = vadd.f32 0.0, %v1523
        %1525 = vmatprep.mubr.f32.mxu0 0.0
        %1526 = vmatmul.mubr.f32.gmra.mrb[0].mxu0 %v1311
        %v1527 = vpop.f32.mrb[0].mxu0
        %v1528 = vadd.f32 0.0, %v1527
        %v1529 = vpop.f32.mrb[0].mxu0
        %v1530 = vadd.f32 0.0, %v1529
        %1531 = vmatprep.mubr.f32.mxu0 0.0
        %1532 = vmatmul.mubr.f32.gmra.mrb[0].mxu0 %v1314
        %v1533 = vpop.f32.mrb[0].mxu0
        %v1534 = vadd.f32 0.0, %v1533
        %v1535 = vpop.f32.mrb[0].mxu0
        %v1536 = vadd.f32 0.0, %v1535
        %1537 = vmatprep.mubr.f32.mxu0 0.0
        %1538 = vmatmul.mubr.f32.gmra.mrb[0].mxu0 %v1317
        %v1539 = vpop.f32.mrb[0].mxu0
        %v1540 = vadd.f32 0.0, %v1539
        %v1541 = vpop.f32.mrb[0].mxu0
        %v1542 = vadd.f32 0.0, %v1541
        %1543 = vmatprep.mubr.f32.mxu0 0.0
        %1544 = vmatmul.mubr.f32.gmra.mrb[0].mxu0 %v1320
        %v1545 = vpop.f32.mrb[0].mxu0
        %v1546 = vadd.f32 0.0, %v1545
        %v1547 = vpop.f32.mrb[0].mxu0
        %v1548 = vadd.f32 0.0, %v1547
        %1549 = vmatprep.mubr.f32.mxu0 0.0
        %1550 = vmatmul.mubr.f32.gmra.mrb[0].mxu0 %v1323
        %v1551 = vpop.f32.mrb[0].mxu0
        %v1552 = vadd.f32 0.0, %v1551
        %v1553 = vpop.f32.mrb[0].mxu0
        %v1554 = vadd.f32 0.0, %v1553
        %1555 = vmatprep.mubr.f32.mxu0 0.0
        %1556 = vmatmul.mubr.f32.gmra.mrb[0].mxu0 %v1326
        %v1557 = vpop.f32.mrb[0].mxu0
        %v1558 = vadd.f32 0.0, %v1557
        %v1559 = vpop.f32.mrb[0].mxu0
        %v1560 = vadd.f32 0.0, %v1559
        %1561 = vmatprep.mubr.f32.mxu0 0.0
        %1562 = vmatmul.mubr.f32.gmra.mrb[0].mxu0 %v1329
        %v1563 = vpop.f32.mrb[0].mxu0
        %v1564 = vadd.f32 0.0, %v1563
        %v1565 = vpop.f32.mrb[0].mxu0
        %v1566 = vadd.f32 0.0, %v1565
        %1567 = vmatprep.mubr.f32.mxu0 0.0
        %1568 = vmatmul.mubr.f32.gmra.mrb[0].mxu0 %v1332
        %v1569 = vpop.f32.mrb[0].mxu0
        %v1570 = vadd.f32 0.0, %v1569
        %v1571 = vpop.f32.mrb[0].mxu0
        %v1572 = vadd.f32 0.0, %v1571
        %1573 = vmatprep.mubr.f32.mxu0 0.0
        %1574 = vmatmul.mubr.f32.gmra.mrb[0].mxu0 %v1335
        %v1575 = vpop.f32.mrb[0].mxu0
        %v1576 = vadd.f32 0.0, %v1575
        %v1577 = vpop.f32.mrb[0].mxu0
        %v1578 = vadd.f32 0.0, %v1577
        %1579 = vmatprep.mubr.f32.mxu0 0.0
        %1580 = vmatmul.mubr.f32.gmra.mrb[0].mxu0 %v1338
        %v1581 = vpop.f32.mrb[0].mxu0
        %v1582 = vadd.f32 0.0, %v1581
        %v1583 = vpop.f32.mrb[0].mxu0
        %v1584 = vadd.f32 0.0, %v1583
        %1585 = vdwg.mxu0
        %v1587 = vsel %vm1252, %v736, 0
        %v1590 = vsel %vm1252, %v741, 0
        %v1593 = vsel %vm1252, %v746, 0
        %v1596 = vsel %vm1252, %v751, 0
        %v1599 = vsel %vm1252, %v756, 0
        %v1602 = vsel %vm1252, %v761, 0
        %v1605 = vsel %vm1252, %v766, 0
        %v1608 = vsel %vm1252, %v771, 0
        %v1611 = vsel %vm1252, %v776, 0
        %v1614 = vsel %vm1252, %v781, 0
        %v1617 = vsel %vm1252, %v786, 0
        %v1620 = vsel %vm1252, %v791, 0
        %v1623 = vsel %vm1252, %v796, 0
        %v1626 = vsel %vm1252, %v801, 0
        %v1629 = vsel %vm1252, %v806, 0
        %v1632 = vsel %vm1252, %v811, 0
        %v1635 = vsel %vm1252, %v816, 0
        %v1638 = vsel %vm1252, %v821, 0
        %v1641 = vsel %vm1252, %v826, 0
        %v1644 = vsel %vm1252, %v831, 0
        %v1647 = vsel %vm1252, %v836, 0
        %v1650 = vsel %vm1252, %v841, 0
        %v1653 = vsel %vm1252, %v846, 0
        %v1656 = vsel %vm1252, %v851, 0
        %v1659 = vsel %vm1252, %v856, 0
        %v1662 = vsel %vm1252, %v861, 0
        %v1665 = vsel %vm1252, %v866, 0
        %v1668 = vsel %vm1252, %v871, 0
        %v1671 = vsel %vm1252, %v876, 0
        %v1674 = vsel %vm1340, %v885, 0
        %v1677 = vsel %vm1340, %v886, 0
        %1679 = vmatprep.subr.mxu0 %v880
        %1680 = vmatpush1.msra.mxu0 %v879
        %1681 = vmatprep.subr.mxu0 %v882
        %1682 = vmatpush1.msra.mxu0 %v881
        %1683 = vmatprep.subr.mxu0 %v884
        %1684 = vmatpush1.msra.mxu0 %v883
        %1685 = vmatprep.subr.mxu0 %v1677
        %1686 = vmatpush1.msra.mxu0 %v1674
        %1687 = vmatprep.subr.mxu0 0.0
        %1688 = vmatpush1.msra.mxu0 0.0
        %1689 = vmatprep.subr.mxu0 0.0
        %1690 = vmatpush1.msra.mxu0 0.0
        %1691 = vmatprep.subr.mxu0 0.0
        %1692 = vmatpush1.msra.mxu0 0.0
        %1693 = vmatprep.subr.mxu0 0.0
        %1694 = vmatpush1.msra.mxu0 0.0
        %1695 = vmatprep.subr.mxu0 0.0
        %1696 = vmatpush1.msra.mxu0 0.0
        %1697 = vmatprep.subr.mxu0 0.0
        %1698 = vmatpush1.msra.mxu0 0.0
        %1699 = vmatprep.subr.mxu0 0.0
        %1700 = vmatpush1.msra.mxu0 0.0
        %1701 = vmatprep.subr.mxu0 0.0
        %1702 = vmatpush1.msra.mxu0 0.0
        %1703 = vmatprep.subr.mxu0 0.0
        %1704 = vmatpush1.msra.mxu0 0.0
        %1705 = vmatprep.subr.mxu0 0.0
        %1706 = vmatpush1.msra.mxu0 0.0
        %1707 = vmatprep.subr.mxu0 0.0
        %1708 = vmatpush1.msra.mxu0 0.0
        %1709 = vmatprep.subr.mxu0 0.0
        %1710 = vmatpush1.msra.mxu0 0.0
        %1711 = vmatprep.subr.mxu0 0.0
        %1712 = vmatpush1.msra.mxu0 0.0
        %1713 = vmatprep.subr.mxu0 0.0
        %1714 = vmatpush1.msra.mxu0 0.0
        %1715 = vmatprep.subr.mxu0 0.0
        %1716 = vmatpush1.msra.mxu0 0.0
        %1717 = vmatprep.subr.mxu0 0.0
        %1718 = vmatpush1.msra.mxu0 0.0
        %1719 = vmatprep.subr.mxu0 0.0
        %1720 = vmatpush1.msra.mxu0 0.0
        %1721 = vmatprep.subr.mxu0 0.0
        %1722 = vmatpush1.msra.mxu0 0.0
        %1723 = vmatprep.subr.mxu0 0.0
        %1724 = vmatpush1.msra.mxu0 0.0
        %1725 = vmatprep.subr.mxu0 0.0
        %1726 = vmatpush1.msra.mxu0 0.0
        %1727 = vmatprep.subr.mxu0 0.0
        %1728 = vmatpush1.msra.mxu0 0.0
        %1729 = vmatprep.subr.mxu0 0.0
        %1730 = vmatpush1.msra.mxu0 0.0
        %1731 = vmatprep.subr.mxu0 0.0
        %1732 = vmatpush1.msra.mxu0 0.0
        %1733 = vmatprep.subr.mxu0 0.0
        %1734 = vmatpush1.msra.mxu0 0.0
        %1735 = vmatprep.subr.mxu0 0.0
        %1736 = vmatpush1.msra.mxu0 0.0
        %1737 = vmatprep.subr.mxu0 0.0
        %1738 = vmatpush1.msra.mxu0 0.0
        %1739 = vmatprep.subr.mxu0 0.0
        %1740 = vmatpush1.msra.mxu0 0.0
        %1741 = vmatprep.subr.mxu0 0.0
        %1742 = vmatpush1.msra.mxu0 0.0
        %1743 = vmatprep.mubr.f32.mxu0 0.0
        %1744 = vmatmul.mubr.f32.gmra.mrb[0].mxu0 %v1587
        %v1745 = vpop.f32.mrb[0].mxu0
        %v1746 = vadd.f32 %v1414, %v1745
        %v1747 = vpop.f32.mrb[0].mxu0
        %v1748 = vadd.f32 %v1416, %v1747
        %1749 = vmatprep.mubr.f32.mxu0 0.0
        %1750 = vmatmul.mubr.f32.gmra.mrb[0].mxu0 %v1590
        %v1751 = vpop.f32.mrb[0].mxu0
        %v1752 = vadd.f32 %v1420, %v1751
        %v1753 = vpop.f32.mrb[0].mxu0
        %v1754 = vadd.f32 %v1422, %v1753
        %1755 = vmatprep.mubr.f32.mxu0 0.0
        %1756 = vmatmul.mubr.f32.gmra.mrb[0].mxu0 %v1593
        %v1757 = vpop.f32.mrb[0].mxu0
        %v1758 = vadd.f32 %v1426, %v1757
        %v1759 = vpop.f32.mrb[0].mxu0
        %v1760 = vadd.f32 %v1428, %v1759
        %1761 = vmatprep.mubr.f32.mxu0 0.0
        %1762 = vmatmul.mubr.f32.gmra.mrb[0].mxu0 %v1596
        %v1763 = vpop.f32.mrb[0].mxu0
        %v1764 = vadd.f32 %v1432, %v1763
        %v1765 = vpop.f32.mrb[0].mxu0
        %v1766 = vadd.f32 %v1434, %v1765
        %1767 = vmatprep.mubr.f32.mxu0 0.0
        %1768 = vmatmul.mubr.f32.gmra.mrb[0].mxu0 %v1599
        %v1769 = vpop.f32.mrb[0].mxu0
        %v1770 = vadd.f32 %v1438, %v1769
        %v1771 = vpop.f32.mrb[0].mxu0
        %v1772 = vadd.f32 %v1440, %v1771
        %1773 = vmatprep.mubr.f32.mxu0 0.0
        %1774 = vmatmul.mubr.f32.gmra.mrb[0].mxu0 %v1602
        %v1775 = vpop.f32.mrb[0].mxu0
        %v1776 = vadd.f32 %v1444, %v1775
        %v1777 = vpop.f32.mrb[0].mxu0
        %v1778 = vadd.f32 %v1446, %v1777
        %1779 = vmatprep.mubr.f32.mxu0 0.0
        %1780 = vmatmul.mubr.f32.gmra.mrb[0].mxu0 %v1605
        %v1781 = vpop.f32.mrb[0].mxu0
        %v1782 = vadd.f32 %v1450, %v1781
        %v1783 = vpop.f32.mrb[0].mxu0
        %v1784 = vadd.f32 %v1452, %v1783
        %1785 = vmatprep.mubr.f32.mxu0 0.0
        %1786 = vmatmul.mubr.f32.gmra.mrb[0].mxu0 %v1608
        %v1787 = vpop.f32.mrb[0].mxu0
        %v1788 = vadd.f32 %v1456, %v1787
        %v1789 = vpop.f32.mrb[0].mxu0
        %v1790 = vadd.f32 %v1458, %v1789
        %1791 = vmatprep.mubr.f32.mxu0 0.0
        %1792 = vmatmul.mubr.f32.gmra.mrb[0].mxu0 %v1611
        %v1793 = vpop.f32.mrb[0].mxu0
        %v1794 = vadd.f32 %v1462, %v1793
        %v1795 = vpop.f32.mrb[0].mxu0
        %v1796 = vadd.f32 %v1464, %v1795
        %1797 = vmatprep.mubr.f32.mxu0 0.0
        %1798 = vmatmul.mubr.f32.gmra.mrb[0].mxu0 %v1614
        %v1799 = vpop.f32.mrb[0].mxu0
        %v1800 = vadd.f32 %v1468, %v1799
        %v1801 = vpop.f32.mrb[0].mxu0
        %v1802 = vadd.f32 %v1470, %v1801
        %1803 = vmatprep.mubr.f32.mxu0 0.0
        %1804 = vmatmul.mubr.f32.gmra.mrb[0].mxu0 %v1617
        %v1805 = vpop.f32.mrb[0].mxu0
        %v1806 = vadd.f32 %v1474, %v1805
        %v1807 = vpop.f32.mrb[0].mxu0
        %v1808 = vadd.f32 %v1476, %v1807
        %1809 = vmatprep.mubr.f32.mxu0 0.0
        %1810 = vmatmul.mubr.f32.gmra.mrb[0].mxu0 %v1620
        %v1811 = vpop.f32.mrb[0].mxu0
        %v1812 = vadd.f32 %v1480, %v1811
        %v1813 = vpop.f32.mrb[0].mxu0
        %v1814 = vadd.f32 %v1482, %v1813
        %1815 = vmatprep.mubr.f32.mxu0 0.0
        %1816 = vmatmul.mubr.f32.gmra.mrb[0].mxu0 %v1623
        %v1817 = vpop.f32.mrb[0].mxu0
        %v1818 = vadd.f32 %v1486, %v1817
        %v1819 = vpop.f32.mrb[0].mxu0
        %v1820 = vadd.f32 %v1488, %v1819
        %1821 = vmatprep.mubr.f32.mxu0 0.0
        %1822 = vmatmul.mubr.f32.gmra.mrb[0].mxu0 %v1626
        %v1823 = vpop.f32.mrb[0].mxu0
        %v1824 = vadd.f32 %v1492, %v1823
        %v1825 = vpop.f32.mrb[0].mxu0
        %v1826 = vadd.f32 %v1494, %v1825
        %1827 = vmatprep.mubr.f32.mxu0 0.0
        %1828 = vmatmul.mubr.f32.gmra.mrb[0].mxu0 %v1629
        %v1829 = vpop.f32.mrb[0].mxu0
        %v1830 = vadd.f32 %v1498, %v1829
        %v1831 = vpop.f32.mrb[0].mxu0
        %v1832 = vadd.f32 %v1500, %v1831
        %1833 = vmatprep.mubr.f32.mxu0 0.0
        %1834 = vmatmul.mubr.f32.gmra.mrb[0].mxu0 %v1632
        %v1835 = vpop.f32.mrb[0].mxu0
        %v1836 = vadd.f32 %v1504, %v1835
        %v1837 = vpop.f32.mrb[0].mxu0
        %v1838 = vadd.f32 %v1506, %v1837
        %1839 = vmatprep.mubr.f32.mxu0 0.0
        %1840 = vmatmul.mubr.f32.gmra.mrb[0].mxu0 %v1635
        %v1841 = vpop.f32.mrb[0].mxu0
        %v1842 = vadd.f32 %v1510, %v1841
        %v1843 = vpop.f32.mrb[0].mxu0
        %v1844 = vadd.f32 %v1512, %v1843
        %1845 = vmatprep.mubr.f32.mxu0 0.0
        %1846 = vmatmul.mubr.f32.gmra.mrb[0].mxu0 %v1638
        %v1847 = vpop.f32.mrb[0].mxu0
        %v1848 = vadd.f32 %v1516, %v1847
        %v1849 = vpop.f32.mrb[0].mxu0
        %v1850 = vadd.f32 %v1518, %v1849
        %1851 = vmatprep.mubr.f32.mxu0 0.0
        %1852 = vmatmul.mubr.f32.gmra.mrb[0].mxu0 %v1641
        %v1853 = vpop.f32.mrb[0].mxu0
        %v1854 = vadd.f32 %v1522, %v1853
        %v1855 = vpop.f32.mrb[0].mxu0
        %v1856 = vadd.f32 %v1524, %v1855
        %1857 = vmatprep.mubr.f32.mxu0 0.0
        %1858 = vmatmul.mubr.f32.gmra.mrb[0].mxu0 %v1644
        %v1859 = vpop.f32.mrb[0].mxu0
        %v1860 = vadd.f32 %v1528, %v1859
        %v1861 = vpop.f32.mrb[0].mxu0
        %v1862 = vadd.f32 %v1530, %v1861
        %1863 = vmatprep.mubr.f32.mxu0 0.0
        %1864 = vmatmul.mubr.f32.gmra.mrb[0].mxu0 %v1647
        %v1865 = vpop.f32.mrb[0].mxu0
        %v1866 = vadd.f32 %v1534, %v1865
        %v1867 = vpop.f32.mrb[0].mxu0
        %v1868 = vadd.f32 %v1536, %v1867
        %1869 = vmatprep.mubr.f32.mxu0 0.0
        %1870 = vmatmul.mubr.f32.gmra.mrb[0].mxu0 %v1650
        %v1871 = vpop.f32.mrb[0].mxu0
        %v1872 = vadd.f32 %v1540, %v1871
        %v1873 = vpop.f32.mrb[0].mxu0
        %v1874 = vadd.f32 %v1542, %v1873
        %1875 = vmatprep.mubr.f32.mxu0 0.0
        %1876 = vmatmul.mubr.f32.gmra.mrb[0].mxu0 %v1653
        %v1877 = vpop.f32.mrb[0].mxu0
        %v1878 = vadd.f32 %v1546, %v1877
        %v1879 = vpop.f32.mrb[0].mxu0
        %v1880 = vadd.f32 %v1548, %v1879
        %1881 = vmatprep.mubr.f32.mxu0 0.0
        %1882 = vmatmul.mubr.f32.gmra.mrb[0].mxu0 %v1656
        %v1883 = vpop.f32.mrb[0].mxu0
        %v1884 = vadd.f32 %v1552, %v1883
        %v1885 = vpop.f32.mrb[0].mxu0
        %v1886 = vadd.f32 %v1554, %v1885
        %1887 = vmatprep.mubr.f32.mxu0 0.0
        %1888 = vmatmul.mubr.f32.gmra.mrb[0].mxu0 %v1659
        %v1889 = vpop.f32.mrb[0].mxu0
        %v1890 = vadd.f32 %v1558, %v1889
        %v1891 = vpop.f32.mrb[0].mxu0
        %v1892 = vadd.f32 %v1560, %v1891
        %1893 = vmatprep.mubr.f32.mxu0 0.0
        %1894 = vmatmul.mubr.f32.gmra.mrb[0].mxu0 %v1662
        %v1895 = vpop.f32.mrb[0].mxu0
        %v1896 = vadd.f32 %v1564, %v1895
        %v1897 = vpop.f32.mrb[0].mxu0
        %v1898 = vadd.f32 %v1566, %v1897
        %1899 = vmatprep.mubr.f32.mxu0 0.0
        %1900 = vmatmul.mubr.f32.gmra.mrb[0].mxu0 %v1665
        %v1901 = vpop.f32.mrb[0].mxu0
        %v1902 = vadd.f32 %v1570, %v1901
        %v1903 = vpop.f32.mrb[0].mxu0
        %v1904 = vadd.f32 %v1572, %v1903
        %1905 = vmatprep.mubr.f32.mxu0 0.0
        %1906 = vmatmul.mubr.f32.gmra.mrb[0].mxu0 %v1668
        %v1907 = vpop.f32.mrb[0].mxu0
        %v1908 = vadd.f32 %v1576, %v1907
        %v1909 = vpop.f32.mrb[0].mxu0
        %v1910 = vadd.f32 %v1578, %v1909
        %1911 = vmatprep.mubr.f32.mxu0 0.0
        %1912 = vmatmul.mubr.f32.gmra.mrb[0].mxu0 %v1671
        %v1913 = vpop.f32.mrb[0].mxu0
        %v1914 = vadd.f32 %v1582, %v1913
        %v1915 = vpop.f32.mrb[0].mxu0
        %v1916 = vadd.f32 %v1584, %v1915
        %1917 = vdwg.mxu0
        %s1918 = scalar_lea.vmem %s1, 928
        %v1919 = vld [vmem:[%s1918] sm:$0xff]
        %v1920 = vld [vmem:[%s1918 + $0x8] sm:$0xff]
        %v1921 = vld [vmem:[%s1918 + $0x10] sm:$0xff]
        %v1922 = vld [vmem:[%s1918 + $0x18] sm:$0xff]
        %v1923 = vld [vmem:[%s1918 + $0x20] sm:$0xff]
        %v1924 = vld [vmem:[%s1918 + $0x28] sm:$0xff]
        %v1925 = vld [vmem:[%s1918 + $0x30] sm:$0xff]
        %v1926 = vld [vmem:[%s1918 + $0x38] sm:$0xff]
        %v1927 = vld [vmem:[%s1918 + $0x40] sm:$0xff]
        %v1928 = vld [vmem:[%s1918 + $0x48] sm:$0xff]
        %v1929 = vld [vmem:[%s1918 + $0x50] sm:$0xff]
        %v1930 = vld [vmem:[%s1918 + $0x58] sm:$0xff]
        %v1931 = vld [vmem:[%s1918 + $0x60] sm:$0xff]
        %v1932 = vld [vmem:[%s1918 + $0x68] sm:$0xff]
        %v1933 = vld [vmem:[%s1918 + $0x70] sm:$0xff]
        %v1934 = vld [vmem:[%s1918 + $0x78] sm:$0xff]
        %v1935 = vld [vmem:[%s1918 + $0x80] sm:$0xff]
        %v1936 = vld [vmem:[%s1918 + $0x88] sm:$0xff]
        %v1937 = vld [vmem:[%s1918 + $0x90] sm:$0xff]
        %v1938 = vld [vmem:[%s1918 + $0x98] sm:$0xff]
        %v1939 = vld [vmem:[%s1918 + $0xa0] sm:$0xff]
        %v1940 = vld [vmem:[%s1918 + $0xa8] sm:$0xff]
        %v1941 = vld [vmem:[%s1918 + $0xb0] sm:$0xff]
        %v1942 = vld [vmem:[%s1918 + $0xb8] sm:$0xff]
        %v1943 = vld [vmem:[%s1918 + $0xc0] sm:$0xff]
        %v1944 = vld [vmem:[%s1918 + $0xc8] sm:$0xff]
        %v1945 = vld [vmem:[%s1918 + $0xd0] sm:$0xff]
        %v1946 = vld [vmem:[%s1918 + $0xd8] sm:$0xff]
        %v1947 = vld [vmem:[%s1918 + $0xe0] sm:$0xff]
        %v1948 = vld [vmem:[%s1918 + $0xe8] sm:$0xff]
        %v1949 = vld [vmem:[%s1918 + $0xf0] sm:$0xff]
        %v1950 = vld [vmem:[%s1918 + $0xf8] sm:$0xff]
        %v1951 = vld [vmem:[%s1918 + $0x100] sm:$0xff]
        %v1952 = vld [vmem:[%s1918 + $0x108] sm:$0xff]
        %v1953 = vld [vmem:[%s1918 + $0x110] sm:$0xff]
        %v1954 = vld [vmem:[%s1918 + $0x118] sm:$0xff]
        %v1955 = vld [vmem:[%s1918 + $0x120] sm:$0xff]
        %v1956 = vld [vmem:[%s1918 + $0x128] sm:$0xff]
        %v1957 = vld [vmem:[%s1918 + $0x130] sm:$0xff]
        %v1958 = vld [vmem:[%s1918 + $0x138] sm:$0xff]
        %v1959 = vld [vmem:[%s1918 + $0x140] sm:$0xff]
        %v1960 = vld [vmem:[%s1918 + $0x148] sm:$0xff]
        %v1961 = vld [vmem:[%s1918 + $0x150] sm:$0xff]
        %v1962 = vld [vmem:[%s1918 + $0x158] sm:$0xff]
        %v1963 = vld [vmem:[%s1918 + $0x160] sm:$0xff]
        %v1964 = vld [vmem:[%s1918 + $0x168] sm:$0xff]
        %v1965 = vld [vmem:[%s1918 + $0x170] sm:$0xff]
        %v1966 = vld [vmem:[%s1918 + $0x178] sm:$0xff]
        %v1967 = vld [vmem:[%s1918 + $0x180] sm:$0xff]
        %v1968 = vld [vmem:[%s1918 + $0x188] sm:$0xff]
        %v1969 = vld [vmem:[%s1918 + $0x190] sm:$0xff]
        %v1970 = vld [vmem:[%s1918 + $0x198] sm:$0xff]
        %v1971 = vld [vmem:[%s1918 + $0x1a0] sm:$0xff]
        %v1972 = vld [vmem:[%s1918 + $0x1a8] sm:$0xff]
        %v1973 = vld [vmem:[%s1918 + $0x1b0] sm:$0xff]
        %v1974 = vld [vmem:[%s1918 + $0x1b8] sm:$0xff]
        %v1975 = vld [vmem:[%s1918 + $0x1c0] sm:$0xff]
        %v1976 = vld [vmem:[%s1918 + $0x1c8] sm:$0xff]
        %v1978 = vsel %vm581, %v1920, 0
        %v1981 = vsel %vm581, %v1922, 0
        %v1984 = vsel %vm581, %v1924, 0
        %v1987 = vsel %vm581, %v1926, 0
        %v1990 = vsel %vm581, %v1928, 0
        %v1993 = vsel %vm581, %v1930, 0
        %v1996 = vsel %vm581, %v1932, 0
        %v1999 = vsel %vm581, %v1934, 0
        %v2002 = vsel %vm581, %v1936, 0
        %v2005 = vsel %vm581, %v1938, 0
        %v2008 = vsel %vm581, %v1940, 0
        %v2011 = vsel %vm581, %v1942, 0
        %v2014 = vsel %vm581, %v1944, 0
        %v2017 = vsel %vm581, %v1946, 0
        %v2020 = vsel %vm581, %v1948, 0
        %v2023 = vsel %vm581, %v1950, 0
        %v2026 = vsel %vm581, %v1952, 0
        %v2029 = vsel %vm581, %v1954, 0
        %v2032 = vsel %vm581, %v1956, 0
        %v2035 = vsel %vm581, %v1958, 0
        %v2038 = vsel %vm581, %v1960, 0
        %v2041 = vsel %vm581, %v1962, 0
        %v2044 = vsel %vm581, %v1964, 0
        %v2047 = vsel %vm581, %v1966, 0
        %v2050 = vsel %vm581, %v1968, 0
        %v2053 = vsel %vm581, %v1970, 0
        %v2056 = vsel %vm581, %v1972, 0
        %v2059 = vsel %vm581, %v1974, 0
        %v2062 = vsel %vm581, %v1976, 0
        %2064 = vmatprep.subr.mxu0 0.0
        %2065 = vmatpush1.msra.mxu0 %v495
        %2066 = vmatprep.subr.mxu0 0.0
        %2067 = vmatpush1.msra.mxu0 %v496
        %2068 = vmatprep.subr.mxu0 0.0
        %2069 = vmatpush1.msra.mxu0 %v497
        %2070 = vmatprep.subr.mxu0 0.0
        %2071 = vmatpush1.msra.mxu0 %v498
        %2072 = vmatprep.subr.mxu0 0.0
        %2073 = vmatpush1.msra.mxu0 %v499
        %2074 = vmatprep.subr.mxu0 0.0
        %2075 = vmatpush1.msra.mxu0 %v500
        %2076 = vmatprep.subr.mxu0 0.0
        %2077 = vmatpush1.msra.mxu0 %v501
        %2078 = vmatprep.subr.mxu0 0.0
        %2079 = vmatpush1.msra.mxu0 %v502
        %2080 = vmatprep.subr.mxu0 0.0
        %2081 = vmatpush1.msra.mxu0 %v503
        %2082 = vmatprep.subr.mxu0 0.0
        %2083 = vmatpush1.msra.mxu0 %v504
        %2084 = vmatprep.subr.mxu0 0.0
        %2085 = vmatpush1.msra.mxu0 %v505
        %2086 = vmatprep.subr.mxu0 0.0
        %2087 = vmatpush1.msra.mxu0 %v506
        %2088 = vmatprep.subr.mxu0 0.0
        %2089 = vmatpush1.msra.mxu0 %v507
        %2090 = vmatprep.subr.mxu0 0.0
        %2091 = vmatpush1.msra.mxu0 %v508
        %2092 = vmatprep.subr.mxu0 0.0
        %2093 = vmatpush1.msra.mxu0 %v509
        %2094 = vmatprep.subr.mxu0 0.0
        %2095 = vmatpush1.msra.mxu0 %v510
        %2096 = vmatprep.subr.mxu0 0.0
        %2097 = vmatpush1.msra.mxu0 %v511
        %2098 = vmatprep.subr.mxu0 0.0
        %2099 = vmatpush1.msra.mxu0 %v512
        %2100 = vmatprep.subr.mxu0 0.0
        %2101 = vmatpush1.msra.mxu0 %v513
        %2102 = vmatprep.subr.mxu0 0.0
        %2103 = vmatpush1.msra.mxu0 %v514
        %2104 = vmatprep.subr.mxu0 0.0
        %2105 = vmatpush1.msra.mxu0 %v515
        %2106 = vmatprep.subr.mxu0 0.0
        %2107 = vmatpush1.msra.mxu0 %v516
        %2108 = vmatprep.subr.mxu0 0.0
        %2109 = vmatpush1.msra.mxu0 %v517
        %2110 = vmatprep.subr.mxu0 0.0
        %2111 = vmatpush1.msra.mxu0 %v518
        %2112 = vmatprep.subr.mxu0 0.0
        %2113 = vmatpush1.msra.mxu0 %v519
        %2114 = vmatprep.subr.mxu0 0.0
        %2115 = vmatpush1.msra.mxu0 %v520
        %2116 = vmatprep.subr.mxu0 0.0
        %2117 = vmatpush1.msra.mxu0 %v521
        %2118 = vmatprep.subr.mxu0 0.0
        %2119 = vmatpush1.msra.mxu0 %v522
        %2120 = vmatprep.subr.mxu0 0.0
        %2121 = vmatpush1.msra.mxu0 0.0
        %2122 = vmatprep.subr.mxu0 0.0
        %2123 = vmatpush1.msra.mxu0 0.0
        %2124 = vmatprep.subr.mxu0 0.0
        %2125 = vmatpush1.msra.mxu0 0.0
        %2126 = vmatprep.subr.mxu0 0.0
        %2127 = vmatpush1.msra.mxu0 0.0
        %2128 = vmatprep.mubr.f32.mxu0 %v1978
        %2129 = vmatmul.mubr.f32.gmra.mrb[0].mxu0 %v1919
        %v2130 = vpop.f32.mrb[0].mxu0
        %v2131 = vadd.f32 0.0, %v2130
        %v2132 = vpop.f32.mrb[0].mxu0
        %2133 = vmatprep.mubr.f32.mxu0 %v1981
        %2134 = vmatmul.mubr.f32.gmra.mrb[0].mxu0 %v1921
        %v2135 = vpop.f32.mrb[0].mxu0
        %v2136 = vadd.f32 0.0, %v2135
        %v2137 = vpop.f32.mrb[0].mxu0
        %2138 = vmatprep.mubr.f32.mxu0 %v1984
        %2139 = vmatmul.mubr.f32.gmra.mrb[0].mxu0 %v1923
        %v2140 = vpop.f32.mrb[0].mxu0
        %v2141 = vadd.f32 0.0, %v2140
        %v2142 = vpop.f32.mrb[0].mxu0
        %2143 = vmatprep.mubr.f32.mxu0 %v1987
        %2144 = vmatmul.mubr.f32.gmra.mrb[0].mxu0 %v1925
        %v2145 = vpop.f32.mrb[0].mxu0
        %v2146 = vadd.f32 0.0, %v2145
        %v2147 = vpop.f32.mrb[0].mxu0
        %2148 = vmatprep.mubr.f32.mxu0 %v1990
        %2149 = vmatmul.mubr.f32.gmra.mrb[0].mxu0 %v1927
        %v2150 = vpop.f32.mrb[0].mxu0
        %v2151 = vadd.f32 0.0, %v2150
        %v2152 = vpop.f32.mrb[0].mxu0
        %2153 = vmatprep.mubr.f32.mxu0 %v1993
        %2154 = vmatmul.mubr.f32.gmra.mrb[0].mxu0 %v1929
        %v2155 = vpop.f32.mrb[0].mxu0
        %v2156 = vadd.f32 0.0, %v2155
        %v2157 = vpop.f32.mrb[0].mxu0
        %2158 = vmatprep.mubr.f32.mxu0 %v1996
        %2159 = vmatmul.mubr.f32.gmra.mrb[0].mxu0 %v1931
        %v2160 = vpop.f32.mrb[0].mxu0
        %v2161 = vadd.f32 0.0, %v2160
        %v2162 = vpop.f32.mrb[0].mxu0
        %2163 = vmatprep.mubr.f32.mxu0 %v1999
        %2164 = vmatmul.mubr.f32.gmra.mrb[0].mxu0 %v1933
        %v2165 = vpop.f32.mrb[0].mxu0
        %v2166 = vadd.f32 0.0, %v2165
        %v2167 = vpop.f32.mrb[0].mxu0
        %2168 = vmatprep.mubr.f32.mxu0 %v2002
        %2169 = vmatmul.mubr.f32.gmra.mrb[0].mxu0 %v1935
        %v2170 = vpop.f32.mrb[0].mxu0
        %v2171 = vadd.f32 0.0, %v2170
        %v2172 = vpop.f32.mrb[0].mxu0
        %2173 = vmatprep.mubr.f32.mxu0 %v2005
        %2174 = vmatmul.mubr.f32.gmra.mrb[0].mxu0 %v1937
        %v2175 = vpop.f32.mrb[0].mxu0
        %v2176 = vadd.f32 0.0, %v2175
        %v2177 = vpop.f32.mrb[0].mxu0
        %2178 = vmatprep.mubr.f32.mxu0 %v2008
        %2179 = vmatmul.mubr.f32.gmra.mrb[0].mxu0 %v1939
        %v2180 = vpop.f32.mrb[0].mxu0
        %v2181 = vadd.f32 0.0, %v2180
        %v2182 = vpop.f32.mrb[0].mxu0
        %2183 = vmatprep.mubr.f32.mxu0 %v2011
        %2184 = vmatmul.mubr.f32.gmra.mrb[0].mxu0 %v1941
        %v2185 = vpop.f32.mrb[0].mxu0
        %v2186 = vadd.f32 0.0, %v2185
        %v2187 = vpop.f32.mrb[0].mxu0
        %2188 = vmatprep.mubr.f32.mxu0 %v2014
        %2189 = vmatmul.mubr.f32.gmra.mrb[0].mxu0 %v1943
        %v2190 = vpop.f32.mrb[0].mxu0
        %v2191 = vadd.f32 0.0, %v2190
        %v2192 = vpop.f32.mrb[0].mxu0
        %2193 = vmatprep.mubr.f32.mxu0 %v2017
        %2194 = vmatmul.mubr.f32.gmra.mrb[0].mxu0 %v1945
        %v2195 = vpop.f32.mrb[0].mxu0
        %v2196 = vadd.f32 0.0, %v2195
        %v2197 = vpop.f32.mrb[0].mxu0
        %2198 = vmatprep.mubr.f32.mxu0 %v2020
        %2199 = vmatmul.mubr.f32.gmra.mrb[0].mxu0 %v1947
        %v2200 = vpop.f32.mrb[0].mxu0
        %v2201 = vadd.f32 0.0, %v2200
        %v2202 = vpop.f32.mrb[0].mxu0
        %2203 = vmatprep.mubr.f32.mxu0 %v2023
        %2204 = vmatmul.mubr.f32.gmra.mrb[0].mxu0 %v1949
        %v2205 = vpop.f32.mrb[0].mxu0
        %v2206 = vadd.f32 0.0, %v2205
        %v2207 = vpop.f32.mrb[0].mxu0
        %2208 = vmatprep.mubr.f32.mxu0 %v2026
        %2209 = vmatmul.mubr.f32.gmra.mrb[0].mxu0 %v1951
        %v2210 = vpop.f32.mrb[0].mxu0
        %v2211 = vadd.f32 0.0, %v2210
        %v2212 = vpop.f32.mrb[0].mxu0
        %2213 = vmatprep.mubr.f32.mxu0 %v2029
        %2214 = vmatmul.mubr.f32.gmra.mrb[0].mxu0 %v1953
        %v2215 = vpop.f32.mrb[0].mxu0
        %v2216 = vadd.f32 0.0, %v2215
        %v2217 = vpop.f32.mrb[0].mxu0
        %2218 = vmatprep.mubr.f32.mxu0 %v2032
        %2219 = vmatmul.mubr.f32.gmra.mrb[0].mxu0 %v1955
        %v2220 = vpop.f32.mrb[0].mxu0
        %v2221 = vadd.f32 0.0, %v2220
        %v2222 = vpop.f32.mrb[0].mxu0
        %2223 = vmatprep.mubr.f32.mxu0 %v2035
        %2224 = vmatmul.mubr.f32.gmra.mrb[0].mxu0 %v1957
        %v2225 = vpop.f32.mrb[0].mxu0
        %v2226 = vadd.f32 0.0, %v2225
        %v2227 = vpop.f32.mrb[0].mxu0
        %2228 = vmatprep.mubr.f32.mxu0 %v2038
        %2229 = vmatmul.mubr.f32.gmra.mrb[0].mxu0 %v1959
        %v2230 = vpop.f32.mrb[0].mxu0
        %v2231 = vadd.f32 0.0, %v2230
        %v2232 = vpop.f32.mrb[0].mxu0
        %2233 = vmatprep.mubr.f32.mxu0 %v2041
        %2234 = vmatmul.mubr.f32.gmra.mrb[0].mxu0 %v1961
        %v2235 = vpop.f32.mrb[0].mxu0
        %v2236 = vadd.f32 0.0, %v2235
        %v2237 = vpop.f32.mrb[0].mxu0
        %2238 = vmatprep.mubr.f32.mxu0 %v2044
        %2239 = vmatmul.mubr.f32.gmra.mrb[0].mxu0 %v1963
        %v2240 = vpop.f32.mrb[0].mxu0
        %v2241 = vadd.f32 0.0, %v2240
        %v2242 = vpop.f32.mrb[0].mxu0
        %2243 = vmatprep.mubr.f32.mxu0 %v2047
        %2244 = vmatmul.mubr.f32.gmra.mrb[0].mxu0 %v1965
        %v2245 = vpop.f32.mrb[0].mxu0
        %v2246 = vadd.f32 0.0, %v2245
        %v2247 = vpop.f32.mrb[0].mxu0
        %2248 = vmatprep.mubr.f32.mxu0 %v2050
        %2249 = vmatmul.mubr.f32.gmra.mrb[0].mxu0 %v1967
        %v2250 = vpop.f32.mrb[0].mxu0
        %v2251 = vadd.f32 0.0, %v2250
        %v2252 = vpop.f32.mrb[0].mxu0
        %2253 = vmatprep.mubr.f32.mxu0 %v2053
        %2254 = vmatmul.mubr.f32.gmra.mrb[0].mxu0 %v1969
        %v2255 = vpop.f32.mrb[0].mxu0
        %v2256 = vadd.f32 0.0, %v2255
        %v2257 = vpop.f32.mrb[0].mxu0
        %2258 = vmatprep.mubr.f32.mxu0 %v2056
        %2259 = vmatmul.mubr.f32.gmra.mrb[0].mxu0 %v1971
        %v2260 = vpop.f32.mrb[0].mxu0
        %v2261 = vadd.f32 0.0, %v2260
        %v2262 = vpop.f32.mrb[0].mxu0
        %2263 = vmatprep.mubr.f32.mxu0 %v2059
        %2264 = vmatmul.mubr.f32.gmra.mrb[0].mxu0 %v1973
        %v2265 = vpop.f32.mrb[0].mxu0
        %v2266 = vadd.f32 0.0, %v2265
        %v2267 = vpop.f32.mrb[0].mxu0
        %2268 = vmatprep.mubr.f32.mxu0 %v2062
        %2269 = vmatmul.mubr.f32.gmra.mrb[0].mxu0 %v1975
        %v2270 = vpop.f32.mrb[0].mxu0
        %v2271 = vadd.f32 0.0, %v2270
        %v2272 = vpop.f32.mrb[0].mxu0
        %2273 = vdwg.mxu0
        %s2274 = scalar_lea.vmem %s2, 128
        %v2275 = vld [vmem:[%s2274] sm:$0xff]
        %v2276 = vld [vmem:[%s2274 + $0x8] sm:$0xff]
        %v2277 = vld [vmem:[%s2274 + $0x10] sm:$0xff]
        %v2278 = vld [vmem:[%s2274 + $0x18] sm:$0xff]
        %v2279 = vld [vmem:[%s2274 + $0x20] sm:$0xff]
        %v2280 = vld [vmem:[%s2274 + $0x28] sm:$0xff]
        %v2281 = vld [vmem:[%s2274 + $0x30] sm:$0xf]
        %v2282 = vld [vmem:[%s2274 + $0x38] sm:$0xf]
        %v2284 = vsel %vm1252, %v2131, 0
        %v2287 = vsel %vm1252, %v2136, 0
        %v2290 = vsel %vm1252, %v2141, 0
        %v2293 = vsel %vm1252, %v2146, 0
        %v2296 = vsel %vm1252, %v2151, 0
        %v2299 = vsel %vm1252, %v2156, 0
        %v2302 = vsel %vm1252, %v2161, 0
        %v2305 = vsel %vm1252, %v2166, 0
        %v2308 = vsel %vm1252, %v2171, 0
        %v2311 = vsel %vm1252, %v2176, 0
        %v2314 = vsel %vm1252, %v2181, 0
        %v2317 = vsel %vm1252, %v2186, 0
        %v2320 = vsel %vm1252, %v2191, 0
        %v2323 = vsel %vm1252, %v2196, 0
        %v2326 = vsel %vm1252, %v2201, 0
        %v2329 = vsel %vm1252, %v2206, 0
        %v2332 = vsel %vm1252, %v2211, 0
        %v2335 = vsel %vm1252, %v2216, 0
        %v2338 = vsel %vm1252, %v2221, 0
        %v2341 = vsel %vm1252, %v2226, 0
        %v2344 = vsel %vm1252, %v2231, 0
        %v2347 = vsel %vm1252, %v2236, 0
        %v2350 = vsel %vm1252, %v2241, 0
        %v2353 = vsel %vm1252, %v2246, 0
        %v2356 = vsel %vm1252, %v2251, 0
        %v2359 = vsel %vm1252, %v2256, 0
        %v2362 = vsel %vm1252, %v2261, 0
        %v2365 = vsel %vm1252, %v2266, 0
        %v2368 = vsel %vm1252, %v2271, 0
        %v2371 = vsel %vm1340, %v2281, 0
        %v2374 = vsel %vm1340, %v2282, 0
        %2376 = vmatprep.subr.mxu0 %v2276
        %2377 = vmatpush1.msra.mxu0 %v2275
        %2378 = vmatprep.subr.mxu0 %v2278
        %2379 = vmatpush1.msra.mxu0 %v2277
        %2380 = vmatprep.subr.mxu0 %v2280
        %2381 = vmatpush1.msra.mxu0 %v2279
        %2382 = vmatprep.subr.mxu0 %v2374
        %2383 = vmatpush1.msra.mxu0 %v2371
        %2384 = vmatprep.subr.mxu0 0.0
        %2385 = vmatpush1.msra.mxu0 0.0
        %2386 = vmatprep.subr.mxu0 0.0
        %2387 = vmatpush1.msra.mxu0 0.0
        %2388 = vmatprep.subr.mxu0 0.0
        %2389 = vmatpush1.msra.mxu0 0.0
        %2390 = vmatprep.subr.mxu0 0.0
        %2391 = vmatpush1.msra.mxu0 0.0
        %2392 = vmatprep.subr.mxu0 0.0
        %2393 = vmatpush1.msra.mxu0 0.0
        %2394 = vmatprep.subr.mxu0 0.0
        %2395 = vmatpush1.msra.mxu0 0.0
        %2396 = vmatprep.subr.mxu0 0.0
        %2397 = vmatpush1.msra.mxu0 0.0
        %2398 = vmatprep.subr.mxu0 0.0
        %2399 = vmatpush1.msra.mxu0 0.0
        %2400 = vmatprep.subr.mxu0 0.0
        %2401 = vmatpush1.msra.mxu0 0.0
        %2402 = vmatprep.subr.mxu0 0.0
        %2403 = vmatpush1.msra.mxu0 0.0
        %2404 = vmatprep.subr.mxu0 0.0
        %2405 = vmatpush1.msra.mxu0 0.0
        %2406 = vmatprep.subr.mxu0 0.0
        %2407 = vmatpush1.msra.mxu0 0.0
        %2408 = vmatprep.subr.mxu0 0.0
        %2409 = vmatpush1.msra.mxu0 0.0
        %2410 = vmatprep.subr.mxu0 0.0
        %2411 = vmatpush1.msra.mxu0 0.0
        %2412 = vmatprep.subr.mxu0 0.0
        %2413 = vmatpush1.msra.mxu0 0.0
        %2414 = vmatprep.subr.mxu0 0.0
        %2415 = vmatpush1.msra.mxu0 0.0
        %2416 = vmatprep.subr.mxu0 0.0
        %2417 = vmatpush1.msra.mxu0 0.0
        %2418 = vmatprep.subr.mxu0 0.0
        %2419 = vmatpush1.msra.mxu0 0.0
        %2420 = vmatprep.subr.mxu0 0.0
        %2421 = vmatpush1.msra.mxu0 0.0
        %2422 = vmatprep.subr.mxu0 0.0
        %2423 = vmatpush1.msra.mxu0 0.0
        %2424 = vmatprep.subr.mxu0 0.0
        %2425 = vmatpush1.msra.mxu0 0.0
        %2426 = vmatprep.subr.mxu0 0.0
        %2427 = vmatpush1.msra.mxu0 0.0
        %2428 = vmatprep.subr.mxu0 0.0
        %2429 = vmatpush1.msra.mxu0 0.0
        %2430 = vmatprep.subr.mxu0 0.0
        %2431 = vmatpush1.msra.mxu0 0.0
        %2432 = vmatprep.subr.mxu0 0.0
        %2433 = vmatpush1.msra.mxu0 0.0
        %2434 = vmatprep.subr.mxu0 0.0
        %2435 = vmatpush1.msra.mxu0 0.0
        %2436 = vmatprep.subr.mxu0 0.0
        %2437 = vmatpush1.msra.mxu0 0.0
        %2438 = vmatprep.subr.mxu0 0.0
        %2439 = vmatpush1.msra.mxu0 0.0
        %2440 = vmatprep.mubr.f32.mxu0 0.0
        %2441 = vmatmul.mubr.f32.gmra.mrb[0].mxu0 %v2284
        %v2442 = vpop.f32.mrb[0].mxu0
        %v2443 = vadd.f32 0.0, %v2442
        %v2444 = vpop.f32.mrb[0].mxu0
        %v2445 = vadd.f32 0.0, %v2444
        %2446 = vmatprep.mubr.f32.mxu0 0.0
        %2447 = vmatmul.mubr.f32.gmra.mrb[0].mxu0 %v2287
        %v2448 = vpop.f32.mrb[0].mxu0
        %v2449 = vadd.f32 0.0, %v2448
        %v2450 = vpop.f32.mrb[0].mxu0
        %v2451 = vadd.f32 0.0, %v2450
        %2452 = vmatprep.mubr.f32.mxu0 0.0
        %2453 = vmatmul.mubr.f32.gmra.mrb[0].mxu0 %v2290
        %v2454 = vpop.f32.mrb[0].mxu0
        %v2455 = vadd.f32 0.0, %v2454
        %v2456 = vpop.f32.mrb[0].mxu0
        %v2457 = vadd.f32 0.0, %v2456
        %2458 = vmatprep.mubr.f32.mxu0 0.0
        %2459 = vmatmul.mubr.f32.gmra.mrb[0].mxu0 %v2293
        %v2460 = vpop.f32.mrb[0].mxu0
        %v2461 = vadd.f32 0.0, %v2460
        %v2462 = vpop.f32.mrb[0].mxu0
        %v2463 = vadd.f32 0.0, %v2462
        %2464 = vmatprep.mubr.f32.mxu0 0.0
        %2465 = vmatmul.mubr.f32.gmra.mrb[0].mxu0 %v2296
        %v2466 = vpop.f32.mrb[0].mxu0
        %v2467 = vadd.f32 0.0, %v2466
        %v2468 = vpop.f32.mrb[0].mxu0
        %v2469 = vadd.f32 0.0, %v2468
        %2470 = vmatprep.mubr.f32.mxu0 0.0
        %2471 = vmatmul.mubr.f32.gmra.mrb[0].mxu0 %v2299
        %v2472 = vpop.f32.mrb[0].mxu0
        %v2473 = vadd.f32 0.0, %v2472
        %v2474 = vpop.f32.mrb[0].mxu0
        %v2475 = vadd.f32 0.0, %v2474
        %2476 = vmatprep.mubr.f32.mxu0 0.0
        %2477 = vmatmul.mubr.f32.gmra.mrb[0].mxu0 %v2302
        %v2478 = vpop.f32.mrb[0].mxu0
        %v2479 = vadd.f32 0.0, %v2478
        %v2480 = vpop.f32.mrb[0].mxu0
        %v2481 = vadd.f32 0.0, %v2480
        %2482 = vmatprep.mubr.f32.mxu0 0.0
        %2483 = vmatmul.mubr.f32.gmra.mrb[0].mxu0 %v2305
        %v2484 = vpop.f32.mrb[0].mxu0
        %v2485 = vadd.f32 0.0, %v2484
        %v2486 = vpop.f32.mrb[0].mxu0
        %v2487 = vadd.f32 0.0, %v2486
        %2488 = vmatprep.mubr.f32.mxu0 0.0
        %2489 = vmatmul.mubr.f32.gmra.mrb[0].mxu0 %v2308
        %v2490 = vpop.f32.mrb[0].mxu0
        %v2491 = vadd.f32 0.0, %v2490
        %v2492 = vpop.f32.mrb[0].mxu0
        %v2493 = vadd.f32 0.0, %v2492
        %2494 = vmatprep.mubr.f32.mxu0 0.0
        %2495 = vmatmul.mubr.f32.gmra.mrb[0].mxu0 %v2311
        %v2496 = vpop.f32.mrb[0].mxu0
        %v2497 = vadd.f32 0.0, %v2496
        %v2498 = vpop.f32.mrb[0].mxu0
        %v2499 = vadd.f32 0.0, %v2498
        %2500 = vmatprep.mubr.f32.mxu0 0.0
        %2501 = vmatmul.mubr.f32.gmra.mrb[0].mxu0 %v2314
        %v2502 = vpop.f32.mrb[0].mxu0
        %v2503 = vadd.f32 0.0, %v2502
        %v2504 = vpop.f32.mrb[0].mxu0
        %v2505 = vadd.f32 0.0, %v2504
        %2506 = vmatprep.mubr.f32.mxu0 0.0
        %2507 = vmatmul.mubr.f32.gmra.mrb[0].mxu0 %v2317
        %v2508 = vpop.f32.mrb[0].mxu0
        %v2509 = vadd.f32 0.0, %v2508
        %v2510 = vpop.f32.mrb[0].mxu0
        %v2511 = vadd.f32 0.0, %v2510
        %2512 = vmatprep.mubr.f32.mxu0 0.0
        %2513 = vmatmul.mubr.f32.gmra.mrb[0].mxu0 %v2320
        %v2514 = vpop.f32.mrb[0].mxu0
        %v2515 = vadd.f32 0.0, %v2514
        %v2516 = vpop.f32.mrb[0].mxu0
        %v2517 = vadd.f32 0.0, %v2516
        %2518 = vmatprep.mubr.f32.mxu0 0.0
        %2519 = vmatmul.mubr.f32.gmra.mrb[0].mxu0 %v2323
        %v2520 = vpop.f32.mrb[0].mxu0
        %v2521 = vadd.f32 0.0, %v2520
        %v2522 = vpop.f32.mrb[0].mxu0
        %v2523 = vadd.f32 0.0, %v2522
        %2524 = vmatprep.mubr.f32.mxu0 0.0
        %2525 = vmatmul.mubr.f32.gmra.mrb[0].mxu0 %v2326
        %v2526 = vpop.f32.mrb[0].mxu0
        %v2527 = vadd.f32 0.0, %v2526
        %v2528 = vpop.f32.mrb[0].mxu0
        %v2529 = vadd.f32 0.0, %v2528
        %2530 = vmatprep.mubr.f32.mxu0 0.0
        %2531 = vmatmul.mubr.f32.gmra.mrb[0].mxu0 %v2329
        %v2532 = vpop.f32.mrb[0].mxu0
        %v2533 = vadd.f32 0.0, %v2532
        %v2534 = vpop.f32.mrb[0].mxu0
        %v2535 = vadd.f32 0.0, %v2534
        %2536 = vmatprep.mubr.f32.mxu0 0.0
        %2537 = vmatmul.mubr.f32.gmra.mrb[0].mxu0 %v2332
        %v2538 = vpop.f32.mrb[0].mxu0
        %v2539 = vadd.f32 0.0, %v2538
        %v2540 = vpop.f32.mrb[0].mxu0
        %v2541 = vadd.f32 0.0, %v2540
        %2542 = vmatprep.mubr.f32.mxu0 0.0
        %2543 = vmatmul.mubr.f32.gmra.mrb[0].mxu0 %v2335
        %v2544 = vpop.f32.mrb[0].mxu0
        %v2545 = vadd.f32 0.0, %v2544
        %v2546 = vpop.f32.mrb[0].mxu0
        %v2547 = vadd.f32 0.0, %v2546
        %2548 = vmatprep.mubr.f32.mxu0 0.0
        %2549 = vmatmul.mubr.f32.gmra.mrb[0].mxu0 %v2338
        %v2550 = vpop.f32.mrb[0].mxu0
        %v2551 = vadd.f32 0.0, %v2550
        %v2552 = vpop.f32.mrb[0].mxu0
        %v2553 = vadd.f32 0.0, %v2552
        %2554 = vmatprep.mubr.f32.mxu0 0.0
        %2555 = vmatmul.mubr.f32.gmra.mrb[0].mxu0 %v2341
        %v2556 = vpop.f32.mrb[0].mxu0
        %v2557 = vadd.f32 0.0, %v2556
        %v2558 = vpop.f32.mrb[0].mxu0
        %v2559 = vadd.f32 0.0, %v2558
        %2560 = vmatprep.mubr.f32.mxu0 0.0
        %2561 = vmatmul.mubr.f32.gmra.mrb[0].mxu0 %v2344
        %v2562 = vpop.f32.mrb[0].mxu0
        %v2563 = vadd.f32 0.0, %v2562
        %v2564 = vpop.f32.mrb[0].mxu0
        %v2565 = vadd.f32 0.0, %v2564
        %2566 = vmatprep.mubr.f32.mxu0 0.0
        %2567 = vmatmul.mubr.f32.gmra.mrb[0].mxu0 %v2347
        %v2568 = vpop.f32.mrb[0].mxu0
        %v2569 = vadd.f32 0.0, %v2568
        %v2570 = vpop.f32.mrb[0].mxu0
        %v2571 = vadd.f32 0.0, %v2570
        %2572 = vmatprep.mubr.f32.mxu0 0.0
        %2573 = vmatmul.mubr.f32.gmra.mrb[0].mxu0 %v2350
        %v2574 = vpop.f32.mrb[0].mxu0
        %v2575 = vadd.f32 0.0, %v2574
        %v2576 = vpop.f32.mrb[0].mxu0
        %v2577 = vadd.f32 0.0, %v2576
        %2578 = vmatprep.mubr.f32.mxu0 0.0
        %2579 = vmatmul.mubr.f32.gmra.mrb[0].mxu0 %v2353
        %v2580 = vpop.f32.mrb[0].mxu0
        %v2581 = vadd.f32 0.0, %v2580
        %v2582 = vpop.f32.mrb[0].mxu0
        %v2583 = vadd.f32 0.0, %v2582
        %2584 = vmatprep.mubr.f32.mxu0 0.0
        %2585 = vmatmul.mubr.f32.gmra.mrb[0].mxu0 %v2356
        %v2586 = vpop.f32.mrb[0].mxu0
        %v2587 = vadd.f32 0.0, %v2586
        %v2588 = vpop.f32.mrb[0].mxu0
        %v2589 = vadd.f32 0.0, %v2588
        %2590 = vmatprep.mubr.f32.mxu0 0.0
        %2591 = vmatmul.mubr.f32.gmra.mrb[0].mxu0 %v2359
        %v2592 = vpop.f32.mrb[0].mxu0
        %v2593 = vadd.f32 0.0, %v2592
        %v2594 = vpop.f32.mrb[0].mxu0
        %v2595 = vadd.f32 0.0, %v2594
        %2596 = vmatprep.mubr.f32.mxu0 0.0
        %2597 = vmatmul.mubr.f32.gmra.mrb[0].mxu0 %v2362
        %v2598 = vpop.f32.mrb[0].mxu0
        %v2599 = vadd.f32 0.0, %v2598
        %v2600 = vpop.f32.mrb[0].mxu0
        %v2601 = vadd.f32 0.0, %v2600
        %2602 = vmatprep.mubr.f32.mxu0 0.0
        %2603 = vmatmul.mubr.f32.gmra.mrb[0].mxu0 %v2365
        %v2604 = vpop.f32.mrb[0].mxu0
        %v2605 = vadd.f32 0.0, %v2604
        %v2606 = vpop.f32.mrb[0].mxu0
        %v2607 = vadd.f32 0.0, %v2606
        %2608 = vmatprep.mubr.f32.mxu0 0.0
        %2609 = vmatmul.mubr.f32.gmra.mrb[0].mxu0 %v2368
        %v2610 = vpop.f32.mrb[0].mxu0
        %v2611 = vadd.f32 0.0, %v2610
        %v2612 = vpop.f32.mrb[0].mxu0
        %v2613 = vadd.f32 0.0, %v2612
        %2614 = vdwg.mxu0
        %v2615 = vadd.f32 %v1746, %v2443
        %v2616 = vadd.f32 %v1748, %v2445
        %v2617 = vadd.f32 %v1752, %v2449
        %v2618 = vadd.f32 %v1754, %v2451
        %v2619 = vadd.f32 %v1758, %v2455
        %v2620 = vadd.f32 %v1760, %v2457
        %v2621 = vadd.f32 %v1764, %v2461
        %v2622 = vadd.f32 %v1766, %v2463
        %v2623 = vadd.f32 %v1770, %v2467
        %v2624 = vadd.f32 %v1772, %v2469
        %v2625 = vadd.f32 %v1776, %v2473
        %v2626 = vadd.f32 %v1778, %v2475
        %v2627 = vadd.f32 %v1782, %v2479
        %v2628 = vadd.f32 %v1784, %v2481
        %v2629 = vadd.f32 %v1788, %v2485
        %v2630 = vadd.f32 %v1790, %v2487
        %v2631 = vadd.f32 %v1794, %v2491
        %v2632 = vadd.f32 %v1796, %v2493
        %v2633 = vadd.f32 %v1800, %v2497
        %v2634 = vadd.f32 %v1802, %v2499
        %v2635 = vadd.f32 %v1806, %v2503
        %v2636 = vadd.f32 %v1808, %v2505
        %v2637 = vadd.f32 %v1812, %v2509
        %v2638 = vadd.f32 %v1814, %v2511
        %v2639 = vadd.f32 %v1818, %v2515
        %v2640 = vadd.f32 %v1820, %v2517
        %v2641 = vadd.f32 %v1824, %v2521
        %v2642 = vadd.f32 %v1826, %v2523
        %v2643 = vadd.f32 %v1830, %v2527
        %v2644 = vadd.f32 %v1832, %v2529
        %v2645 = vadd.f32 %v1836, %v2533
        %v2646 = vadd.f32 %v1838, %v2535
        %v2647 = vadd.f32 %v1842, %v2539
        %v2648 = vadd.f32 %v1844, %v2541
        %v2649 = vadd.f32 %v1848, %v2545
        %v2650 = vadd.f32 %v1850, %v2547
        %v2651 = vadd.f32 %v1854, %v2551
        %v2652 = vadd.f32 %v1856, %v2553
        %v2653 = vadd.f32 %v1860, %v2557
        %v2654 = vadd.f32 %v1862, %v2559
        %v2655 = vadd.f32 %v1866, %v2563
        %v2656 = vadd.f32 %v1868, %v2565
        %v2657 = vadd.f32 %v1872, %v2569
        %v2658 = vadd.f32 %v1874, %v2571
        %v2659 = vadd.f32 %v1878, %v2575
        %v2660 = vadd.f32 %v1880, %v2577
        %v2661 = vadd.f32 %v1884, %v2581
        %v2662 = vadd.f32 %v1886, %v2583
        %v2663 = vadd.f32 %v1890, %v2587
        %v2664 = vadd.f32 %v1892, %v2589
        %v2665 = vadd.f32 %v1896, %v2593
        %v2666 = vadd.f32 %v1898, %v2595
        %v2667 = vadd.f32 %v1902, %v2599
        %v2668 = vadd.f32 %v1904, %v2601
        %v2669 = vadd.f32 %v1908, %v2605
        %v2670 = vadd.f32 %v1910, %v2607
        %v2671 = vadd.f32 %v1914, %v2611
        %v2672 = vadd.f32 %v1916, %v2613
        %s2673 = scalar_lea.vmem %s1, 1392
        %v2674 = vld [vmem:[%s2673] sm:$0xff]
        %v2675 = vld [vmem:[%s2673 + $0x8] sm:$0xff]
        %v2676 = vld [vmem:[%s2673 + $0x10] sm:$0xff]
        %v2677 = vld [vmem:[%s2673 + $0x18] sm:$0xff]
        %v2678 = vld [vmem:[%s2673 + $0x20] sm:$0xff]
        %v2679 = vld [vmem:[%s2673 + $0x28] sm:$0xff]
        %v2680 = vld [vmem:[%s2673 + $0x30] sm:$0xff]
        %v2681 = vld [vmem:[%s2673 + $0x38] sm:$0xff]
        %v2682 = vld [vmem:[%s2673 + $0x40] sm:$0xff]
        %v2683 = vld [vmem:[%s2673 + $0x48] sm:$0xff]
        %v2684 = vld [vmem:[%s2673 + $0x50] sm:$0xff]
        %v2685 = vld [vmem:[%s2673 + $0x58] sm:$0xff]
        %v2686 = vld [vmem:[%s2673 + $0x60] sm:$0xff]
        %v2687 = vld [vmem:[%s2673 + $0x68] sm:$0xff]
        %v2688 = vld [vmem:[%s2673 + $0x70] sm:$0xff]
        %v2689 = vld [vmem:[%s2673 + $0x78] sm:$0xff]
        %v2690 = vld [vmem:[%s2673 + $0x80] sm:$0xff]
        %v2691 = vld [vmem:[%s2673 + $0x88] sm:$0xff]
        %v2692 = vld [vmem:[%s2673 + $0x90] sm:$0xff]
        %v2693 = vld [vmem:[%s2673 + $0x98] sm:$0xff]
        %v2694 = vld [vmem:[%s2673 + $0xa0] sm:$0xff]
        %v2695 = vld [vmem:[%s2673 + $0xa8] sm:$0xff]
        %v2696 = vld [vmem:[%s2673 + $0xb0] sm:$0xff]
        %v2697 = vld [vmem:[%s2673 + $0xb8] sm:$0xff]
        %v2698 = vld [vmem:[%s2673 + $0xc0] sm:$0xff]
        %v2699 = vld [vmem:[%s2673 + $0xc8] sm:$0xff]
        %v2700 = vld [vmem:[%s2673 + $0xd0] sm:$0xff]
        %v2701 = vld [vmem:[%s2673 + $0xd8] sm:$0xff]
        %v2702 = vld [vmem:[%s2673 + $0xe0] sm:$0xff]
        %v2703 = vld [vmem:[%s2673 + $0xe8] sm:$0xff]
        %v2704 = vld [vmem:[%s2673 + $0xf0] sm:$0xff]
        %v2705 = vld [vmem:[%s2673 + $0xf8] sm:$0xff]
        %v2706 = vld [vmem:[%s2673 + $0x100] sm:$0xff]
        %v2707 = vld [vmem:[%s2673 + $0x108] sm:$0xff]
        %v2708 = vld [vmem:[%s2673 + $0x110] sm:$0xff]
        %v2709 = vld [vmem:[%s2673 + $0x118] sm:$0xff]
        %v2710 = vld [vmem:[%s2673 + $0x120] sm:$0xff]
        %v2711 = vld [vmem:[%s2673 + $0x128] sm:$0xff]
        %v2712 = vld [vmem:[%s2673 + $0x130] sm:$0xff]
        %v2713 = vld [vmem:[%s2673 + $0x138] sm:$0xff]
        %v2714 = vld [vmem:[%s2673 + $0x140] sm:$0xff]
        %v2715 = vld [vmem:[%s2673 + $0x148] sm:$0xff]
        %v2716 = vld [vmem:[%s2673 + $0x150] sm:$0xff]
        %v2717 = vld [vmem:[%s2673 + $0x158] sm:$0xff]
        %v2718 = vld [vmem:[%s2673 + $0x160] sm:$0xff]
        %v2719 = vld [vmem:[%s2673 + $0x168] sm:$0xff]
        %v2720 = vld [vmem:[%s2673 + $0x170] sm:$0xff]
        %v2721 = vld [vmem:[%s2673 + $0x178] sm:$0xff]
        %v2722 = vld [vmem:[%s2673 + $0x180] sm:$0xff]
        %v2723 = vld [vmem:[%s2673 + $0x188] sm:$0xff]
        %v2724 = vld [vmem:[%s2673 + $0x190] sm:$0xff]
        %v2725 = vld [vmem:[%s2673 + $0x198] sm:$0xff]
        %v2726 = vld [vmem:[%s2673 + $0x1a0] sm:$0xff]
        %v2727 = vld [vmem:[%s2673 + $0x1a8] sm:$0xff]
        %v2728 = vld [vmem:[%s2673 + $0x1b0] sm:$0xff]
        %v2729 = vld [vmem:[%s2673 + $0x1b8] sm:$0xff]
        %v2730 = vld [vmem:[%s2673 + $0x1c0] sm:$0xff]
        %v2731 = vld [vmem:[%s2673 + $0x1c8] sm:$0xff]
        %v2733 = vsel %vm581, %v2675, 0
        %v2736 = vsel %vm581, %v2677, 0
        %v2739 = vsel %vm581, %v2679, 0
        %v2742 = vsel %vm581, %v2681, 0
        %v2745 = vsel %vm581, %v2683, 0
        %v2748 = vsel %vm581, %v2685, 0
        %v2751 = vsel %vm581, %v2687, 0
        %v2754 = vsel %vm581, %v2689, 0
        %v2757 = vsel %vm581, %v2691, 0
        %v2760 = vsel %vm581, %v2693, 0
        %v2763 = vsel %vm581, %v2695, 0
        %v2766 = vsel %vm581, %v2697, 0
        %v2769 = vsel %vm581, %v2699, 0
        %v2772 = vsel %vm581, %v2701, 0
        %v2775 = vsel %vm581, %v2703, 0
        %v2778 = vsel %vm581, %v2705, 0
        %v2781 = vsel %vm581, %v2707, 0
        %v2784 = vsel %vm581, %v2709, 0
        %v2787 = vsel %vm581, %v2711, 0
        %v2790 = vsel %vm581, %v2713, 0
        %v2793 = vsel %vm581, %v2715, 0
        %v2796 = vsel %vm581, %v2717, 0
        %v2799 = vsel %vm581, %v2719, 0
        %v2802 = vsel %vm581, %v2721, 0
        %v2805 = vsel %vm581, %v2723, 0
        %v2808 = vsel %vm581, %v2725, 0
        %v2811 = vsel %vm581, %v2727, 0
        %v2814 = vsel %vm581, %v2729, 0
        %v2817 = vsel %vm581, %v2731, 0
        %2819 = vmatprep.subr.mxu0 0.0
        %2820 = vmatpush1.msra.mxu0 %v495
        %2821 = vmatprep.subr.mxu0 0.0
        %2822 = vmatpush1.msra.mxu0 %v496
        %2823 = vmatprep.subr.mxu0 0.0
        %2824 = vmatpush1.msra.mxu0 %v497
        %2825 = vmatprep.subr.mxu0 0.0
        %2826 = vmatpush1.msra.mxu0 %v498
        %2827 = vmatprep.subr.mxu0 0.0
        %2828 = vmatpush1.msra.mxu0 %v499
        %2829 = vmatprep.subr.mxu0 0.0
        %2830 = vmatpush1.msra.mxu0 %v500
        %2831 = vmatprep.subr.mxu0 0.0
        %2832 = vmatpush1.msra.mxu0 %v501
        %2833 = vmatprep.subr.mxu0 0.0
        %2834 = vmatpush1.msra.mxu0 %v502
        %2835 = vmatprep.subr.mxu0 0.0
        %2836 = vmatpush1.msra.mxu0 %v503
        %2837 = vmatprep.subr.mxu0 0.0
        %2838 = vmatpush1.msra.mxu0 %v504
        %2839 = vmatprep.subr.mxu0 0.0
        %2840 = vmatpush1.msra.mxu0 %v505
        %2841 = vmatprep.subr.mxu0 0.0
        %2842 = vmatpush1.msra.mxu0 %v506
        %2843 = vmatprep.subr.mxu0 0.0
        %2844 = vmatpush1.msra.mxu0 %v507
        %2845 = vmatprep.subr.mxu0 0.0
        %2846 = vmatpush1.msra.mxu0 %v508
        %2847 = vmatprep.subr.mxu0 0.0
        %2848 = vmatpush1.msra.mxu0 %v509
        %2849 = vmatprep.subr.mxu0 0.0
        %2850 = vmatpush1.msra.mxu0 %v510
        %2851 = vmatprep.subr.mxu0 0.0
        %2852 = vmatpush1.msra.mxu0 %v511
        %2853 = vmatprep.subr.mxu0 0.0
        %2854 = vmatpush1.msra.mxu0 %v512
        %2855 = vmatprep.subr.mxu0 0.0
        %2856 = vmatpush1.msra.mxu0 %v513
        %2857 = vmatprep.subr.mxu0 0.0
        %2858 = vmatpush1.msra.mxu0 %v514
        %2859 = vmatprep.subr.mxu0 0.0
        %2860 = vmatpush1.msra.mxu0 %v515
        %2861 = vmatprep.subr.mxu0 0.0
        %2862 = vmatpush1.msra.mxu0 %v516
        %2863 = vmatprep.subr.mxu0 0.0
        %2864 = vmatpush1.msra.mxu0 %v517
        %2865 = vmatprep.subr.mxu0 0.0
        %2866 = vmatpush1.msra.mxu0 %v518
        %2867 = vmatprep.subr.mxu0 0.0
        %2868 = vmatpush1.msra.mxu0 %v519
        %2869 = vmatprep.subr.mxu0 0.0
        %2870 = vmatpush1.msra.mxu0 %v520
        %2871 = vmatprep.subr.mxu0 0.0
        %2872 = vmatpush1.msra.mxu0 %v521
        %2873 = vmatprep.subr.mxu0 0.0
        %2874 = vmatpush1.msra.mxu0 %v522
        %2875 = vmatprep.subr.mxu0 0.0
        %2876 = vmatpush1.msra.mxu0 0.0
        %2877 = vmatprep.subr.mxu0 0.0
        %2878 = vmatpush1.msra.mxu0 0.0
        %2879 = vmatprep.subr.mxu0 0.0
        %2880 = vmatpush1.msra.mxu0 0.0
        %2881 = vmatprep.subr.mxu0 0.0
        %2882 = vmatpush1.msra.mxu0 0.0
        %2883 = vmatprep.mubr.f32.mxu0 %v2733
        %2884 = vmatmul.mubr.f32.gmra.mrb[0].mxu0 %v2674
        %v2885 = vpop.f32.mrb[0].mxu0
        %v2886 = vadd.f32 0.0, %v2885
        %v2887 = vpop.f32.mrb[0].mxu0
        %2888 = vmatprep.mubr.f32.mxu0 %v2736
        %2889 = vmatmul.mubr.f32.gmra.mrb[0].mxu0 %v2676
        %v2890 = vpop.f32.mrb[0].mxu0
        %v2891 = vadd.f32 0.0, %v2890
        %v2892 = vpop.f32.mrb[0].mxu0
        %2893 = vmatprep.mubr.f32.mxu0 %v2739
        %2894 = vmatmul.mubr.f32.gmra.mrb[0].mxu0 %v2678
        %v2895 = vpop.f32.mrb[0].mxu0
        %v2896 = vadd.f32 0.0, %v2895
        %v2897 = vpop.f32.mrb[0].mxu0
        %2898 = vmatprep.mubr.f32.mxu0 %v2742
        %2899 = vmatmul.mubr.f32.gmra.mrb[0].mxu0 %v2680
        %v2900 = vpop.f32.mrb[0].mxu0
        %v2901 = vadd.f32 0.0, %v2900
        %v2902 = vpop.f32.mrb[0].mxu0
        %2903 = vmatprep.mubr.f32.mxu0 %v2745
        %2904 = vmatmul.mubr.f32.gmra.mrb[0].mxu0 %v2682
        %v2905 = vpop.f32.mrb[0].mxu0
        %v2906 = vadd.f32 0.0, %v2905
        %v2907 = vpop.f32.mrb[0].mxu0
        %2908 = vmatprep.mubr.f32.mxu0 %v2748
        %2909 = vmatmul.mubr.f32.gmra.mrb[0].mxu0 %v2684
        %v2910 = vpop.f32.mrb[0].mxu0
        %v2911 = vadd.f32 0.0, %v2910
        %v2912 = vpop.f32.mrb[0].mxu0
        %2913 = vmatprep.mubr.f32.mxu0 %v2751
        %2914 = vmatmul.mubr.f32.gmra.mrb[0].mxu0 %v2686
        %v2915 = vpop.f32.mrb[0].mxu0
        %v2916 = vadd.f32 0.0, %v2915
        %v2917 = vpop.f32.mrb[0].mxu0
        %2918 = vmatprep.mubr.f32.mxu0 %v2754
        %2919 = vmatmul.mubr.f32.gmra.mrb[0].mxu0 %v2688
        %v2920 = vpop.f32.mrb[0].mxu0
        %v2921 = vadd.f32 0.0, %v2920
        %v2922 = vpop.f32.mrb[0].mxu0
        %2923 = vmatprep.mubr.f32.mxu0 %v2757
        %2924 = vmatmul.mubr.f32.gmra.mrb[0].mxu0 %v2690
        %v2925 = vpop.f32.mrb[0].mxu0
        %v2926 = vadd.f32 0.0, %v2925
        %v2927 = vpop.f32.mrb[0].mxu0
        %2928 = vmatprep.mubr.f32.mxu0 %v2760
        %2929 = vmatmul.mubr.f32.gmra.mrb[0].mxu0 %v2692
        %v2930 = vpop.f32.mrb[0].mxu0
        %v2931 = vadd.f32 0.0, %v2930
        %v2932 = vpop.f32.mrb[0].mxu0
        %2933 = vmatprep.mubr.f32.mxu0 %v2763
        %2934 = vmatmul.mubr.f32.gmra.mrb[0].mxu0 %v2694
        %v2935 = vpop.f32.mrb[0].mxu0
        %v2936 = vadd.f32 0.0, %v2935
        %v2937 = vpop.f32.mrb[0].mxu0
        %2938 = vmatprep.mubr.f32.mxu0 %v2766
        %2939 = vmatmul.mubr.f32.gmra.mrb[0].mxu0 %v2696
        %v2940 = vpop.f32.mrb[0].mxu0
        %v2941 = vadd.f32 0.0, %v2940
        %v2942 = vpop.f32.mrb[0].mxu0
        %2943 = vmatprep.mubr.f32.mxu0 %v2769
        %2944 = vmatmul.mubr.f32.gmra.mrb[0].mxu0 %v2698
        %v2945 = vpop.f32.mrb[0].mxu0
        %v2946 = vadd.f32 0.0, %v2945
        %v2947 = vpop.f32.mrb[0].mxu0
        %2948 = vmatprep.mubr.f32.mxu0 %v2772
        %2949 = vmatmul.mubr.f32.gmra.mrb[0].mxu0 %v2700
        %v2950 = vpop.f32.mrb[0].mxu0
        %v2951 = vadd.f32 0.0, %v2950
        %v2952 = vpop.f32.mrb[0].mxu0
        %2953 = vmatprep.mubr.f32.mxu0 %v2775
        %2954 = vmatmul.mubr.f32.gmra.mrb[0].mxu0 %v2702
        %v2955 = vpop.f32.mrb[0].mxu0
        %v2956 = vadd.f32 0.0, %v2955
        %v2957 = vpop.f32.mrb[0].mxu0
        %2958 = vmatprep.mubr.f32.mxu0 %v2778
        %2959 = vmatmul.mubr.f32.gmra.mrb[0].mxu0 %v2704
        %v2960 = vpop.f32.mrb[0].mxu0
        %v2961 = vadd.f32 0.0, %v2960
        %v2962 = vpop.f32.mrb[0].mxu0
        %2963 = vmatprep.mubr.f32.mxu0 %v2781
        %2964 = vmatmul.mubr.f32.gmra.mrb[0].mxu0 %v2706
        %v2965 = vpop.f32.mrb[0].mxu0
        %v2966 = vadd.f32 0.0, %v2965
        %v2967 = vpop.f32.mrb[0].mxu0
        %2968 = vmatprep.mubr.f32.mxu0 %v2784
        %2969 = vmatmul.mubr.f32.gmra.mrb[0].mxu0 %v2708
        %v2970 = vpop.f32.mrb[0].mxu0
        %v2971 = vadd.f32 0.0, %v2970
        %v2972 = vpop.f32.mrb[0].mxu0
        %2973 = vmatprep.mubr.f32.mxu0 %v2787
        %2974 = vmatmul.mubr.f32.gmra.mrb[0].mxu0 %v2710
        %v2975 = vpop.f32.mrb[0].mxu0
        %v2976 = vadd.f32 0.0, %v2975
        %v2977 = vpop.f32.mrb[0].mxu0
        %2978 = vmatprep.mubr.f32.mxu0 %v2790
        %2979 = vmatmul.mubr.f32.gmra.mrb[0].mxu0 %v2712
        %v2980 = vpop.f32.mrb[0].mxu0
        %v2981 = vadd.f32 0.0, %v2980
        %v2982 = vpop.f32.mrb[0].mxu0
        %2983 = vmatprep.mubr.f32.mxu0 %v2793
        %2984 = vmatmul.mubr.f32.gmra.mrb[0].mxu0 %v2714
        %v2985 = vpop.f32.mrb[0].mxu0
        %v2986 = vadd.f32 0.0, %v2985
        %v2987 = vpop.f32.mrb[0].mxu0
        %2988 = vmatprep.mubr.f32.mxu0 %v2796
        %2989 = vmatmul.mubr.f32.gmra.mrb[0].mxu0 %v2716
        %v2990 = vpop.f32.mrb[0].mxu0
        %v2991 = vadd.f32 0.0, %v2990
        %v2992 = vpop.f32.mrb[0].mxu0
        %2993 = vmatprep.mubr.f32.mxu0 %v2799
        %2994 = vmatmul.mubr.f32.gmra.mrb[0].mxu0 %v2718
        %v2995 = vpop.f32.mrb[0].mxu0
        %v2996 = vadd.f32 0.0, %v2995
        %v2997 = vpop.f32.mrb[0].mxu0
        %2998 = vmatprep.mubr.f32.mxu0 %v2802
        %2999 = vmatmul.mubr.f32.gmra.mrb[0].mxu0 %v2720
        %v3000 = vpop.f32.mrb[0].mxu0
        %v3001 = vadd.f32 0.0, %v3000
        %v3002 = vpop.f32.mrb[0].mxu0
        %3003 = vmatprep.mubr.f32.mxu0 %v2805
        %3004 = vmatmul.mubr.f32.gmra.mrb[0].mxu0 %v2722
        %v3005 = vpop.f32.mrb[0].mxu0
        %v3006 = vadd.f32 0.0, %v3005
        %v3007 = vpop.f32.mrb[0].mxu0
        %3008 = vmatprep.mubr.f32.mxu0 %v2808
        %3009 = vmatmul.mubr.f32.gmra.mrb[0].mxu0 %v2724
        %v3010 = vpop.f32.mrb[0].mxu0
        %v3011 = vadd.f32 0.0, %v3010
        %v3012 = vpop.f32.mrb[0].mxu0
        %3013 = vmatprep.mubr.f32.mxu0 %v2811
        %3014 = vmatmul.mubr.f32.gmra.mrb[0].mxu0 %v2726
        %v3015 = vpop.f32.mrb[0].mxu0
        %v3016 = vadd.f32 0.0, %v3015
        %v3017 = vpop.f32.mrb[0].mxu0
        %3018 = vmatprep.mubr.f32.mxu0 %v2814
        %3019 = vmatmul.mubr.f32.gmra.mrb[0].mxu0 %v2728
        %v3020 = vpop.f32.mrb[0].mxu0
        %v3021 = vadd.f32 0.0, %v3020
        %v3022 = vpop.f32.mrb[0].mxu0
        %3023 = vmatprep.mubr.f32.mxu0 %v2817
        %3024 = vmatmul.mubr.f32.gmra.mrb[0].mxu0 %v2730
        %v3025 = vpop.f32.mrb[0].mxu0
        %v3026 = vadd.f32 0.0, %v3025
        %v3027 = vpop.f32.mrb[0].mxu0
        %3028 = vdwg.mxu0
        %s3029 = scalar_lea.vmem %s2, 192
        %v3030 = vld [vmem:[%s3029] sm:$0xff]
        %v3031 = vld [vmem:[%s3029 + $0x8] sm:$0xff]
        %v3032 = vld [vmem:[%s3029 + $0x10] sm:$0xff]
        %v3033 = vld [vmem:[%s3029 + $0x18] sm:$0xff]
        %v3034 = vld [vmem:[%s3029 + $0x20] sm:$0xff]
        %v3035 = vld [vmem:[%s3029 + $0x28] sm:$0xff]
        %v3036 = vld [vmem:[%s3029 + $0x30] sm:$0xf]
        %v3037 = vld [vmem:[%s3029 + $0x38] sm:$0xf]
        %v3039 = vsel %vm1252, %v2886, 0
        %v3042 = vsel %vm1252, %v2891, 0
        %v3045 = vsel %vm1252, %v2896, 0
        %v3048 = vsel %vm1252, %v2901, 0
        %v3051 = vsel %vm1252, %v2906, 0
        %v3054 = vsel %vm1252, %v2911, 0
        %v3057 = vsel %vm1252, %v2916, 0
        %v3060 = vsel %vm1252, %v2921, 0
        %v3063 = vsel %vm1252, %v2926, 0
        %v3066 = vsel %vm1252, %v2931, 0
        %v3069 = vsel %vm1252, %v2936, 0
        %v3072 = vsel %vm1252, %v2941, 0
        %v3075 = vsel %vm1252, %v2946, 0
        %v3078 = vsel %vm1252, %v2951, 0
        %v3081 = vsel %vm1252, %v2956, 0
        %v3084 = vsel %vm1252, %v2961, 0
        %v3087 = vsel %vm1252, %v2966, 0
        %v3090 = vsel %vm1252, %v2971, 0
        %v3093 = vsel %vm1252, %v2976, 0
        %v3096 = vsel %vm1252, %v2981, 0
        %v3099 = vsel %vm1252, %v2986, 0
        %v3102 = vsel %vm1252, %v2991, 0
        %v3105 = vsel %vm1252, %v2996, 0
        %v3108 = vsel %vm1252, %v3001, 0
        %v3111 = vsel %vm1252, %v3006, 0
        %v3114 = vsel %vm1252, %v3011, 0
        %v3117 = vsel %vm1252, %v3016, 0
        %v3120 = vsel %vm1252, %v3021, 0
        %v3123 = vsel %vm1252, %v3026, 0
        %v3126 = vsel %vm1340, %v3036, 0
        %v3129 = vsel %vm1340, %v3037, 0
        %3131 = vmatprep.subr.mxu0 %v3031
        %3132 = vmatpush1.msra.mxu0 %v3030
        %3133 = vmatprep.subr.mxu0 %v3033
        %3134 = vmatpush1.msra.mxu0 %v3032
        %3135 = vmatprep.subr.mxu0 %v3035
        %3136 = vmatpush1.msra.mxu0 %v3034
        %3137 = vmatprep.subr.mxu0 %v3129
        %3138 = vmatpush1.msra.mxu0 %v3126
        %3139 = vmatprep.subr.mxu0 0.0
        %3140 = vmatpush1.msra.mxu0 0.0
        %3141 = vmatprep.subr.mxu0 0.0
        %3142 = vmatpush1.msra.mxu0 0.0
        %3143 = vmatprep.subr.mxu0 0.0
        %3144 = vmatpush1.msra.mxu0 0.0
        %3145 = vmatprep.subr.mxu0 0.0
        %3146 = vmatpush1.msra.mxu0 0.0
        %3147 = vmatprep.subr.mxu0 0.0
        %3148 = vmatpush1.msra.mxu0 0.0
        %3149 = vmatprep.subr.mxu0 0.0
        %3150 = vmatpush1.msra.mxu0 0.0
        %3151 = vmatprep.subr.mxu0 0.0
        %3152 = vmatpush1.msra.mxu0 0.0
        %3153 = vmatprep.subr.mxu0 0.0
        %3154 = vmatpush1.msra.mxu0 0.0
        %3155 = vmatprep.subr.mxu0 0.0
        %3156 = vmatpush1.msra.mxu0 0.0
        %3157 = vmatprep.subr.mxu0 0.0
        %3158 = vmatpush1.msra.mxu0 0.0
        %3159 = vmatprep.subr.mxu0 0.0
        %3160 = vmatpush1.msra.mxu0 0.0
        %3161 = vmatprep.subr.mxu0 0.0
        %3162 = vmatpush1.msra.mxu0 0.0
        %3163 = vmatprep.subr.mxu0 0.0
        %3164 = vmatpush1.msra.mxu0 0.0
        %3165 = vmatprep.subr.mxu0 0.0
        %3166 = vmatpush1.msra.mxu0 0.0
        %3167 = vmatprep.subr.mxu0 0.0
        %3168 = vmatpush1.msra.mxu0 0.0
        %3169 = vmatprep.subr.mxu0 0.0
        %3170 = vmatpush1.msra.mxu0 0.0
        %3171 = vmatprep.subr.mxu0 0.0
        %3172 = vmatpush1.msra.mxu0 0.0
        %3173 = vmatprep.subr.mxu0 0.0
        %3174 = vmatpush1.msra.mxu0 0.0
        %3175 = vmatprep.subr.mxu0 0.0
        %3176 = vmatpush1.msra.mxu0 0.0
        %3177 = vmatprep.subr.mxu0 0.0
        %3178 = vmatpush1.msra.mxu0 0.0
        %3179 = vmatprep.subr.mxu0 0.0
        %3180 = vmatpush1.msra.mxu0 0.0
        %3181 = vmatprep.subr.mxu0 0.0
        %3182 = vmatpush1.msra.mxu0 0.0
        %3183 = vmatprep.subr.mxu0 0.0
        %3184 = vmatpush1.msra.mxu0 0.0
        %3185 = vmatprep.subr.mxu0 0.0
        %3186 = vmatpush1.msra.mxu0 0.0
        %3187 = vmatprep.subr.mxu0 0.0
        %3188 = vmatpush1.msra.mxu0 0.0
        %3189 = vmatprep.subr.mxu0 0.0
        %3190 = vmatpush1.msra.mxu0 0.0
        %3191 = vmatprep.subr.mxu0 0.0
        %3192 = vmatpush1.msra.mxu0 0.0
        %3193 = vmatprep.subr.mxu0 0.0
        %3194 = vmatpush1.msra.mxu0 0.0
        %3195 = vmatprep.mubr.f32.mxu0 0.0
        %3196 = vmatmul.mubr.f32.gmra.mrb[0].mxu0 %v3039
        %v3197 = vpop.f32.mrb[0].mxu0
        %v3198 = vadd.f32 0.0, %v3197
        %v3199 = vpop.f32.mrb[0].mxu0
        %v3200 = vadd.f32 0.0, %v3199
        %3201 = vmatprep.mubr.f32.mxu0 0.0
        %3202 = vmatmul.mubr.f32.gmra.mrb[0].mxu0 %v3042
        %v3203 = vpop.f32.mrb[0].mxu0
        %v3204 = vadd.f32 0.0, %v3203
        %v3205 = vpop.f32.mrb[0].mxu0
        %v3206 = vadd.f32 0.0, %v3205
        %3207 = vmatprep.mubr.f32.mxu0 0.0
        %3208 = vmatmul.mubr.f32.gmra.mrb[0].mxu0 %v3045
        %v3209 = vpop.f32.mrb[0].mxu0
        %v3210 = vadd.f32 0.0, %v3209
        %v3211 = vpop.f32.mrb[0].mxu0
        %v3212 = vadd.f32 0.0, %v3211
        %3213 = vmatprep.mubr.f32.mxu0 0.0
        %3214 = vmatmul.mubr.f32.gmra.mrb[0].mxu0 %v3048
        %v3215 = vpop.f32.mrb[0].mxu0
        %v3216 = vadd.f32 0.0, %v3215
        %v3217 = vpop.f32.mrb[0].mxu0
        %v3218 = vadd.f32 0.0, %v3217
        %3219 = vmatprep.mubr.f32.mxu0 0.0
        %3220 = vmatmul.mubr.f32.gmra.mrb[0].mxu0 %v3051
        %v3221 = vpop.f32.mrb[0].mxu0
        %v3222 = vadd.f32 0.0, %v3221
        %v3223 = vpop.f32.mrb[0].mxu0
        %v3224 = vadd.f32 0.0, %v3223
        %3225 = vmatprep.mubr.f32.mxu0 0.0
        %3226 = vmatmul.mubr.f32.gmra.mrb[0].mxu0 %v3054
        %v3227 = vpop.f32.mrb[0].mxu0
        %v3228 = vadd.f32 0.0, %v3227
        %v3229 = vpop.f32.mrb[0].mxu0
        %v3230 = vadd.f32 0.0, %v3229
        %3231 = vmatprep.mubr.f32.mxu0 0.0
        %3232 = vmatmul.mubr.f32.gmra.mrb[0].mxu0 %v3057
        %v3233 = vpop.f32.mrb[0].mxu0
        %v3234 = vadd.f32 0.0, %v3233
        %v3235 = vpop.f32.mrb[0].mxu0
        %v3236 = vadd.f32 0.0, %v3235
        %3237 = vmatprep.mubr.f32.mxu0 0.0
        %3238 = vmatmul.mubr.f32.gmra.mrb[0].mxu0 %v3060
        %v3239 = vpop.f32.mrb[0].mxu0
        %v3240 = vadd.f32 0.0, %v3239
        %v3241 = vpop.f32.mrb[0].mxu0
        %v3242 = vadd.f32 0.0, %v3241
        %3243 = vmatprep.mubr.f32.mxu0 0.0
        %3244 = vmatmul.mubr.f32.gmra.mrb[0].mxu0 %v3063
        %v3245 = vpop.f32.mrb[0].mxu0
        %v3246 = vadd.f32 0.0, %v3245
        %v3247 = vpop.f32.mrb[0].mxu0
        %v3248 = vadd.f32 0.0, %v3247
        %3249 = vmatprep.mubr.f32.mxu0 0.0
        %3250 = vmatmul.mubr.f32.gmra.mrb[0].mxu0 %v3066
        %v3251 = vpop.f32.mrb[0].mxu0
        %v3252 = vadd.f32 0.0, %v3251
        %v3253 = vpop.f32.mrb[0].mxu0
        %v3254 = vadd.f32 0.0, %v3253
        %3255 = vmatprep.mubr.f32.mxu0 0.0
        %3256 = vmatmul.mubr.f32.gmra.mrb[0].mxu0 %v3069
        %v3257 = vpop.f32.mrb[0].mxu0
        %v3258 = vadd.f32 0.0, %v3257
        %v3259 = vpop.f32.mrb[0].mxu0
        %v3260 = vadd.f32 0.0, %v3259
        %3261 = vmatprep.mubr.f32.mxu0 0.0
        %3262 = vmatmul.mubr.f32.gmra.mrb[0].mxu0 %v3072
        %v3263 = vpop.f32.mrb[0].mxu0
        %v3264 = vadd.f32 0.0, %v3263
        %v3265 = vpop.f32.mrb[0].mxu0
        %v3266 = vadd.f32 0.0, %v3265
        %3267 = vmatprep.mubr.f32.mxu0 0.0
        %3268 = vmatmul.mubr.f32.gmra.mrb[0].mxu0 %v3075
        %v3269 = vpop.f32.mrb[0].mxu0
        %v3270 = vadd.f32 0.0, %v3269
        %v3271 = vpop.f32.mrb[0].mxu0
        %v3272 = vadd.f32 0.0, %v3271
        %3273 = vmatprep.mubr.f32.mxu0 0.0
        %3274 = vmatmul.mubr.f32.gmra.mrb[0].mxu0 %v3078
        %v3275 = vpop.f32.mrb[0].mxu0
        %v3276 = vadd.f32 0.0, %v3275
        %v3277 = vpop.f32.mrb[0].mxu0
        %v3278 = vadd.f32 0.0, %v3277
        %3279 = vmatprep.mubr.f32.mxu0 0.0
        %3280 = vmatmul.mubr.f32.gmra.mrb[0].mxu0 %v3081
        %v3281 = vpop.f32.mrb[0].mxu0
        %v3282 = vadd.f32 0.0, %v3281
        %v3283 = vpop.f32.mrb[0].mxu0
        %v3284 = vadd.f32 0.0, %v3283
        %3285 = vmatprep.mubr.f32.mxu0 0.0
        %3286 = vmatmul.mubr.f32.gmra.mrb[0].mxu0 %v3084
        %v3287 = vpop.f32.mrb[0].mxu0
        %v3288 = vadd.f32 0.0, %v3287
        %v3289 = vpop.f32.mrb[0].mxu0
        %v3290 = vadd.f32 0.0, %v3289
        %3291 = vmatprep.mubr.f32.mxu0 0.0
        %3292 = vmatmul.mubr.f32.gmra.mrb[0].mxu0 %v3087
        %v3293 = vpop.f32.mrb[0].mxu0
        %v3294 = vadd.f32 0.0, %v3293
        %v3295 = vpop.f32.mrb[0].mxu0
        %v3296 = vadd.f32 0.0, %v3295
        %3297 = vmatprep.mubr.f32.mxu0 0.0
        %3298 = vmatmul.mubr.f32.gmra.mrb[0].mxu0 %v3090
        %v3299 = vpop.f32.mrb[0].mxu0
        %v3300 = vadd.f32 0.0, %v3299
        %v3301 = vpop.f32.mrb[0].mxu0
        %v3302 = vadd.f32 0.0, %v3301
        %3303 = vmatprep.mubr.f32.mxu0 0.0
        %3304 = vmatmul.mubr.f32.gmra.mrb[0].mxu0 %v3093
        %v3305 = vpop.f32.mrb[0].mxu0
        %v3306 = vadd.f32 0.0, %v3305
        %v3307 = vpop.f32.mrb[0].mxu0
        %v3308 = vadd.f32 0.0, %v3307
        %3309 = vmatprep.mubr.f32.mxu0 0.0
        %3310 = vmatmul.mubr.f32.gmra.mrb[0].mxu0 %v3096
        %v3311 = vpop.f32.mrb[0].mxu0
        %v3312 = vadd.f32 0.0, %v3311
        %v3313 = vpop.f32.mrb[0].mxu0
        %v3314 = vadd.f32 0.0, %v3313
        %3315 = vmatprep.mubr.f32.mxu0 0.0
        %3316 = vmatmul.mubr.f32.gmra.mrb[0].mxu0 %v3099
        %v3317 = vpop.f32.mrb[0].mxu0
        %v3318 = vadd.f32 0.0, %v3317
        %v3319 = vpop.f32.mrb[0].mxu0
        %v3320 = vadd.f32 0.0, %v3319
        %3321 = vmatprep.mubr.f32.mxu0 0.0
        %3322 = vmatmul.mubr.f32.gmra.mrb[0].mxu0 %v3102
        %v3323 = vpop.f32.mrb[0].mxu0
        %v3324 = vadd.f32 0.0, %v3323
        %v3325 = vpop.f32.mrb[0].mxu0
        %v3326 = vadd.f32 0.0, %v3325
        %3327 = vmatprep.mubr.f32.mxu0 0.0
        %3328 = vmatmul.mubr.f32.gmra.mrb[0].mxu0 %v3105
        %v3329 = vpop.f32.mrb[0].mxu0
        %v3330 = vadd.f32 0.0, %v3329
        %v3331 = vpop.f32.mrb[0].mxu0
        %v3332 = vadd.f32 0.0, %v3331
        %3333 = vmatprep.mubr.f32.mxu0 0.0
        %3334 = vmatmul.mubr.f32.gmra.mrb[0].mxu0 %v3108
        %v3335 = vpop.f32.mrb[0].mxu0
        %v3336 = vadd.f32 0.0, %v3335
        %v3337 = vpop.f32.mrb[0].mxu0
        %v3338 = vadd.f32 0.0, %v3337
        %3339 = vmatprep.mubr.f32.mxu0 0.0
        %3340 = vmatmul.mubr.f32.gmra.mrb[0].mxu0 %v3111
        %v3341 = vpop.f32.mrb[0].mxu0
        %v3342 = vadd.f32 0.0, %v3341
        %v3343 = vpop.f32.mrb[0].mxu0
        %v3344 = vadd.f32 0.0, %v3343
        %3345 = vmatprep.mubr.f32.mxu0 0.0
        %3346 = vmatmul.mubr.f32.gmra.mrb[0].mxu0 %v3114
        %v3347 = vpop.f32.mrb[0].mxu0
        %v3348 = vadd.f32 0.0, %v3347
        %v3349 = vpop.f32.mrb[0].mxu0
        %v3350 = vadd.f32 0.0, %v3349
        %3351 = vmatprep.mubr.f32.mxu0 0.0
        %3352 = vmatmul.mubr.f32.gmra.mrb[0].mxu0 %v3117
        %v3353 = vpop.f32.mrb[0].mxu0
        %v3354 = vadd.f32 0.0, %v3353
        %v3355 = vpop.f32.mrb[0].mxu0
        %v3356 = vadd.f32 0.0, %v3355
        %3357 = vmatprep.mubr.f32.mxu0 0.0
        %3358 = vmatmul.mubr.f32.gmra.mrb[0].mxu0 %v3120
        %v3359 = vpop.f32.mrb[0].mxu0
        %v3360 = vadd.f32 0.0, %v3359
        %v3361 = vpop.f32.mrb[0].mxu0
        %v3362 = vadd.f32 0.0, %v3361
        %3363 = vmatprep.mubr.f32.mxu0 0.0
        %3364 = vmatmul.mubr.f32.gmra.mrb[0].mxu0 %v3123
        %v3365 = vpop.f32.mrb[0].mxu0
        %v3366 = vadd.f32 0.0, %v3365
        %v3367 = vpop.f32.mrb[0].mxu0
        %v3368 = vadd.f32 0.0, %v3367
        %3369 = vdwg.mxu0
        %v3370 = vadd.f32 %v2615, %v3198
        %v3371 = vadd.f32 %v2616, %v3200
        %v3372 = vadd.f32 %v2617, %v3204
        %v3373 = vadd.f32 %v2618, %v3206
        %v3374 = vadd.f32 %v2619, %v3210
        %v3375 = vadd.f32 %v2620, %v3212
        %v3376 = vadd.f32 %v2621, %v3216
        %v3377 = vadd.f32 %v2622, %v3218
        %v3378 = vadd.f32 %v2623, %v3222
        %v3379 = vadd.f32 %v2624, %v3224
        %v3380 = vadd.f32 %v2625, %v3228
        %v3381 = vadd.f32 %v2626, %v3230
        %v3382 = vadd.f32 %v2627, %v3234
        %v3383 = vadd.f32 %v2628, %v3236
        %v3384 = vadd.f32 %v2629, %v3240
        %v3385 = vadd.f32 %v2630, %v3242
        %v3386 = vadd.f32 %v2631, %v3246
        %v3387 = vadd.f32 %v2632, %v3248
        %v3388 = vadd.f32 %v2633, %v3252
        %v3389 = vadd.f32 %v2634, %v3254
        %v3390 = vadd.f32 %v2635, %v3258
        %v3391 = vadd.f32 %v2636, %v3260
        %v3392 = vadd.f32 %v2637, %v3264
        %v3393 = vadd.f32 %v2638, %v3266
        %v3394 = vadd.f32 %v2639, %v3270
        %v3395 = vadd.f32 %v2640, %v3272
        %v3396 = vadd.f32 %v2641, %v3276
        %v3397 = vadd.f32 %v2642, %v3278
        %v3398 = vadd.f32 %v2643, %v3282
        %v3399 = vadd.f32 %v2644, %v3284
        %v3400 = vadd.f32 %v2645, %v3288
        %v3401 = vadd.f32 %v2646, %v3290
        %v3402 = vadd.f32 %v2647, %v3294
        %v3403 = vadd.f32 %v2648, %v3296
        %v3404 = vadd.f32 %v2649, %v3300
        %v3405 = vadd.f32 %v2650, %v3302
        %v3406 = vadd.f32 %v2651, %v3306
        %v3407 = vadd.f32 %v2652, %v3308
        %v3408 = vadd.f32 %v2653, %v3312
        %v3409 = vadd.f32 %v2654, %v3314
        %v3410 = vadd.f32 %v2655, %v3318
        %v3411 = vadd.f32 %v2656, %v3320
        %v3412 = vadd.f32 %v2657, %v3324
        %v3413 = vadd.f32 %v2658, %v3326
        %v3414 = vadd.f32 %v2659, %v3330
        %v3415 = vadd.f32 %v2660, %v3332
        %v3416 = vadd.f32 %v2661, %v3336
        %v3417 = vadd.f32 %v2662, %v3338
        %v3418 = vadd.f32 %v2663, %v3342
        %v3419 = vadd.f32 %v2664, %v3344
        %v3420 = vadd.f32 %v2665, %v3348
        %v3421 = vadd.f32 %v2666, %v3350
        %v3422 = vadd.f32 %v2667, %v3354
        %v3423 = vadd.f32 %v2668, %v3356
        %v3424 = vadd.f32 %v2669, %v3360
        %v3425 = vadd.f32 %v2670, %v3362
        %v3426 = vadd.f32 %v2671, %v3366
        %v3427 = vadd.f32 %v2672, %v3368
        %s3428 = scalar_lea.vmem %s1, 1856
        %v3429 = vld [vmem:[%s3428] sm:$0xff]
        %v3430 = vld [vmem:[%s3428 + $0x8] sm:$0xff]
        %v3431 = vld [vmem:[%s3428 + $0x10] sm:$0xff]
        %v3432 = vld [vmem:[%s3428 + $0x18] sm:$0xff]
        %v3433 = vld [vmem:[%s3428 + $0x20] sm:$0xff]
        %v3434 = vld [vmem:[%s3428 + $0x28] sm:$0xff]
        %v3435 = vld [vmem:[%s3428 + $0x30] sm:$0xff]
        %v3436 = vld [vmem:[%s3428 + $0x38] sm:$0xff]
        %v3437 = vld [vmem:[%s3428 + $0x40] sm:$0xff]
        %v3438 = vld [vmem:[%s3428 + $0x48] sm:$0xff]
        %v3439 = vld [vmem:[%s3428 + $0x50] sm:$0xff]
        %v3440 = vld [vmem:[%s3428 + $0x58] sm:$0xff]
        %v3441 = vld [vmem:[%s3428 + $0x60] sm:$0xff]
        %v3442 = vld [vmem:[%s3428 + $0x68] sm:$0xff]
        %v3443 = vld [vmem:[%s3428 + $0x70] sm:$0xff]
        %v3444 = vld [vmem:[%s3428 + $0x78] sm:$0xff]
        %v3445 = vld [vmem:[%s3428 + $0x80] sm:$0xff]
        %v3446 = vld [vmem:[%s3428 + $0x88] sm:$0xff]
        %v3447 = vld [vmem:[%s3428 + $0x90] sm:$0xff]
        %v3448 = vld [vmem:[%s3428 + $0x98] sm:$0xff]
        %v3449 = vld [vmem:[%s3428 + $0xa0] sm:$0xff]
        %v3450 = vld [vmem:[%s3428 + $0xa8] sm:$0xff]
        %v3451 = vld [vmem:[%s3428 + $0xb0] sm:$0xff]
        %v3452 = vld [vmem:[%s3428 + $0xb8] sm:$0xff]
        %v3453 = vld [vmem:[%s3428 + $0xc0] sm:$0xff]
        %v3454 = vld [vmem:[%s3428 + $0xc8] sm:$0xff]
        %v3455 = vld [vmem:[%s3428 + $0xd0] sm:$0xff]
        %v3456 = vld [vmem:[%s3428 + $0xd8] sm:$0xff]
        %v3457 = vld [vmem:[%s3428 + $0xe0] sm:$0xff]
        %v3458 = vld [vmem:[%s3428 + $0xe8] sm:$0xff]
        %v3459 = vld [vmem:[%s3428 + $0xf0] sm:$0xff]
        %v3460 = vld [vmem:[%s3428 + $0xf8] sm:$0xff]
        %v3461 = vld [vmem:[%s3428 + $0x100] sm:$0xff]
        %v3462 = vld [vmem:[%s3428 + $0x108] sm:$0xff]
        %v3463 = vld [vmem:[%s3428 + $0x110] sm:$0xff]
        %v3464 = vld [vmem:[%s3428 + $0x118] sm:$0xff]
        %v3465 = vld [vmem:[%s3428 + $0x120] sm:$0xff]
        %v3466 = vld [vmem:[%s3428 + $0x128] sm:$0xff]
        %v3467 = vld [vmem:[%s3428 + $0x130] sm:$0xff]
        %v3468 = vld [vmem:[%s3428 + $0x138] sm:$0xff]
        %v3469 = vld [vmem:[%s3428 + $0x140] sm:$0xff]
        %v3470 = vld [vmem:[%s3428 + $0x148] sm:$0xff]
        %v3471 = vld [vmem:[%s3428 + $0x150] sm:$0xff]
        %v3472 = vld [vmem:[%s3428 + $0x158] sm:$0xff]
        %v3473 = vld [vmem:[%s3428 + $0x160] sm:$0xff]
        %v3474 = vld [vmem:[%s3428 + $0x168] sm:$0xff]
        %v3475 = vld [vmem:[%s3428 + $0x170] sm:$0xff]
        %v3476 = vld [vmem:[%s3428 + $0x178] sm:$0xff]
        %v3477 = vld [vmem:[%s3428 + $0x180] sm:$0xff]
        %v3478 = vld [vmem:[%s3428 + $0x188] sm:$0xff]
        %v3479 = vld [vmem:[%s3428 + $0x190] sm:$0xff]
        %v3480 = vld [vmem:[%s3428 + $0x198] sm:$0xff]
        %v3481 = vld [vmem:[%s3428 + $0x1a0] sm:$0xff]
        %v3482 = vld [vmem:[%s3428 + $0x1a8] sm:$0xff]
        %v3483 = vld [vmem:[%s3428 + $0x1b0] sm:$0xff]
        %v3484 = vld [vmem:[%s3428 + $0x1b8] sm:$0xff]
        %v3485 = vld [vmem:[%s3428 + $0x1c0] sm:$0xff]
        %v3486 = vld [vmem:[%s3428 + $0x1c8] sm:$0xff]
        %v3488 = vsel %vm581, %v3430, 0
        %v3491 = vsel %vm581, %v3432, 0
        %v3494 = vsel %vm581, %v3434, 0
        %v3497 = vsel %vm581, %v3436, 0
        %v3500 = vsel %vm581, %v3438, 0
        %v3503 = vsel %vm581, %v3440, 0
        %v3506 = vsel %vm581, %v3442, 0
        %v3509 = vsel %vm581, %v3444, 0
        %v3512 = vsel %vm581, %v3446, 0
        %v3515 = vsel %vm581, %v3448, 0
        %v3518 = vsel %vm581, %v3450, 0
        %v3521 = vsel %vm581, %v3452, 0
        %v3524 = vsel %vm581, %v3454, 0
        %v3527 = vsel %vm581, %v3456, 0
        %v3530 = vsel %vm581, %v3458, 0
        %v3533 = vsel %vm581, %v3460, 0
        %v3536 = vsel %vm581, %v3462, 0
        %v3539 = vsel %vm581, %v3464, 0
        %v3542 = vsel %vm581, %v3466, 0
        %v3545 = vsel %vm581, %v3468, 0
        %v3548 = vsel %vm581, %v3470, 0
        %v3551 = vsel %vm581, %v3472, 0
        %v3554 = vsel %vm581, %v3474, 0
        %v3557 = vsel %vm581, %v3476, 0
        %v3560 = vsel %vm581, %v3478, 0
        %v3563 = vsel %vm581, %v3480, 0
        %v3566 = vsel %vm581, %v3482, 0
        %v3569 = vsel %vm581, %v3484, 0
        %v3572 = vsel %vm581, %v3486, 0
        %3574 = vmatprep.subr.mxu0 0.0
        %3575 = vmatpush1.msra.mxu0 %v495
        %3576 = vmatprep.subr.mxu0 0.0
        %3577 = vmatpush1.msra.mxu0 %v496
        %3578 = vmatprep.subr.mxu0 0.0
        %3579 = vmatpush1.msra.mxu0 %v497
        %3580 = vmatprep.subr.mxu0 0.0
        %3581 = vmatpush1.msra.mxu0 %v498
        %3582 = vmatprep.subr.mxu0 0.0
        %3583 = vmatpush1.msra.mxu0 %v499
        %3584 = vmatprep.subr.mxu0 0.0
        %3585 = vmatpush1.msra.mxu0 %v500
        %3586 = vmatprep.subr.mxu0 0.0
        %3587 = vmatpush1.msra.mxu0 %v501
        %3588 = vmatprep.subr.mxu0 0.0
        %3589 = vmatpush1.msra.mxu0 %v502
        %3590 = vmatprep.subr.mxu0 0.0
        %3591 = vmatpush1.msra.mxu0 %v503
        %3592 = vmatprep.subr.mxu0 0.0
        %3593 = vmatpush1.msra.mxu0 %v504
        %3594 = vmatprep.subr.mxu0 0.0
        %3595 = vmatpush1.msra.mxu0 %v505
        %3596 = vmatprep.subr.mxu0 0.0
        %3597 = vmatpush1.msra.mxu0 %v506
        %3598 = vmatprep.subr.mxu0 0.0
        %3599 = vmatpush1.msra.mxu0 %v507
        %3600 = vmatprep.subr.mxu0 0.0
        %3601 = vmatpush1.msra.mxu0 %v508
        %3602 = vmatprep.subr.mxu0 0.0
        %3603 = vmatpush1.msra.mxu0 %v509
        %3604 = vmatprep.subr.mxu0 0.0
        %3605 = vmatpush1.msra.mxu0 %v510
        %3606 = vmatprep.subr.mxu0 0.0
        %3607 = vmatpush1.msra.mxu0 %v511
        %3608 = vmatprep.subr.mxu0 0.0
        %3609 = vmatpush1.msra.mxu0 %v512
        %3610 = vmatprep.subr.mxu0 0.0
        %3611 = vmatpush1.msra.mxu0 %v513
        %3612 = vmatprep.subr.mxu0 0.0
        %3613 = vmatpush1.msra.mxu0 %v514
        %3614 = vmatprep.subr.mxu0 0.0
        %3615 = vmatpush1.msra.mxu0 %v515
        %3616 = vmatprep.subr.mxu0 0.0
        %3617 = vmatpush1.msra.mxu0 %v516
        %3618 = vmatprep.subr.mxu0 0.0
        %3619 = vmatpush1.msra.mxu0 %v517
        %3620 = vmatprep.subr.mxu0 0.0
        %3621 = vmatpush1.msra.mxu0 %v518
        %3622 = vmatprep.subr.mxu0 0.0
        %3623 = vmatpush1.msra.mxu0 %v519
        %3624 = vmatprep.subr.mxu0 0.0
        %3625 = vmatpush1.msra.mxu0 %v520
        %3626 = vmatprep.subr.mxu0 0.0
        %3627 = vmatpush1.msra.mxu0 %v521
        %3628 = vmatprep.subr.mxu0 0.0
        %3629 = vmatpush1.msra.mxu0 %v522
        %3630 = vmatprep.subr.mxu0 0.0
        %3631 = vmatpush1.msra.mxu0 0.0
        %3632 = vmatprep.subr.mxu0 0.0
        %3633 = vmatpush1.msra.mxu0 0.0
        %3634 = vmatprep.subr.mxu0 0.0
        %3635 = vmatpush1.msra.mxu0 0.0
        %3636 = vmatprep.subr.mxu0 0.0
        %3637 = vmatpush1.msra.mxu0 0.0
        %3638 = vmatprep.mubr.f32.mxu0 %v3488
        %3639 = vmatmul.mubr.f32.gmra.mrb[0].mxu0 %v3429
        %v3640 = vpop.f32.mrb[0].mxu0
        %v3641 = vadd.f32 0.0, %v3640
        %v3642 = vpop.f32.mrb[0].mxu0
        %3643 = vmatprep.mubr.f32.mxu0 %v3491
        %3644 = vmatmul.mubr.f32.gmra.mrb[0].mxu0 %v3431
        %v3645 = vpop.f32.mrb[0].mxu0
        %v3646 = vadd.f32 0.0, %v3645
        %v3647 = vpop.f32.mrb[0].mxu0
        %3648 = vmatprep.mubr.f32.mxu0 %v3494
        %3649 = vmatmul.mubr.f32.gmra.mrb[0].mxu0 %v3433
        %v3650 = vpop.f32.mrb[0].mxu0
        %v3651 = vadd.f32 0.0, %v3650
        %v3652 = vpop.f32.mrb[0].mxu0
        %3653 = vmatprep.mubr.f32.mxu0 %v3497
        %3654 = vmatmul.mubr.f32.gmra.mrb[0].mxu0 %v3435
        %v3655 = vpop.f32.mrb[0].mxu0
        %v3656 = vadd.f32 0.0, %v3655
        %v3657 = vpop.f32.mrb[0].mxu0
        %3658 = vmatprep.mubr.f32.mxu0 %v3500
        %3659 = vmatmul.mubr.f32.gmra.mrb[0].mxu0 %v3437
        %v3660 = vpop.f32.mrb[0].mxu0
        %v3661 = vadd.f32 0.0, %v3660
        %v3662 = vpop.f32.mrb[0].mxu0
        %3663 = vmatprep.mubr.f32.mxu0 %v3503
        %3664 = vmatmul.mubr.f32.gmra.mrb[0].mxu0 %v3439
        %v3665 = vpop.f32.mrb[0].mxu0
        %v3666 = vadd.f32 0.0, %v3665
        %v3667 = vpop.f32.mrb[0].mxu0
        %3668 = vmatprep.mubr.f32.mxu0 %v3506
        %3669 = vmatmul.mubr.f32.gmra.mrb[0].mxu0 %v3441
        %v3670 = vpop.f32.mrb[0].mxu0
        %v3671 = vadd.f32 0.0, %v3670
        %v3672 = vpop.f32.mrb[0].mxu0
        %3673 = vmatprep.mubr.f32.mxu0 %v3509
        %3674 = vmatmul.mubr.f32.gmra.mrb[0].mxu0 %v3443
        %v3675 = vpop.f32.mrb[0].mxu0
        %v3676 = vadd.f32 0.0, %v3675
        %v3677 = vpop.f32.mrb[0].mxu0
        %3678 = vmatprep.mubr.f32.mxu0 %v3512
        %3679 = vmatmul.mubr.f32.gmra.mrb[0].mxu0 %v3445
        %v3680 = vpop.f32.mrb[0].mxu0
        %v3681 = vadd.f32 0.0, %v3680
        %v3682 = vpop.f32.mrb[0].mxu0
        %3683 = vmatprep.mubr.f32.mxu0 %v3515
        %3684 = vmatmul.mubr.f32.gmra.mrb[0].mxu0 %v3447
        %v3685 = vpop.f32.mrb[0].mxu0
        %v3686 = vadd.f32 0.0, %v3685
        %v3687 = vpop.f32.mrb[0].mxu0
        %3688 = vmatprep.mubr.f32.mxu0 %v3518
        %3689 = vmatmul.mubr.f32.gmra.mrb[0].mxu0 %v3449
        %v3690 = vpop.f32.mrb[0].mxu0
        %v3691 = vadd.f32 0.0, %v3690
        %v3692 = vpop.f32.mrb[0].mxu0
        %3693 = vmatprep.mubr.f32.mxu0 %v3521
        %3694 = vmatmul.mubr.f32.gmra.mrb[0].mxu0 %v3451
        %v3695 = vpop.f32.mrb[0].mxu0
        %v3696 = vadd.f32 0.0, %v3695
        %v3697 = vpop.f32.mrb[0].mxu0
        %3698 = vmatprep.mubr.f32.mxu0 %v3524
        %3699 = vmatmul.mubr.f32.gmra.mrb[0].mxu0 %v3453
        %v3700 = vpop.f32.mrb[0].mxu0
        %v3701 = vadd.f32 0.0, %v3700
        %v3702 = vpop.f32.mrb[0].mxu0
        %3703 = vmatprep.mubr.f32.mxu0 %v3527
        %3704 = vmatmul.mubr.f32.gmra.mrb[0].mxu0 %v3455
        %v3705 = vpop.f32.mrb[0].mxu0
        %v3706 = vadd.f32 0.0, %v3705
        %v3707 = vpop.f32.mrb[0].mxu0
        %3708 = vmatprep.mubr.f32.mxu0 %v3530
        %3709 = vmatmul.mubr.f32.gmra.mrb[0].mxu0 %v3457
        %v3710 = vpop.f32.mrb[0].mxu0
        %v3711 = vadd.f32 0.0, %v3710
        %v3712 = vpop.f32.mrb[0].mxu0
        %3713 = vmatprep.mubr.f32.mxu0 %v3533
        %3714 = vmatmul.mubr.f32.gmra.mrb[0].mxu0 %v3459
        %v3715 = vpop.f32.mrb[0].mxu0
        %v3716 = vadd.f32 0.0, %v3715
        %v3717 = vpop.f32.mrb[0].mxu0
        %3718 = vmatprep.mubr.f32.mxu0 %v3536
        %3719 = vmatmul.mubr.f32.gmra.mrb[0].mxu0 %v3461
        %v3720 = vpop.f32.mrb[0].mxu0
        %v3721 = vadd.f32 0.0, %v3720
        %v3722 = vpop.f32.mrb[0].mxu0
        %3723 = vmatprep.mubr.f32.mxu0 %v3539
        %3724 = vmatmul.mubr.f32.gmra.mrb[0].mxu0 %v3463
        %v3725 = vpop.f32.mrb[0].mxu0
        %v3726 = vadd.f32 0.0, %v3725
        %v3727 = vpop.f32.mrb[0].mxu0
        %3728 = vmatprep.mubr.f32.mxu0 %v3542
        %3729 = vmatmul.mubr.f32.gmra.mrb[0].mxu0 %v3465
        %v3730 = vpop.f32.mrb[0].mxu0
        %v3731 = vadd.f32 0.0, %v3730
        %v3732 = vpop.f32.mrb[0].mxu0
        %3733 = vmatprep.mubr.f32.mxu0 %v3545
        %3734 = vmatmul.mubr.f32.gmra.mrb[0].mxu0 %v3467
        %v3735 = vpop.f32.mrb[0].mxu0
        %v3736 = vadd.f32 0.0, %v3735
        %v3737 = vpop.f32.mrb[0].mxu0
        %3738 = vmatprep.mubr.f32.mxu0 %v3548
        %3739 = vmatmul.mubr.f32.gmra.mrb[0].mxu0 %v3469
        %v3740 = vpop.f32.mrb[0].mxu0
        %v3741 = vadd.f32 0.0, %v3740
        %v3742 = vpop.f32.mrb[0].mxu0
        %3743 = vmatprep.mubr.f32.mxu0 %v3551
        %3744 = vmatmul.mubr.f32.gmra.mrb[0].mxu0 %v3471
        %v3745 = vpop.f32.mrb[0].mxu0
        %v3746 = vadd.f32 0.0, %v3745
        %v3747 = vpop.f32.mrb[0].mxu0
        %3748 = vmatprep.mubr.f32.mxu0 %v3554
        %3749 = vmatmul.mubr.f32.gmra.mrb[0].mxu0 %v3473
        %v3750 = vpop.f32.mrb[0].mxu0
        %v3751 = vadd.f32 0.0, %v3750
        %v3752 = vpop.f32.mrb[0].mxu0
        %3753 = vmatprep.mubr.f32.mxu0 %v3557
        %3754 = vmatmul.mubr.f32.gmra.mrb[0].mxu0 %v3475
        %v3755 = vpop.f32.mrb[0].mxu0
        %v3756 = vadd.f32 0.0, %v3755
        %v3757 = vpop.f32.mrb[0].mxu0
        %3758 = vmatprep.mubr.f32.mxu0 %v3560
        %3759 = vmatmul.mubr.f32.gmra.mrb[0].mxu0 %v3477
        %v3760 = vpop.f32.mrb[0].mxu0
        %v3761 = vadd.f32 0.0, %v3760
        %v3762 = vpop.f32.mrb[0].mxu0
        %3763 = vmatprep.mubr.f32.mxu0 %v3563
        %3764 = vmatmul.mubr.f32.gmra.mrb[0].mxu0 %v3479
        %v3765 = vpop.f32.mrb[0].mxu0
        %v3766 = vadd.f32 0.0, %v3765
        %v3767 = vpop.f32.mrb[0].mxu0
        %3768 = vmatprep.mubr.f32.mxu0 %v3566
        %3769 = vmatmul.mubr.f32.gmra.mrb[0].mxu0 %v3481
        %v3770 = vpop.f32.mrb[0].mxu0
        %v3771 = vadd.f32 0.0, %v3770
        %v3772 = vpop.f32.mrb[0].mxu0
        %3773 = vmatprep.mubr.f32.mxu0 %v3569
        %3774 = vmatmul.mubr.f32.gmra.mrb[0].mxu0 %v3483
        %v3775 = vpop.f32.mrb[0].mxu0
        %v3776 = vadd.f32 0.0, %v3775
        %v3777 = vpop.f32.mrb[0].mxu0
        %3778 = vmatprep.mubr.f32.mxu0 %v3572
        %3779 = vmatmul.mubr.f32.gmra.mrb[0].mxu0 %v3485
        %v3780 = vpop.f32.mrb[0].mxu0
        %v3781 = vadd.f32 0.0, %v3780
        %v3782 = vpop.f32.mrb[0].mxu0
        %3783 = vdwg.mxu0
        %s3784 = scalar_lea.vmem %s2, 256
        %v3785 = vld [vmem:[%s3784] sm:$0xff]
        %v3786 = vld [vmem:[%s3784 + $0x8] sm:$0xff]
        %v3787 = vld [vmem:[%s3784 + $0x10] sm:$0xff]
        %v3788 = vld [vmem:[%s3784 + $0x18] sm:$0xff]
        %v3789 = vld [vmem:[%s3784 + $0x20] sm:$0xff]
        %v3790 = vld [vmem:[%s3784 + $0x28] sm:$0xff]
        %v3791 = vld [vmem:[%s3784 + $0x30] sm:$0xf]
        %v3792 = vld [vmem:[%s3784 + $0x38] sm:$0xf]
        %v3794 = vsel %vm1252, %v3641, 0
        %v3797 = vsel %vm1252, %v3646, 0
        %v3800 = vsel %vm1252, %v3651, 0
        %v3803 = vsel %vm1252, %v3656, 0
        %v3806 = vsel %vm1252, %v3661, 0
        %v3809 = vsel %vm1252, %v3666, 0
        %v3812 = vsel %vm1252, %v3671, 0
        %v3815 = vsel %vm1252, %v3676, 0
        %v3818 = vsel %vm1252, %v3681, 0
        %v3821 = vsel %vm1252, %v3686, 0
        %v3824 = vsel %vm1252, %v3691, 0
        %v3827 = vsel %vm1252, %v3696, 0
        %v3830 = vsel %vm1252, %v3701, 0
        %v3833 = vsel %vm1252, %v3706, 0
        %v3836 = vsel %vm1252, %v3711, 0
        %v3839 = vsel %vm1252, %v3716, 0
        %v3842 = vsel %vm1252, %v3721, 0
        %v3845 = vsel %vm1252, %v3726, 0
        %v3848 = vsel %vm1252, %v3731, 0
        %v3851 = vsel %vm1252, %v3736, 0
        %v3854 = vsel %vm1252, %v3741, 0
        %v3857 = vsel %vm1252, %v3746, 0
        %v3860 = vsel %vm1252, %v3751, 0
        %v3863 = vsel %vm1252, %v3756, 0
        %v3866 = vsel %vm1252, %v3761, 0
        %v3869 = vsel %vm1252, %v3766, 0
        %v3872 = vsel %vm1252, %v3771, 0
        %v3875 = vsel %vm1252, %v3776, 0
        %v3878 = vsel %vm1252, %v3781, 0
        %v3881 = vsel %vm1340, %v3791, 0
        %v3884 = vsel %vm1340, %v3792, 0
        %3886 = vmatprep.subr.mxu0 %v3786
        %3887 = vmatpush1.msra.mxu0 %v3785
        %3888 = vmatprep.subr.mxu0 %v3788
        %3889 = vmatpush1.msra.mxu0 %v3787
        %3890 = vmatprep.subr.mxu0 %v3790
        %3891 = vmatpush1.msra.mxu0 %v3789
        %3892 = vmatprep.subr.mxu0 %v3884
        %3893 = vmatpush1.msra.mxu0 %v3881
        %3894 = vmatprep.subr.mxu0 0.0
        %3895 = vmatpush1.msra.mxu0 0.0
        %3896 = vmatprep.subr.mxu0 0.0
        %3897 = vmatpush1.msra.mxu0 0.0
        %3898 = vmatprep.subr.mxu0 0.0
        %3899 = vmatpush1.msra.mxu0 0.0
        %3900 = vmatprep.subr.mxu0 0.0
        %3901 = vmatpush1.msra.mxu0 0.0
        %3902 = vmatprep.subr.mxu0 0.0
        %3903 = vmatpush1.msra.mxu0 0.0
        %3904 = vmatprep.subr.mxu0 0.0
        %3905 = vmatpush1.msra.mxu0 0.0
        %3906 = vmatprep.subr.mxu0 0.0
        %3907 = vmatpush1.msra.mxu0 0.0
        %3908 = vmatprep.subr.mxu0 0.0
        %3909 = vmatpush1.msra.mxu0 0.0
        %3910 = vmatprep.subr.mxu0 0.0
        %3911 = vmatpush1.msra.mxu0 0.0
        %3912 = vmatprep.subr.mxu0 0.0
        %3913 = vmatpush1.msra.mxu0 0.0
        %3914 = vmatprep.subr.mxu0 0.0
        %3915 = vmatpush1.msra.mxu0 0.0
        %3916 = vmatprep.subr.mxu0 0.0
        %3917 = vmatpush1.msra.mxu0 0.0
        %3918 = vmatprep.subr.mxu0 0.0
        %3919 = vmatpush1.msra.mxu0 0.0
        %3920 = vmatprep.subr.mxu0 0.0
        %3921 = vmatpush1.msra.mxu0 0.0
        %3922 = vmatprep.subr.mxu0 0.0
        %3923 = vmatpush1.msra.mxu0 0.0
        %3924 = vmatprep.subr.mxu0 0.0
        %3925 = vmatpush1.msra.mxu0 0.0
        %3926 = vmatprep.subr.mxu0 0.0
        %3927 = vmatpush1.msra.mxu0 0.0
        %3928 = vmatprep.subr.mxu0 0.0
        %3929 = vmatpush1.msra.mxu0 0.0
        %3930 = vmatprep.subr.mxu0 0.0
        %3931 = vmatpush1.msra.mxu0 0.0
        %3932 = vmatprep.subr.mxu0 0.0
        %3933 = vmatpush1.msra.mxu0 0.0
        %3934 = vmatprep.subr.mxu0 0.0
        %3935 = vmatpush1.msra.mxu0 0.0
        %3936 = vmatprep.subr.mxu0 0.0
        %3937 = vmatpush1.msra.mxu0 0.0
        %3938 = vmatprep.subr.mxu0 0.0
        %3939 = vmatpush1.msra.mxu0 0.0
        %3940 = vmatprep.subr.mxu0 0.0
        %3941 = vmatpush1.msra.mxu0 0.0
        %3942 = vmatprep.subr.mxu0 0.0
        %3943 = vmatpush1.msra.mxu0 0.0
        %3944 = vmatprep.subr.mxu0 0.0
        %3945 = vmatpush1.msra.mxu0 0.0
        %3946 = vmatprep.subr.mxu0 0.0
        %3947 = vmatpush1.msra.mxu0 0.0
        %3948 = vmatprep.subr.mxu0 0.0
        %3949 = vmatpush1.msra.mxu0 0.0
        %3950 = vmatprep.mubr.f32.mxu0 0.0
        %3951 = vmatmul.mubr.f32.gmra.mrb[0].mxu0 %v3794
        %v3952 = vpop.f32.mrb[0].mxu0
        %v3953 = vadd.f32 0.0, %v3952
        %v3954 = vpop.f32.mrb[0].mxu0
        %v3955 = vadd.f32 0.0, %v3954
        %3956 = vmatprep.mubr.f32.mxu0 0.0
        %3957 = vmatmul.mubr.f32.gmra.mrb[0].mxu0 %v3797
        %v3958 = vpop.f32.mrb[0].mxu0
        %v3959 = vadd.f32 0.0, %v3958
        %v3960 = vpop.f32.mrb[0].mxu0
        %v3961 = vadd.f32 0.0, %v3960
        %3962 = vmatprep.mubr.f32.mxu0 0.0
        %3963 = vmatmul.mubr.f32.gmra.mrb[0].mxu0 %v3800
        %v3964 = vpop.f32.mrb[0].mxu0
        %v3965 = vadd.f32 0.0, %v3964
        %v3966 = vpop.f32.mrb[0].mxu0
        %v3967 = vadd.f32 0.0, %v3966
        %3968 = vmatprep.mubr.f32.mxu0 0.0
        %3969 = vmatmul.mubr.f32.gmra.mrb[0].mxu0 %v3803
        %v3970 = vpop.f32.mrb[0].mxu0
        %v3971 = vadd.f32 0.0, %v3970
        %v3972 = vpop.f32.mrb[0].mxu0
        %v3973 = vadd.f32 0.0, %v3972
        %3974 = vmatprep.mubr.f32.mxu0 0.0
        %3975 = vmatmul.mubr.f32.gmra.mrb[0].mxu0 %v3806
        %v3976 = vpop.f32.mrb[0].mxu0
        %v3977 = vadd.f32 0.0, %v3976
        %v3978 = vpop.f32.mrb[0].mxu0
        %v3979 = vadd.f32 0.0, %v3978
        %3980 = vmatprep.mubr.f32.mxu0 0.0
        %3981 = vmatmul.mubr.f32.gmra.mrb[0].mxu0 %v3809
        %v3982 = vpop.f32.mrb[0].mxu0
        %v3983 = vadd.f32 0.0, %v3982
        %v3984 = vpop.f32.mrb[0].mxu0
        %v3985 = vadd.f32 0.0, %v3984
        %3986 = vmatprep.mubr.f32.mxu0 0.0
        %3987 = vmatmul.mubr.f32.gmra.mrb[0].mxu0 %v3812
        %v3988 = vpop.f32.mrb[0].mxu0
        %v3989 = vadd.f32 0.0, %v3988
        %v3990 = vpop.f32.mrb[0].mxu0
        %v3991 = vadd.f32 0.0, %v3990
        %3992 = vmatprep.mubr.f32.mxu0 0.0
        %3993 = vmatmul.mubr.f32.gmra.mrb[0].mxu0 %v3815
        %v3994 = vpop.f32.mrb[0].mxu0
        %v3995 = vadd.f32 0.0, %v3994
        %v3996 = vpop.f32.mrb[0].mxu0
        %v3997 = vadd.f32 0.0, %v3996
        %3998 = vmatprep.mubr.f32.mxu0 0.0
        %3999 = vmatmul.mubr.f32.gmra.mrb[0].mxu0 %v3818
        %v4000 = vpop.f32.mrb[0].mxu0
        %v4001 = vadd.f32 0.0, %v4000
        %v4002 = vpop.f32.mrb[0].mxu0
        %v4003 = vadd.f32 0.0, %v4002
        %4004 = vmatprep.mubr.f32.mxu0 0.0
        %4005 = vmatmul.mubr.f32.gmra.mrb[0].mxu0 %v3821
        %v4006 = vpop.f32.mrb[0].mxu0
        %v4007 = vadd.f32 0.0, %v4006
        %v4008 = vpop.f32.mrb[0].mxu0
        %v4009 = vadd.f32 0.0, %v4008
        %4010 = vmatprep.mubr.f32.mxu0 0.0
        %4011 = vmatmul.mubr.f32.gmra.mrb[0].mxu0 %v3824
        %v4012 = vpop.f32.mrb[0].mxu0
        %v4013 = vadd.f32 0.0, %v4012
        %v4014 = vpop.f32.mrb[0].mxu0
        %v4015 = vadd.f32 0.0, %v4014
        %4016 = vmatprep.mubr.f32.mxu0 0.0
        %4017 = vmatmul.mubr.f32.gmra.mrb[0].mxu0 %v3827
        %v4018 = vpop.f32.mrb[0].mxu0
        %v4019 = vadd.f32 0.0, %v4018
        %v4020 = vpop.f32.mrb[0].mxu0
        %v4021 = vadd.f32 0.0, %v4020
        %4022 = vmatprep.mubr.f32.mxu0 0.0
        %4023 = vmatmul.mubr.f32.gmra.mrb[0].mxu0 %v3830
        %v4024 = vpop.f32.mrb[0].mxu0
        %v4025 = vadd.f32 0.0, %v4024
        %v4026 = vpop.f32.mrb[0].mxu0
        %v4027 = vadd.f32 0.0, %v4026
        %4028 = vmatprep.mubr.f32.mxu0 0.0
        %4029 = vmatmul.mubr.f32.gmra.mrb[0].mxu0 %v3833
        %v4030 = vpop.f32.mrb[0].mxu0
        %v4031 = vadd.f32 0.0, %v4030
        %v4032 = vpop.f32.mrb[0].mxu0
        %v4033 = vadd.f32 0.0, %v4032
        %4034 = vmatprep.mubr.f32.mxu0 0.0
        %4035 = vmatmul.mubr.f32.gmra.mrb[0].mxu0 %v3836
        %v4036 = vpop.f32.mrb[0].mxu0
        %v4037 = vadd.f32 0.0, %v4036
        %v4038 = vpop.f32.mrb[0].mxu0
        %v4039 = vadd.f32 0.0, %v4038
        %4040 = vmatprep.mubr.f32.mxu0 0.0
        %4041 = vmatmul.mubr.f32.gmra.mrb[0].mxu0 %v3839
        %v4042 = vpop.f32.mrb[0].mxu0
        %v4043 = vadd.f32 0.0, %v4042
        %v4044 = vpop.f32.mrb[0].mxu0
        %v4045 = vadd.f32 0.0, %v4044
        %4046 = vmatprep.mubr.f32.mxu0 0.0
        %4047 = vmatmul.mubr.f32.gmra.mrb[0].mxu0 %v3842
        %v4048 = vpop.f32.mrb[0].mxu0
        %v4049 = vadd.f32 0.0, %v4048
        %v4050 = vpop.f32.mrb[0].mxu0
        %v4051 = vadd.f32 0.0, %v4050
        %4052 = vmatprep.mubr.f32.mxu0 0.0
        %4053 = vmatmul.mubr.f32.gmra.mrb[0].mxu0 %v3845
        %v4054 = vpop.f32.mrb[0].mxu0
        %v4055 = vadd.f32 0.0, %v4054
        %v4056 = vpop.f32.mrb[0].mxu0
        %v4057 = vadd.f32 0.0, %v4056
        %4058 = vmatprep.mubr.f32.mxu0 0.0
        %4059 = vmatmul.mubr.f32.gmra.mrb[0].mxu0 %v3848
        %v4060 = vpop.f32.mrb[0].mxu0
        %v4061 = vadd.f32 0.0, %v4060
        %v4062 = vpop.f32.mrb[0].mxu0
        %v4063 = vadd.f32 0.0, %v4062
        %4064 = vmatprep.mubr.f32.mxu0 0.0
        %4065 = vmatmul.mubr.f32.gmra.mrb[0].mxu0 %v3851
        %v4066 = vpop.f32.mrb[0].mxu0
        %v4067 = vadd.f32 0.0, %v4066
        %v4068 = vpop.f32.mrb[0].mxu0
        %v4069 = vadd.f32 0.0, %v4068
        %4070 = vmatprep.mubr.f32.mxu0 0.0
        %4071 = vmatmul.mubr.f32.gmra.mrb[0].mxu0 %v3854
        %v4072 = vpop.f32.mrb[0].mxu0
        %v4073 = vadd.f32 0.0, %v4072
        %v4074 = vpop.f32.mrb[0].mxu0
        %v4075 = vadd.f32 0.0, %v4074
        %4076 = vmatprep.mubr.f32.mxu0 0.0
        %4077 = vmatmul.mubr.f32.gmra.mrb[0].mxu0 %v3857
        %v4078 = vpop.f32.mrb[0].mxu0
        %v4079 = vadd.f32 0.0, %v4078
        %v4080 = vpop.f32.mrb[0].mxu0
        %v4081 = vadd.f32 0.0, %v4080
        %4082 = vmatprep.mubr.f32.mxu0 0.0
        %4083 = vmatmul.mubr.f32.gmra.mrb[0].mxu0 %v3860
        %v4084 = vpop.f32.mrb[0].mxu0
        %v4085 = vadd.f32 0.0, %v4084
        %v4086 = vpop.f32.mrb[0].mxu0
        %v4087 = vadd.f32 0.0, %v4086
        %4088 = vmatprep.mubr.f32.mxu0 0.0
        %4089 = vmatmul.mubr.f32.gmra.mrb[0].mxu0 %v3863
        %v4090 = vpop.f32.mrb[0].mxu0
        %v4091 = vadd.f32 0.0, %v4090
        %v4092 = vpop.f32.mrb[0].mxu0
        %v4093 = vadd.f32 0.0, %v4092
        %4094 = vmatprep.mubr.f32.mxu0 0.0
        %4095 = vmatmul.mubr.f32.gmra.mrb[0].mxu0 %v3866
        %v4096 = vpop.f32.mrb[0].mxu0
        %v4097 = vadd.f32 0.0, %v4096
        %v4098 = vpop.f32.mrb[0].mxu0
        %v4099 = vadd.f32 0.0, %v4098
        %4100 = vmatprep.mubr.f32.mxu0 0.0
        %4101 = vmatmul.mubr.f32.gmra.mrb[0].mxu0 %v3869
        %v4102 = vpop.f32.mrb[0].mxu0
        %v4103 = vadd.f32 0.0, %v4102
        %v4104 = vpop.f32.mrb[0].mxu0
        %v4105 = vadd.f32 0.0, %v4104
        %4106 = vmatprep.mubr.f32.mxu0 0.0
        %4107 = vmatmul.mubr.f32.gmra.mrb[0].mxu0 %v3872
        %v4108 = vpop.f32.mrb[0].mxu0
        %v4109 = vadd.f32 0.0, %v4108
        %v4110 = vpop.f32.mrb[0].mxu0
        %v4111 = vadd.f32 0.0, %v4110
        %4112 = vmatprep.mubr.f32.mxu0 0.0
        %4113 = vmatmul.mubr.f32.gmra.mrb[0].mxu0 %v3875
        %v4114 = vpop.f32.mrb[0].mxu0
        %v4115 = vadd.f32 0.0, %v4114
        %v4116 = vpop.f32.mrb[0].mxu0
        %v4117 = vadd.f32 0.0, %v4116
        %4118 = vmatprep.mubr.f32.mxu0 0.0
        %4119 = vmatmul.mubr.f32.gmra.mrb[0].mxu0 %v3878
        %v4120 = vpop.f32.mrb[0].mxu0
        %v4121 = vadd.f32 0.0, %v4120
        %v4122 = vpop.f32.mrb[0].mxu0
        %v4123 = vadd.f32 0.0, %v4122
        %4124 = vdwg.mxu0
        %v4125 = vadd.f32 %v3370, %v3953
        %v4126 = vadd.f32 %v3371, %v3955
        %v4127 = vadd.f32 %v3372, %v3959
        %v4128 = vadd.f32 %v3373, %v3961
        %v4129 = vadd.f32 %v3374, %v3965
        %v4130 = vadd.f32 %v3375, %v3967
        %v4131 = vadd.f32 %v3376, %v3971
        %v4132 = vadd.f32 %v3377, %v3973
        %v4133 = vadd.f32 %v3378, %v3977
        %v4134 = vadd.f32 %v3379, %v3979
        %v4135 = vadd.f32 %v3380, %v3983
        %v4136 = vadd.f32 %v3381, %v3985
        %v4137 = vadd.f32 %v3382, %v3989
        %v4138 = vadd.f32 %v3383, %v3991
        %v4139 = vadd.f32 %v3384, %v3995
        %v4140 = vadd.f32 %v3385, %v3997
        %v4141 = vadd.f32 %v3386, %v4001
        %v4142 = vadd.f32 %v3387, %v4003
        %v4143 = vadd.f32 %v3388, %v4007
        %v4144 = vadd.f32 %v3389, %v4009
        %v4145 = vadd.f32 %v3390, %v4013
        %v4146 = vadd.f32 %v3391, %v4015
        %v4147 = vadd.f32 %v3392, %v4019
        %v4148 = vadd.f32 %v3393, %v4021
        %v4149 = vadd.f32 %v3394, %v4025
        %v4150 = vadd.f32 %v3395, %v4027
        %v4151 = vadd.f32 %v3396, %v4031
        %v4152 = vadd.f32 %v3397, %v4033
        %v4153 = vadd.f32 %v3398, %v4037
        %v4154 = vadd.f32 %v3399, %v4039
        %v4155 = vadd.f32 %v3400, %v4043
        %v4156 = vadd.f32 %v3401, %v4045
        %v4157 = vadd.f32 %v3402, %v4049
        %v4158 = vadd.f32 %v3403, %v4051
        %v4159 = vadd.f32 %v3404, %v4055
        %v4160 = vadd.f32 %v3405, %v4057
        %v4161 = vadd.f32 %v3406, %v4061
        %v4162 = vadd.f32 %v3407, %v4063
        %v4163 = vadd.f32 %v3408, %v4067
        %v4164 = vadd.f32 %v3409, %v4069
        %v4165 = vadd.f32 %v3410, %v4073
        %v4166 = vadd.f32 %v3411, %v4075
        %v4167 = vadd.f32 %v3412, %v4079
        %v4168 = vadd.f32 %v3413, %v4081
        %v4169 = vadd.f32 %v3414, %v4085
        %v4170 = vadd.f32 %v3415, %v4087
        %v4171 = vadd.f32 %v3416, %v4091
        %v4172 = vadd.f32 %v3417, %v4093
        %v4173 = vadd.f32 %v3418, %v4097
        %v4174 = vadd.f32 %v3419, %v4099
        %v4175 = vadd.f32 %v3420, %v4103
        %v4176 = vadd.f32 %v3421, %v4105
        %v4177 = vadd.f32 %v3422, %v4109
        %v4178 = vadd.f32 %v3423, %v4111
        %v4179 = vadd.f32 %v3424, %v4115
        %v4180 = vadd.f32 %v3425, %v4117
        %v4181 = vadd.f32 %v3426, %v4121
        %v4182 = vadd.f32 %v3427, %v4123
        %s4183 = scalar_lea.vmem %s1, 2320
        %v4184 = vld [vmem:[%s4183] sm:$0xff]
        %v4185 = vld [vmem:[%s4183 + $0x8] sm:$0xff]
        %v4186 = vld [vmem:[%s4183 + $0x10] sm:$0xff]
        %v4187 = vld [vmem:[%s4183 + $0x18] sm:$0xff]
        %v4188 = vld [vmem:[%s4183 + $0x20] sm:$0xff]
        %v4189 = vld [vmem:[%s4183 + $0x28] sm:$0xff]
        %v4190 = vld [vmem:[%s4183 + $0x30] sm:$0xff]
        %v4191 = vld [vmem:[%s4183 + $0x38] sm:$0xff]
        %v4192 = vld [vmem:[%s4183 + $0x40] sm:$0xff]
        %v4193 = vld [vmem:[%s4183 + $0x48] sm:$0xff]
        %v4194 = vld [vmem:[%s4183 + $0x50] sm:$0xff]
        %v4195 = vld [vmem:[%s4183 + $0x58] sm:$0xff]
        %v4196 = vld [vmem:[%s4183 + $0x60] sm:$0xff]
        %v4197 = vld [vmem:[%s4183 + $0x68] sm:$0xff]
        %v4198 = vld [vmem:[%s4183 + $0x70] sm:$0xff]
        %v4199 = vld [vmem:[%s4183 + $0x78] sm:$0xff]
        %v4200 = vld [vmem:[%s4183 + $0x80] sm:$0xff]
        %v4201 = vld [vmem:[%s4183 + $0x88] sm:$0xff]
        %v4202 = vld [vmem:[%s4183 + $0x90] sm:$0xff]
        %v4203 = vld [vmem:[%s4183 + $0x98] sm:$0xff]
        %v4204 = vld [vmem:[%s4183 + $0xa0] sm:$0xff]
        %v4205 = vld [vmem:[%s4183 + $0xa8] sm:$0xff]
        %v4206 = vld [vmem:[%s4183 + $0xb0] sm:$0xff]
        %v4207 = vld [vmem:[%s4183 + $0xb8] sm:$0xff]
        %v4208 = vld [vmem:[%s4183 + $0xc0] sm:$0xff]
        %v4209 = vld [vmem:[%s4183 + $0xc8] sm:$0xff]
        %v4210 = vld [vmem:[%s4183 + $0xd0] sm:$0xff]
        %v4211 = vld [vmem:[%s4183 + $0xd8] sm:$0xff]
        %v4212 = vld [vmem:[%s4183 + $0xe0] sm:$0xff]
        %v4213 = vld [vmem:[%s4183 + $0xe8] sm:$0xff]
        %v4214 = vld [vmem:[%s4183 + $0xf0] sm:$0xff]
        %v4215 = vld [vmem:[%s4183 + $0xf8] sm:$0xff]
        %v4216 = vld [vmem:[%s4183 + $0x100] sm:$0xff]
        %v4217 = vld [vmem:[%s4183 + $0x108] sm:$0xff]
        %v4218 = vld [vmem:[%s4183 + $0x110] sm:$0xff]
        %v4219 = vld [vmem:[%s4183 + $0x118] sm:$0xff]
        %v4220 = vld [vmem:[%s4183 + $0x120] sm:$0xff]
        %v4221 = vld [vmem:[%s4183 + $0x128] sm:$0xff]
        %v4222 = vld [vmem:[%s4183 + $0x130] sm:$0xff]
        %v4223 = vld [vmem:[%s4183 + $0x138] sm:$0xff]
        %v4224 = vld [vmem:[%s4183 + $0x140] sm:$0xff]
        %v4225 = vld [vmem:[%s4183 + $0x148] sm:$0xff]
        %v4226 = vld [vmem:[%s4183 + $0x150] sm:$0xff]
        %v4227 = vld [vmem:[%s4183 + $0x158] sm:$0xff]
        %v4228 = vld [vmem:[%s4183 + $0x160] sm:$0xff]
        %v4229 = vld [vmem:[%s4183 + $0x168] sm:$0xff]
        %v4230 = vld [vmem:[%s4183 + $0x170] sm:$0xff]
        %v4231 = vld [vmem:[%s4183 + $0x178] sm:$0xff]
        %v4232 = vld [vmem:[%s4183 + $0x180] sm:$0xff]
        %v4233 = vld [vmem:[%s4183 + $0x188] sm:$0xff]
        %v4234 = vld [vmem:[%s4183 + $0x190] sm:$0xff]
        %v4235 = vld [vmem:[%s4183 + $0x198] sm:$0xff]
        %v4236 = vld [vmem:[%s4183 + $0x1a0] sm:$0xff]
        %v4237 = vld [vmem:[%s4183 + $0x1a8] sm:$0xff]
        %v4238 = vld [vmem:[%s4183 + $0x1b0] sm:$0xff]
        %v4239 = vld [vmem:[%s4183 + $0x1b8] sm:$0xff]
        %v4240 = vld [vmem:[%s4183 + $0x1c0] sm:$0xff]
        %v4241 = vld [vmem:[%s4183 + $0x1c8] sm:$0xff]
        %v4243 = vsel %vm581, %v4185, 0
        %v4246 = vsel %vm581, %v4187, 0
        %v4249 = vsel %vm581, %v4189, 0
        %v4252 = vsel %vm581, %v4191, 0
        %v4255 = vsel %vm581, %v4193, 0
        %v4258 = vsel %vm581, %v4195, 0
        %v4261 = vsel %vm581, %v4197, 0
        %v4264 = vsel %vm581, %v4199, 0
        %v4267 = vsel %vm581, %v4201, 0
        %v4270 = vsel %vm581, %v4203, 0
        %v4273 = vsel %vm581, %v4205, 0
        %v4276 = vsel %vm581, %v4207, 0
        %v4279 = vsel %vm581, %v4209, 0
        %v4282 = vsel %vm581, %v4211, 0
        %v4285 = vsel %vm581, %v4213, 0
        %v4288 = vsel %vm581, %v4215, 0
        %v4291 = vsel %vm581, %v4217, 0
        %v4294 = vsel %vm581, %v4219, 0
        %v4297 = vsel %vm581, %v4221, 0
        %v4300 = vsel %vm581, %v4223, 0
        %v4303 = vsel %vm581, %v4225, 0
        %v4306 = vsel %vm581, %v4227, 0
        %v4309 = vsel %vm581, %v4229, 0
        %v4312 = vsel %vm581, %v4231, 0
        %v4315 = vsel %vm581, %v4233, 0
        %v4318 = vsel %vm581, %v4235, 0
        %v4321 = vsel %vm581, %v4237, 0
        %v4324 = vsel %vm581, %v4239, 0
        %v4327 = vsel %vm581, %v4241, 0
        %4329 = vmatprep.subr.mxu0 0.0
        %4330 = vmatpush1.msra.mxu0 %v495
        %4331 = vmatprep.subr.mxu0 0.0
        %4332 = vmatpush1.msra.mxu0 %v496
        %4333 = vmatprep.subr.mxu0 0.0
        %4334 = vmatpush1.msra.mxu0 %v497
        %4335 = vmatprep.subr.mxu0 0.0
        %4336 = vmatpush1.msra.mxu0 %v498
        %4337 = vmatprep.subr.mxu0 0.0
        %4338 = vmatpush1.msra.mxu0 %v499
        %4339 = vmatprep.subr.mxu0 0.0
        %4340 = vmatpush1.msra.mxu0 %v500
        %4341 = vmatprep.subr.mxu0 0.0
        %4342 = vmatpush1.msra.mxu0 %v501
        %4343 = vmatprep.subr.mxu0 0.0
        %4344 = vmatpush1.msra.mxu0 %v502
        %4345 = vmatprep.subr.mxu0 0.0
        %4346 = vmatpush1.msra.mxu0 %v503
        %4347 = vmatprep.subr.mxu0 0.0
        %4348 = vmatpush1.msra.mxu0 %v504
        %4349 = vmatprep.subr.mxu0 0.0
        %4350 = vmatpush1.msra.mxu0 %v505
        %4351 = vmatprep.subr.mxu0 0.0
        %4352 = vmatpush1.msra.mxu0 %v506
        %4353 = vmatprep.subr.mxu0 0.0
        %4354 = vmatpush1.msra.mxu0 %v507
        %4355 = vmatprep.subr.mxu0 0.0
        %4356 = vmatpush1.msra.mxu0 %v508
        %4357 = vmatprep.subr.mxu0 0.0
        %4358 = vmatpush1.msra.mxu0 %v509
        %4359 = vmatprep.subr.mxu0 0.0
        %4360 = vmatpush1.msra.mxu0 %v510
        %4361 = vmatprep.subr.mxu0 0.0
        %4362 = vmatpush1.msra.mxu0 %v511
        %4363 = vmatprep.subr.mxu0 0.0
        %4364 = vmatpush1.msra.mxu0 %v512
        %4365 = vmatprep.subr.mxu0 0.0
        %4366 = vmatpush1.msra.mxu0 %v513
        %4367 = vmatprep.subr.mxu0 0.0
        %4368 = vmatpush1.msra.mxu0 %v514
        %4369 = vmatprep.subr.mxu0 0.0
        %4370 = vmatpush1.msra.mxu0 %v515
        %4371 = vmatprep.subr.mxu0 0.0
        %4372 = vmatpush1.msra.mxu0 %v516
        %4373 = vmatprep.subr.mxu0 0.0
        %4374 = vmatpush1.msra.mxu0 %v517
        %4375 = vmatprep.subr.mxu0 0.0
        %4376 = vmatpush1.msra.mxu0 %v518
        %4377 = vmatprep.subr.mxu0 0.0
        %4378 = vmatpush1.msra.mxu0 %v519
        %4379 = vmatprep.subr.mxu0 0.0
        %4380 = vmatpush1.msra.mxu0 %v520
        %4381 = vmatprep.subr.mxu0 0.0
        %4382 = vmatpush1.msra.mxu0 %v521
        %4383 = vmatprep.subr.mxu0 0.0
        %4384 = vmatpush1.msra.mxu0 %v522
        %4385 = vmatprep.subr.mxu0 0.0
        %4386 = vmatpush1.msra.mxu0 0.0
        %4387 = vmatprep.subr.mxu0 0.0
        %4388 = vmatpush1.msra.mxu0 0.0
        %4389 = vmatprep.subr.mxu0 0.0
        %4390 = vmatpush1.msra.mxu0 0.0
        %4391 = vmatprep.subr.mxu0 0.0
        %4392 = vmatpush1.msra.mxu0 0.0
        %4393 = vmatprep.mubr.f32.mxu0 %v4243
        %4394 = vmatmul.mubr.f32.gmra.mrb[0].mxu0 %v4184
        %v4395 = vpop.f32.mrb[0].mxu0
        %v4396 = vadd.f32 0.0, %v4395
        %v4397 = vpop.f32.mrb[0].mxu0
        %4398 = vmatprep.mubr.f32.mxu0 %v4246
        %4399 = vmatmul.mubr.f32.gmra.mrb[0].mxu0 %v4186
        %v4400 = vpop.f32.mrb[0].mxu0
        %v4401 = vadd.f32 0.0, %v4400
        %v4402 = vpop.f32.mrb[0].mxu0
        %4403 = vmatprep.mubr.f32.mxu0 %v4249
        %4404 = vmatmul.mubr.f32.gmra.mrb[0].mxu0 %v4188
        %v4405 = vpop.f32.mrb[0].mxu0
        %v4406 = vadd.f32 0.0, %v4405
        %v4407 = vpop.f32.mrb[0].mxu0
        %4408 = vmatprep.mubr.f32.mxu0 %v4252
        %4409 = vmatmul.mubr.f32.gmra.mrb[0].mxu0 %v4190
        %v4410 = vpop.f32.mrb[0].mxu0
        %v4411 = vadd.f32 0.0, %v4410
        %v4412 = vpop.f32.mrb[0].mxu0
        %4413 = vmatprep.mubr.f32.mxu0 %v4255
        %4414 = vmatmul.mubr.f32.gmra.mrb[0].mxu0 %v4192
        %v4415 = vpop.f32.mrb[0].mxu0
        %v4416 = vadd.f32 0.0, %v4415
        %v4417 = vpop.f32.mrb[0].mxu0
        %4418 = vmatprep.mubr.f32.mxu0 %v4258
        %4419 = vmatmul.mubr.f32.gmra.mrb[0].mxu0 %v4194
        %v4420 = vpop.f32.mrb[0].mxu0
        %v4421 = vadd.f32 0.0, %v4420
        %v4422 = vpop.f32.mrb[0].mxu0
        %4423 = vmatprep.mubr.f32.mxu0 %v4261
        %4424 = vmatmul.mubr.f32.gmra.mrb[0].mxu0 %v4196
        %v4425 = vpop.f32.mrb[0].mxu0
        %v4426 = vadd.f32 0.0, %v4425
        %v4427 = vpop.f32.mrb[0].mxu0
        %4428 = vmatprep.mubr.f32.mxu0 %v4264
        %4429 = vmatmul.mubr.f32.gmra.mrb[0].mxu0 %v4198
        %v4430 = vpop.f32.mrb[0].mxu0
        %v4431 = vadd.f32 0.0, %v4430
        %v4432 = vpop.f32.mrb[0].mxu0
        %4433 = vmatprep.mubr.f32.mxu0 %v4267
        %4434 = vmatmul.mubr.f32.gmra.mrb[0].mxu0 %v4200
        %v4435 = vpop.f32.mrb[0].mxu0
        %v4436 = vadd.f32 0.0, %v4435
        %v4437 = vpop.f32.mrb[0].mxu0
        %4438 = vmatprep.mubr.f32.mxu0 %v4270
        %4439 = vmatmul.mubr.f32.gmra.mrb[0].mxu0 %v4202
        %v4440 = vpop.f32.mrb[0].mxu0
        %v4441 = vadd.f32 0.0, %v4440
        %v4442 = vpop.f32.mrb[0].mxu0
        %4443 = vmatprep.mubr.f32.mxu0 %v4273
        %4444 = vmatmul.mubr.f32.gmra.mrb[0].mxu0 %v4204
        %v4445 = vpop.f32.mrb[0].mxu0
        %v4446 = vadd.f32 0.0, %v4445
        %v4447 = vpop.f32.mrb[0].mxu0
        %4448 = vmatprep.mubr.f32.mxu0 %v4276
        %4449 = vmatmul.mubr.f32.gmra.mrb[0].mxu0 %v4206
        %v4450 = vpop.f32.mrb[0].mxu0
        %v4451 = vadd.f32 0.0, %v4450
        %v4452 = vpop.f32.mrb[0].mxu0
        %4453 = vmatprep.mubr.f32.mxu0 %v4279
        %4454 = vmatmul.mubr.f32.gmra.mrb[0].mxu0 %v4208
        %v4455 = vpop.f32.mrb[0].mxu0
        %v4456 = vadd.f32 0.0, %v4455
        %v4457 = vpop.f32.mrb[0].mxu0
        %4458 = vmatprep.mubr.f32.mxu0 %v4282
        %4459 = vmatmul.mubr.f32.gmra.mrb[0].mxu0 %v4210
        %v4460 = vpop.f32.mrb[0].mxu0
        %v4461 = vadd.f32 0.0, %v4460
        %v4462 = vpop.f32.mrb[0].mxu0
        %4463 = vmatprep.mubr.f32.mxu0 %v4285
        %4464 = vmatmul.mubr.f32.gmra.mrb[0].mxu0 %v4212
        %v4465 = vpop.f32.mrb[0].mxu0
        %v4466 = vadd.f32 0.0, %v4465
        %v4467 = vpop.f32.mrb[0].mxu0
        %4468 = vmatprep.mubr.f32.mxu0 %v4288
        %4469 = vmatmul.mubr.f32.gmra.mrb[0].mxu0 %v4214
        %v4470 = vpop.f32.mrb[0].mxu0
        %v4471 = vadd.f32 0.0, %v4470
        %v4472 = vpop.f32.mrb[0].mxu0
        %4473 = vmatprep.mubr.f32.mxu0 %v4291
        %4474 = vmatmul.mubr.f32.gmra.mrb[0].mxu0 %v4216
        %v4475 = vpop.f32.mrb[0].mxu0
        %v4476 = vadd.f32 0.0, %v4475
        %v4477 = vpop.f32.mrb[0].mxu0
        %4478 = vmatprep.mubr.f32.mxu0 %v4294
        %4479 = vmatmul.mubr.f32.gmra.mrb[0].mxu0 %v4218
        %v4480 = vpop.f32.mrb[0].mxu0
        %v4481 = vadd.f32 0.0, %v4480
        %v4482 = vpop.f32.mrb[0].mxu0
        %4483 = vmatprep.mubr.f32.mxu0 %v4297
        %4484 = vmatmul.mubr.f32.gmra.mrb[0].mxu0 %v4220
        %v4485 = vpop.f32.mrb[0].mxu0
        %v4486 = vadd.f32 0.0, %v4485
        %v4487 = vpop.f32.mrb[0].mxu0
        %4488 = vmatprep.mubr.f32.mxu0 %v4300
        %4489 = vmatmul.mubr.f32.gmra.mrb[0].mxu0 %v4222
        %v4490 = vpop.f32.mrb[0].mxu0
        %v4491 = vadd.f32 0.0, %v4490
        %v4492 = vpop.f32.mrb[0].mxu0
        %4493 = vmatprep.mubr.f32.mxu0 %v4303
        %4494 = vmatmul.mubr.f32.gmra.mrb[0].mxu0 %v4224
        %v4495 = vpop.f32.mrb[0].mxu0
        %v4496 = vadd.f32 0.0, %v4495
        %v4497 = vpop.f32.mrb[0].mxu0
        %4498 = vmatprep.mubr.f32.mxu0 %v4306
        %4499 = vmatmul.mubr.f32.gmra.mrb[0].mxu0 %v4226
        %v4500 = vpop.f32.mrb[0].mxu0
        %v4501 = vadd.f32 0.0, %v4500
        %v4502 = vpop.f32.mrb[0].mxu0
        %4503 = vmatprep.mubr.f32.mxu0 %v4309
        %4504 = vmatmul.mubr.f32.gmra.mrb[0].mxu0 %v4228
        %v4505 = vpop.f32.mrb[0].mxu0
        %v4506 = vadd.f32 0.0, %v4505
        %v4507 = vpop.f32.mrb[0].mxu0
        %4508 = vmatprep.mubr.f32.mxu0 %v4312
        %4509 = vmatmul.mubr.f32.gmra.mrb[0].mxu0 %v4230
        %v4510 = vpop.f32.mrb[0].mxu0
        %v4511 = vadd.f32 0.0, %v4510
        %v4512 = vpop.f32.mrb[0].mxu0
        %4513 = vmatprep.mubr.f32.mxu0 %v4315
        %4514 = vmatmul.mubr.f32.gmra.mrb[0].mxu0 %v4232
        %v4515 = vpop.f32.mrb[0].mxu0
        %v4516 = vadd.f32 0.0, %v4515
        %v4517 = vpop.f32.mrb[0].mxu0
        %4518 = vmatprep.mubr.f32.mxu0 %v4318
        %4519 = vmatmul.mubr.f32.gmra.mrb[0].mxu0 %v4234
        %v4520 = vpop.f32.mrb[0].mxu0
        %v4521 = vadd.f32 0.0, %v4520
        %v4522 = vpop.f32.mrb[0].mxu0
        %4523 = vmatprep.mubr.f32.mxu0 %v4321
        %4524 = vmatmul.mubr.f32.gmra.mrb[0].mxu0 %v4236
        %v4525 = vpop.f32.mrb[0].mxu0
        %v4526 = vadd.f32 0.0, %v4525
        %v4527 = vpop.f32.mrb[0].mxu0
        %4528 = vmatprep.mubr.f32.mxu0 %v4324
        %4529 = vmatmul.mubr.f32.gmra.mrb[0].mxu0 %v4238
        %v4530 = vpop.f32.mrb[0].mxu0
        %v4531 = vadd.f32 0.0, %v4530
        %v4532 = vpop.f32.mrb[0].mxu0
        %4533 = vmatprep.mubr.f32.mxu0 %v4327
        %4534 = vmatmul.mubr.f32.gmra.mrb[0].mxu0 %v4240
        %v4535 = vpop.f32.mrb[0].mxu0
        %v4536 = vadd.f32 0.0, %v4535
        %v4537 = vpop.f32.mrb[0].mxu0
        %4538 = vdwg.mxu0
        %s4539 = scalar_lea.vmem %s2, 320
        %v4540 = vld [vmem:[%s4539] sm:$0xff]
        %v4541 = vld [vmem:[%s4539 + $0x8] sm:$0xff]
        %v4542 = vld [vmem:[%s4539 + $0x10] sm:$0xff]
        %v4543 = vld [vmem:[%s4539 + $0x18] sm:$0xff]
        %v4544 = vld [vmem:[%s4539 + $0x20] sm:$0xff]
        %v4545 = vld [vmem:[%s4539 + $0x28] sm:$0xff]
        %v4546 = vld [vmem:[%s4539 + $0x30] sm:$0xf]
        %v4547 = vld [vmem:[%s4539 + $0x38] sm:$0xf]
        %v4549 = vsel %vm1252, %v4396, 0
        %v4552 = vsel %vm1252, %v4401, 0
        %v4555 = vsel %vm1252, %v4406, 0
        %v4558 = vsel %vm1252, %v4411, 0
        %v4561 = vsel %vm1252, %v4416, 0
        %v4564 = vsel %vm1252, %v4421, 0
        %v4567 = vsel %vm1252, %v4426, 0
        %v4570 = vsel %vm1252, %v4431, 0
        %v4573 = vsel %vm1252, %v4436, 0
        %v4576 = vsel %vm1252, %v4441, 0
        %v4579 = vsel %vm1252, %v4446, 0
        %v4582 = vsel %vm1252, %v4451, 0
        %v4585 = vsel %vm1252, %v4456, 0
        %v4588 = vsel %vm1252, %v4461, 0
        %v4591 = vsel %vm1252, %v4466, 0
        %v4594 = vsel %vm1252, %v4471, 0
        %v4597 = vsel %vm1252, %v4476, 0
        %v4600 = vsel %vm1252, %v4481, 0
        %v4603 = vsel %vm1252, %v4486, 0
        %v4606 = vsel %vm1252, %v4491, 0
        %v4609 = vsel %vm1252, %v4496, 0
        %v4612 = vsel %vm1252, %v4501, 0
        %v4615 = vsel %vm1252, %v4506, 0
        %v4618 = vsel %vm1252, %v4511, 0
        %v4621 = vsel %vm1252, %v4516, 0
        %v4624 = vsel %vm1252, %v4521, 0
        %v4627 = vsel %vm1252, %v4526, 0
        %v4630 = vsel %vm1252, %v4531, 0
        %v4633 = vsel %vm1252, %v4536, 0
        %v4636 = vsel %vm1340, %v4546, 0
        %v4639 = vsel %vm1340, %v4547, 0
        %4641 = vmatprep.subr.mxu0 %v4541
        %4642 = vmatpush1.msra.mxu0 %v4540
        %4643 = vmatprep.subr.mxu0 %v4543
        %4644 = vmatpush1.msra.mxu0 %v4542
        %4645 = vmatprep.subr.mxu0 %v4545
        %4646 = vmatpush1.msra.mxu0 %v4544
        %4647 = vmatprep.subr.mxu0 %v4639
        %4648 = vmatpush1.msra.mxu0 %v4636
        %4649 = vmatprep.subr.mxu0 0.0
        %4650 = vmatpush1.msra.mxu0 0.0
        %4651 = vmatprep.subr.mxu0 0.0
        %4652 = vmatpush1.msra.mxu0 0.0
        %4653 = vmatprep.subr.mxu0 0.0
        %4654 = vmatpush1.msra.mxu0 0.0
        %4655 = vmatprep.subr.mxu0 0.0
        %4656 = vmatpush1.msra.mxu0 0.0
        %4657 = vmatprep.subr.mxu0 0.0
        %4658 = vmatpush1.msra.mxu0 0.0
        %4659 = vmatprep.subr.mxu0 0.0
        %4660 = vmatpush1.msra.mxu0 0.0
        %4661 = vmatprep.subr.mxu0 0.0
        %4662 = vmatpush1.msra.mxu0 0.0
        %4663 = vmatprep.subr.mxu0 0.0
        %4664 = vmatpush1.msra.mxu0 0.0
        %4665 = vmatprep.subr.mxu0 0.0
        %4666 = vmatpush1.msra.mxu0 0.0
        %4667 = vmatprep.subr.mxu0 0.0
        %4668 = vmatpush1.msra.mxu0 0.0
        %4669 = vmatprep.subr.mxu0 0.0
        %4670 = vmatpush1.msra.mxu0 0.0
        %4671 = vmatprep.subr.mxu0 0.0
        %4672 = vmatpush1.msra.mxu0 0.0
        %4673 = vmatprep.subr.mxu0 0.0
        %4674 = vmatpush1.msra.mxu0 0.0
        %4675 = vmatprep.subr.mxu0 0.0
        %4676 = vmatpush1.msra.mxu0 0.0
        %4677 = vmatprep.subr.mxu0 0.0
        %4678 = vmatpush1.msra.mxu0 0.0
        %4679 = vmatprep.subr.mxu0 0.0
        %4680 = vmatpush1.msra.mxu0 0.0
        %4681 = vmatprep.subr.mxu0 0.0
        %4682 = vmatpush1.msra.mxu0 0.0
        %4683 = vmatprep.subr.mxu0 0.0
        %4684 = vmatpush1.msra.mxu0 0.0
        %4685 = vmatprep.subr.mxu0 0.0
        %4686 = vmatpush1.msra.mxu0 0.0
        %4687 = vmatprep.subr.mxu0 0.0
        %4688 = vmatpush1.msra.mxu0 0.0
        %4689 = vmatprep.subr.mxu0 0.0
        %4690 = vmatpush1.msra.mxu0 0.0
        %4691 = vmatprep.subr.mxu0 0.0
        %4692 = vmatpush1.msra.mxu0 0.0
        %4693 = vmatprep.subr.mxu0 0.0
        %4694 = vmatpush1.msra.mxu0 0.0
        %4695 = vmatprep.subr.mxu0 0.0
        %4696 = vmatpush1.msra.mxu0 0.0
        %4697 = vmatprep.subr.mxu0 0.0
        %4698 = vmatpush1.msra.mxu0 0.0
        %4699 = vmatprep.subr.mxu0 0.0
        %4700 = vmatpush1.msra.mxu0 0.0
        %4701 = vmatprep.subr.mxu0 0.0
        %4702 = vmatpush1.msra.mxu0 0.0
        %4703 = vmatprep.subr.mxu0 0.0
        %4704 = vmatpush1.msra.mxu0 0.0
        %4705 = vmatprep.mubr.f32.mxu0 0.0
        %4706 = vmatmul.mubr.f32.gmra.mrb[0].mxu0 %v4549
        %v4707 = vpop.f32.mrb[0].mxu0
        %v4708 = vadd.f32 0.0, %v4707
        %v4709 = vpop.f32.mrb[0].mxu0
        %v4710 = vadd.f32 0.0, %v4709
        %4711 = vmatprep.mubr.f32.mxu0 0.0
        %4712 = vmatmul.mubr.f32.gmra.mrb[0].mxu0 %v4552
        %v4713 = vpop.f32.mrb[0].mxu0
        %v4714 = vadd.f32 0.0, %v4713
        %v4715 = vpop.f32.mrb[0].mxu0
        %v4716 = vadd.f32 0.0, %v4715
        %4717 = vmatprep.mubr.f32.mxu0 0.0
        %4718 = vmatmul.mubr.f32.gmra.mrb[0].mxu0 %v4555
        %v4719 = vpop.f32.mrb[0].mxu0
        %v4720 = vadd.f32 0.0, %v4719
        %v4721 = vpop.f32.mrb[0].mxu0
        %v4722 = vadd.f32 0.0, %v4721
        %4723 = vmatprep.mubr.f32.mxu0 0.0
        %4724 = vmatmul.mubr.f32.gmra.mrb[0].mxu0 %v4558
        %v4725 = vpop.f32.mrb[0].mxu0
        %v4726 = vadd.f32 0.0, %v4725
        %v4727 = vpop.f32.mrb[0].mxu0
        %v4728 = vadd.f32 0.0, %v4727
        %4729 = vmatprep.mubr.f32.mxu0 0.0
        %4730 = vmatmul.mubr.f32.gmra.mrb[0].mxu0 %v4561
        %v4731 = vpop.f32.mrb[0].mxu0
        %v4732 = vadd.f32 0.0, %v4731
        %v4733 = vpop.f32.mrb[0].mxu0
        %v4734 = vadd.f32 0.0, %v4733
        %4735 = vmatprep.mubr.f32.mxu0 0.0
        %4736 = vmatmul.mubr.f32.gmra.mrb[0].mxu0 %v4564
        %v4737 = vpop.f32.mrb[0].mxu0
        %v4738 = vadd.f32 0.0, %v4737
        %v4739 = vpop.f32.mrb[0].mxu0
        %v4740 = vadd.f32 0.0, %v4739
        %4741 = vmatprep.mubr.f32.mxu0 0.0
        %4742 = vmatmul.mubr.f32.gmra.mrb[0].mxu0 %v4567
        %v4743 = vpop.f32.mrb[0].mxu0
        %v4744 = vadd.f32 0.0, %v4743
        %v4745 = vpop.f32.mrb[0].mxu0
        %v4746 = vadd.f32 0.0, %v4745
        %4747 = vmatprep.mubr.f32.mxu0 0.0
        %4748 = vmatmul.mubr.f32.gmra.mrb[0].mxu0 %v4570
        %v4749 = vpop.f32.mrb[0].mxu0
        %v4750 = vadd.f32 0.0, %v4749
        %v4751 = vpop.f32.mrb[0].mxu0
        %v4752 = vadd.f32 0.0, %v4751
        %4753 = vmatprep.mubr.f32.mxu0 0.0
        %4754 = vmatmul.mubr.f32.gmra.mrb[0].mxu0 %v4573
        %v4755 = vpop.f32.mrb[0].mxu0
        %v4756 = vadd.f32 0.0, %v4755
        %v4757 = vpop.f32.mrb[0].mxu0
        %v4758 = vadd.f32 0.0, %v4757
        %4759 = vmatprep.mubr.f32.mxu0 0.0
        %4760 = vmatmul.mubr.f32.gmra.mrb[0].mxu0 %v4576
        %v4761 = vpop.f32.mrb[0].mxu0
        %v4762 = vadd.f32 0.0, %v4761
        %v4763 = vpop.f32.mrb[0].mxu0
        %v4764 = vadd.f32 0.0, %v4763
        %4765 = vmatprep.mubr.f32.mxu0 0.0
        %4766 = vmatmul.mubr.f32.gmra.mrb[0].mxu0 %v4579
        %v4767 = vpop.f32.mrb[0].mxu0
        %v4768 = vadd.f32 0.0, %v4767
        %v4769 = vpop.f32.mrb[0].mxu0
        %v4770 = vadd.f32 0.0, %v4769
        %4771 = vmatprep.mubr.f32.mxu0 0.0
        %4772 = vmatmul.mubr.f32.gmra.mrb[0].mxu0 %v4582
        %v4773 = vpop.f32.mrb[0].mxu0
        %v4774 = vadd.f32 0.0, %v4773
        %v4775 = vpop.f32.mrb[0].mxu0
        %v4776 = vadd.f32 0.0, %v4775
        %4777 = vmatprep.mubr.f32.mxu0 0.0
        %4778 = vmatmul.mubr.f32.gmra.mrb[0].mxu0 %v4585
        %v4779 = vpop.f32.mrb[0].mxu0
        %v4780 = vadd.f32 0.0, %v4779
        %v4781 = vpop.f32.mrb[0].mxu0
        %v4782 = vadd.f32 0.0, %v4781
        %4783 = vmatprep.mubr.f32.mxu0 0.0
        %4784 = vmatmul.mubr.f32.gmra.mrb[0].mxu0 %v4588
        %v4785 = vpop.f32.mrb[0].mxu0
        %v4786 = vadd.f32 0.0, %v4785
        %v4787 = vpop.f32.mrb[0].mxu0
        %v4788 = vadd.f32 0.0, %v4787
        %4789 = vmatprep.mubr.f32.mxu0 0.0
        %4790 = vmatmul.mubr.f32.gmra.mrb[0].mxu0 %v4591
        %v4791 = vpop.f32.mrb[0].mxu0
        %v4792 = vadd.f32 0.0, %v4791
        %v4793 = vpop.f32.mrb[0].mxu0
        %v4794 = vadd.f32 0.0, %v4793
        %4795 = vmatprep.mubr.f32.mxu0 0.0
        %4796 = vmatmul.mubr.f32.gmra.mrb[0].mxu0 %v4594
        %v4797 = vpop.f32.mrb[0].mxu0
        %v4798 = vadd.f32 0.0, %v4797
        %v4799 = vpop.f32.mrb[0].mxu0
        %v4800 = vadd.f32 0.0, %v4799
        %4801 = vmatprep.mubr.f32.mxu0 0.0
        %4802 = vmatmul.mubr.f32.gmra.mrb[0].mxu0 %v4597
        %v4803 = vpop.f32.mrb[0].mxu0
        %v4804 = vadd.f32 0.0, %v4803
        %v4805 = vpop.f32.mrb[0].mxu0
        %v4806 = vadd.f32 0.0, %v4805
        %4807 = vmatprep.mubr.f32.mxu0 0.0
        %4808 = vmatmul.mubr.f32.gmra.mrb[0].mxu0 %v4600
        %v4809 = vpop.f32.mrb[0].mxu0
        %v4810 = vadd.f32 0.0, %v4809
        %v4811 = vpop.f32.mrb[0].mxu0
        %v4812 = vadd.f32 0.0, %v4811
        %4813 = vmatprep.mubr.f32.mxu0 0.0
        %4814 = vmatmul.mubr.f32.gmra.mrb[0].mxu0 %v4603
        %v4815 = vpop.f32.mrb[0].mxu0
        %v4816 = vadd.f32 0.0, %v4815
        %v4817 = vpop.f32.mrb[0].mxu0
        %v4818 = vadd.f32 0.0, %v4817
        %4819 = vmatprep.mubr.f32.mxu0 0.0
        %4820 = vmatmul.mubr.f32.gmra.mrb[0].mxu0 %v4606
        %v4821 = vpop.f32.mrb[0].mxu0
        %v4822 = vadd.f32 0.0, %v4821
        %v4823 = vpop.f32.mrb[0].mxu0
        %v4824 = vadd.f32 0.0, %v4823
        %4825 = vmatprep.mubr.f32.mxu0 0.0
        %4826 = vmatmul.mubr.f32.gmra.mrb[0].mxu0 %v4609
        %v4827 = vpop.f32.mrb[0].mxu0
        %v4828 = vadd.f32 0.0, %v4827
        %v4829 = vpop.f32.mrb[0].mxu0
        %v4830 = vadd.f32 0.0, %v4829
        %4831 = vmatprep.mubr.f32.mxu0 0.0
        %4832 = vmatmul.mubr.f32.gmra.mrb[0].mxu0 %v4612
        %v4833 = vpop.f32.mrb[0].mxu0
        %v4834 = vadd.f32 0.0, %v4833
        %v4835 = vpop.f32.mrb[0].mxu0
        %v4836 = vadd.f32 0.0, %v4835
        %4837 = vmatprep.mubr.f32.mxu0 0.0
        %4838 = vmatmul.mubr.f32.gmra.mrb[0].mxu0 %v4615
        %v4839 = vpop.f32.mrb[0].mxu0
        %v4840 = vadd.f32 0.0, %v4839
        %v4841 = vpop.f32.mrb[0].mxu0
        %v4842 = vadd.f32 0.0, %v4841
        %4843 = vmatprep.mubr.f32.mxu0 0.0
        %4844 = vmatmul.mubr.f32.gmra.mrb[0].mxu0 %v4618
        %v4845 = vpop.f32.mrb[0].mxu0
        %v4846 = vadd.f32 0.0, %v4845
        %v4847 = vpop.f32.mrb[0].mxu0
        %v4848 = vadd.f32 0.0, %v4847
        %4849 = vmatprep.mubr.f32.mxu0 0.0
        %4850 = vmatmul.mubr.f32.gmra.mrb[0].mxu0 %v4621
        %v4851 = vpop.f32.mrb[0].mxu0
        %v4852 = vadd.f32 0.0, %v4851
        %v4853 = vpop.f32.mrb[0].mxu0
        %v4854 = vadd.f32 0.0, %v4853
        %4855 = vmatprep.mubr.f32.mxu0 0.0
        %4856 = vmatmul.mubr.f32.gmra.mrb[0].mxu0 %v4624
        %v4857 = vpop.f32.mrb[0].mxu0
        %v4858 = vadd.f32 0.0, %v4857
        %v4859 = vpop.f32.mrb[0].mxu0
        %v4860 = vadd.f32 0.0, %v4859
        %4861 = vmatprep.mubr.f32.mxu0 0.0
        %4862 = vmatmul.mubr.f32.gmra.mrb[0].mxu0 %v4627
        %v4863 = vpop.f32.mrb[0].mxu0
        %v4864 = vadd.f32 0.0, %v4863
        %v4865 = vpop.f32.mrb[0].mxu0
        %v4866 = vadd.f32 0.0, %v4865
        %4867 = vmatprep.mubr.f32.mxu0 0.0
        %4868 = vmatmul.mubr.f32.gmra.mrb[0].mxu0 %v4630
        %v4869 = vpop.f32.mrb[0].mxu0
        %v4870 = vadd.f32 0.0, %v4869
        %v4871 = vpop.f32.mrb[0].mxu0
        %v4872 = vadd.f32 0.0, %v4871
        %4873 = vmatprep.mubr.f32.mxu0 0.0
        %4874 = vmatmul.mubr.f32.gmra.mrb[0].mxu0 %v4633
        %v4875 = vpop.f32.mrb[0].mxu0
        %v4876 = vadd.f32 0.0, %v4875
        %v4877 = vpop.f32.mrb[0].mxu0
        %v4878 = vadd.f32 0.0, %v4877
        %4879 = vdwg.mxu0
        %v4880 = vadd.f32 %v4125, %v4708
        %v4881 = vadd.f32 %v4126, %v4710
        %v4882 = vadd.f32 %v4127, %v4714
        %v4883 = vadd.f32 %v4128, %v4716
        %v4884 = vadd.f32 %v4129, %v4720
        %v4885 = vadd.f32 %v4130, %v4722
        %v4886 = vadd.f32 %v4131, %v4726
        %v4887 = vadd.f32 %v4132, %v4728
        %v4888 = vadd.f32 %v4133, %v4732
        %v4889 = vadd.f32 %v4134, %v4734
        %v4890 = vadd.f32 %v4135, %v4738
        %v4891 = vadd.f32 %v4136, %v4740
        %v4892 = vadd.f32 %v4137, %v4744
        %v4893 = vadd.f32 %v4138, %v4746
        %v4894 = vadd.f32 %v4139, %v4750
        %v4895 = vadd.f32 %v4140, %v4752
        %v4896 = vadd.f32 %v4141, %v4756
        %v4897 = vadd.f32 %v4142, %v4758
        %v4898 = vadd.f32 %v4143, %v4762
        %v4899 = vadd.f32 %v4144, %v4764
        %v4900 = vadd.f32 %v4145, %v4768
        %v4901 = vadd.f32 %v4146, %v4770
        %v4902 = vadd.f32 %v4147, %v4774
        %v4903 = vadd.f32 %v4148, %v4776
        %v4904 = vadd.f32 %v4149, %v4780
        %v4905 = vadd.f32 %v4150, %v4782
        %v4906 = vadd.f32 %v4151, %v4786
        %v4907 = vadd.f32 %v4152, %v4788
        %v4908 = vadd.f32 %v4153, %v4792
        %v4909 = vadd.f32 %v4154, %v4794
        %v4910 = vadd.f32 %v4155, %v4798
        %v4911 = vadd.f32 %v4156, %v4800
        %v4912 = vadd.f32 %v4157, %v4804
        %v4913 = vadd.f32 %v4158, %v4806
        %v4914 = vadd.f32 %v4159, %v4810
        %v4915 = vadd.f32 %v4160, %v4812
        %v4916 = vadd.f32 %v4161, %v4816
        %v4917 = vadd.f32 %v4162, %v4818
        %v4918 = vadd.f32 %v4163, %v4822
        %v4919 = vadd.f32 %v4164, %v4824
        %v4920 = vadd.f32 %v4165, %v4828
        %v4921 = vadd.f32 %v4166, %v4830
        %v4922 = vadd.f32 %v4167, %v4834
        %v4923 = vadd.f32 %v4168, %v4836
        %v4924 = vadd.f32 %v4169, %v4840
        %v4925 = vadd.f32 %v4170, %v4842
        %v4926 = vadd.f32 %v4171, %v4846
        %v4927 = vadd.f32 %v4172, %v4848
        %v4928 = vadd.f32 %v4173, %v4852
        %v4929 = vadd.f32 %v4174, %v4854
        %v4930 = vadd.f32 %v4175, %v4858
        %v4931 = vadd.f32 %v4176, %v4860
        %v4932 = vadd.f32 %v4177, %v4864
        %v4933 = vadd.f32 %v4178, %v4866
        %v4934 = vadd.f32 %v4179, %v4870
        %v4935 = vadd.f32 %v4180, %v4872
        %v4936 = vadd.f32 %v4181, %v4876
        %v4937 = vadd.f32 %v4182, %v4878
        %v4938 = vld [vmem:[%s3] sm:$0x3]
        %v4940 = vlaneseq
        %v4941 = vshrl.u32 %v4940, 7
        %v4942 = vsub.s32 0, %v4941
        %v4943 = vrot.slane %v4938, %v4942
        %v4944 = vlaneseq
        %v4945 = vshrl.u32 %v4944, 7
        %v4946 = vsub.s32 1, %v4945
        %v4947 = vrot.slane %v4938, %v4946
        %v4950 = vadd.f32 %v4880, %v4943
        %v4951 = vadd.f32 %v4881, %v4947
        %v4952 = vadd.f32 %v4882, %v4943
        %v4953 = vadd.f32 %v4883, %v4947
        %v4954 = vadd.f32 %v4884, %v4943
        %v4955 = vadd.f32 %v4885, %v4947
        %v4956 = vadd.f32 %v4886, %v4943
        %v4957 = vadd.f32 %v4887, %v4947
        %v4958 = vadd.f32 %v4888, %v4943
        %v4959 = vadd.f32 %v4889, %v4947
        %v4960 = vadd.f32 %v4890, %v4943
        %v4961 = vadd.f32 %v4891, %v4947
        %v4962 = vadd.f32 %v4892, %v4943
        %v4963 = vadd.f32 %v4893, %v4947
        %v4964 = vadd.f32 %v4894, %v4943
        %v4965 = vadd.f32 %v4895, %v4947
        %v4966 = vadd.f32 %v4896, %v4943
        %v4967 = vadd.f32 %v4897, %v4947
        %v4968 = vadd.f32 %v4898, %v4943
        %v4969 = vadd.f32 %v4899, %v4947
        %v4970 = vadd.f32 %v4900, %v4943
        %v4971 = vadd.f32 %v4901, %v4947
        %v4972 = vadd.f32 %v4902, %v4943
        %v4973 = vadd.f32 %v4903, %v4947
        %v4974 = vadd.f32 %v4904, %v4943
        %v4975 = vadd.f32 %v4905, %v4947
        %v4976 = vadd.f32 %v4906, %v4943
        %v4977 = vadd.f32 %v4907, %v4947
        %v4978 = vadd.f32 %v4908, %v4943
        %v4979 = vadd.f32 %v4909, %v4947
        %v4980 = vadd.f32 %v4910, %v4943
        %v4981 = vadd.f32 %v4911, %v4947
        %v4982 = vadd.f32 %v4912, %v4943
        %v4983 = vadd.f32 %v4913, %v4947
        %v4984 = vadd.f32 %v4914, %v4943
        %v4985 = vadd.f32 %v4915, %v4947
        %v4986 = vadd.f32 %v4916, %v4943
        %v4987 = vadd.f32 %v4917, %v4947
        %v4988 = vadd.f32 %v4918, %v4943
        %v4989 = vadd.f32 %v4919, %v4947
        %v4990 = vadd.f32 %v4920, %v4943
        %v4991 = vadd.f32 %v4921, %v4947
        %v4992 = vadd.f32 %v4922, %v4943
        %v4993 = vadd.f32 %v4923, %v4947
        %v4994 = vadd.f32 %v4924, %v4943
        %v4995 = vadd.f32 %v4925, %v4947
        %v4996 = vadd.f32 %v4926, %v4943
        %v4997 = vadd.f32 %v4927, %v4947
        %v4998 = vadd.f32 %v4928, %v4943
        %v4999 = vadd.f32 %v4929, %v4947
        %v5000 = vadd.f32 %v4930, %v4943
        %v5001 = vadd.f32 %v4931, %v4947
        %v5002 = vadd.f32 %v4932, %v4943
        %v5003 = vadd.f32 %v4933, %v4947
        %v5004 = vadd.f32 %v4934, %v4943
        %v5005 = vadd.f32 %v4935, %v4947
        %v5006 = vadd.f32 %v4936, %v4943
        %v5007 = vadd.f32 %v4937, %v4947
        %v5008 = vmax.f32 %v4950, 0.0
        %v5009 = vmax.f32 %v4951, 0.0
        %v5010 = vmax.f32 %v4952, 0.0
        %v5011 = vmax.f32 %v4953, 0.0
        %v5012 = vmax.f32 %v4954, 0.0
        %v5013 = vmax.f32 %v4955, 0.0
        %v5014 = vmax.f32 %v4956, 0.0
        %v5015 = vmax.f32 %v4957, 0.0
        %v5016 = vmax.f32 %v4958, 0.0
        %v5017 = vmax.f32 %v4959, 0.0
        %v5018 = vmax.f32 %v4960, 0.0
        %v5019 = vmax.f32 %v4961, 0.0
        %v5020 = vmax.f32 %v4962, 0.0
        %v5021 = vmax.f32 %v4963, 0.0
        %v5022 = vmax.f32 %v4964, 0.0
        %v5023 = vmax.f32 %v4965, 0.0
        %v5024 = vmax.f32 %v4966, 0.0
        %v5025 = vmax.f32 %v4967, 0.0
        %v5026 = vmax.f32 %v4968, 0.0
        %v5027 = vmax.f32 %v4969, 0.0
        %v5028 = vmax.f32 %v4970, 0.0
        %v5029 = vmax.f32 %v4971, 0.0
        %v5030 = vmax.f32 %v4972, 0.0
        %v5031 = vmax.f32 %v4973, 0.0
        %v5032 = vmax.f32 %v4974, 0.0
        %v5033 = vmax.f32 %v4975, 0.0
        %v5034 = vmax.f32 %v4976, 0.0
        %v5035 = vmax.f32 %v4977, 0.0
        %v5036 = vmax.f32 %v4978, 0.0
        %v5037 = vmax.f32 %v4979, 0.0
        %v5038 = vmax.f32 %v4980, 0.0
        %v5039 = vmax.f32 %v4981, 0.0
        %v5040 = vmax.f32 %v4982, 0.0
        %v5041 = vmax.f32 %v4983, 0.0
        %v5042 = vmax.f32 %v4984, 0.0
        %v5043 = vmax.f32 %v4985, 0.0
        %v5044 = vmax.f32 %v4986, 0.0
        %v5045 = vmax.f32 %v4987, 0.0
        %v5046 = vmax.f32 %v4988, 0.0
        %v5047 = vmax.f32 %v4989, 0.0
        %v5048 = vmax.f32 %v4990, 0.0
        %v5049 = vmax.f32 %v4991, 0.0
        %v5050 = vmax.f32 %v4992, 0.0
        %v5051 = vmax.f32 %v4993, 0.0
        %v5052 = vmax.f32 %v4994, 0.0
        %v5053 = vmax.f32 %v4995, 0.0
        %v5054 = vmax.f32 %v4996, 0.0
        %v5055 = vmax.f32 %v4997, 0.0
        %v5056 = vmax.f32 %v4998, 0.0
        %v5057 = vmax.f32 %v4999, 0.0
        %v5058 = vmax.f32 %v5000, 0.0
        %v5059 = vmax.f32 %v5001, 0.0
        %v5060 = vmax.f32 %v5002, 0.0
        %v5061 = vmax.f32 %v5003, 0.0
        %v5062 = vmax.f32 %v5004, 0.0
        %v5063 = vmax.f32 %v5005, 0.0
        %v5064 = vmax.f32 %v5006, 0.0
        %v5065 = vmax.f32 %v5007, 0.0
        %v5066 = vld [vmem:[%s4] sm:$0xff]
        %v5067 = vld [vmem:[%s4 + $0x8] sm:$0xff]
        %v5068 = vld [vmem:[%s4 + $0x10] sm:$0xff]
        %v5069 = vld [vmem:[%s4 + $0x18] sm:$0xff]
        %v5070 = vld [vmem:[%s4 + $0x20] sm:$0xff]
        %v5071 = vld [vmem:[%s4 + $0x28] sm:$0xff]
        %v5072 = vld [vmem:[%s4 + $0x30] sm:$0xff]
        %v5073 = vld [vmem:[%s4 + $0x38] sm:$0xff]
        %v5074 = vld [vmem:[%s4 + $0x40] sm:$0xff]
        %v5075 = vld [vmem:[%s4 + $0x48] sm:$0xff]
        %v5076 = vld [vmem:[%s4 + $0x50] sm:$0xff]
        %v5077 = vld [vmem:[%s4 + $0x58] sm:$0xff]
        %v5078 = vld [vmem:[%s4 + $0x60] sm:$0xff]
        %v5079 = vld [vmem:[%s4 + $0x68] sm:$0xff]
        %v5080 = vld [vmem:[%s4 + $0x70] sm:$0xff]
        %v5081 = vld [vmem:[%s4 + $0x78] sm:$0xff]
        %v5082 = vld [vmem:[%s4 + $0x80] sm:$0xff]
        %v5083 = vld [vmem:[%s4 + $0x88] sm:$0xff]
        %v5084 = vld [vmem:[%s4 + $0x90] sm:$0xff]
        %v5085 = vld [vmem:[%s4 + $0x98] sm:$0xff]
        %v5086 = vld [vmem:[%s4 + $0xa0] sm:$0xff]
        %v5087 = vld [vmem:[%s4 + $0xa8] sm:$0xff]
        %v5088 = vld [vmem:[%s4 + $0xb0] sm:$0xff]
        %v5089 = vld [vmem:[%s4 + $0xb8] sm:$0xff]
        %v5090 = vld [vmem:[%s4 + $0xc0] sm:$0xff]
        %v5091 = vld [vmem:[%s4 + $0xc8] sm:$0xff]
        %v5092 = vld [vmem:[%s4 + $0xd0] sm:$0xff]
        %v5093 = vld [vmem:[%s4 + $0xd8] sm:$0xff]
        %v5094 = vld [vmem:[%s4 + $0xe0] sm:$0xff]
        %v5095 = vld [vmem:[%s4 + $0xe8] sm:$0xff]
        %vm5096 = vcmask 850944
        %v5098 = vsel %vm5096, %v5067, 0
        %v5101 = vsel %vm5096, %v5069, 0
        %v5104 = vsel %vm5096, %v5071, 0
        %v5107 = vsel %vm5096, %v5073, 0
        %v5110 = vsel %vm5096, %v5075, 0
        %v5113 = vsel %vm5096, %v5077, 0
        %v5116 = vsel %vm5096, %v5079, 0
        %v5119 = vsel %vm5096, %v5081, 0
        %v5122 = vsel %vm5096, %v5083, 0
        %v5125 = vsel %vm5096, %v5085, 0
        %v5128 = vsel %vm5096, %v5087, 0
        %v5131 = vsel %vm5096, %v5089, 0
        %v5134 = vsel %vm5096, %v5091, 0
        %v5137 = vsel %vm5096, %v5093, 0
        %v5140 = vsel %vm5096, %v5095, 0
        %5142 = vmatprep.subr.mxu0 %v5009
        %5143 = vmatpush1.msra.mxu0 %v5008
        %5144 = vmatprep.subr.mxu0 %v5011
        %5145 = vmatpush1.msra.mxu0 %v5010
        %5146 = vmatprep.subr.mxu0 %v5013
        %5147 = vmatpush1.msra.mxu0 %v5012
        %5148 = vmatprep.subr.mxu0 %v5015
        %5149 = vmatpush1.msra.mxu0 %v5014
        %5150 = vmatprep.subr.mxu0 %v5017
        %5151 = vmatpush1.msra.mxu0 %v5016
        %5152 = vmatprep.subr.mxu0 %v5019
        %5153 = vmatpush1.msra.mxu0 %v5018
        %5154 = vmatprep.subr.mxu0 %v5021
        %5155 = vmatpush1.msra.mxu0 %v5020
        %5156 = vmatprep.subr.mxu0 %v5023
        %5157 = vmatpush1.msra.mxu0 %v5022
        %5158 = vmatprep.subr.mxu0 %v5025
        %5159 = vmatpush1.msra.mxu0 %v5024
        %5160 = vmatprep.subr.mxu0 %v5027
        %5161 = vmatpush1.msra.mxu0 %v5026
        %5162 = vmatprep.subr.mxu0 %v5029
        %5163 = vmatpush1.msra.mxu0 %v5028
        %5164 = vmatprep.subr.mxu0 %v5031
        %5165 = vmatpush1.msra.mxu0 %v5030
        %5166 = vmatprep.subr.mxu0 %v5033
        %5167 = vmatpush1.msra.mxu0 %v5032
        %5168 = vmatprep.subr.mxu0 %v5035
        %5169 = vmatpush1.msra.mxu0 %v5034
        %5170 = vmatprep.subr.mxu0 %v5037
        %5171 = vmatpush1.msra.mxu0 %v5036
        %5172 = vmatprep.subr.mxu0 %v5039
        %5173 = vmatpush1.msra.mxu0 %v5038
        %5174 = vmatprep.subr.mxu0 %v5041
        %5175 = vmatpush1.msra.mxu0 %v5040
        %5176 = vmatprep.subr.mxu0 %v5043
        %5177 = vmatpush1.msra.mxu0 %v5042
        %5178 = vmatprep.subr.mxu0 %v5045
        %5179 = vmatpush1.msra.mxu0 %v5044
        %5180 = vmatprep.subr.mxu0 %v5047
        %5181 = vmatpush1.msra.mxu0 %v5046
        %5182 = vmatprep.subr.mxu0 %v5049
        %5183 = vmatpush1.msra.mxu0 %v5048
        %5184 = vmatprep.subr.mxu0 %v5051
        %5185 = vmatpush1.msra.mxu0 %v5050
        %5186 = vmatprep.subr.mxu0 %v5053
        %5187 = vmatpush1.msra.mxu0 %v5052
        %5188 = vmatprep.subr.mxu0 %v5055
        %5189 = vmatpush1.msra.mxu0 %v5054
        %5190 = vmatprep.subr.mxu0 %v5057
        %5191 = vmatpush1.msra.mxu0 %v5056
        %5192 = vmatprep.subr.mxu0 %v5059
        %5193 = vmatpush1.msra.mxu0 %v5058
        %5194 = vmatprep.subr.mxu0 %v5061
        %5195 = vmatpush1.msra.mxu0 %v5060
        %5196 = vmatprep.subr.mxu0 %v5063
        %5197 = vmatpush1.msra.mxu0 %v5062
        %5198 = vmatprep.subr.mxu0 %v5065
        %5199 = vmatpush1.msra.mxu0 %v5064
        %5200 = vmatprep.subr.mxu0 0.0
        %5201 = vmatpush1.msra.mxu0 0.0
        %5202 = vmatprep.subr.mxu0 0.0
        %5203 = vmatpush1.msra.mxu0 0.0
        %5204 = vmatprep.subr.mxu0 0.0
        %5205 = vmatpush1.msra.mxu0 0.0
        %5206 = vmatprep.mubr.f32.mxu0 %v5098
        %5207 = vmatmul.mubr.f32.gmra.mrb[0].mxu0 %v5066
        %v5208 = vpop.f32.mrb[0].mxu0
        %v5209 = vadd.f32 0.0, %v5208
        %v5210 = vpop.f32.mrb[0].mxu0
        %v5211 = vadd.f32 0.0, %v5210
        %5212 = vmatprep.mubr.f32.mxu0 %v5101
        %5213 = vmatmul.mubr.f32.gmra.mrb[0].mxu0 %v5068
        %v5214 = vpop.f32.mrb[0].mxu0
        %v5215 = vadd.f32 0.0, %v5214
        %v5216 = vpop.f32.mrb[0].mxu0
        %v5217 = vadd.f32 0.0, %v5216
        %5218 = vmatprep.mubr.f32.mxu0 %v5104
        %5219 = vmatmul.mubr.f32.gmra.mrb[0].mxu0 %v5070
        %v5220 = vpop.f32.mrb[0].mxu0
        %v5221 = vadd.f32 0.0, %v5220
        %v5222 = vpop.f32.mrb[0].mxu0
        %v5223 = vadd.f32 0.0, %v5222
        %5224 = vmatprep.mubr.f32.mxu0 %v5107
        %5225 = vmatmul.mubr.f32.gmra.mrb[0].mxu0 %v5072
        %v5226 = vpop.f32.mrb[0].mxu0
        %v5227 = vadd.f32 0.0, %v5226
        %v5228 = vpop.f32.mrb[0].mxu0
        %v5229 = vadd.f32 0.0, %v5228
        %5230 = vmatprep.mubr.f32.mxu0 %v5110
        %5231 = vmatmul.mubr.f32.gmra.mrb[0].mxu0 %v5074
        %v5232 = vpop.f32.mrb[0].mxu0
        %v5233 = vadd.f32 0.0, %v5232
        %v5234 = vpop.f32.mrb[0].mxu0
        %v5235 = vadd.f32 0.0, %v5234
        %5236 = vmatprep.mubr.f32.mxu0 %v5113
        %5237 = vmatmul.mubr.f32.gmra.mrb[0].mxu0 %v5076
        %v5238 = vpop.f32.mrb[0].mxu0
        %v5239 = vadd.f32 0.0, %v5238
        %v5240 = vpop.f32.mrb[0].mxu0
        %v5241 = vadd.f32 0.0, %v5240
        %5242 = vmatprep.mubr.f32.mxu0 %v5116
        %5243 = vmatmul.mubr.f32.gmra.mrb[0].mxu0 %v5078
        %v5244 = vpop.f32.mrb[0].mxu0
        %v5245 = vadd.f32 0.0, %v5244
        %v5246 = vpop.f32.mrb[0].mxu0
        %v5247 = vadd.f32 0.0, %v5246
        %5248 = vmatprep.mubr.f32.mxu0 %v5119
        %5249 = vmatmul.mubr.f32.gmra.mrb[0].mxu0 %v5080
        %v5250 = vpop.f32.mrb[0].mxu0
        %v5251 = vadd.f32 0.0, %v5250
        %v5252 = vpop.f32.mrb[0].mxu0
        %v5253 = vadd.f32 0.0, %v5252
        %5254 = vmatprep.mubr.f32.mxu0 %v5122
        %5255 = vmatmul.mubr.f32.gmra.mrb[0].mxu0 %v5082
        %v5256 = vpop.f32.mrb[0].mxu0
        %v5257 = vadd.f32 0.0, %v5256
        %v5258 = vpop.f32.mrb[0].mxu0
        %v5259 = vadd.f32 0.0, %v5258
        %5260 = vmatprep.mubr.f32.mxu0 %v5125
        %5261 = vmatmul.mubr.f32.gmra.mrb[0].mxu0 %v5084
        %v5262 = vpop.f32.mrb[0].mxu0
        %v5263 = vadd.f32 0.0, %v5262
        %v5264 = vpop.f32.mrb[0].mxu0
        %v5265 = vadd.f32 0.0, %v5264
        %5266 = vmatprep.mubr.f32.mxu0 %v5128
        %5267 = vmatmul.mubr.f32.gmra.mrb[0].mxu0 %v5086
        %v5268 = vpop.f32.mrb[0].mxu0
        %v5269 = vadd.f32 0.0, %v5268
        %v5270 = vpop.f32.mrb[0].mxu0
        %v5271 = vadd.f32 0.0, %v5270
        %5272 = vmatprep.mubr.f32.mxu0 %v5131
        %5273 = vmatmul.mubr.f32.gmra.mrb[0].mxu0 %v5088
        %v5274 = vpop.f32.mrb[0].mxu0
        %v5275 = vadd.f32 0.0, %v5274
        %v5276 = vpop.f32.mrb[0].mxu0
        %v5277 = vadd.f32 0.0, %v5276
        %5278 = vmatprep.mubr.f32.mxu0 %v5134
        %5279 = vmatmul.mubr.f32.gmra.mrb[0].mxu0 %v5090
        %v5280 = vpop.f32.mrb[0].mxu0
        %v5281 = vadd.f32 0.0, %v5280
        %v5282 = vpop.f32.mrb[0].mxu0
        %v5283 = vadd.f32 0.0, %v5282
        %5284 = vmatprep.mubr.f32.mxu0 %v5137
        %5285 = vmatmul.mubr.f32.gmra.mrb[0].mxu0 %v5092
        %v5286 = vpop.f32.mrb[0].mxu0
        %v5287 = vadd.f32 0.0, %v5286
        %v5288 = vpop.f32.mrb[0].mxu0
        %v5289 = vadd.f32 0.0, %v5288
        %5290 = vmatprep.mubr.f32.mxu0 %v5140
        %5291 = vmatmul.mubr.f32.gmra.mrb[0].mxu0 %v5094
        %v5292 = vpop.f32.mrb[0].mxu0
        %v5293 = vadd.f32 0.0, %v5292
        %v5294 = vpop.f32.mrb[0].mxu0
        %v5295 = vadd.f32 0.0, %v5294
        %5296 = vdwg.mxu0
        %v5297 = vld [vmem:[%s5] sm:$0xff]
        %v5298 = vld [vmem:[%s5 + $0x8] sm:$0xff]
        %v5299 = vld [vmem:[%s5 + $0x10] sm:$0xff]
        %v5300 = vld [vmem:[%s5 + $0x18] sm:$0xff]
        %v5301 = vld [vmem:[%s5 + $0x20] sm:$0xff]
        %v5302 = vld [vmem:[%s5 + $0x28] sm:$0xff]
        %v5303 = vld [vmem:[%s5 + $0x30] sm:$0xff]
        %v5304 = vld [vmem:[%s5 + $0x38] sm:$0xff]
        %v5305 = vld [vmem:[%s5 + $0x40] sm:$0xff]
        %v5306 = vld [vmem:[%s5 + $0x48] sm:$0xff]
        %v5307 = vld [vmem:[%s5 + $0x50] sm:$0xff]
        %v5308 = vld [vmem:[%s5 + $0x58] sm:$0xff]
        %v5309 = vld [vmem:[%s5 + $0x60] sm:$0xff]
        %v5310 = vld [vmem:[%s5 + $0x68] sm:$0xff]
        %v5311 = vld [vmem:[%s5 + $0x70] sm:$0xff]
        %v5312 = vld [vmem:[%s5 + $0x78] sm:$0xff]
        %v5313 = vld [vmem:[%s5 + $0x80] sm:$0xff]
        %v5314 = vld [vmem:[%s5 + $0x88] sm:$0xff]
        %v5315 = vld [vmem:[%s5 + $0x90] sm:$0xff]
        %v5316 = vld [vmem:[%s5 + $0x98] sm:$0xff]
        %v5317 = vld [vmem:[%s5 + $0xa0] sm:$0xff]
        %v5318 = vld [vmem:[%s5 + $0xa8] sm:$0xff]
        %v5319 = vld [vmem:[%s5 + $0xb0] sm:$0xff]
        %v5320 = vld [vmem:[%s5 + $0xb8] sm:$0xff]
        %v5321 = vld [vmem:[%s5 + $0xc0] sm:$0xff]
        %v5322 = vld [vmem:[%s5 + $0xc8] sm:$0xff]
        %v5323 = vld [vmem:[%s5 + $0xd0] sm:$0xff]
        %v5324 = vld [vmem:[%s5 + $0xd8] sm:$0xff]
        %v5325 = vld [vmem:[%s5 + $0xe0] sm:$0xff]
        %v5326 = vld [vmem:[%s5 + $0xe8] sm:$0xff]
        %v5327 = vld [vmem:[%s5 + $0xf0] sm:$0xff]
        %v5328 = vld [vmem:[%s5 + $0xf8] sm:$0xff]
        %v5329 = vld [vmem:[%s5 + $0x100] sm:$0xff]
        %v5330 = vld [vmem:[%s5 + $0x108] sm:$0xff]
        %v5331 = vld [vmem:[%s5 + $0x110] sm:$0xff]
        %v5332 = vld [vmem:[%s5 + $0x118] sm:$0xff]
        %v5333 = vld [vmem:[%s5 + $0x120] sm:$0xff]
        %v5334 = vld [vmem:[%s5 + $0x128] sm:$0xff]
        %v5335 = vld [vmem:[%s5 + $0x130] sm:$0xff]
        %v5336 = vld [vmem:[%s5 + $0x138] sm:$0xff]
        %v5337 = vld [vmem:[%s5 + $0x140] sm:$0xff]
        %v5338 = vld [vmem:[%s5 + $0x148] sm:$0xff]
        %v5339 = vld [vmem:[%s5 + $0x150] sm:$0x3f]
        %v5340 = vld [vmem:[%s5 + $0x158] sm:$0x3f]
        %s5341 = scalar_lea.vmem %s4, 240
        %v5342 = vld [vmem:[%s5341] sm:$0xff]
        %v5343 = vld [vmem:[%s5341 + $0x8] sm:$0xff]
        %v5344 = vld [vmem:[%s5341 + $0x10] sm:$0xff]
        %v5345 = vld [vmem:[%s5341 + $0x18] sm:$0xff]
        %v5346 = vld [vmem:[%s5341 + $0x20] sm:$0xff]
        %v5347 = vld [vmem:[%s5341 + $0x28] sm:$0xff]
        %v5348 = vld [vmem:[%s5341 + $0x30] sm:$0xff]
        %v5349 = vld [vmem:[%s5341 + $0x38] sm:$0xff]
        %v5350 = vld [vmem:[%s5341 + $0x40] sm:$0xff]
        %v5351 = vld [vmem:[%s5341 + $0x48] sm:$0xff]
        %v5352 = vld [vmem:[%s5341 + $0x50] sm:$0xff]
        %v5353 = vld [vmem:[%s5341 + $0x58] sm:$0xff]
        %v5354 = vld [vmem:[%s5341 + $0x60] sm:$0xff]
        %v5355 = vld [vmem:[%s5341 + $0x68] sm:$0xff]
        %v5356 = vld [vmem:[%s5341 + $0x70] sm:$0xff]
        %v5357 = vld [vmem:[%s5341 + $0x78] sm:$0xff]
        %v5358 = vld [vmem:[%s5341 + $0x80] sm:$0xff]
        %v5359 = vld [vmem:[%s5341 + $0x88] sm:$0xff]
        %v5360 = vld [vmem:[%s5341 + $0x90] sm:$0xff]
        %v5361 = vld [vmem:[%s5341 + $0x98] sm:$0xff]
        %v5362 = vld [vmem:[%s5341 + $0xa0] sm:$0xff]
        %v5363 = vld [vmem:[%s5341 + $0xa8] sm:$0xff]
        %v5364 = vld [vmem:[%s5341 + $0xb0] sm:$0xff]
        %v5365 = vld [vmem:[%s5341 + $0xb8] sm:$0xff]
        %v5366 = vld [vmem:[%s5341 + $0xc0] sm:$0xff]
        %v5367 = vld [vmem:[%s5341 + $0xc8] sm:$0xff]
        %v5368 = vld [vmem:[%s5341 + $0xd0] sm:$0xff]
        %v5369 = vld [vmem:[%s5341 + $0xd8] sm:$0xff]
        %v5370 = vld [vmem:[%s5341 + $0xe0] sm:$0xff]
        %v5371 = vld [vmem:[%s5341 + $0xe8] sm:$0xff]
        %v5373 = vsel %vm5096, %v5343, 0
        %v5376 = vsel %vm5096, %v5345, 0
        %v5379 = vsel %vm5096, %v5347, 0
        %v5382 = vsel %vm5096, %v5349, 0
        %v5385 = vsel %vm5096, %v5351, 0
        %v5388 = vsel %vm5096, %v5353, 0
        %v5391 = vsel %vm5096, %v5355, 0
        %v5394 = vsel %vm5096, %v5357, 0
        %v5397 = vsel %vm5096, %v5359, 0
        %v5400 = vsel %vm5096, %v5361, 0
        %v5403 = vsel %vm5096, %v5363, 0
        %v5406 = vsel %vm5096, %v5365, 0
        %v5409 = vsel %vm5096, %v5367, 0
        %v5412 = vsel %vm5096, %v5369, 0
        %v5415 = vsel %vm5096, %v5371, 0
        %5417 = vmatprep.subr.mxu0 %v5009
        %5418 = vmatpush1.msra.mxu0 %v5008
        %5419 = vmatprep.subr.mxu0 %v5011
        %5420 = vmatpush1.msra.mxu0 %v5010
        %5421 = vmatprep.subr.mxu0 %v5013
        %5422 = vmatpush1.msra.mxu0 %v5012
        %5423 = vmatprep.subr.mxu0 %v5015
        %5424 = vmatpush1.msra.mxu0 %v5014
        %5425 = vmatprep.subr.mxu0 %v5017
        %5426 = vmatpush1.msra.mxu0 %v5016
        %5427 = vmatprep.subr.mxu0 %v5019
        %5428 = vmatpush1.msra.mxu0 %v5018
        %5429 = vmatprep.subr.mxu0 %v5021
        %5430 = vmatpush1.msra.mxu0 %v5020
        %5431 = vmatprep.subr.mxu0 %v5023
        %5432 = vmatpush1.msra.mxu0 %v5022
        %5433 = vmatprep.subr.mxu0 %v5025
        %5434 = vmatpush1.msra.mxu0 %v5024
        %5435 = vmatprep.subr.mxu0 %v5027
        %5436 = vmatpush1.msra.mxu0 %v5026
        %5437 = vmatprep.subr.mxu0 %v5029
        %5438 = vmatpush1.msra.mxu0 %v5028
        %5439 = vmatprep.subr.mxu0 %v5031
        %5440 = vmatpush1.msra.mxu0 %v5030
        %5441 = vmatprep.subr.mxu0 %v5033
        %5442 = vmatpush1.msra.mxu0 %v5032
        %5443 = vmatprep.subr.mxu0 %v5035
        %5444 = vmatpush1.msra.mxu0 %v5034
        %5445 = vmatprep.subr.mxu0 %v5037
        %5446 = vmatpush1.msra.mxu0 %v5036
        %5447 = vmatprep.subr.mxu0 %v5039
        %5448 = vmatpush1.msra.mxu0 %v5038
        %5449 = vmatprep.subr.mxu0 %v5041
        %5450 = vmatpush1.msra.mxu0 %v5040
        %5451 = vmatprep.subr.mxu0 %v5043
        %5452 = vmatpush1.msra.mxu0 %v5042
        %5453 = vmatprep.subr.mxu0 %v5045
        %5454 = vmatpush1.msra.mxu0 %v5044
        %5455 = vmatprep.subr.mxu0 %v5047
        %5456 = vmatpush1.msra.mxu0 %v5046
        %5457 = vmatprep.subr.mxu0 %v5049
        %5458 = vmatpush1.msra.mxu0 %v5048
        %5459 = vmatprep.subr.mxu0 %v5051
        %5460 = vmatpush1.msra.mxu0 %v5050
        %5461 = vmatprep.subr.mxu0 %v5053
        %5462 = vmatpush1.msra.mxu0 %v5052
        %5463 = vmatprep.subr.mxu0 %v5055
        %5464 = vmatpush1.msra.mxu0 %v5054
        %5465 = vmatprep.subr.mxu0 %v5057
        %5466 = vmatpush1.msra.mxu0 %v5056
        %5467 = vmatprep.subr.mxu0 %v5059
        %5468 = vmatpush1.msra.mxu0 %v5058
        %5469 = vmatprep.subr.mxu0 %v5061
        %5470 = vmatpush1.msra.mxu0 %v5060
        %5471 = vmatprep.subr.mxu0 %v5063
        %5472 = vmatpush1.msra.mxu0 %v5062
        %5473 = vmatprep.subr.mxu0 %v5065
        %5474 = vmatpush1.msra.mxu0 %v5064
        %5475 = vmatprep.subr.mxu0 0.0
        %5476 = vmatpush1.msra.mxu0 0.0
        %5477 = vmatprep.subr.mxu0 0.0
        %5478 = vmatpush1.msra.mxu0 0.0
        %5479 = vmatprep.subr.mxu0 0.0
        %5480 = vmatpush1.msra.mxu0 0.0
        %5481 = vmatprep.mubr.f32.mxu0 %v5373
        %5482 = vmatmul.mubr.f32.gmra.mrb[0].mxu0 %v5342
        %v5483 = vpop.f32.mrb[0].mxu0
        %v5484 = vadd.f32 0.0, %v5483
        %v5485 = vpop.f32.mrb[0].mxu0
        %v5486 = vadd.f32 0.0, %v5485
        %5487 = vmatprep.mubr.f32.mxu0 %v5376
        %5488 = vmatmul.mubr.f32.gmra.mrb[0].mxu0 %v5344
        %v5489 = vpop.f32.mrb[0].mxu0
        %v5490 = vadd.f32 0.0, %v5489
        %v5491 = vpop.f32.mrb[0].mxu0
        %v5492 = vadd.f32 0.0, %v5491
        %5493 = vmatprep.mubr.f32.mxu0 %v5379
        %5494 = vmatmul.mubr.f32.gmra.mrb[0].mxu0 %v5346
        %v5495 = vpop.f32.mrb[0].mxu0
        %v5496 = vadd.f32 0.0, %v5495
        %v5497 = vpop.f32.mrb[0].mxu0
        %v5498 = vadd.f32 0.0, %v5497
        %5499 = vmatprep.mubr.f32.mxu0 %v5382
        %5500 = vmatmul.mubr.f32.gmra.mrb[0].mxu0 %v5348
        %v5501 = vpop.f32.mrb[0].mxu0
        %v5502 = vadd.f32 0.0, %v5501
        %v5503 = vpop.f32.mrb[0].mxu0
        %v5504 = vadd.f32 0.0, %v5503
        %5505 = vmatprep.mubr.f32.mxu0 %v5385
        %5506 = vmatmul.mubr.f32.gmra.mrb[0].mxu0 %v5350
        %v5507 = vpop.f32.mrb[0].mxu0
        %v5508 = vadd.f32 0.0, %v5507
        %v5509 = vpop.f32.mrb[0].mxu0
        %v5510 = vadd.f32 0.0, %v5509
        %5511 = vmatprep.mubr.f32.mxu0 %v5388
        %5512 = vmatmul.mubr.f32.gmra.mrb[0].mxu0 %v5352
        %v5513 = vpop.f32.mrb[0].mxu0
        %v5514 = vadd.f32 0.0, %v5513
        %v5515 = vpop.f32.mrb[0].mxu0
        %v5516 = vadd.f32 0.0, %v5515
        %5517 = vmatprep.mubr.f32.mxu0 %v5391
        %5518 = vmatmul.mubr.f32.gmra.mrb[0].mxu0 %v5354
        %v5519 = vpop.f32.mrb[0].mxu0
        %v5520 = vadd.f32 0.0, %v5519
        %v5521 = vpop.f32.mrb[0].mxu0
        %v5522 = vadd.f32 0.0, %v5521
        %5523 = vmatprep.mubr.f32.mxu0 %v5394
        %5524 = vmatmul.mubr.f32.gmra.mrb[0].mxu0 %v5356
        %v5525 = vpop.f32.mrb[0].mxu0
        %v5526 = vadd.f32 0.0, %v5525
        %v5527 = vpop.f32.mrb[0].mxu0
        %v5528 = vadd.f32 0.0, %v5527
        %5529 = vmatprep.mubr.f32.mxu0 %v5397
        %5530 = vmatmul.mubr.f32.gmra.mrb[0].mxu0 %v5358
        %v5531 = vpop.f32.mrb[0].mxu0
        %v5532 = vadd.f32 0.0, %v5531
        %v5533 = vpop.f32.mrb[0].mxu0
        %v5534 = vadd.f32 0.0, %v5533
        %5535 = vmatprep.mubr.f32.mxu0 %v5400
        %5536 = vmatmul.mubr.f32.gmra.mrb[0].mxu0 %v5360
        %v5537 = vpop.f32.mrb[0].mxu0
        %v5538 = vadd.f32 0.0, %v5537
        %v5539 = vpop.f32.mrb[0].mxu0
        %v5540 = vadd.f32 0.0, %v5539
        %5541 = vmatprep.mubr.f32.mxu0 %v5403
        %5542 = vmatmul.mubr.f32.gmra.mrb[0].mxu0 %v5362
        %v5543 = vpop.f32.mrb[0].mxu0
        %v5544 = vadd.f32 0.0, %v5543
        %v5545 = vpop.f32.mrb[0].mxu0
        %v5546 = vadd.f32 0.0, %v5545
        %5547 = vmatprep.mubr.f32.mxu0 %v5406
        %5548 = vmatmul.mubr.f32.gmra.mrb[0].mxu0 %v5364
        %v5549 = vpop.f32.mrb[0].mxu0
        %v5550 = vadd.f32 0.0, %v5549
        %v5551 = vpop.f32.mrb[0].mxu0
        %v5552 = vadd.f32 0.0, %v5551
        %5553 = vmatprep.mubr.f32.mxu0 %v5409
        %5554 = vmatmul.mubr.f32.gmra.mrb[0].mxu0 %v5366
        %v5555 = vpop.f32.mrb[0].mxu0
        %v5556 = vadd.f32 0.0, %v5555
        %v5557 = vpop.f32.mrb[0].mxu0
        %v5558 = vadd.f32 0.0, %v5557
        %5559 = vmatprep.mubr.f32.mxu0 %v5412
        %5560 = vmatmul.mubr.f32.gmra.mrb[0].mxu0 %v5368
        %v5561 = vpop.f32.mrb[0].mxu0
        %v5562 = vadd.f32 0.0, %v5561
        %v5563 = vpop.f32.mrb[0].mxu0
        %v5564 = vadd.f32 0.0, %v5563
        %5565 = vmatprep.mubr.f32.mxu0 %v5415
        %5566 = vmatmul.mubr.f32.gmra.mrb[0].mxu0 %v5370
        %v5567 = vpop.f32.mrb[0].mxu0
        %v5568 = vadd.f32 0.0, %v5567
        %v5569 = vpop.f32.mrb[0].mxu0
        %v5570 = vadd.f32 0.0, %v5569
        %5571 = vdwg.mxu0
        %s5572 = scalar_lea.vmem %s5, 352
        %v5573 = vld [vmem:[%s5572] sm:$0xff]
        %v5574 = vld [vmem:[%s5572 + $0x8] sm:$0xff]
        %v5575 = vld [vmem:[%s5572 + $0x10] sm:$0xff]
        %v5576 = vld [vmem:[%s5572 + $0x18] sm:$0xff]
        %v5577 = vld [vmem:[%s5572 + $0x20] sm:$0xff]
        %v5578 = vld [vmem:[%s5572 + $0x28] sm:$0xff]
        %v5579 = vld [vmem:[%s5572 + $0x30] sm:$0xff]
        %v5580 = vld [vmem:[%s5572 + $0x38] sm:$0xff]
        %v5581 = vld [vmem:[%s5572 + $0x40] sm:$0xff]
        %v5582 = vld [vmem:[%s5572 + $0x48] sm:$0xff]
        %v5583 = vld [vmem:[%s5572 + $0x50] sm:$0xff]
        %v5584 = vld [vmem:[%s5572 + $0x58] sm:$0xff]
        %v5585 = vld [vmem:[%s5572 + $0x60] sm:$0xff]
        %v5586 = vld [vmem:[%s5572 + $0x68] sm:$0xff]
        %v5587 = vld [vmem:[%s5572 + $0x70] sm:$0xff]
        %v5588 = vld [vmem:[%s5572 + $0x78] sm:$0xff]
        %v5589 = vld [vmem:[%s5572 + $0x80] sm:$0xff]
        %v5590 = vld [vmem:[%s5572 + $0x88] sm:$0xff]
        %v5591 = vld [vmem:[%s5572 + $0x90] sm:$0xff]
        %v5592 = vld [vmem:[%s5572 + $0x98] sm:$0xff]
        %v5593 = vld [vmem:[%s5572 + $0xa0] sm:$0xff]
        %v5594 = vld [vmem:[%s5572 + $0xa8] sm:$0xff]
        %v5595 = vld [vmem:[%s5572 + $0xb0] sm:$0xff]
        %v5596 = vld [vmem:[%s5572 + $0xb8] sm:$0xff]
        %v5597 = vld [vmem:[%s5572 + $0xc0] sm:$0xff]
        %v5598 = vld [vmem:[%s5572 + $0xc8] sm:$0xff]
        %v5599 = vld [vmem:[%s5572 + $0xd0] sm:$0xff]
        %v5600 = vld [vmem:[%s5572 + $0xd8] sm:$0xff]
        %v5601 = vld [vmem:[%s5572 + $0xe0] sm:$0xff]
        %v5602 = vld [vmem:[%s5572 + $0xe8] sm:$0xff]
        %v5603 = vld [vmem:[%s5572 + $0xf0] sm:$0xff]
        %v5604 = vld [vmem:[%s5572 + $0xf8] sm:$0xff]
        %v5605 = vld [vmem:[%s5572 + $0x100] sm:$0xff]
        %v5606 = vld [vmem:[%s5572 + $0x108] sm:$0xff]
        %v5607 = vld [vmem:[%s5572 + $0x110] sm:$0xff]
        %v5608 = vld [vmem:[%s5572 + $0x118] sm:$0xff]
        %v5609 = vld [vmem:[%s5572 + $0x120] sm:$0xff]
        %v5610 = vld [vmem:[%s5572 + $0x128] sm:$0xff]
        %v5611 = vld [vmem:[%s5572 + $0x130] sm:$0xff]
        %v5612 = vld [vmem:[%s5572 + $0x138] sm:$0xff]
        %v5613 = vld [vmem:[%s5572 + $0x140] sm:$0xff]
        %v5614 = vld [vmem:[%s5572 + $0x148] sm:$0xff]
        %v5615 = vld [vmem:[%s5572 + $0x150] sm:$0x3f]
        %v5616 = vld [vmem:[%s5572 + $0x158] sm:$0x3f]
        %vm5617 = vcmask 375808
        %v5619 = vsel %vm5617, %v5486, 0
        %v5622 = vsel %vm5617, %v5492, 0
        %v5625 = vsel %vm5617, %v5498, 0
        %v5628 = vsel %vm5617, %v5504, 0
        %v5631 = vsel %vm5617, %v5510, 0
        %v5634 = vsel %vm5617, %v5516, 0
        %v5637 = vsel %vm5617, %v5522, 0
        %v5640 = vsel %vm5617, %v5528, 0
        %v5643 = vsel %vm5617, %v5534, 0
        %v5646 = vsel %vm5617, %v5540, 0
        %v5649 = vsel %vm5617, %v5546, 0
        %v5652 = vsel %vm5617, %v5552, 0
        %v5655 = vsel %vm5617, %v5558, 0
        %v5658 = vsel %vm5617, %v5564, 0
        %v5661 = vsel %vm5617, %v5570, 0
        %vm5663 = vcmask 1045504
        %v5665 = vsel %vm5663, %v5615, 0
        %v5668 = vsel %vm5663, %v5616, 0
        %5670 = vmatprep.subr.mxu0 %v5574
        %5671 = vmatpush1.msra.mxu0 %v5573
        %5672 = vmatprep.subr.mxu0 %v5576
        %5673 = vmatpush1.msra.mxu0 %v5575
        %5674 = vmatprep.subr.mxu0 %v5578
        %5675 = vmatpush1.msra.mxu0 %v5577
        %5676 = vmatprep.subr.mxu0 %v5580
        %5677 = vmatpush1.msra.mxu0 %v5579
        %5678 = vmatprep.subr.mxu0 %v5582
        %5679 = vmatpush1.msra.mxu0 %v5581
        %5680 = vmatprep.subr.mxu0 %v5584
        %5681 = vmatpush1.msra.mxu0 %v5583
        %5682 = vmatprep.subr.mxu0 %v5586
        %5683 = vmatpush1.msra.mxu0 %v5585
        %5684 = vmatprep.subr.mxu0 %v5588
        %5685 = vmatpush1.msra.mxu0 %v5587
        %5686 = vmatprep.subr.mxu0 %v5590
        %5687 = vmatpush1.msra.mxu0 %v5589
        %5688 = vmatprep.subr.mxu0 %v5592
        %5689 = vmatpush1.msra.mxu0 %v5591
        %5690 = vmatprep.subr.mxu0 %v5594
        %5691 = vmatpush1.msra.mxu0 %v5593
        %5692 = vmatprep.subr.mxu0 %v5596
        %5693 = vmatpush1.msra.mxu0 %v5595
        %5694 = vmatprep.subr.mxu0 %v5598
        %5695 = vmatpush1.msra.mxu0 %v5597
        %5696 = vmatprep.subr.mxu0 %v5600
        %5697 = vmatpush1.msra.mxu0 %v5599
        %5698 = vmatprep.subr.mxu0 %v5602
        %5699 = vmatpush1.msra.mxu0 %v5601
        %5700 = vmatprep.subr.mxu0 %v5604
        %5701 = vmatpush1.msra.mxu0 %v5603
        %5702 = vmatprep.subr.mxu0 %v5606
        %5703 = vmatpush1.msra.mxu0 %v5605
        %5704 = vmatprep.subr.mxu0 %v5608
        %5705 = vmatpush1.msra.mxu0 %v5607
        %5706 = vmatprep.subr.mxu0 %v5610
        %5707 = vmatpush1.msra.mxu0 %v5609
        %5708 = vmatprep.subr.mxu0 %v5612
        %5709 = vmatpush1.msra.mxu0 %v5611
        %5710 = vmatprep.subr.mxu0 %v5614
        %5711 = vmatpush1.msra.mxu0 %v5613
        %5712 = vmatprep.subr.mxu0 %v5668
        %5713 = vmatpush1.msra.mxu0 %v5665
        %5714 = vmatprep.subr.mxu0 0.0
        %5715 = vmatpush1.msra.mxu0 0.0
        %5716 = vmatprep.subr.mxu0 0.0
        %5717 = vmatpush1.msra.mxu0 0.0
        %5718 = vmatprep.subr.mxu0 0.0
        %5719 = vmatpush1.msra.mxu0 0.0
        %5720 = vmatprep.subr.mxu0 0.0
        %5721 = vmatpush1.msra.mxu0 0.0
        %5722 = vmatprep.subr.mxu0 0.0
        %5723 = vmatpush1.msra.mxu0 0.0
        %5724 = vmatprep.subr.mxu0 0.0
        %5725 = vmatpush1.msra.mxu0 0.0
        %5726 = vmatprep.subr.mxu0 0.0
        %5727 = vmatpush1.msra.mxu0 0.0
        %5728 = vmatprep.subr.mxu0 0.0
        %5729 = vmatpush1.msra.mxu0 0.0
        %5730 = vmatprep.subr.mxu0 0.0
        %5731 = vmatpush1.msra.mxu0 0.0
        %5732 = vmatprep.subr.mxu0 0.0
        %5733 = vmatpush1.msra.mxu0 0.0
        %5734 = vmatprep.mubr.f32.mxu0 %v5619
        %5735 = vmatmul.mubr.f32.gmra.mrb[0].mxu0 %v5484
        %v5736 = vpop.f32.mrb[0].mxu0
        %v5737 = vadd.f32 0.0, %v5736
        %v5738 = vpop.f32.mrb[0].mxu0
        %v5739 = vadd.f32 0.0, %v5738
        %5740 = vmatprep.mubr.f32.mxu0 %v5622
        %5741 = vmatmul.mubr.f32.gmra.mrb[0].mxu0 %v5490
        %v5742 = vpop.f32.mrb[0].mxu0
        %v5743 = vadd.f32 0.0, %v5742
        %v5744 = vpop.f32.mrb[0].mxu0
        %v5745 = vadd.f32 0.0, %v5744
        %5746 = vmatprep.mubr.f32.mxu0 %v5625
        %5747 = vmatmul.mubr.f32.gmra.mrb[0].mxu0 %v5496
        %v5748 = vpop.f32.mrb[0].mxu0
        %v5749 = vadd.f32 0.0, %v5748
        %v5750 = vpop.f32.mrb[0].mxu0
        %v5751 = vadd.f32 0.0, %v5750
        %5752 = vmatprep.mubr.f32.mxu0 %v5628
        %5753 = vmatmul.mubr.f32.gmra.mrb[0].mxu0 %v5502
        %v5754 = vpop.f32.mrb[0].mxu0
        %v5755 = vadd.f32 0.0, %v5754
        %v5756 = vpop.f32.mrb[0].mxu0
        %v5757 = vadd.f32 0.0, %v5756
        %5758 = vmatprep.mubr.f32.mxu0 %v5631
        %5759 = vmatmul.mubr.f32.gmra.mrb[0].mxu0 %v5508
        %v5760 = vpop.f32.mrb[0].mxu0
        %v5761 = vadd.f32 0.0, %v5760
        %v5762 = vpop.f32.mrb[0].mxu0
        %v5763 = vadd.f32 0.0, %v5762
        %5764 = vmatprep.mubr.f32.mxu0 %v5634
        %5765 = vmatmul.mubr.f32.gmra.mrb[0].mxu0 %v5514
        %v5766 = vpop.f32.mrb[0].mxu0
        %v5767 = vadd.f32 0.0, %v5766
        %v5768 = vpop.f32.mrb[0].mxu0
        %v5769 = vadd.f32 0.0, %v5768
        %5770 = vmatprep.mubr.f32.mxu0 %v5637
        %5771 = vmatmul.mubr.f32.gmra.mrb[0].mxu0 %v5520
        %v5772 = vpop.f32.mrb[0].mxu0
        %v5773 = vadd.f32 0.0, %v5772
        %v5774 = vpop.f32.mrb[0].mxu0
        %v5775 = vadd.f32 0.0, %v5774
        %5776 = vmatprep.mubr.f32.mxu0 %v5640
        %5777 = vmatmul.mubr.f32.gmra.mrb[0].mxu0 %v5526
        %v5778 = vpop.f32.mrb[0].mxu0
        %v5779 = vadd.f32 0.0, %v5778
        %v5780 = vpop.f32.mrb[0].mxu0
        %v5781 = vadd.f32 0.0, %v5780
        %5782 = vmatprep.mubr.f32.mxu0 %v5643
        %5783 = vmatmul.mubr.f32.gmra.mrb[0].mxu0 %v5532
        %v5784 = vpop.f32.mrb[0].mxu0
        %v5785 = vadd.f32 0.0, %v5784
        %v5786 = vpop.f32.mrb[0].mxu0
        %v5787 = vadd.f32 0.0, %v5786
        %5788 = vmatprep.mubr.f32.mxu0 %v5646
        %5789 = vmatmul.mubr.f32.gmra.mrb[0].mxu0 %v5538
        %v5790 = vpop.f32.mrb[0].mxu0
        %v5791 = vadd.f32 0.0, %v5790
        %v5792 = vpop.f32.mrb[0].mxu0
        %v5793 = vadd.f32 0.0, %v5792
        %5794 = vmatprep.mubr.f32.mxu0 %v5649
        %5795 = vmatmul.mubr.f32.gmra.mrb[0].mxu0 %v5544
        %v5796 = vpop.f32.mrb[0].mxu0
        %v5797 = vadd.f32 0.0, %v5796
        %v5798 = vpop.f32.mrb[0].mxu0
        %v5799 = vadd.f32 0.0, %v5798
        %5800 = vmatprep.mubr.f32.mxu0 %v5652
        %5801 = vmatmul.mubr.f32.gmra.mrb[0].mxu0 %v5550
        %v5802 = vpop.f32.mrb[0].mxu0
        %v5803 = vadd.f32 0.0, %v5802
        %v5804 = vpop.f32.mrb[0].mxu0
        %v5805 = vadd.f32 0.0, %v5804
        %5806 = vmatprep.mubr.f32.mxu0 %v5655
        %5807 = vmatmul.mubr.f32.gmra.mrb[0].mxu0 %v5556
        %v5808 = vpop.f32.mrb[0].mxu0
        %v5809 = vadd.f32 0.0, %v5808
        %v5810 = vpop.f32.mrb[0].mxu0
        %v5811 = vadd.f32 0.0, %v5810
        %5812 = vmatprep.mubr.f32.mxu0 %v5658
        %5813 = vmatmul.mubr.f32.gmra.mrb[0].mxu0 %v5562
        %v5814 = vpop.f32.mrb[0].mxu0
        %v5815 = vadd.f32 0.0, %v5814
        %v5816 = vpop.f32.mrb[0].mxu0
        %v5817 = vadd.f32 0.0, %v5816
        %5818 = vmatprep.mubr.f32.mxu0 %v5661
        %5819 = vmatmul.mubr.f32.gmra.mrb[0].mxu0 %v5568
        %v5820 = vpop.f32.mrb[0].mxu0
        %v5821 = vadd.f32 0.0, %v5820
        %v5822 = vpop.f32.mrb[0].mxu0
        %v5823 = vadd.f32 0.0, %v5822
        %5824 = vdwg.mxu0
        %v5826 = vsel %vm5617, %v5211, 0
        %v5829 = vsel %vm5617, %v5217, 0
        %v5832 = vsel %vm5617, %v5223, 0
        %v5835 = vsel %vm5617, %v5229, 0
        %v5838 = vsel %vm5617, %v5235, 0
        %v5841 = vsel %vm5617, %v5241, 0
        %v5844 = vsel %vm5617, %v5247, 0
        %v5847 = vsel %vm5617, %v5253, 0
        %v5850 = vsel %vm5617, %v5259, 0
        %v5853 = vsel %vm5617, %v5265, 0
        %v5856 = vsel %vm5617, %v5271, 0
        %v5859 = vsel %vm5617, %v5277, 0
        %v5862 = vsel %vm5617, %v5283, 0
        %v5865 = vsel %vm5617, %v5289, 0
        %v5868 = vsel %vm5617, %v5295, 0
        %v5871 = vsel %vm5663, %v5339, 0
        %v5874 = vsel %vm5663, %v5340, 0
        %5876 = vmatprep.subr.mxu0 %v5298
        %5877 = vmatpush1.msra.mxu0 %v5297
        %5878 = vmatprep.subr.mxu0 %v5300
        %5879 = vmatpush1.msra.mxu0 %v5299
        %5880 = vmatprep.subr.mxu0 %v5302
        %5881 = vmatpush1.msra.mxu0 %v5301
        %5882 = vmatprep.subr.mxu0 %v5304
        %5883 = vmatpush1.msra.mxu0 %v5303
        %5884 = vmatprep.subr.mxu0 %v5306
        %5885 = vmatpush1.msra.mxu0 %v5305
        %5886 = vmatprep.subr.mxu0 %v5308
        %5887 = vmatpush1.msra.mxu0 %v5307
        %5888 = vmatprep.subr.mxu0 %v5310
        %5889 = vmatpush1.msra.mxu0 %v5309
        %5890 = vmatprep.subr.mxu0 %v5312
        %5891 = vmatpush1.msra.mxu0 %v5311
        %5892 = vmatprep.subr.mxu0 %v5314
        %5893 = vmatpush1.msra.mxu0 %v5313
        %5894 = vmatprep.subr.mxu0 %v5316
        %5895 = vmatpush1.msra.mxu0 %v5315
        %5896 = vmatprep.subr.mxu0 %v5318
        %5897 = vmatpush1.msra.mxu0 %v5317
        %5898 = vmatprep.subr.mxu0 %v5320
        %5899 = vmatpush1.msra.mxu0 %v5319
        %5900 = vmatprep.subr.mxu0 %v5322
        %5901 = vmatpush1.msra.mxu0 %v5321
        %5902 = vmatprep.subr.mxu0 %v5324
        %5903 = vmatpush1.msra.mxu0 %v5323
        %5904 = vmatprep.subr.mxu0 %v5326
        %5905 = vmatpush1.msra.mxu0 %v5325
        %5906 = vmatprep.subr.mxu0 %v5328
        %5907 = vmatpush1.msra.mxu0 %v5327
        %5908 = vmatprep.subr.mxu0 %v5330
        %5909 = vmatpush1.msra.mxu0 %v5329
        %5910 = vmatprep.subr.mxu0 %v5332
        %5911 = vmatpush1.msra.mxu0 %v5331
        %5912 = vmatprep.subr.mxu0 %v5334
        %5913 = vmatpush1.msra.mxu0 %v5333
        %5914 = vmatprep.subr.mxu0 %v5336
        %5915 = vmatpush1.msra.mxu0 %v5335
        %5916 = vmatprep.subr.mxu0 %v5338
        %5917 = vmatpush1.msra.mxu0 %v5337
        %5918 = vmatprep.subr.mxu0 %v5874
        %5919 = vmatpush1.msra.mxu0 %v5871
        %5920 = vmatprep.subr.mxu0 0.0
        %5921 = vmatpush1.msra.mxu0 0.0
        %5922 = vmatprep.subr.mxu0 0.0
        %5923 = vmatpush1.msra.mxu0 0.0
        %5924 = vmatprep.subr.mxu0 0.0
        %5925 = vmatpush1.msra.mxu0 0.0
        %5926 = vmatprep.subr.mxu0 0.0
        %5927 = vmatpush1.msra.mxu0 0.0
        %5928 = vmatprep.subr.mxu0 0.0
        %5929 = vmatpush1.msra.mxu0 0.0
        %5930 = vmatprep.subr.mxu0 0.0
        %5931 = vmatpush1.msra.mxu0 0.0
        %5932 = vmatprep.subr.mxu0 0.0
        %5933 = vmatpush1.msra.mxu0 0.0
        %5934 = vmatprep.subr.mxu0 0.0
        %5935 = vmatpush1.msra.mxu0 0.0
        %5936 = vmatprep.subr.mxu0 0.0
        %5937 = vmatpush1.msra.mxu0 0.0
        %5938 = vmatprep.subr.mxu0 0.0
        %5939 = vmatpush1.msra.mxu0 0.0
        %5940 = vmatprep.mubr.f32.mxu0 %v5826
        %5941 = vmatmul.mubr.f32.gmra.mrb[0].mxu0 %v5209
        %v5942 = vpop.f32.mrb[0].mxu0
        %v5943 = vadd.f32 %v5737, %v5942
        %v5944 = vpop.f32.mrb[0].mxu0
        %v5945 = vadd.f32 %v5739, %v5944
        %5946 = vmatprep.mubr.f32.mxu0 %v5829
        %5947 = vmatmul.mubr.f32.gmra.mrb[0].mxu0 %v5215
        %v5948 = vpop.f32.mrb[0].mxu0
        %v5949 = vadd.f32 %v5743, %v5948
        %v5950 = vpop.f32.mrb[0].mxu0
        %v5951 = vadd.f32 %v5745, %v5950
        %5952 = vmatprep.mubr.f32.mxu0 %v5832
        %5953 = vmatmul.mubr.f32.gmra.mrb[0].mxu0 %v5221
        %v5954 = vpop.f32.mrb[0].mxu0
        %v5955 = vadd.f32 %v5749, %v5954
        %v5956 = vpop.f32.mrb[0].mxu0
        %v5957 = vadd.f32 %v5751, %v5956
        %5958 = vmatprep.mubr.f32.mxu0 %v5835
        %5959 = vmatmul.mubr.f32.gmra.mrb[0].mxu0 %v5227
        %v5960 = vpop.f32.mrb[0].mxu0
        %v5961 = vadd.f32 %v5755, %v5960
        %v5962 = vpop.f32.mrb[0].mxu0
        %v5963 = vadd.f32 %v5757, %v5962
        %5964 = vmatprep.mubr.f32.mxu0 %v5838
        %5965 = vmatmul.mubr.f32.gmra.mrb[0].mxu0 %v5233
        %v5966 = vpop.f32.mrb[0].mxu0
        %v5967 = vadd.f32 %v5761, %v5966
        %v5968 = vpop.f32.mrb[0].mxu0
        %v5969 = vadd.f32 %v5763, %v5968
        %5970 = vmatprep.mubr.f32.mxu0 %v5841
        %5971 = vmatmul.mubr.f32.gmra.mrb[0].mxu0 %v5239
        %v5972 = vpop.f32.mrb[0].mxu0
        %v5973 = vadd.f32 %v5767, %v5972
        %v5974 = vpop.f32.mrb[0].mxu0
        %v5975 = vadd.f32 %v5769, %v5974
        %5976 = vmatprep.mubr.f32.mxu0 %v5844
        %5977 = vmatmul.mubr.f32.gmra.mrb[0].mxu0 %v5245
        %v5978 = vpop.f32.mrb[0].mxu0
        %v5979 = vadd.f32 %v5773, %v5978
        %v5980 = vpop.f32.mrb[0].mxu0
        %v5981 = vadd.f32 %v5775, %v5980
        %5982 = vmatprep.mubr.f32.mxu0 %v5847
        %5983 = vmatmul.mubr.f32.gmra.mrb[0].mxu0 %v5251
        %v5984 = vpop.f32.mrb[0].mxu0
        %v5985 = vadd.f32 %v5779, %v5984
        %v5986 = vpop.f32.mrb[0].mxu0
        %v5987 = vadd.f32 %v5781, %v5986
        %5988 = vmatprep.mubr.f32.mxu0 %v5850
        %5989 = vmatmul.mubr.f32.gmra.mrb[0].mxu0 %v5257
        %v5990 = vpop.f32.mrb[0].mxu0
        %v5991 = vadd.f32 %v5785, %v5990
        %v5992 = vpop.f32.mrb[0].mxu0
        %v5993 = vadd.f32 %v5787, %v5992
        %5994 = vmatprep.mubr.f32.mxu0 %v5853
        %5995 = vmatmul.mubr.f32.gmra.mrb[0].mxu0 %v5263
        %v5996 = vpop.f32.mrb[0].mxu0
        %v5997 = vadd.f32 %v5791, %v5996
        %v5998 = vpop.f32.mrb[0].mxu0
        %v5999 = vadd.f32 %v5793, %v5998
        %6000 = vmatprep.mubr.f32.mxu0 %v5856
        %6001 = vmatmul.mubr.f32.gmra.mrb[0].mxu0 %v5269
        %v6002 = vpop.f32.mrb[0].mxu0
        %v6003 = vadd.f32 %v5797, %v6002
        %v6004 = vpop.f32.mrb[0].mxu0
        %v6005 = vadd.f32 %v5799, %v6004
        %6006 = vmatprep.mubr.f32.mxu0 %v5859
        %6007 = vmatmul.mubr.f32.gmra.mrb[0].mxu0 %v5275
        %v6008 = vpop.f32.mrb[0].mxu0
        %v6009 = vadd.f32 %v5803, %v6008
        %v6010 = vpop.f32.mrb[0].mxu0
        %v6011 = vadd.f32 %v5805, %v6010
        %6012 = vmatprep.mubr.f32.mxu0 %v5862
        %6013 = vmatmul.mubr.f32.gmra.mrb[0].mxu0 %v5281
        %v6014 = vpop.f32.mrb[0].mxu0
        %v6015 = vadd.f32 %v5809, %v6014
        %v6016 = vpop.f32.mrb[0].mxu0
        %v6017 = vadd.f32 %v5811, %v6016
        %6018 = vmatprep.mubr.f32.mxu0 %v5865
        %6019 = vmatmul.mubr.f32.gmra.mrb[0].mxu0 %v5287
        %v6020 = vpop.f32.mrb[0].mxu0
        %v6021 = vadd.f32 %v5815, %v6020
        %v6022 = vpop.f32.mrb[0].mxu0
        %v6023 = vadd.f32 %v5817, %v6022
        %6024 = vmatprep.mubr.f32.mxu0 %v5868
        %6025 = vmatmul.mubr.f32.gmra.mrb[0].mxu0 %v5293
        %v6026 = vpop.f32.mrb[0].mxu0
        %v6027 = vadd.f32 %v5821, %v6026
        %v6028 = vpop.f32.mrb[0].mxu0
        %v6029 = vadd.f32 %v5823, %v6028
        %6030 = vdwg.mxu0
        %s6031 = scalar_lea.vmem %s4, 480
        %v6032 = vld [vmem:[%s6031] sm:$0xff]
        %v6033 = vld [vmem:[%s6031 + $0x8] sm:$0xff]
        %v6034 = vld [vmem:[%s6031 + $0x10] sm:$0xff]
        %v6035 = vld [vmem:[%s6031 + $0x18] sm:$0xff]
        %v6036 = vld [vmem:[%s6031 + $0x20] sm:$0xff]
        %v6037 = vld [vmem:[%s6031 + $0x28] sm:$0xff]
        %v6038 = vld [vmem:[%s6031 + $0x30] sm:$0xff]
        %v6039 = vld [vmem:[%s6031 + $0x38] sm:$0xff]
        %v6040 = vld [vmem:[%s6031 + $0x40] sm:$0xff]
        %v6041 = vld [vmem:[%s6031 + $0x48] sm:$0xff]
        %v6042 = vld [vmem:[%s6031 + $0x50] sm:$0xff]
        %v6043 = vld [vmem:[%s6031 + $0x58] sm:$0xff]
        %v6044 = vld [vmem:[%s6031 + $0x60] sm:$0xff]
        %v6045 = vld [vmem:[%s6031 + $0x68] sm:$0xff]
        %v6046 = vld [vmem:[%s6031 + $0x70] sm:$0xff]
        %v6047 = vld [vmem:[%s6031 + $0x78] sm:$0xff]
        %v6048 = vld [vmem:[%s6031 + $0x80] sm:$0xff]
        %v6049 = vld [vmem:[%s6031 + $0x88] sm:$0xff]
        %v6050 = vld [vmem:[%s6031 + $0x90] sm:$0xff]
        %v6051 = vld [vmem:[%s6031 + $0x98] sm:$0xff]
        %v6052 = vld [vmem:[%s6031 + $0xa0] sm:$0xff]
        %v6053 = vld [vmem:[%s6031 + $0xa8] sm:$0xff]
        %v6054 = vld [vmem:[%s6031 + $0xb0] sm:$0xff]
        %v6055 = vld [vmem:[%s6031 + $0xb8] sm:$0xff]
        %v6056 = vld [vmem:[%s6031 + $0xc0] sm:$0xff]
        %v6057 = vld [vmem:[%s6031 + $0xc8] sm:$0xff]
        %v6058 = vld [vmem:[%s6031 + $0xd0] sm:$0xff]
        %v6059 = vld [vmem:[%s6031 + $0xd8] sm:$0xff]
        %v6060 = vld [vmem:[%s6031 + $0xe0] sm:$0xff]
        %v6061 = vld [vmem:[%s6031 + $0xe8] sm:$0xff]
        %v6063 = vsel %vm5096, %v6033, 0
        %v6066 = vsel %vm5096, %v6035, 0
        %v6069 = vsel %vm5096, %v6037, 0
        %v6072 = vsel %vm5096, %v6039, 0
        %v6075 = vsel %vm5096, %v6041, 0
        %v6078 = vsel %vm5096, %v6043, 0
        %v6081 = vsel %vm5096, %v6045, 0
        %v6084 = vsel %vm5096, %v6047, 0
        %v6087 = vsel %vm5096, %v6049, 0
        %v6090 = vsel %vm5096, %v6051, 0
        %v6093 = vsel %vm5096, %v6053, 0
        %v6096 = vsel %vm5096, %v6055, 0
        %v6099 = vsel %vm5096, %v6057, 0
        %v6102 = vsel %vm5096, %v6059, 0
        %v6105 = vsel %vm5096, %v6061, 0
        %6107 = vmatprep.subr.mxu0 %v5009
        %6108 = vmatpush1.msra.mxu0 %v5008
        %6109 = vmatprep.subr.mxu0 %v5011
        %6110 = vmatpush1.msra.mxu0 %v5010
        %6111 = vmatprep.subr.mxu0 %v5013
        %6112 = vmatpush1.msra.mxu0 %v5012
        %6113 = vmatprep.subr.mxu0 %v5015
        %6114 = vmatpush1.msra.mxu0 %v5014
        %6115 = vmatprep.subr.mxu0 %v5017
        %6116 = vmatpush1.msra.mxu0 %v5016
        %6117 = vmatprep.subr.mxu0 %v5019
        %6118 = vmatpush1.msra.mxu0 %v5018
        %6119 = vmatprep.subr.mxu0 %v5021
        %6120 = vmatpush1.msra.mxu0 %v5020
        %6121 = vmatprep.subr.mxu0 %v5023
        %6122 = vmatpush1.msra.mxu0 %v5022
        %6123 = vmatprep.subr.mxu0 %v5025
        %6124 = vmatpush1.msra.mxu0 %v5024
        %6125 = vmatprep.subr.mxu0 %v5027
        %6126 = vmatpush1.msra.mxu0 %v5026
        %6127 = vmatprep.subr.mxu0 %v5029
        %6128 = vmatpush1.msra.mxu0 %v5028
        %6129 = vmatprep.subr.mxu0 %v5031
        %6130 = vmatpush1.msra.mxu0 %v5030
        %6131 = vmatprep.subr.mxu0 %v5033
        %6132 = vmatpush1.msra.mxu0 %v5032
        %6133 = vmatprep.subr.mxu0 %v5035
        %6134 = vmatpush1.msra.mxu0 %v5034
        %6135 = vmatprep.subr.mxu0 %v5037
        %6136 = vmatpush1.msra.mxu0 %v5036
        %6137 = vmatprep.subr.mxu0 %v5039
        %6138 = vmatpush1.msra.mxu0 %v5038
        %6139 = vmatprep.subr.mxu0 %v5041
        %6140 = vmatpush1.msra.mxu0 %v5040
        %6141 = vmatprep.subr.mxu0 %v5043
        %6142 = vmatpush1.msra.mxu0 %v5042
        %6143 = vmatprep.subr.mxu0 %v5045
        %6144 = vmatpush1.msra.mxu0 %v5044
        %6145 = vmatprep.subr.mxu0 %v5047
        %6146 = vmatpush1.msra.mxu0 %v5046
        %6147 = vmatprep.subr.mxu0 %v5049
        %6148 = vmatpush1.msra.mxu0 %v5048
        %6149 = vmatprep.subr.mxu0 %v5051
        %6150 = vmatpush1.msra.mxu0 %v5050
        %6151 = vmatprep.subr.mxu0 %v5053
        %6152 = vmatpush1.msra.mxu0 %v5052
        %6153 = vmatprep.subr.mxu0 %v5055
        %6154 = vmatpush1.msra.mxu0 %v5054
        %6155 = vmatprep.subr.mxu0 %v5057
        %6156 = vmatpush1.msra.mxu0 %v5056
        %6157 = vmatprep.subr.mxu0 %v5059
        %6158 = vmatpush1.msra.mxu0 %v5058
        %6159 = vmatprep.subr.mxu0 %v5061
        %6160 = vmatpush1.msra.mxu0 %v5060
        %6161 = vmatprep.subr.mxu0 %v5063
        %6162 = vmatpush1.msra.mxu0 %v5062
        %6163 = vmatprep.subr.mxu0 %v5065
        %6164 = vmatpush1.msra.mxu0 %v5064
        %6165 = vmatprep.subr.mxu0 0.0
        %6166 = vmatpush1.msra.mxu0 0.0
        %6167 = vmatprep.subr.mxu0 0.0
        %6168 = vmatpush1.msra.mxu0 0.0
        %6169 = vmatprep.subr.mxu0 0.0
        %6170 = vmatpush1.msra.mxu0 0.0
        %6171 = vmatprep.mubr.f32.mxu0 %v6063
        %6172 = vmatmul.mubr.f32.gmra.mrb[0].mxu0 %v6032
        %v6173 = vpop.f32.mrb[0].mxu0
        %v6174 = vadd.f32 0.0, %v6173
        %v6175 = vpop.f32.mrb[0].mxu0
        %v6176 = vadd.f32 0.0, %v6175
        %6177 = vmatprep.mubr.f32.mxu0 %v6066
        %6178 = vmatmul.mubr.f32.gmra.mrb[0].mxu0 %v6034
        %v6179 = vpop.f32.mrb[0].mxu0
        %v6180 = vadd.f32 0.0, %v6179
        %v6181 = vpop.f32.mrb[0].mxu0
        %v6182 = vadd.f32 0.0, %v6181
        %6183 = vmatprep.mubr.f32.mxu0 %v6069
        %6184 = vmatmul.mubr.f32.gmra.mrb[0].mxu0 %v6036
        %v6185 = vpop.f32.mrb[0].mxu0
        %v6186 = vadd.f32 0.0, %v6185
        %v6187 = vpop.f32.mrb[0].mxu0
        %v6188 = vadd.f32 0.0, %v6187
        %6189 = vmatprep.mubr.f32.mxu0 %v6072
        %6190 = vmatmul.mubr.f32.gmra.mrb[0].mxu0 %v6038
        %v6191 = vpop.f32.mrb[0].mxu0
        %v6192 = vadd.f32 0.0, %v6191
        %v6193 = vpop.f32.mrb[0].mxu0
        %v6194 = vadd.f32 0.0, %v6193
        %6195 = vmatprep.mubr.f32.mxu0 %v6075
        %6196 = vmatmul.mubr.f32.gmra.mrb[0].mxu0 %v6040
        %v6197 = vpop.f32.mrb[0].mxu0
        %v6198 = vadd.f32 0.0, %v6197
        %v6199 = vpop.f32.mrb[0].mxu0
        %v6200 = vadd.f32 0.0, %v6199
        %6201 = vmatprep.mubr.f32.mxu0 %v6078
        %6202 = vmatmul.mubr.f32.gmra.mrb[0].mxu0 %v6042
        %v6203 = vpop.f32.mrb[0].mxu0
        %v6204 = vadd.f32 0.0, %v6203
        %v6205 = vpop.f32.mrb[0].mxu0
        %v6206 = vadd.f32 0.0, %v6205
        %6207 = vmatprep.mubr.f32.mxu0 %v6081
        %6208 = vmatmul.mubr.f32.gmra.mrb[0].mxu0 %v6044
        %v6209 = vpop.f32.mrb[0].mxu0
        %v6210 = vadd.f32 0.0, %v6209
        %v6211 = vpop.f32.mrb[0].mxu0
        %v6212 = vadd.f32 0.0, %v6211
        %6213 = vmatprep.mubr.f32.mxu0 %v6084
        %6214 = vmatmul.mubr.f32.gmra.mrb[0].mxu0 %v6046
        %v6215 = vpop.f32.mrb[0].mxu0
        %v6216 = vadd.f32 0.0, %v6215
        %v6217 = vpop.f32.mrb[0].mxu0
        %v6218 = vadd.f32 0.0, %v6217
        %6219 = vmatprep.mubr.f32.mxu0 %v6087
        %6220 = vmatmul.mubr.f32.gmra.mrb[0].mxu0 %v6048
        %v6221 = vpop.f32.mrb[0].mxu0
        %v6222 = vadd.f32 0.0, %v6221
        %v6223 = vpop.f32.mrb[0].mxu0
        %v6224 = vadd.f32 0.0, %v6223
        %6225 = vmatprep.mubr.f32.mxu0 %v6090
        %6226 = vmatmul.mubr.f32.gmra.mrb[0].mxu0 %v6050
        %v6227 = vpop.f32.mrb[0].mxu0
        %v6228 = vadd.f32 0.0, %v6227
        %v6229 = vpop.f32.mrb[0].mxu0
        %v6230 = vadd.f32 0.0, %v6229
        %6231 = vmatprep.mubr.f32.mxu0 %v6093
        %6232 = vmatmul.mubr.f32.gmra.mrb[0].mxu0 %v6052
        %v6233 = vpop.f32.mrb[0].mxu0
        %v6234 = vadd.f32 0.0, %v6233
        %v6235 = vpop.f32.mrb[0].mxu0
        %v6236 = vadd.f32 0.0, %v6235
        %6237 = vmatprep.mubr.f32.mxu0 %v6096
        %6238 = vmatmul.mubr.f32.gmra.mrb[0].mxu0 %v6054
        %v6239 = vpop.f32.mrb[0].mxu0
        %v6240 = vadd.f32 0.0, %v6239
        %v6241 = vpop.f32.mrb[0].mxu0
        %v6242 = vadd.f32 0.0, %v6241
        %6243 = vmatprep.mubr.f32.mxu0 %v6099
        %6244 = vmatmul.mubr.f32.gmra.mrb[0].mxu0 %v6056
        %v6245 = vpop.f32.mrb[0].mxu0
        %v6246 = vadd.f32 0.0, %v6245
        %v6247 = vpop.f32.mrb[0].mxu0
        %v6248 = vadd.f32 0.0, %v6247
        %6249 = vmatprep.mubr.f32.mxu0 %v6102
        %6250 = vmatmul.mubr.f32.gmra.mrb[0].mxu0 %v6058
        %v6251 = vpop.f32.mrb[0].mxu0
        %v6252 = vadd.f32 0.0, %v6251
        %v6253 = vpop.f32.mrb[0].mxu0
        %v6254 = vadd.f32 0.0, %v6253
        %6255 = vmatprep.mubr.f32.mxu0 %v6105
        %6256 = vmatmul.mubr.f32.gmra.mrb[0].mxu0 %v6060
        %v6257 = vpop.f32.mrb[0].mxu0
        %v6258 = vadd.f32 0.0, %v6257
        %v6259 = vpop.f32.mrb[0].mxu0
        %v6260 = vadd.f32 0.0, %v6259
        %6261 = vdwg.mxu0
        %s6262 = scalar_lea.vmem %s5, 704
        %v6263 = vld [vmem:[%s6262] sm:$0xff]
        %v6264 = vld [vmem:[%s6262 + $0x8] sm:$0xff]
        %v6265 = vld [vmem:[%s6262 + $0x10] sm:$0xff]
        %v6266 = vld [vmem:[%s6262 + $0x18] sm:$0xff]
        %v6267 = vld [vmem:[%s6262 + $0x20] sm:$0xff]
        %v6268 = vld [vmem:[%s6262 + $0x28] sm:$0xff]
        %v6269 = vld [vmem:[%s6262 + $0x30] sm:$0xff]
        %v6270 = vld [vmem:[%s6262 + $0x38] sm:$0xff]
        %v6271 = vld [vmem:[%s6262 + $0x40] sm:$0xff]
        %v6272 = vld [vmem:[%s6262 + $0x48] sm:$0xff]
        %v6273 = vld [vmem:[%s6262 + $0x50] sm:$0xff]
        %v6274 = vld [vmem:[%s6262 + $0x58] sm:$0xff]
        %v6275 = vld [vmem:[%s6262 + $0x60] sm:$0xff]
        %v6276 = vld [vmem:[%s6262 + $0x68] sm:$0xff]
        %v6277 = vld [vmem:[%s6262 + $0x70] sm:$0xff]
        %v6278 = vld [vmem:[%s6262 + $0x78] sm:$0xff]
        %v6279 = vld [vmem:[%s6262 + $0x80] sm:$0xff]
        %v6280 = vld [vmem:[%s6262 + $0x88] sm:$0xff]
        %v6281 = vld [vmem:[%s6262 + $0x90] sm:$0xff]
        %v6282 = vld [vmem:[%s6262 + $0x98] sm:$0xff]
        %v6283 = vld [vmem:[%s6262 + $0xa0] sm:$0xff]
        %v6284 = vld [vmem:[%s6262 + $0xa8] sm:$0xff]
        %v6285 = vld [vmem:[%s6262 + $0xb0] sm:$0xff]
        %v6286 = vld [vmem:[%s6262 + $0xb8] sm:$0xff]
        %v6287 = vld [vmem:[%s6262 + $0xc0] sm:$0xff]
        %v6288 = vld [vmem:[%s6262 + $0xc8] sm:$0xff]
        %v6289 = vld [vmem:[%s6262 + $0xd0] sm:$0xff]
        %v6290 = vld [vmem:[%s6262 + $0xd8] sm:$0xff]
        %v6291 = vld [vmem:[%s6262 + $0xe0] sm:$0xff]
        %v6292 = vld [vmem:[%s6262 + $0xe8] sm:$0xff]
        %v6293 = vld [vmem:[%s6262 + $0xf0] sm:$0xff]
        %v6294 = vld [vmem:[%s6262 + $0xf8] sm:$0xff]
        %v6295 = vld [vmem:[%s6262 + $0x100] sm:$0xff]
        %v6296 = vld [vmem:[%s6262 + $0x108] sm:$0xff]
        %v6297 = vld [vmem:[%s6262 + $0x110] sm:$0xff]
        %v6298 = vld [vmem:[%s6262 + $0x118] sm:$0xff]
        %v6299 = vld [vmem:[%s6262 + $0x120] sm:$0xff]
        %v6300 = vld [vmem:[%s6262 + $0x128] sm:$0xff]
        %v6301 = vld [vmem:[%s6262 + $0x130] sm:$0xff]
        %v6302 = vld [vmem:[%s6262 + $0x138] sm:$0xff]
        %v6303 = vld [vmem:[%s6262 + $0x140] sm:$0xff]
        %v6304 = vld [vmem:[%s6262 + $0x148] sm:$0xff]
        %v6305 = vld [vmem:[%s6262 + $0x150] sm:$0x3f]
        %v6306 = vld [vmem:[%s6262 + $0x158] sm:$0x3f]
        %v6308 = vsel %vm5617, %v6176, 0
        %v6311 = vsel %vm5617, %v6182, 0
        %v6314 = vsel %vm5617, %v6188, 0
        %v6317 = vsel %vm5617, %v6194, 0
        %v6320 = vsel %vm5617, %v6200, 0
        %v6323 = vsel %vm5617, %v6206, 0
        %v6326 = vsel %vm5617, %v6212, 0
        %v6329 = vsel %vm5617, %v6218, 0
        %v6332 = vsel %vm5617, %v6224, 0
        %v6335 = vsel %vm5617, %v6230, 0
        %v6338 = vsel %vm5617, %v6236, 0
        %v6341 = vsel %vm5617, %v6242, 0
        %v6344 = vsel %vm5617, %v6248, 0
        %v6347 = vsel %vm5617, %v6254, 0
        %v6350 = vsel %vm5617, %v6260, 0
        %v6353 = vsel %vm5663, %v6305, 0
        %v6356 = vsel %vm5663, %v6306, 0
        %6358 = vmatprep.subr.mxu0 %v6264
        %6359 = vmatpush1.msra.mxu0 %v6263
        %6360 = vmatprep.subr.mxu0 %v6266
        %6361 = vmatpush1.msra.mxu0 %v6265
        %6362 = vmatprep.subr.mxu0 %v6268
        %6363 = vmatpush1.msra.mxu0 %v6267
        %6364 = vmatprep.subr.mxu0 %v6270
        %6365 = vmatpush1.msra.mxu0 %v6269
        %6366 = vmatprep.subr.mxu0 %v6272
        %6367 = vmatpush1.msra.mxu0 %v6271
        %6368 = vmatprep.subr.mxu0 %v6274
        %6369 = vmatpush1.msra.mxu0 %v6273
        %6370 = vmatprep.subr.mxu0 %v6276
        %6371 = vmatpush1.msra.mxu0 %v6275
        %6372 = vmatprep.subr.mxu0 %v6278
        %6373 = vmatpush1.msra.mxu0 %v6277
        %6374 = vmatprep.subr.mxu0 %v6280
        %6375 = vmatpush1.msra.mxu0 %v6279
        %6376 = vmatprep.subr.mxu0 %v6282
        %6377 = vmatpush1.msra.mxu0 %v6281
        %6378 = vmatprep.subr.mxu0 %v6284
        %6379 = vmatpush1.msra.mxu0 %v6283
        %6380 = vmatprep.subr.mxu0 %v6286
        %6381 = vmatpush1.msra.mxu0 %v6285
        %6382 = vmatprep.subr.mxu0 %v6288
        %6383 = vmatpush1.msra.mxu0 %v6287
        %6384 = vmatprep.subr.mxu0 %v6290
        %6385 = vmatpush1.msra.mxu0 %v6289
        %6386 = vmatprep.subr.mxu0 %v6292
        %6387 = vmatpush1.msra.mxu0 %v6291
        %6388 = vmatprep.subr.mxu0 %v6294
        %6389 = vmatpush1.msra.mxu0 %v6293
        %6390 = vmatprep.subr.mxu0 %v6296
        %6391 = vmatpush1.msra.mxu0 %v6295
        %6392 = vmatprep.subr.mxu0 %v6298
        %6393 = vmatpush1.msra.mxu0 %v6297
        %6394 = vmatprep.subr.mxu0 %v6300
        %6395 = vmatpush1.msra.mxu0 %v6299
        %6396 = vmatprep.subr.mxu0 %v6302
        %6397 = vmatpush1.msra.mxu0 %v6301
        %6398 = vmatprep.subr.mxu0 %v6304
        %6399 = vmatpush1.msra.mxu0 %v6303
        %6400 = vmatprep.subr.mxu0 %v6356
        %6401 = vmatpush1.msra.mxu0 %v6353
        %6402 = vmatprep.subr.mxu0 0.0
        %6403 = vmatpush1.msra.mxu0 0.0
        %6404 = vmatprep.subr.mxu0 0.0
        %6405 = vmatpush1.msra.mxu0 0.0
        %6406 = vmatprep.subr.mxu0 0.0
        %6407 = vmatpush1.msra.mxu0 0.0
        %6408 = vmatprep.subr.mxu0 0.0
        %6409 = vmatpush1.msra.mxu0 0.0
        %6410 = vmatprep.subr.mxu0 0.0
        %6411 = vmatpush1.msra.mxu0 0.0
        %6412 = vmatprep.subr.mxu0 0.0
        %6413 = vmatpush1.msra.mxu0 0.0
        %6414 = vmatprep.subr.mxu0 0.0
        %6415 = vmatpush1.msra.mxu0 0.0
        %6416 = vmatprep.subr.mxu0 0.0
        %6417 = vmatpush1.msra.mxu0 0.0
        %6418 = vmatprep.subr.mxu0 0.0
        %6419 = vmatpush1.msra.mxu0 0.0
        %6420 = vmatprep.subr.mxu0 0.0
        %6421 = vmatpush1.msra.mxu0 0.0
        %6422 = vmatprep.mubr.f32.mxu0 %v6308
        %6423 = vmatmul.mubr.f32.gmra.mrb[0].mxu0 %v6174
        %v6424 = vpop.f32.mrb[0].mxu0
        %v6425 = vadd.f32 0.0, %v6424
        %v6426 = vpop.f32.mrb[0].mxu0
        %v6427 = vadd.f32 0.0, %v6426
        %6428 = vmatprep.mubr.f32.mxu0 %v6311
        %6429 = vmatmul.mubr.f32.gmra.mrb[0].mxu0 %v6180
        %v6430 = vpop.f32.mrb[0].mxu0
        %v6431 = vadd.f32 0.0, %v6430
        %v6432 = vpop.f32.mrb[0].mxu0
        %v6433 = vadd.f32 0.0, %v6432
        %6434 = vmatprep.mubr.f32.mxu0 %v6314
        %6435 = vmatmul.mubr.f32.gmra.mrb[0].mxu0 %v6186
        %v6436 = vpop.f32.mrb[0].mxu0
        %v6437 = vadd.f32 0.0, %v6436
        %v6438 = vpop.f32.mrb[0].mxu0
        %v6439 = vadd.f32 0.0, %v6438
        %6440 = vmatprep.mubr.f32.mxu0 %v6317
        %6441 = vmatmul.mubr.f32.gmra.mrb[0].mxu0 %v6192
        %v6442 = vpop.f32.mrb[0].mxu0
        %v6443 = vadd.f32 0.0, %v6442
        %v6444 = vpop.f32.mrb[0].mxu0
        %v6445 = vadd.f32 0.0, %v6444
        %6446 = vmatprep.mubr.f32.mxu0 %v6320
        %6447 = vmatmul.mubr.f32.gmra.mrb[0].mxu0 %v6198
        %v6448 = vpop.f32.mrb[0].mxu0
        %v6449 = vadd.f32 0.0, %v6448
        %v6450 = vpop.f32.mrb[0].mxu0
        %v6451 = vadd.f32 0.0, %v6450
        %6452 = vmatprep.mubr.f32.mxu0 %v6323
        %6453 = vmatmul.mubr.f32.gmra.mrb[0].mxu0 %v6204
        %v6454 = vpop.f32.mrb[0].mxu0
        %v6455 = vadd.f32 0.0, %v6454
        %v6456 = vpop.f32.mrb[0].mxu0
        %v6457 = vadd.f32 0.0, %v6456
        %6458 = vmatprep.mubr.f32.mxu0 %v6326
        %6459 = vmatmul.mubr.f32.gmra.mrb[0].mxu0 %v6210
        %v6460 = vpop.f32.mrb[0].mxu0
        %v6461 = vadd.f32 0.0, %v6460
        %v6462 = vpop.f32.mrb[0].mxu0
        %v6463 = vadd.f32 0.0, %v6462
        %6464 = vmatprep.mubr.f32.mxu0 %v6329
        %6465 = vmatmul.mubr.f32.gmra.mrb[0].mxu0 %v6216
        %v6466 = vpop.f32.mrb[0].mxu0
        %v6467 = vadd.f32 0.0, %v6466
        %v6468 = vpop.f32.mrb[0].mxu0
        %v6469 = vadd.f32 0.0, %v6468
        %6470 = vmatprep.mubr.f32.mxu0 %v6332
        %6471 = vmatmul.mubr.f32.gmra.mrb[0].mxu0 %v6222
        %v6472 = vpop.f32.mrb[0].mxu0
        %v6473 = vadd.f32 0.0, %v6472
        %v6474 = vpop.f32.mrb[0].mxu0
        %v6475 = vadd.f32 0.0, %v6474
        %6476 = vmatprep.mubr.f32.mxu0 %v6335
        %6477 = vmatmul.mubr.f32.gmra.mrb[0].mxu0 %v6228
        %v6478 = vpop.f32.mrb[0].mxu0
        %v6479 = vadd.f32 0.0, %v6478
        %v6480 = vpop.f32.mrb[0].mxu0
        %v6481 = vadd.f32 0.0, %v6480
        %6482 = vmatprep.mubr.f32.mxu0 %v6338
        %6483 = vmatmul.mubr.f32.gmra.mrb[0].mxu0 %v6234
        %v6484 = vpop.f32.mrb[0].mxu0
        %v6485 = vadd.f32 0.0, %v6484
        %v6486 = vpop.f32.mrb[0].mxu0
        %v6487 = vadd.f32 0.0, %v6486
        %6488 = vmatprep.mubr.f32.mxu0 %v6341
        %6489 = vmatmul.mubr.f32.gmra.mrb[0].mxu0 %v6240
        %v6490 = vpop.f32.mrb[0].mxu0
        %v6491 = vadd.f32 0.0, %v6490
        %v6492 = vpop.f32.mrb[0].mxu0
        %v6493 = vadd.f32 0.0, %v6492
        %6494 = vmatprep.mubr.f32.mxu0 %v6344
        %6495 = vmatmul.mubr.f32.gmra.mrb[0].mxu0 %v6246
        %v6496 = vpop.f32.mrb[0].mxu0
        %v6497 = vadd.f32 0.0, %v6496
        %v6498 = vpop.f32.mrb[0].mxu0
        %v6499 = vadd.f32 0.0, %v6498
        %6500 = vmatprep.mubr.f32.mxu0 %v6347
        %6501 = vmatmul.mubr.f32.gmra.mrb[0].mxu0 %v6252
        %v6502 = vpop.f32.mrb[0].mxu0
        %v6503 = vadd.f32 0.0, %v6502
        %v6504 = vpop.f32.mrb[0].mxu0
        %v6505 = vadd.f32 0.0, %v6504
        %6506 = vmatprep.mubr.f32.mxu0 %v6350
        %6507 = vmatmul.mubr.f32.gmra.mrb[0].mxu0 %v6258
        %v6508 = vpop.f32.mrb[0].mxu0
        %v6509 = vadd.f32 0.0, %v6508
        %v6510 = vpop.f32.mrb[0].mxu0
        %v6511 = vadd.f32 0.0, %v6510
        %6512 = vdwg.mxu0
        %v6513 = vadd.f32 %v5943, %v6425
        %v6514 = vadd.f32 %v5945, %v6427
        %v6515 = vadd.f32 %v5949, %v6431
        %v6516 = vadd.f32 %v5951, %v6433
        %v6517 = vadd.f32 %v5955, %v6437
        %v6518 = vadd.f32 %v5957, %v6439
        %v6519 = vadd.f32 %v5961, %v6443
        %v6520 = vadd.f32 %v5963, %v6445
        %v6521 = vadd.f32 %v5967, %v6449
        %v6522 = vadd.f32 %v5969, %v6451
        %v6523 = vadd.f32 %v5973, %v6455
        %v6524 = vadd.f32 %v5975, %v6457
        %v6525 = vadd.f32 %v5979, %v6461
        %v6526 = vadd.f32 %v5981, %v6463
        %v6527 = vadd.f32 %v5985, %v6467
        %v6528 = vadd.f32 %v5987, %v6469
        %v6529 = vadd.f32 %v5991, %v6473
        %v6530 = vadd.f32 %v5993, %v6475
        %v6531 = vadd.f32 %v5997, %v6479
        %v6532 = vadd.f32 %v5999, %v6481
        %v6533 = vadd.f32 %v6003, %v6485
        %v6534 = vadd.f32 %v6005, %v6487
        %v6535 = vadd.f32 %v6009, %v6491
        %v6536 = vadd.f32 %v6011, %v6493
        %v6537 = vadd.f32 %v6015, %v6497
        %v6538 = vadd.f32 %v6017, %v6499
        %v6539 = vadd.f32 %v6021, %v6503
        %v6540 = vadd.f32 %v6023, %v6505
        %v6541 = vadd.f32 %v6027, %v6509
        %v6542 = vadd.f32 %v6029, %v6511
        %s6543 = scalar_lea.vmem %s4, 720
        %v6544 = vld [vmem:[%s6543] sm:$0xff]
        %v6545 = vld [vmem:[%s6543 + $0x8] sm:$0xff]
        %v6546 = vld [vmem:[%s6543 + $0x10] sm:$0xff]
        %v6547 = vld [vmem:[%s6543 + $0x18] sm:$0xff]
        %v6548 = vld [vmem:[%s6543 + $0x20] sm:$0xff]
        %v6549 = vld [vmem:[%s6543 + $0x28] sm:$0xff]
        %v6550 = vld [vmem:[%s6543 + $0x30] sm:$0xff]
        %v6551 = vld [vmem:[%s6543 + $0x38] sm:$0xff]
        %v6552 = vld [vmem:[%s6543 + $0x40] sm:$0xff]
        %v6553 = vld [vmem:[%s6543 + $0x48] sm:$0xff]
        %v6554 = vld [vmem:[%s6543 + $0x50] sm:$0xff]
        %v6555 = vld [vmem:[%s6543 + $0x58] sm:$0xff]
        %v6556 = vld [vmem:[%s6543 + $0x60] sm:$0xff]
        %v6557 = vld [vmem:[%s6543 + $0x68] sm:$0xff]
        %v6558 = vld [vmem:[%s6543 + $0x70] sm:$0xff]
        %v6559 = vld [vmem:[%s6543 + $0x78] sm:$0xff]
        %v6560 = vld [vmem:[%s6543 + $0x80] sm:$0xff]
        %v6561 = vld [vmem:[%s6543 + $0x88] sm:$0xff]
        %v6562 = vld [vmem:[%s6543 + $0x90] sm:$0xff]
        %v6563 = vld [vmem:[%s6543 + $0x98] sm:$0xff]
        %v6564 = vld [vmem:[%s6543 + $0xa0] sm:$0xff]
        %v6565 = vld [vmem:[%s6543 + $0xa8] sm:$0xff]
        %v6566 = vld [vmem:[%s6543 + $0xb0] sm:$0xff]
        %v6567 = vld [vmem:[%s6543 + $0xb8] sm:$0xff]
        %v6568 = vld [vmem:[%s6543 + $0xc0] sm:$0xff]
        %v6569 = vld [vmem:[%s6543 + $0xc8] sm:$0xff]
        %v6570 = vld [vmem:[%s6543 + $0xd0] sm:$0xff]
        %v6571 = vld [vmem:[%s6543 + $0xd8] sm:$0xff]
        %v6572 = vld [vmem:[%s6543 + $0xe0] sm:$0xff]
        %v6573 = vld [vmem:[%s6543 + $0xe8] sm:$0xff]
        %v6575 = vsel %vm5096, %v6545, 0
        %v6578 = vsel %vm5096, %v6547, 0
        %v6581 = vsel %vm5096, %v6549, 0
        %v6584 = vsel %vm5096, %v6551, 0
        %v6587 = vsel %vm5096, %v6553, 0
        %v6590 = vsel %vm5096, %v6555, 0
        %v6593 = vsel %vm5096, %v6557, 0
        %v6596 = vsel %vm5096, %v6559, 0
        %v6599 = vsel %vm5096, %v6561, 0
        %v6602 = vsel %vm5096, %v6563, 0
        %v6605 = vsel %vm5096, %v6565, 0
        %v6608 = vsel %vm5096, %v6567, 0
        %v6611 = vsel %vm5096, %v6569, 0
        %v6614 = vsel %vm5096, %v6571, 0
        %v6617 = vsel %vm5096, %v6573, 0
        %6619 = vmatprep.subr.mxu0 %v5009
        %6620 = vmatpush1.msra.mxu0 %v5008
        %6621 = vmatprep.subr.mxu0 %v5011
        %6622 = vmatpush1.msra.mxu0 %v5010
        %6623 = vmatprep.subr.mxu0 %v5013
        %6624 = vmatpush1.msra.mxu0 %v5012
        %6625 = vmatprep.subr.mxu0 %v5015
        %6626 = vmatpush1.msra.mxu0 %v5014
        %6627 = vmatprep.subr.mxu0 %v5017
        %6628 = vmatpush1.msra.mxu0 %v5016
        %6629 = vmatprep.subr.mxu0 %v5019
        %6630 = vmatpush1.msra.mxu0 %v5018
        %6631 = vmatprep.subr.mxu0 %v5021
        %6632 = vmatpush1.msra.mxu0 %v5020
        %6633 = vmatprep.subr.mxu0 %v5023
        %6634 = vmatpush1.msra.mxu0 %v5022
        %6635 = vmatprep.subr.mxu0 %v5025
        %6636 = vmatpush1.msra.mxu0 %v5024
        %6637 = vmatprep.subr.mxu0 %v5027
        %6638 = vmatpush1.msra.mxu0 %v5026
        %6639 = vmatprep.subr.mxu0 %v5029
        %6640 = vmatpush1.msra.mxu0 %v5028
        %6641 = vmatprep.subr.mxu0 %v5031
        %6642 = vmatpush1.msra.mxu0 %v5030
        %6643 = vmatprep.subr.mxu0 %v5033
        %6644 = vmatpush1.msra.mxu0 %v5032
        %6645 = vmatprep.subr.mxu0 %v5035
        %6646 = vmatpush1.msra.mxu0 %v5034
        %6647 = vmatprep.subr.mxu0 %v5037
        %6648 = vmatpush1.msra.mxu0 %v5036
        %6649 = vmatprep.subr.mxu0 %v5039
        %6650 = vmatpush1.msra.mxu0 %v5038
        %6651 = vmatprep.subr.mxu0 %v5041
        %6652 = vmatpush1.msra.mxu0 %v5040
        %6653 = vmatprep.subr.mxu0 %v5043
        %6654 = vmatpush1.msra.mxu0 %v5042
        %6655 = vmatprep.subr.mxu0 %v5045
        %6656 = vmatpush1.msra.mxu0 %v5044
        %6657 = vmatprep.subr.mxu0 %v5047
        %6658 = vmatpush1.msra.mxu0 %v5046
        %6659 = vmatprep.subr.mxu0 %v5049
        %6660 = vmatpush1.msra.mxu0 %v5048
        %6661 = vmatprep.subr.mxu0 %v5051
        %6662 = vmatpush1.msra.mxu0 %v5050
        %6663 = vmatprep.subr.mxu0 %v5053
        %6664 = vmatpush1.msra.mxu0 %v5052
        %6665 = vmatprep.subr.mxu0 %v5055
        %6666 = vmatpush1.msra.mxu0 %v5054
        %6667 = vmatprep.subr.mxu0 %v5057
        %6668 = vmatpush1.msra.mxu0 %v5056
        %6669 = vmatprep.subr.mxu0 %v5059
        %6670 = vmatpush1.msra.mxu0 %v5058
        %6671 = vmatprep.subr.mxu0 %v5061
        %6672 = vmatpush1.msra.mxu0 %v5060
        %6673 = vmatprep.subr.mxu0 %v5063
        %6674 = vmatpush1.msra.mxu0 %v5062
        %6675 = vmatprep.subr.mxu0 %v5065
        %6676 = vmatpush1.msra.mxu0 %v5064
        %6677 = vmatprep.subr.mxu0 0.0
        %6678 = vmatpush1.msra.mxu0 0.0
        %6679 = vmatprep.subr.mxu0 0.0
        %6680 = vmatpush1.msra.mxu0 0.0
        %6681 = vmatprep.subr.mxu0 0.0
        %6682 = vmatpush1.msra.mxu0 0.0
        %6683 = vmatprep.mubr.f32.mxu0 %v6575
        %6684 = vmatmul.mubr.f32.gmra.mrb[0].mxu0 %v6544
        %v6685 = vpop.f32.mrb[0].mxu0
        %v6686 = vadd.f32 0.0, %v6685
        %v6687 = vpop.f32.mrb[0].mxu0
        %v6688 = vadd.f32 0.0, %v6687
        %6689 = vmatprep.mubr.f32.mxu0 %v6578
        %6690 = vmatmul.mubr.f32.gmra.mrb[0].mxu0 %v6546
        %v6691 = vpop.f32.mrb[0].mxu0
        %v6692 = vadd.f32 0.0, %v6691
        %v6693 = vpop.f32.mrb[0].mxu0
        %v6694 = vadd.f32 0.0, %v6693
        %6695 = vmatprep.mubr.f32.mxu0 %v6581
        %6696 = vmatmul.mubr.f32.gmra.mrb[0].mxu0 %v6548
        %v6697 = vpop.f32.mrb[0].mxu0
        %v6698 = vadd.f32 0.0, %v6697
        %v6699 = vpop.f32.mrb[0].mxu0
        %v6700 = vadd.f32 0.0, %v6699
        %6701 = vmatprep.mubr.f32.mxu0 %v6584
        %6702 = vmatmul.mubr.f32.gmra.mrb[0].mxu0 %v6550
        %v6703 = vpop.f32.mrb[0].mxu0
        %v6704 = vadd.f32 0.0, %v6703
        %v6705 = vpop.f32.mrb[0].mxu0
        %v6706 = vadd.f32 0.0, %v6705
        %6707 = vmatprep.mubr.f32.mxu0 %v6587
        %6708 = vmatmul.mubr.f32.gmra.mrb[0].mxu0 %v6552
        %v6709 = vpop.f32.mrb[0].mxu0
        %v6710 = vadd.f32 0.0, %v6709
        %v6711 = vpop.f32.mrb[0].mxu0
        %v6712 = vadd.f32 0.0, %v6711
        %6713 = vmatprep.mubr.f32.mxu0 %v6590
        %6714 = vmatmul.mubr.f32.gmra.mrb[0].mxu0 %v6554
        %v6715 = vpop.f32.mrb[0].mxu0
        %v6716 = vadd.f32 0.0, %v6715
        %v6717 = vpop.f32.mrb[0].mxu0
        %v6718 = vadd.f32 0.0, %v6717
        %6719 = vmatprep.mubr.f32.mxu0 %v6593
        %6720 = vmatmul.mubr.f32.gmra.mrb[0].mxu0 %v6556
        %v6721 = vpop.f32.mrb[0].mxu0
        %v6722 = vadd.f32 0.0, %v6721
        %v6723 = vpop.f32.mrb[0].mxu0
        %v6724 = vadd.f32 0.0, %v6723
        %6725 = vmatprep.mubr.f32.mxu0 %v6596
        %6726 = vmatmul.mubr.f32.gmra.mrb[0].mxu0 %v6558
        %v6727 = vpop.f32.mrb[0].mxu0
        %v6728 = vadd.f32 0.0, %v6727
        %v6729 = vpop.f32.mrb[0].mxu0
        %v6730 = vadd.f32 0.0, %v6729
        %6731 = vmatprep.mubr.f32.mxu0 %v6599
        %6732 = vmatmul.mubr.f32.gmra.mrb[0].mxu0 %v6560
        %v6733 = vpop.f32.mrb[0].mxu0
        %v6734 = vadd.f32 0.0, %v6733
        %v6735 = vpop.f32.mrb[0].mxu0
        %v6736 = vadd.f32 0.0, %v6735
        %6737 = vmatprep.mubr.f32.mxu0 %v6602
        %6738 = vmatmul.mubr.f32.gmra.mrb[0].mxu0 %v6562
        %v6739 = vpop.f32.mrb[0].mxu0
        %v6740 = vadd.f32 0.0, %v6739
        %v6741 = vpop.f32.mrb[0].mxu0
        %v6742 = vadd.f32 0.0, %v6741
        %6743 = vmatprep.mubr.f32.mxu0 %v6605
        %6744 = vmatmul.mubr.f32.gmra.mrb[0].mxu0 %v6564
        %v6745 = vpop.f32.mrb[0].mxu0
        %v6746 = vadd.f32 0.0, %v6745
        %v6747 = vpop.f32.mrb[0].mxu0
        %v6748 = vadd.f32 0.0, %v6747
        %6749 = vmatprep.mubr.f32.mxu0 %v6608
        %6750 = vmatmul.mubr.f32.gmra.mrb[0].mxu0 %v6566
        %v6751 = vpop.f32.mrb[0].mxu0
        %v6752 = vadd.f32 0.0, %v6751
        %v6753 = vpop.f32.mrb[0].mxu0
        %v6754 = vadd.f32 0.0, %v6753
        %6755 = vmatprep.mubr.f32.mxu0 %v6611
        %6756 = vmatmul.mubr.f32.gmra.mrb[0].mxu0 %v6568
        %v6757 = vpop.f32.mrb[0].mxu0
        %v6758 = vadd.f32 0.0, %v6757
        %v6759 = vpop.f32.mrb[0].mxu0
        %v6760 = vadd.f32 0.0, %v6759
        %6761 = vmatprep.mubr.f32.mxu0 %v6614
        %6762 = vmatmul.mubr.f32.gmra.mrb[0].mxu0 %v6570
        %v6763 = vpop.f32.mrb[0].mxu0
        %v6764 = vadd.f32 0.0, %v6763
        %v6765 = vpop.f32.mrb[0].mxu0
        %v6766 = vadd.f32 0.0, %v6765
        %6767 = vmatprep.mubr.f32.mxu0 %v6617
        %6768 = vmatmul.mubr.f32.gmra.mrb[0].mxu0 %v6572
        %v6769 = vpop.f32.mrb[0].mxu0
        %v6770 = vadd.f32 0.0, %v6769
        %v6771 = vpop.f32.mrb[0].mxu0
        %v6772 = vadd.f32 0.0, %v6771
        %6773 = vdwg.mxu0
        %s6774 = scalar_lea.vmem %s5, 1056
        %v6775 = vld [vmem:[%s6774] sm:$0xff]
        %v6776 = vld [vmem:[%s6774 + $0x8] sm:$0xff]
        %v6777 = vld [vmem:[%s6774 + $0x10] sm:$0xff]
        %v6778 = vld [vmem:[%s6774 + $0x18] sm:$0xff]
        %v6779 = vld [vmem:[%s6774 + $0x20] sm:$0xff]
        %v6780 = vld [vmem:[%s6774 + $0x28] sm:$0xff]
        %v6781 = vld [vmem:[%s6774 + $0x30] sm:$0xff]
        %v6782 = vld [vmem:[%s6774 + $0x38] sm:$0xff]
        %v6783 = vld [vmem:[%s6774 + $0x40] sm:$0xff]
        %v6784 = vld [vmem:[%s6774 + $0x48] sm:$0xff]
        %v6785 = vld [vmem:[%s6774 + $0x50] sm:$0xff]
        %v6786 = vld [vmem:[%s6774 + $0x58] sm:$0xff]
        %v6787 = vld [vmem:[%s6774 + $0x60] sm:$0xff]
        %v6788 = vld [vmem:[%s6774 + $0x68] sm:$0xff]
        %v6789 = vld [vmem:[%s6774 + $0x70] sm:$0xff]
        %v6790 = vld [vmem:[%s6774 + $0x78] sm:$0xff]
        %v6791 = vld [vmem:[%s6774 + $0x80] sm:$0xff]
        %v6792 = vld [vmem:[%s6774 + $0x88] sm:$0xff]
        %v6793 = vld [vmem:[%s6774 + $0x90] sm:$0xff]
        %v6794 = vld [vmem:[%s6774 + $0x98] sm:$0xff]
        %v6795 = vld [vmem:[%s6774 + $0xa0] sm:$0xff]
        %v6796 = vld [vmem:[%s6774 + $0xa8] sm:$0xff]
        %v6797 = vld [vmem:[%s6774 + $0xb0] sm:$0xff]
        %v6798 = vld [vmem:[%s6774 + $0xb8] sm:$0xff]
        %v6799 = vld [vmem:[%s6774 + $0xc0] sm:$0xff]
        %v6800 = vld [vmem:[%s6774 + $0xc8] sm:$0xff]
        %v6801 = vld [vmem:[%s6774 + $0xd0] sm:$0xff]
        %v6802 = vld [vmem:[%s6774 + $0xd8] sm:$0xff]
        %v6803 = vld [vmem:[%s6774 + $0xe0] sm:$0xff]
        %v6804 = vld [vmem:[%s6774 + $0xe8] sm:$0xff]
        %v6805 = vld [vmem:[%s6774 + $0xf0] sm:$0xff]
        %v6806 = vld [vmem:[%s6774 + $0xf8] sm:$0xff]
        %v6807 = vld [vmem:[%s6774 + $0x100] sm:$0xff]
        %v6808 = vld [vmem:[%s6774 + $0x108] sm:$0xff]
        %v6809 = vld [vmem:[%s6774 + $0x110] sm:$0xff]
        %v6810 = vld [vmem:[%s6774 + $0x118] sm:$0xff]
        %v6811 = vld [vmem:[%s6774 + $0x120] sm:$0xff]
        %v6812 = vld [vmem:[%s6774 + $0x128] sm:$0xff]
        %v6813 = vld [vmem:[%s6774 + $0x130] sm:$0xff]
        %v6814 = vld [vmem:[%s6774 + $0x138] sm:$0xff]
        %v6815 = vld [vmem:[%s6774 + $0x140] sm:$0xff]
        %v6816 = vld [vmem:[%s6774 + $0x148] sm:$0xff]
        %v6817 = vld [vmem:[%s6774 + $0x150] sm:$0x3f]
        %v6818 = vld [vmem:[%s6774 + $0x158] sm:$0x3f]
        %v6820 = vsel %vm5617, %v6688, 0
        %v6823 = vsel %vm5617, %v6694, 0
        %v6826 = vsel %vm5617, %v6700, 0
        %v6829 = vsel %vm5617, %v6706, 0
        %v6832 = vsel %vm5617, %v6712, 0
        %v6835 = vsel %vm5617, %v6718, 0
        %v6838 = vsel %vm5617, %v6724, 0
        %v6841 = vsel %vm5617, %v6730, 0
        %v6844 = vsel %vm5617, %v6736, 0
        %v6847 = vsel %vm5617, %v6742, 0
        %v6850 = vsel %vm5617, %v6748, 0
        %v6853 = vsel %vm5617, %v6754, 0
        %v6856 = vsel %vm5617, %v6760, 0
        %v6859 = vsel %vm5617, %v6766, 0
        %v6862 = vsel %vm5617, %v6772, 0
        %v6865 = vsel %vm5663, %v6817, 0
        %v6868 = vsel %vm5663, %v6818, 0
        %6870 = vmatprep.subr.mxu0 %v6776
        %6871 = vmatpush1.msra.mxu0 %v6775
        %6872 = vmatprep.subr.mxu0 %v6778
        %6873 = vmatpush1.msra.mxu0 %v6777
        %6874 = vmatprep.subr.mxu0 %v6780
        %6875 = vmatpush1.msra.mxu0 %v6779
        %6876 = vmatprep.subr.mxu0 %v6782
        %6877 = vmatpush1.msra.mxu0 %v6781
        %6878 = vmatprep.subr.mxu0 %v6784
        %6879 = vmatpush1.msra.mxu0 %v6783
        %6880 = vmatprep.subr.mxu0 %v6786
        %6881 = vmatpush1.msra.mxu0 %v6785
        %6882 = vmatprep.subr.mxu0 %v6788
        %6883 = vmatpush1.msra.mxu0 %v6787
        %6884 = vmatprep.subr.mxu0 %v6790
        %6885 = vmatpush1.msra.mxu0 %v6789
        %6886 = vmatprep.subr.mxu0 %v6792
        %6887 = vmatpush1.msra.mxu0 %v6791
        %6888 = vmatprep.subr.mxu0 %v6794
        %6889 = vmatpush1.msra.mxu0 %v6793
        %6890 = vmatprep.subr.mxu0 %v6796
        %6891 = vmatpush1.msra.mxu0 %v6795
        %6892 = vmatprep.subr.mxu0 %v6798
        %6893 = vmatpush1.msra.mxu0 %v6797
        %6894 = vmatprep.subr.mxu0 %v6800
        %6895 = vmatpush1.msra.mxu0 %v6799
        %6896 = vmatprep.subr.mxu0 %v6802
        %6897 = vmatpush1.msra.mxu0 %v6801
        %6898 = vmatprep.subr.mxu0 %v6804
        %6899 = vmatpush1.msra.mxu0 %v6803
        %6900 = vmatprep.subr.mxu0 %v6806
        %6901 = vmatpush1.msra.mxu0 %v6805
        %6902 = vmatprep.subr.mxu0 %v6808
        %6903 = vmatpush1.msra.mxu0 %v6807
        %6904 = vmatprep.subr.mxu0 %v6810
        %6905 = vmatpush1.msra.mxu0 %v6809
        %6906 = vmatprep.subr.mxu0 %v6812
        %6907 = vmatpush1.msra.mxu0 %v6811
        %6908 = vmatprep.subr.mxu0 %v6814
        %6909 = vmatpush1.msra.mxu0 %v6813
        %6910 = vmatprep.subr.mxu0 %v6816
        %6911 = vmatpush1.msra.mxu0 %v6815
        %6912 = vmatprep.subr.mxu0 %v6868
        %6913 = vmatpush1.msra.mxu0 %v6865
        %6914 = vmatprep.subr.mxu0 0.0
        %6915 = vmatpush1.msra.mxu0 0.0
        %6916 = vmatprep.subr.mxu0 0.0
        %6917 = vmatpush1.msra.mxu0 0.0
        %6918 = vmatprep.subr.mxu0 0.0
        %6919 = vmatpush1.msra.mxu0 0.0
        %6920 = vmatprep.subr.mxu0 0.0
        %6921 = vmatpush1.msra.mxu0 0.0
        %6922 = vmatprep.subr.mxu0 0.0
        %6923 = vmatpush1.msra.mxu0 0.0
        %6924 = vmatprep.subr.mxu0 0.0
        %6925 = vmatpush1.msra.mxu0 0.0
        %6926 = vmatprep.subr.mxu0 0.0
        %6927 = vmatpush1.msra.mxu0 0.0
        %6928 = vmatprep.subr.mxu0 0.0
        %6929 = vmatpush1.msra.mxu0 0.0
        %6930 = vmatprep.subr.mxu0 0.0
        %6931 = vmatpush1.msra.mxu0 0.0
        %6932 = vmatprep.subr.mxu0 0.0
        %6933 = vmatpush1.msra.mxu0 0.0
        %6934 = vmatprep.mubr.f32.mxu0 %v6820
        %6935 = vmatmul.mubr.f32.gmra.mrb[0].mxu0 %v6686
        %v6936 = vpop.f32.mrb[0].mxu0
        %v6937 = vadd.f32 0.0, %v6936
        %v6938 = vpop.f32.mrb[0].mxu0
        %v6939 = vadd.f32 0.0, %v6938
        %6940 = vmatprep.mubr.f32.mxu0 %v6823
        %6941 = vmatmul.mubr.f32.gmra.mrb[0].mxu0 %v6692
        %v6942 = vpop.f32.mrb[0].mxu0
        %v6943 = vadd.f32 0.0, %v6942
        %v6944 = vpop.f32.mrb[0].mxu0
        %v6945 = vadd.f32 0.0, %v6944
        %6946 = vmatprep.mubr.f32.mxu0 %v6826
        %6947 = vmatmul.mubr.f32.gmra.mrb[0].mxu0 %v6698
        %v6948 = vpop.f32.mrb[0].mxu0
        %v6949 = vadd.f32 0.0, %v6948
        %v6950 = vpop.f32.mrb[0].mxu0
        %v6951 = vadd.f32 0.0, %v6950
        %6952 = vmatprep.mubr.f32.mxu0 %v6829
        %6953 = vmatmul.mubr.f32.gmra.mrb[0].mxu0 %v6704
        %v6954 = vpop.f32.mrb[0].mxu0
        %v6955 = vadd.f32 0.0, %v6954
        %v6956 = vpop.f32.mrb[0].mxu0
        %v6957 = vadd.f32 0.0, %v6956
        %6958 = vmatprep.mubr.f32.mxu0 %v6832
        %6959 = vmatmul.mubr.f32.gmra.mrb[0].mxu0 %v6710
        %v6960 = vpop.f32.mrb[0].mxu0
        %v6961 = vadd.f32 0.0, %v6960
        %v6962 = vpop.f32.mrb[0].mxu0
        %v6963 = vadd.f32 0.0, %v6962
        %6964 = vmatprep.mubr.f32.mxu0 %v6835
        %6965 = vmatmul.mubr.f32.gmra.mrb[0].mxu0 %v6716
        %v6966 = vpop.f32.mrb[0].mxu0
        %v6967 = vadd.f32 0.0, %v6966
        %v6968 = vpop.f32.mrb[0].mxu0
        %v6969 = vadd.f32 0.0, %v6968
        %6970 = vmatprep.mubr.f32.mxu0 %v6838
        %6971 = vmatmul.mubr.f32.gmra.mrb[0].mxu0 %v6722
        %v6972 = vpop.f32.mrb[0].mxu0
        %v6973 = vadd.f32 0.0, %v6972
        %v6974 = vpop.f32.mrb[0].mxu0
        %v6975 = vadd.f32 0.0, %v6974
        %6976 = vmatprep.mubr.f32.mxu0 %v6841
        %6977 = vmatmul.mubr.f32.gmra.mrb[0].mxu0 %v6728
        %v6978 = vpop.f32.mrb[0].mxu0
        %v6979 = vadd.f32 0.0, %v6978
        %v6980 = vpop.f32.mrb[0].mxu0
        %v6981 = vadd.f32 0.0, %v6980
        %6982 = vmatprep.mubr.f32.mxu0 %v6844
        %6983 = vmatmul.mubr.f32.gmra.mrb[0].mxu0 %v6734
        %v6984 = vpop.f32.mrb[0].mxu0
        %v6985 = vadd.f32 0.0, %v6984
        %v6986 = vpop.f32.mrb[0].mxu0
        %v6987 = vadd.f32 0.0, %v6986
        %6988 = vmatprep.mubr.f32.mxu0 %v6847
        %6989 = vmatmul.mubr.f32.gmra.mrb[0].mxu0 %v6740
        %v6990 = vpop.f32.mrb[0].mxu0
        %v6991 = vadd.f32 0.0, %v6990
        %v6992 = vpop.f32.mrb[0].mxu0
        %v6993 = vadd.f32 0.0, %v6992
        %6994 = vmatprep.mubr.f32.mxu0 %v6850
        %6995 = vmatmul.mubr.f32.gmra.mrb[0].mxu0 %v6746
        %v6996 = vpop.f32.mrb[0].mxu0
        %v6997 = vadd.f32 0.0, %v6996
        %v6998 = vpop.f32.mrb[0].mxu0
        %v6999 = vadd.f32 0.0, %v6998
        %7000 = vmatprep.mubr.f32.mxu0 %v6853
        %7001 = vmatmul.mubr.f32.gmra.mrb[0].mxu0 %v6752
        %v7002 = vpop.f32.mrb[0].mxu0
        %v7003 = vadd.f32 0.0, %v7002
        %v7004 = vpop.f32.mrb[0].mxu0
        %v7005 = vadd.f32 0.0, %v7004
        %7006 = vmatprep.mubr.f32.mxu0 %v6856
        %7007 = vmatmul.mubr.f32.gmra.mrb[0].mxu0 %v6758
        %v7008 = vpop.f32.mrb[0].mxu0
        %v7009 = vadd.f32 0.0, %v7008
        %v7010 = vpop.f32.mrb[0].mxu0
        %v7011 = vadd.f32 0.0, %v7010
        %7012 = vmatprep.mubr.f32.mxu0 %v6859
        %7013 = vmatmul.mubr.f32.gmra.mrb[0].mxu0 %v6764
        %v7014 = vpop.f32.mrb[0].mxu0
        %v7015 = vadd.f32 0.0, %v7014
        %v7016 = vpop.f32.mrb[0].mxu0
        %v7017 = vadd.f32 0.0, %v7016
        %7018 = vmatprep.mubr.f32.mxu0 %v6862
        %7019 = vmatmul.mubr.f32.gmra.mrb[0].mxu0 %v6770
        %v7020 = vpop.f32.mrb[0].mxu0
        %v7021 = vadd.f32 0.0, %v7020
        %v7022 = vpop.f32.mrb[0].mxu0
        %v7023 = vadd.f32 0.0, %v7022
        %7024 = vdwg.mxu0
        %v7025 = vadd.f32 %v6513, %v6937
        %v7026 = vadd.f32 %v6514, %v6939
        %v7027 = vadd.f32 %v6515, %v6943
        %v7028 = vadd.f32 %v6516, %v6945
        %v7029 = vadd.f32 %v6517, %v6949
        %v7030 = vadd.f32 %v6518, %v6951
        %v7031 = vadd.f32 %v6519, %v6955
        %v7032 = vadd.f32 %v6520, %v6957
        %v7033 = vadd.f32 %v6521, %v6961
        %v7034 = vadd.f32 %v6522, %v6963
        %v7035 = vadd.f32 %v6523, %v6967
        %v7036 = vadd.f32 %v6524, %v6969
        %v7037 = vadd.f32 %v6525, %v6973
        %v7038 = vadd.f32 %v6526, %v6975
        %v7039 = vadd.f32 %v6527, %v6979
        %v7040 = vadd.f32 %v6528, %v6981
        %v7041 = vadd.f32 %v6529, %v6985
        %v7042 = vadd.f32 %v6530, %v6987
        %v7043 = vadd.f32 %v6531, %v6991
        %v7044 = vadd.f32 %v6532, %v6993
        %v7045 = vadd.f32 %v6533, %v6997
        %v7046 = vadd.f32 %v6534, %v6999
        %v7047 = vadd.f32 %v6535, %v7003
        %v7048 = vadd.f32 %v6536, %v7005
        %v7049 = vadd.f32 %v6537, %v7009
        %v7050 = vadd.f32 %v6538, %v7011
        %v7051 = vadd.f32 %v6539, %v7015
        %v7052 = vadd.f32 %v6540, %v7017
        %v7053 = vadd.f32 %v6541, %v7021
        %v7054 = vadd.f32 %v6542, %v7023
        %s7055 = scalar_lea.vmem %s4, 960
        %v7056 = vld [vmem:[%s7055] sm:$0xff]
        %v7057 = vld [vmem:[%s7055 + $0x8] sm:$0xff]
        %v7058 = vld [vmem:[%s7055 + $0x10] sm:$0xff]
        %v7059 = vld [vmem:[%s7055 + $0x18] sm:$0xff]
        %v7060 = vld [vmem:[%s7055 + $0x20] sm:$0xff]
        %v7061 = vld [vmem:[%s7055 + $0x28] sm:$0xff]
        %v7062 = vld [vmem:[%s7055 + $0x30] sm:$0xff]
        %v7063 = vld [vmem:[%s7055 + $0x38] sm:$0xff]
        %v7064 = vld [vmem:[%s7055 + $0x40] sm:$0xff]
        %v7065 = vld [vmem:[%s7055 + $0x48] sm:$0xff]
        %v7066 = vld [vmem:[%s7055 + $0x50] sm:$0xff]
        %v7067 = vld [vmem:[%s7055 + $0x58] sm:$0xff]
        %v7068 = vld [vmem:[%s7055 + $0x60] sm:$0xff]
        %v7069 = vld [vmem:[%s7055 + $0x68] sm:$0xff]
        %v7070 = vld [vmem:[%s7055 + $0x70] sm:$0xff]
        %v7071 = vld [vmem:[%s7055 + $0x78] sm:$0xff]
        %v7072 = vld [vmem:[%s7055 + $0x80] sm:$0xff]
        %v7073 = vld [vmem:[%s7055 + $0x88] sm:$0xff]
        %v7074 = vld [vmem:[%s7055 + $0x90] sm:$0xff]
        %v7075 = vld [vmem:[%s7055 + $0x98] sm:$0xff]
        %v7076 = vld [vmem:[%s7055 + $0xa0] sm:$0xff]
        %v7077 = vld [vmem:[%s7055 + $0xa8] sm:$0xff]
        %v7078 = vld [vmem:[%s7055 + $0xb0] sm:$0xff]
        %v7079 = vld [vmem:[%s7055 + $0xb8] sm:$0xff]
        %v7080 = vld [vmem:[%s7055 + $0xc0] sm:$0xff]
        %v7081 = vld [vmem:[%s7055 + $0xc8] sm:$0xff]
        %v7082 = vld [vmem:[%s7055 + $0xd0] sm:$0xff]
        %v7083 = vld [vmem:[%s7055 + $0xd8] sm:$0xff]
        %v7084 = vld [vmem:[%s7055 + $0xe0] sm:$0xff]
        %v7085 = vld [vmem:[%s7055 + $0xe8] sm:$0xff]
        %v7087 = vsel %vm5096, %v7057, 0
        %v7090 = vsel %vm5096, %v7059, 0
        %v7093 = vsel %vm5096, %v7061, 0
        %v7096 = vsel %vm5096, %v7063, 0
        %v7099 = vsel %vm5096, %v7065, 0
        %v7102 = vsel %vm5096, %v7067, 0
        %v7105 = vsel %vm5096, %v7069, 0
        %v7108 = vsel %vm5096, %v7071, 0
        %v7111 = vsel %vm5096, %v7073, 0
        %v7114 = vsel %vm5096, %v7075, 0
        %v7117 = vsel %vm5096, %v7077, 0
        %v7120 = vsel %vm5096, %v7079, 0
        %v7123 = vsel %vm5096, %v7081, 0
        %v7126 = vsel %vm5096, %v7083, 0
        %v7129 = vsel %vm5096, %v7085, 0
        %7131 = vmatprep.subr.mxu0 %v5009
        %7132 = vmatpush1.msra.mxu0 %v5008
        %7133 = vmatprep.subr.mxu0 %v5011
        %7134 = vmatpush1.msra.mxu0 %v5010
        %7135 = vmatprep.subr.mxu0 %v5013
        %7136 = vmatpush1.msra.mxu0 %v5012
        %7137 = vmatprep.subr.mxu0 %v5015
        %7138 = vmatpush1.msra.mxu0 %v5014
        %7139 = vmatprep.subr.mxu0 %v5017
        %7140 = vmatpush1.msra.mxu0 %v5016
        %7141 = vmatprep.subr.mxu0 %v5019
        %7142 = vmatpush1.msra.mxu0 %v5018
        %7143 = vmatprep.subr.mxu0 %v5021
        %7144 = vmatpush1.msra.mxu0 %v5020
        %7145 = vmatprep.subr.mxu0 %v5023
        %7146 = vmatpush1.msra.mxu0 %v5022
        %7147 = vmatprep.subr.mxu0 %v5025
        %7148 = vmatpush1.msra.mxu0 %v5024
        %7149 = vmatprep.subr.mxu0 %v5027
        %7150 = vmatpush1.msra.mxu0 %v5026
        %7151 = vmatprep.subr.mxu0 %v5029
        %7152 = vmatpush1.msra.mxu0 %v5028
        %7153 = vmatprep.subr.mxu0 %v5031
        %7154 = vmatpush1.msra.mxu0 %v5030
        %7155 = vmatprep.subr.mxu0 %v5033
        %7156 = vmatpush1.msra.mxu0 %v5032
        %7157 = vmatprep.subr.mxu0 %v5035
        %7158 = vmatpush1.msra.mxu0 %v5034
        %7159 = vmatprep.subr.mxu0 %v5037
        %7160 = vmatpush1.msra.mxu0 %v5036
        %7161 = vmatprep.subr.mxu0 %v5039
        %7162 = vmatpush1.msra.mxu0 %v5038
        %7163 = vmatprep.subr.mxu0 %v5041
        %7164 = vmatpush1.msra.mxu0 %v5040
        %7165 = vmatprep.subr.mxu0 %v5043
        %7166 = vmatpush1.msra.mxu0 %v5042
        %7167 = vmatprep.subr.mxu0 %v5045
        %7168 = vmatpush1.msra.mxu0 %v5044
        %7169 = vmatprep.subr.mxu0 %v5047
        %7170 = vmatpush1.msra.mxu0 %v5046
        %7171 = vmatprep.subr.mxu0 %v5049
        %7172 = vmatpush1.msra.mxu0 %v5048
        %7173 = vmatprep.subr.mxu0 %v5051
        %7174 = vmatpush1.msra.mxu0 %v5050
        %7175 = vmatprep.subr.mxu0 %v5053
        %7176 = vmatpush1.msra.mxu0 %v5052
        %7177 = vmatprep.subr.mxu0 %v5055
        %7178 = vmatpush1.msra.mxu0 %v5054
        %7179 = vmatprep.subr.mxu0 %v5057
        %7180 = vmatpush1.msra.mxu0 %v5056
        %7181 = vmatprep.subr.mxu0 %v5059
        %7182 = vmatpush1.msra.mxu0 %v5058
        %7183 = vmatprep.subr.mxu0 %v5061
        %7184 = vmatpush1.msra.mxu0 %v5060
        %7185 = vmatprep.subr.mxu0 %v5063
        %7186 = vmatpush1.msra.mxu0 %v5062
        %7187 = vmatprep.subr.mxu0 %v5065
        %7188 = vmatpush1.msra.mxu0 %v5064
        %7189 = vmatprep.subr.mxu0 0.0
        %7190 = vmatpush1.msra.mxu0 0.0
        %7191 = vmatprep.subr.mxu0 0.0
        %7192 = vmatpush1.msra.mxu0 0.0
        %7193 = vmatprep.subr.mxu0 0.0
        %7194 = vmatpush1.msra.mxu0 0.0
        %7195 = vmatprep.mubr.f32.mxu0 %v7087
        %7196 = vmatmul.mubr.f32.gmra.mrb[0].mxu0 %v7056
        %v7197 = vpop.f32.mrb[0].mxu0
        %v7198 = vadd.f32 0.0, %v7197
        %v7199 = vpop.f32.mrb[0].mxu0
        %v7200 = vadd.f32 0.0, %v7199
        %7201 = vmatprep.mubr.f32.mxu0 %v7090
        %7202 = vmatmul.mubr.f32.gmra.mrb[0].mxu0 %v7058
        %v7203 = vpop.f32.mrb[0].mxu0
        %v7204 = vadd.f32 0.0, %v7203
        %v7205 = vpop.f32.mrb[0].mxu0
        %v7206 = vadd.f32 0.0, %v7205
        %7207 = vmatprep.mubr.f32.mxu0 %v7093
        %7208 = vmatmul.mubr.f32.gmra.mrb[0].mxu0 %v7060
        %v7209 = vpop.f32.mrb[0].mxu0
        %v7210 = vadd.f32 0.0, %v7209
        %v7211 = vpop.f32.mrb[0].mxu0
        %v7212 = vadd.f32 0.0, %v7211
        %7213 = vmatprep.mubr.f32.mxu0 %v7096
        %7214 = vmatmul.mubr.f32.gmra.mrb[0].mxu0 %v7062
        %v7215 = vpop.f32.mrb[0].mxu0
        %v7216 = vadd.f32 0.0, %v7215
        %v7217 = vpop.f32.mrb[0].mxu0
        %v7218 = vadd.f32 0.0, %v7217
        %7219 = vmatprep.mubr.f32.mxu0 %v7099
        %7220 = vmatmul.mubr.f32.gmra.mrb[0].mxu0 %v7064
        %v7221 = vpop.f32.mrb[0].mxu0
        %v7222 = vadd.f32 0.0, %v7221
        %v7223 = vpop.f32.mrb[0].mxu0
        %v7224 = vadd.f32 0.0, %v7223
        %7225 = vmatprep.mubr.f32.mxu0 %v7102
        %7226 = vmatmul.mubr.f32.gmra.mrb[0].mxu0 %v7066
        %v7227 = vpop.f32.mrb[0].mxu0
        %v7228 = vadd.f32 0.0, %v7227
        %v7229 = vpop.f32.mrb[0].mxu0
        %v7230 = vadd.f32 0.0, %v7229
        %7231 = vmatprep.mubr.f32.mxu0 %v7105
        %7232 = vmatmul.mubr.f32.gmra.mrb[0].mxu0 %v7068
        %v7233 = vpop.f32.mrb[0].mxu0
        %v7234 = vadd.f32 0.0, %v7233
        %v7235 = vpop.f32.mrb[0].mxu0
        %v7236 = vadd.f32 0.0, %v7235
        %7237 = vmatprep.mubr.f32.mxu0 %v7108
        %7238 = vmatmul.mubr.f32.gmra.mrb[0].mxu0 %v7070
        %v7239 = vpop.f32.mrb[0].mxu0
        %v7240 = vadd.f32 0.0, %v7239
        %v7241 = vpop.f32.mrb[0].mxu0
        %v7242 = vadd.f32 0.0, %v7241
        %7243 = vmatprep.mubr.f32.mxu0 %v7111
        %7244 = vmatmul.mubr.f32.gmra.mrb[0].mxu0 %v7072
        %v7245 = vpop.f32.mrb[0].mxu0
        %v7246 = vadd.f32 0.0, %v7245
        %v7247 = vpop.f32.mrb[0].mxu0
        %v7248 = vadd.f32 0.0, %v7247
        %7249 = vmatprep.mubr.f32.mxu0 %v7114
        %7250 = vmatmul.mubr.f32.gmra.mrb[0].mxu0 %v7074
        %v7251 = vpop.f32.mrb[0].mxu0
        %v7252 = vadd.f32 0.0, %v7251
        %v7253 = vpop.f32.mrb[0].mxu0
        %v7254 = vadd.f32 0.0, %v7253
        %7255 = vmatprep.mubr.f32.mxu0 %v7117
        %7256 = vmatmul.mubr.f32.gmra.mrb[0].mxu0 %v7076
        %v7257 = vpop.f32.mrb[0].mxu0
        %v7258 = vadd.f32 0.0, %v7257
        %v7259 = vpop.f32.mrb[0].mxu0
        %v7260 = vadd.f32 0.0, %v7259
        %7261 = vmatprep.mubr.f32.mxu0 %v7120
        %7262 = vmatmul.mubr.f32.gmra.mrb[0].mxu0 %v7078
        %v7263 = vpop.f32.mrb[0].mxu0
        %v7264 = vadd.f32 0.0, %v7263
        %v7265 = vpop.f32.mrb[0].mxu0
        %v7266 = vadd.f32 0.0, %v7265
        %7267 = vmatprep.mubr.f32.mxu0 %v7123
        %7268 = vmatmul.mubr.f32.gmra.mrb[0].mxu0 %v7080
        %v7269 = vpop.f32.mrb[0].mxu0
        %v7270 = vadd.f32 0.0, %v7269
        %v7271 = vpop.f32.mrb[0].mxu0
        %v7272 = vadd.f32 0.0, %v7271
        %7273 = vmatprep.mubr.f32.mxu0 %v7126
        %7274 = vmatmul.mubr.f32.gmra.mrb[0].mxu0 %v7082
        %v7275 = vpop.f32.mrb[0].mxu0
        %v7276 = vadd.f32 0.0, %v7275
        %v7277 = vpop.f32.mrb[0].mxu0
        %v7278 = vadd.f32 0.0, %v7277
        %7279 = vmatprep.mubr.f32.mxu0 %v7129
        %7280 = vmatmul.mubr.f32.gmra.mrb[0].mxu0 %v7084
        %v7281 = vpop.f32.mrb[0].mxu0
        %v7282 = vadd.f32 0.0, %v7281
        %v7283 = vpop.f32.mrb[0].mxu0
        %v7284 = vadd.f32 0.0, %v7283
        %7285 = vdwg.mxu0
        %s7286 = scalar_lea.vmem %s5, 1408
        %v7287 = vld [vmem:[%s7286] sm:$0xff]
        %v7288 = vld [vmem:[%s7286 + $0x8] sm:$0xff]
        %v7289 = vld [vmem:[%s7286 + $0x10] sm:$0xff]
        %v7290 = vld [vmem:[%s7286 + $0x18] sm:$0xff]
        %v7291 = vld [vmem:[%s7286 + $0x20] sm:$0xff]
        %v7292 = vld [vmem:[%s7286 + $0x28] sm:$0xff]
        %v7293 = vld [vmem:[%s7286 + $0x30] sm:$0xff]
        %v7294 = vld [vmem:[%s7286 + $0x38] sm:$0xff]
        %v7295 = vld [vmem:[%s7286 + $0x40] sm:$0xff]
        %v7296 = vld [vmem:[%s7286 + $0x48] sm:$0xff]
        %v7297 = vld [vmem:[%s7286 + $0x50] sm:$0xff]
        %v7298 = vld [vmem:[%s7286 + $0x58] sm:$0xff]
        %v7299 = vld [vmem:[%s7286 + $0x60] sm:$0xff]
        %v7300 = vld [vmem:[%s7286 + $0x68] sm:$0xff]
        %v7301 = vld [vmem:[%s7286 + $0x70] sm:$0xff]
        %v7302 = vld [vmem:[%s7286 + $0x78] sm:$0xff]
        %v7303 = vld [vmem:[%s7286 + $0x80] sm:$0xff]
        %v7304 = vld [vmem:[%s7286 + $0x88] sm:$0xff]
        %v7305 = vld [vmem:[%s7286 + $0x90] sm:$0xff]
        %v7306 = vld [vmem:[%s7286 + $0x98] sm:$0xff]
        %v7307 = vld [vmem:[%s7286 + $0xa0] sm:$0xff]
        %v7308 = vld [vmem:[%s7286 + $0xa8] sm:$0xff]
        %v7309 = vld [vmem:[%s7286 + $0xb0] sm:$0xff]
        %v7310 = vld [vmem:[%s7286 + $0xb8] sm:$0xff]
        %v7311 = vld [vmem:[%s7286 + $0xc0] sm:$0xff]
        %v7312 = vld [vmem:[%s7286 + $0xc8] sm:$0xff]
        %v7313 = vld [vmem:[%s7286 + $0xd0] sm:$0xff]
        %v7314 = vld [vmem:[%s7286 + $0xd8] sm:$0xff]
        %v7315 = vld [vmem:[%s7286 + $0xe0] sm:$0xff]
        %v7316 = vld [vmem:[%s7286 + $0xe8] sm:$0xff]
        %v7317 = vld [vmem:[%s7286 + $0xf0] sm:$0xff]
        %v7318 = vld [vmem:[%s7286 + $0xf8] sm:$0xff]
        %v7319 = vld [vmem:[%s7286 + $0x100] sm:$0xff]
        %v7320 = vld [vmem:[%s7286 + $0x108] sm:$0xff]
        %v7321 = vld [vmem:[%s7286 + $0x110] sm:$0xff]
        %v7322 = vld [vmem:[%s7286 + $0x118] sm:$0xff]
        %v7323 = vld [vmem:[%s7286 + $0x120] sm:$0xff]
        %v7324 = vld [vmem:[%s7286 + $0x128] sm:$0xff]
        %v7325 = vld [vmem:[%s7286 + $0x130] sm:$0xff]
        %v7326 = vld [vmem:[%s7286 + $0x138] sm:$0xff]
        %v7327 = vld [vmem:[%s7286 + $0x140] sm:$0xff]
        %v7328 = vld [vmem:[%s7286 + $0x148] sm:$0xff]
        %v7329 = vld [vmem:[%s7286 + $0x150] sm:$0x3f]
        %v7330 = vld [vmem:[%s7286 + $0x158] sm:$0x3f]
        %v7332 = vsel %vm5617, %v7200, 0
        %v7335 = vsel %vm5617, %v7206, 0
        %v7338 = vsel %vm5617, %v7212, 0
        %v7341 = vsel %vm5617, %v7218, 0
        %v7344 = vsel %vm5617, %v7224, 0
        %v7347 = vsel %vm5617, %v7230, 0
        %v7350 = vsel %vm5617, %v7236, 0
        %v7353 = vsel %vm5617, %v7242, 0
        %v7356 = vsel %vm5617, %v7248, 0
        %v7359 = vsel %vm5617, %v7254, 0
        %v7362 = vsel %vm5617, %v7260, 0
        %v7365 = vsel %vm5617, %v7266, 0
        %v7368 = vsel %vm5617, %v7272, 0
        %v7371 = vsel %vm5617, %v7278, 0
        %v7374 = vsel %vm5617, %v7284, 0
        %v7377 = vsel %vm5663, %v7329, 0
        %v7380 = vsel %vm5663, %v7330, 0
        %7382 = vmatprep.subr.mxu0 %v7288
        %7383 = vmatpush1.msra.mxu0 %v7287
        %7384 = vmatprep.subr.mxu0 %v7290
        %7385 = vmatpush1.msra.mxu0 %v7289
        %7386 = vmatprep.subr.mxu0 %v7292
        %7387 = vmatpush1.msra.mxu0 %v7291
        %7388 = vmatprep.subr.mxu0 %v7294
        %7389 = vmatpush1.msra.mxu0 %v7293
        %7390 = vmatprep.subr.mxu0 %v7296
        %7391 = vmatpush1.msra.mxu0 %v7295
        %7392 = vmatprep.subr.mxu0 %v7298
        %7393 = vmatpush1.msra.mxu0 %v7297
        %7394 = vmatprep.subr.mxu0 %v7300
        %7395 = vmatpush1.msra.mxu0 %v7299
        %7396 = vmatprep.subr.mxu0 %v7302
        %7397 = vmatpush1.msra.mxu0 %v7301
        %7398 = vmatprep.subr.mxu0 %v7304
        %7399 = vmatpush1.msra.mxu0 %v7303
        %7400 = vmatprep.subr.mxu0 %v7306
        %7401 = vmatpush1.msra.mxu0 %v7305
        %7402 = vmatprep.subr.mxu0 %v7308
        %7403 = vmatpush1.msra.mxu0 %v7307
        %7404 = vmatprep.subr.mxu0 %v7310
        %7405 = vmatpush1.msra.mxu0 %v7309
        %7406 = vmatprep.subr.mxu0 %v7312
        %7407 = vmatpush1.msra.mxu0 %v7311
        %7408 = vmatprep.subr.mxu0 %v7314
        %7409 = vmatpush1.msra.mxu0 %v7313
        %7410 = vmatprep.subr.mxu0 %v7316
        %7411 = vmatpush1.msra.mxu0 %v7315
        %7412 = vmatprep.subr.mxu0 %v7318
        %7413 = vmatpush1.msra.mxu0 %v7317
        %7414 = vmatprep.subr.mxu0 %v7320
        %7415 = vmatpush1.msra.mxu0 %v7319
        %7416 = vmatprep.subr.mxu0 %v7322
        %7417 = vmatpush1.msra.mxu0 %v7321
        %7418 = vmatprep.subr.mxu0 %v7324
        %7419 = vmatpush1.msra.mxu0 %v7323
        %7420 = vmatprep.subr.mxu0 %v7326
        %7421 = vmatpush1.msra.mxu0 %v7325
        %7422 = vmatprep.subr.mxu0 %v7328
        %7423 = vmatpush1.msra.mxu0 %v7327
        %7424 = vmatprep.subr.mxu0 %v7380
        %7425 = vmatpush1.msra.mxu0 %v7377
        %7426 = vmatprep.subr.mxu0 0.0
        %7427 = vmatpush1.msra.mxu0 0.0
        %7428 = vmatprep.subr.mxu0 0.0
        %7429 = vmatpush1.msra.mxu0 0.0
        %7430 = vmatprep.subr.mxu0 0.0
        %7431 = vmatpush1.msra.mxu0 0.0
        %7432 = vmatprep.subr.mxu0 0.0
        %7433 = vmatpush1.msra.mxu0 0.0
        %7434 = vmatprep.subr.mxu0 0.0
        %7435 = vmatpush1.msra.mxu0 0.0
        %7436 = vmatprep.subr.mxu0 0.0
        %7437 = vmatpush1.msra.mxu0 0.0
        %7438 = vmatprep.subr.mxu0 0.0
        %7439 = vmatpush1.msra.mxu0 0.0
        %7440 = vmatprep.subr.mxu0 0.0
        %7441 = vmatpush1.msra.mxu0 0.0
        %7442 = vmatprep.subr.mxu0 0.0
        %7443 = vmatpush1.msra.mxu0 0.0
        %7444 = vmatprep.subr.mxu0 0.0
        %7445 = vmatpush1.msra.mxu0 0.0
        %7446 = vmatprep.mubr.f32.mxu0 %v7332
        %7447 = vmatmul.mubr.f32.gmra.mrb[0].mxu0 %v7198
        %v7448 = vpop.f32.mrb[0].mxu0
        %v7449 = vadd.f32 0.0, %v7448
        %v7450 = vpop.f32.mrb[0].mxu0
        %v7451 = vadd.f32 0.0, %v7450
        %7452 = vmatprep.mubr.f32.mxu0 %v7335
        %7453 = vmatmul.mubr.f32.gmra.mrb[0].mxu0 %v7204
        %v7454 = vpop.f32.mrb[0].mxu0
        %v7455 = vadd.f32 0.0, %v7454
        %v7456 = vpop.f32.mrb[0].mxu0
        %v7457 = vadd.f32 0.0, %v7456
        %7458 = vmatprep.mubr.f32.mxu0 %v7338
        %7459 = vmatmul.mubr.f32.gmra.mrb[0].mxu0 %v7210
        %v7460 = vpop.f32.mrb[0].mxu0
        %v7461 = vadd.f32 0.0, %v7460
        %v7462 = vpop.f32.mrb[0].mxu0
        %v7463 = vadd.f32 0.0, %v7462
        %7464 = vmatprep.mubr.f32.mxu0 %v7341
        %7465 = vmatmul.mubr.f32.gmra.mrb[0].mxu0 %v7216
        %v7466 = vpop.f32.mrb[0].mxu0
        %v7467 = vadd.f32 0.0, %v7466
        %v7468 = vpop.f32.mrb[0].mxu0
        %v7469 = vadd.f32 0.0, %v7468
        %7470 = vmatprep.mubr.f32.mxu0 %v7344
        %7471 = vmatmul.mubr.f32.gmra.mrb[0].mxu0 %v7222
        %v7472 = vpop.f32.mrb[0].mxu0
        %v7473 = vadd.f32 0.0, %v7472
        %v7474 = vpop.f32.mrb[0].mxu0
        %v7475 = vadd.f32 0.0, %v7474
        %7476 = vmatprep.mubr.f32.mxu0 %v7347
        %7477 = vmatmul.mubr.f32.gmra.mrb[0].mxu0 %v7228
        %v7478 = vpop.f32.mrb[0].mxu0
        %v7479 = vadd.f32 0.0, %v7478
        %v7480 = vpop.f32.mrb[0].mxu0
        %v7481 = vadd.f32 0.0, %v7480
        %7482 = vmatprep.mubr.f32.mxu0 %v7350
        %7483 = vmatmul.mubr.f32.gmra.mrb[0].mxu0 %v7234
        %v7484 = vpop.f32.mrb[0].mxu0
        %v7485 = vadd.f32 0.0, %v7484
        %v7486 = vpop.f32.mrb[0].mxu0
        %v7487 = vadd.f32 0.0, %v7486
        %7488 = vmatprep.mubr.f32.mxu0 %v7353
        %7489 = vmatmul.mubr.f32.gmra.mrb[0].mxu0 %v7240
        %v7490 = vpop.f32.mrb[0].mxu0
        %v7491 = vadd.f32 0.0, %v7490
        %v7492 = vpop.f32.mrb[0].mxu0
        %v7493 = vadd.f32 0.0, %v7492
        %7494 = vmatprep.mubr.f32.mxu0 %v7356
        %7495 = vmatmul.mubr.f32.gmra.mrb[0].mxu0 %v7246
        %v7496 = vpop.f32.mrb[0].mxu0
        %v7497 = vadd.f32 0.0, %v7496
        %v7498 = vpop.f32.mrb[0].mxu0
        %v7499 = vadd.f32 0.0, %v7498
        %7500 = vmatprep.mubr.f32.mxu0 %v7359
        %7501 = vmatmul.mubr.f32.gmra.mrb[0].mxu0 %v7252
        %v7502 = vpop.f32.mrb[0].mxu0
        %v7503 = vadd.f32 0.0, %v7502
        %v7504 = vpop.f32.mrb[0].mxu0
        %v7505 = vadd.f32 0.0, %v7504
        %7506 = vmatprep.mubr.f32.mxu0 %v7362
        %7507 = vmatmul.mubr.f32.gmra.mrb[0].mxu0 %v7258
        %v7508 = vpop.f32.mrb[0].mxu0
        %v7509 = vadd.f32 0.0, %v7508
        %v7510 = vpop.f32.mrb[0].mxu0
        %v7511 = vadd.f32 0.0, %v7510
        %7512 = vmatprep.mubr.f32.mxu0 %v7365
        %7513 = vmatmul.mubr.f32.gmra.mrb[0].mxu0 %v7264
        %v7514 = vpop.f32.mrb[0].mxu0
        %v7515 = vadd.f32 0.0, %v7514
        %v7516 = vpop.f32.mrb[0].mxu0
        %v7517 = vadd.f32 0.0, %v7516
        %7518 = vmatprep.mubr.f32.mxu0 %v7368
        %7519 = vmatmul.mubr.f32.gmra.mrb[0].mxu0 %v7270
        %v7520 = vpop.f32.mrb[0].mxu0
        %v7521 = vadd.f32 0.0, %v7520
        %v7522 = vpop.f32.mrb[0].mxu0
        %v7523 = vadd.f32 0.0, %v7522
        %7524 = vmatprep.mubr.f32.mxu0 %v7371
        %7525 = vmatmul.mubr.f32.gmra.mrb[0].mxu0 %v7276
        %v7526 = vpop.f32.mrb[0].mxu0
        %v7527 = vadd.f32 0.0, %v7526
        %v7528 = vpop.f32.mrb[0].mxu0
        %v7529 = vadd.f32 0.0, %v7528
        %7530 = vmatprep.mubr.f32.mxu0 %v7374
        %7531 = vmatmul.mubr.f32.gmra.mrb[0].mxu0 %v7282
        %v7532 = vpop.f32.mrb[0].mxu0
        %v7533 = vadd.f32 0.0, %v7532
        %v7534 = vpop.f32.mrb[0].mxu0
        %v7535 = vadd.f32 0.0, %v7534
        %7536 = vdwg.mxu0
        %v7537 = vadd.f32 %v7025, %v7449
        %v7538 = vadd.f32 %v7026, %v7451
        %v7539 = vadd.f32 %v7027, %v7455
        %v7540 = vadd.f32 %v7028, %v7457
        %v7541 = vadd.f32 %v7029, %v7461
        %v7542 = vadd.f32 %v7030, %v7463
        %v7543 = vadd.f32 %v7031, %v7467
        %v7544 = vadd.f32 %v7032, %v7469
        %v7545 = vadd.f32 %v7033, %v7473
        %v7546 = vadd.f32 %v7034, %v7475
        %v7547 = vadd.f32 %v7035, %v7479
        %v7548 = vadd.f32 %v7036, %v7481
        %v7549 = vadd.f32 %v7037, %v7485
        %v7550 = vadd.f32 %v7038, %v7487
        %v7551 = vadd.f32 %v7039, %v7491
        %v7552 = vadd.f32 %v7040, %v7493
        %v7553 = vadd.f32 %v7041, %v7497
        %v7554 = vadd.f32 %v7042, %v7499
        %v7555 = vadd.f32 %v7043, %v7503
        %v7556 = vadd.f32 %v7044, %v7505
        %v7557 = vadd.f32 %v7045, %v7509
        %v7558 = vadd.f32 %v7046, %v7511
        %v7559 = vadd.f32 %v7047, %v7515
        %v7560 = vadd.f32 %v7048, %v7517
        %v7561 = vadd.f32 %v7049, %v7521
        %v7562 = vadd.f32 %v7050, %v7523
        %v7563 = vadd.f32 %v7051, %v7527
        %v7564 = vadd.f32 %v7052, %v7529
        %v7565 = vadd.f32 %v7053, %v7533
        %v7566 = vadd.f32 %v7054, %v7535
        %v7567 = vld [vmem:[%s6] sm:$0x3]
        %v7569 = vlaneseq
        %v7570 = vshrl.u32 %v7569, 7
        %v7571 = vsub.s32 0, %v7570
        %v7572 = vrot.slane %v7567, %v7571
        %v7573 = vlaneseq
        %v7574 = vshrl.u32 %v7573, 7
        %v7575 = vsub.s32 1, %v7574
        %v7576 = vrot.slane %v7567, %v7575
        %v7579 = vadd.f32 %v7537, %v7572
        %v7580 = vadd.f32 %v7538, %v7576
        %v7581 = vadd.f32 %v7539, %v7572
        %v7582 = vadd.f32 %v7540, %v7576
        %v7583 = vadd.f32 %v7541, %v7572
        %v7584 = vadd.f32 %v7542, %v7576
        %v7585 = vadd.f32 %v7543, %v7572
        %v7586 = vadd.f32 %v7544, %v7576
        %v7587 = vadd.f32 %v7545, %v7572
        %v7588 = vadd.f32 %v7546, %v7576
        %v7589 = vadd.f32 %v7547, %v7572
        %v7590 = vadd.f32 %v7548, %v7576
        %v7591 = vadd.f32 %v7549, %v7572
        %v7592 = vadd.f32 %v7550, %v7576
        %v7593 = vadd.f32 %v7551, %v7572
        %v7594 = vadd.f32 %v7552, %v7576
        %v7595 = vadd.f32 %v7553, %v7572
        %v7596 = vadd.f32 %v7554, %v7576
        %v7597 = vadd.f32 %v7555, %v7572
        %v7598 = vadd.f32 %v7556, %v7576
        %v7599 = vadd.f32 %v7557, %v7572
        %v7600 = vadd.f32 %v7558, %v7576
        %v7601 = vadd.f32 %v7559, %v7572
        %v7602 = vadd.f32 %v7560, %v7576
        %v7603 = vadd.f32 %v7561, %v7572
        %v7604 = vadd.f32 %v7562, %v7576
        %v7605 = vadd.f32 %v7563, %v7572
        %v7606 = vadd.f32 %v7564, %v7576
        %v7607 = vadd.f32 %v7565, %v7572
        %v7608 = vadd.f32 %v7566, %v7576
        %v7609 = vmax.f32 %v7579, 0.0
        %v7610 = vmax.f32 %v7580, 0.0
        %v7611 = vmax.f32 %v7581, 0.0
        %v7612 = vmax.f32 %v7582, 0.0
        %v7613 = vmax.f32 %v7583, 0.0
        %v7614 = vmax.f32 %v7584, 0.0
        %v7615 = vmax.f32 %v7585, 0.0
        %v7616 = vmax.f32 %v7586, 0.0
        %v7617 = vmax.f32 %v7587, 0.0
        %v7618 = vmax.f32 %v7588, 0.0
        %v7619 = vmax.f32 %v7589, 0.0
        %v7620 = vmax.f32 %v7590, 0.0
        %v7621 = vmax.f32 %v7591, 0.0
        %v7622 = vmax.f32 %v7592, 0.0
        %v7623 = vmax.f32 %v7593, 0.0
        %v7624 = vmax.f32 %v7594, 0.0
        %v7625 = vmax.f32 %v7595, 0.0
        %v7626 = vmax.f32 %v7596, 0.0
        %v7627 = vmax.f32 %v7597, 0.0
        %v7628 = vmax.f32 %v7598, 0.0
        %v7629 = vmax.f32 %v7599, 0.0
        %v7630 = vmax.f32 %v7600, 0.0
        %v7631 = vmax.f32 %v7601, 0.0
        %v7632 = vmax.f32 %v7602, 0.0
        %v7633 = vmax.f32 %v7603, 0.0
        %v7634 = vmax.f32 %v7604, 0.0
        %v7635 = vmax.f32 %v7605, 0.0
        %v7636 = vmax.f32 %v7606, 0.0
        %v7637 = vmax.f32 %v7607, 0.0
        %v7638 = vmax.f32 %v7608, 0.0
        %v7639 = vld [vmem:[%s7] sm:$0xff]
        %v7640 = vld [vmem:[%s7 + $0x8] sm:$0xff]
        %v7641 = vld [vmem:[%s7 + $0x10] sm:$0xff]
        %v7642 = vld [vmem:[%s7 + $0x18] sm:$0xff]
        %v7643 = vld [vmem:[%s7 + $0x20] sm:$0xff]
        %v7644 = vld [vmem:[%s7 + $0x28] sm:$0xff]
        %v7645 = vld [vmem:[%s7 + $0x30] sm:$0xff]
        %vm7646 = vcmask 982016
        %v7648 = vsel %vm7646, %v7639, 0
        %v7651 = vsel %vm7646, %v7640, 0
        %v7654 = vsel %vm7646, %v7641, 0
        %v7657 = vsel %vm7646, %v7642, 0
        %v7660 = vsel %vm7646, %v7643, 0
        %v7663 = vsel %vm7646, %v7644, 0
        %v7666 = vsel %vm7646, %v7645, 0
        %7668 = vmatprep.subr.mxu0 %v7610
        %7669 = vmatpush1.msra.mxu0 %v7609
        %7670 = vmatprep.subr.mxu0 %v7612
        %7671 = vmatpush1.msra.mxu0 %v7611
        %7672 = vmatprep.subr.mxu0 %v7614
        %7673 = vmatpush1.msra.mxu0 %v7613
        %7674 = vmatprep.subr.mxu0 %v7616
        %7675 = vmatpush1.msra.mxu0 %v7615
        %7676 = vmatprep.subr.mxu0 %v7618
        %7677 = vmatpush1.msra.mxu0 %v7617
        %7678 = vmatprep.subr.mxu0 %v7620
        %7679 = vmatpush1.msra.mxu0 %v7619
        %7680 = vmatprep.subr.mxu0 %v7622
        %7681 = vmatpush1.msra.mxu0 %v7621
        %7682 = vmatprep.subr.mxu0 %v7624
        %7683 = vmatpush1.msra.mxu0 %v7623
        %7684 = vmatprep.subr.mxu0 %v7626
        %7685 = vmatpush1.msra.mxu0 %v7625
        %7686 = vmatprep.subr.mxu0 %v7628
        %7687 = vmatpush1.msra.mxu0 %v7627
        %7688 = vmatprep.subr.mxu0 %v7630
        %7689 = vmatpush1.msra.mxu0 %v7629
        %7690 = vmatprep.subr.mxu0 %v7632
        %7691 = vmatpush1.msra.mxu0 %v7631
        %7692 = vmatprep.subr.mxu0 %v7634
        %7693 = vmatpush1.msra.mxu0 %v7633
        %7694 = vmatprep.subr.mxu0 %v7636
        %7695 = vmatpush1.msra.mxu0 %v7635
        %7696 = vmatprep.subr.mxu0 %v7638
        %7697 = vmatpush1.msra.mxu0 %v7637
        %7698 = vmatprep.subr.mxu0 0.0
        %7699 = vmatpush1.msra.mxu0 0.0
        %7700 = vmatprep.subr.mxu0 0.0
        %7701 = vmatpush1.msra.mxu0 0.0
        %7702 = vmatprep.subr.mxu0 0.0
        %7703 = vmatpush1.msra.mxu0 0.0
        %7704 = vmatprep.subr.mxu0 0.0
        %7705 = vmatpush1.msra.mxu0 0.0
        %7706 = vmatprep.subr.mxu0 0.0
        %7707 = vmatpush1.msra.mxu0 0.0
        %7708 = vmatprep.subr.mxu0 0.0
        %7709 = vmatpush1.msra.mxu0 0.0
        %7710 = vmatprep.subr.mxu0 0.0
        %7711 = vmatpush1.msra.mxu0 0.0
        %7712 = vmatprep.subr.mxu0 0.0
        %7713 = vmatpush1.msra.mxu0 0.0
        %7714 = vmatprep.subr.mxu0 0.0
        %7715 = vmatpush1.msra.mxu0 0.0
        %7716 = vmatprep.subr.mxu0 0.0
        %7717 = vmatpush1.msra.mxu0 0.0
        %7718 = vmatprep.subr.mxu0 0.0
        %7719 = vmatpush1.msra.mxu0 0.0
        %7720 = vmatprep.subr.mxu0 0.0
        %7721 = vmatpush1.msra.mxu0 0.0
        %7722 = vmatprep.subr.mxu0 0.0
        %7723 = vmatpush1.msra.mxu0 0.0
        %7724 = vmatprep.subr.mxu0 0.0
        %7725 = vmatpush1.msra.mxu0 0.0
        %7726 = vmatprep.subr.mxu0 0.0
        %7727 = vmatpush1.msra.mxu0 0.0
        %7728 = vmatprep.subr.mxu0 0.0
        %7729 = vmatpush1.msra.mxu0 0.0
        %7730 = vmatprep.subr.mxu0 0.0
        %7731 = vmatpush1.msra.mxu0 0.0
        %7732 = vmatprep.mubr.f32.mxu0 0.0
        %7733 = vmatmul.mubr.f32.gmra.mrb[0].mxu0 %v7648
        %v7734 = vpop.f32.mrb[0].mxu0
        %v7735 = vadd.f32 0.0, %v7734
        %v7736 = vpop.f32.mrb[0].mxu0
        %v7737 = vadd.f32 0.0, %v7736
        %7738 = vmatprep.mubr.f32.mxu0 0.0
        %7739 = vmatmul.mubr.f32.gmra.mrb[0].mxu0 %v7651
        %v7740 = vpop.f32.mrb[0].mxu0
        %v7741 = vadd.f32 0.0, %v7740
        %v7742 = vpop.f32.mrb[0].mxu0
        %v7743 = vadd.f32 0.0, %v7742
        %7744 = vmatprep.mubr.f32.mxu0 0.0
        %7745 = vmatmul.mubr.f32.gmra.mrb[0].mxu0 %v7654
        %v7746 = vpop.f32.mrb[0].mxu0
        %v7747 = vadd.f32 0.0, %v7746
        %v7748 = vpop.f32.mrb[0].mxu0
        %v7749 = vadd.f32 0.0, %v7748
        %7750 = vmatprep.mubr.f32.mxu0 0.0
        %7751 = vmatmul.mubr.f32.gmra.mrb[0].mxu0 %v7657
        %v7752 = vpop.f32.mrb[0].mxu0
        %v7753 = vadd.f32 0.0, %v7752
        %v7754 = vpop.f32.mrb[0].mxu0
        %v7755 = vadd.f32 0.0, %v7754
        %7756 = vmatprep.mubr.f32.mxu0 0.0
        %7757 = vmatmul.mubr.f32.gmra.mrb[0].mxu0 %v7660
        %v7758 = vpop.f32.mrb[0].mxu0
        %v7759 = vadd.f32 0.0, %v7758
        %v7760 = vpop.f32.mrb[0].mxu0
        %v7761 = vadd.f32 0.0, %v7760
        %7762 = vmatprep.mubr.f32.mxu0 0.0
        %7763 = vmatmul.mubr.f32.gmra.mrb[0].mxu0 %v7663
        %v7764 = vpop.f32.mrb[0].mxu0
        %v7765 = vadd.f32 0.0, %v7764
        %v7766 = vpop.f32.mrb[0].mxu0
        %v7767 = vadd.f32 0.0, %v7766
        %7768 = vmatprep.mubr.f32.mxu0 0.0
        %7769 = vmatmul.mubr.f32.gmra.mrb[0].mxu0 %v7666
        %v7770 = vpop.f32.mrb[0].mxu0
        %v7771 = vadd.f32 0.0, %v7770
        %v7772 = vpop.f32.mrb[0].mxu0
        %v7773 = vadd.f32 0.0, %v7772
        %7774 = vdwg.mxu0
        %v7775 = vld [vmem:[%s8] sm:$0xff]
        %v7776 = vld [vmem:[%s8 + $0x8] sm:$0xff]
        %v7777 = vld [vmem:[%s8 + $0x10] sm:$0xff]
        %v7778 = vld [vmem:[%s8 + $0x18] sm:$0xff]
        %v7779 = vld [vmem:[%s8 + $0x20] sm:$0xff]
        %v7780 = vld [vmem:[%s8 + $0x28] sm:$0xff]
        %v7781 = vld [vmem:[%s8 + $0x30] sm:$0xff]
        %v7782 = vld [vmem:[%s8 + $0x38] sm:$0xff]
        %v7783 = vld [vmem:[%s8 + $0x40] sm:$0xff]
        %v7784 = vld [vmem:[%s8 + $0x48] sm:$0xff]
        %v7785 = vld [vmem:[%s8 + $0x50] sm:$0xff]
        %v7786 = vld [vmem:[%s8 + $0x58] sm:$0xff]
        %v7787 = vld [vmem:[%s8 + $0x60] sm:$0xff]
        %v7788 = vld [vmem:[%s8 + $0x68] sm:$0xff]
        %v7789 = vld [vmem:[%s8 + $0x70] sm:$0xff]
        %v7790 = vld [vmem:[%s8 + $0x78] sm:$0xff]
        %v7791 = vld [vmem:[%s8 + $0x80] sm:$0xff]
        %v7792 = vld [vmem:[%s8 + $0x88] sm:$0xff]
        %v7793 = vld [vmem:[%s8 + $0x90] sm:$0xff]
        %v7794 = vld [vmem:[%s8 + $0x98] sm:$0xff]
        %v7795 = vld [vmem:[%s8 + $0xa0] sm:$0xff]
        %v7796 = vld [vmem:[%s8 + $0xa8] sm:$0xff]
        %v7797 = vld [vmem:[%s8 + $0xb0] sm:$0xff]
        %v7798 = vld [vmem:[%s8 + $0xb8] sm:$0xff]
        %v7799 = vld [vmem:[%s8 + $0xc0] sm:$0xff]
        %v7800 = vld [vmem:[%s8 + $0xc8] sm:$0xff]
        %v7801 = vld [vmem:[%s8 + $0xd0] sm:$0xff]
        %v7802 = vld [vmem:[%s8 + $0xd8] sm:$0xff]
        %v7803 = vld [vmem:[%s8 + $0xe0] sm:$0xff]
        %v7804 = vld [vmem:[%s8 + $0xe8] sm:$0xff]
        %v7805 = vld [vmem:[%s8 + $0xf0] sm:$0xff]
        %v7806 = vld [vmem:[%s8 + $0xf8] sm:$0xff]
        %v7807 = vld [vmem:[%s8 + $0x100] sm:$0xff]
        %v7808 = vld [vmem:[%s8 + $0x108] sm:$0xff]
        %v7809 = vld [vmem:[%s8 + $0x110] sm:$0xff]
        %v7810 = vld [vmem:[%s8 + $0x118] sm:$0xff]
        %v7811 = vld [vmem:[%s8 + $0x120] sm:$0xff]
        %v7812 = vld [vmem:[%s8 + $0x128] sm:$0xff]
        %v7813 = vld [vmem:[%s8 + $0x130] sm:$0xff]
        %v7814 = vld [vmem:[%s8 + $0x138] sm:$0xff]
        %v7815 = vld [vmem:[%s8 + $0x140] sm:$0xff]
        %v7816 = vld [vmem:[%s8 + $0x148] sm:$0xff]
        %v7817 = vld [vmem:[%s8 + $0x150] sm:$0xff]
        %v7818 = vld [vmem:[%s8 + $0x158] sm:$0xff]
        %v7819 = vld [vmem:[%s8 + $0x160] sm:$0xf]
        %v7820 = vld [vmem:[%s8 + $0x168] sm:$0xf]
        %s7821 = scalar_lea.vmem %s7, 56
        %v7822 = vld [vmem:[%s7821] sm:$0xff]
        %v7823 = vld [vmem:[%s7821 + $0x8] sm:$0xff]
        %v7824 = vld [vmem:[%s7821 + $0x10] sm:$0xff]
        %v7825 = vld [vmem:[%s7821 + $0x18] sm:$0xff]
        %v7826 = vld [vmem:[%s7821 + $0x20] sm:$0xff]
        %v7827 = vld [vmem:[%s7821 + $0x28] sm:$0xff]
        %v7828 = vld [vmem:[%s7821 + $0x30] sm:$0xff]
        %v7830 = vsel %vm7646, %v7822, 0
        %v7833 = vsel %vm7646, %v7823, 0
        %v7836 = vsel %vm7646, %v7824, 0
        %v7839 = vsel %vm7646, %v7825, 0
        %v7842 = vsel %vm7646, %v7826, 0
        %v7845 = vsel %vm7646, %v7827, 0
        %v7848 = vsel %vm7646, %v7828, 0
        %7850 = vmatprep.subr.mxu0 %v7610
        %7851 = vmatpush1.msra.mxu0 %v7609
        %7852 = vmatprep.subr.mxu0 %v7612
        %7853 = vmatpush1.msra.mxu0 %v7611
        %7854 = vmatprep.subr.mxu0 %v7614
        %7855 = vmatpush1.msra.mxu0 %v7613
        %7856 = vmatprep.subr.mxu0 %v7616
        %7857 = vmatpush1.msra.mxu0 %v7615
        %7858 = vmatprep.subr.mxu0 %v7618
        %7859 = vmatpush1.msra.mxu0 %v7617
        %7860 = vmatprep.subr.mxu0 %v7620
        %7861 = vmatpush1.msra.mxu0 %v7619
        %7862 = vmatprep.subr.mxu0 %v7622
        %7863 = vmatpush1.msra.mxu0 %v7621
        %7864 = vmatprep.subr.mxu0 %v7624
        %7865 = vmatpush1.msra.mxu0 %v7623
        %7866 = vmatprep.subr.mxu0 %v7626
        %7867 = vmatpush1.msra.mxu0 %v7625
        %7868 = vmatprep.subr.mxu0 %v7628
        %7869 = vmatpush1.msra.mxu0 %v7627
        %7870 = vmatprep.subr.mxu0 %v7630
        %7871 = vmatpush1.msra.mxu0 %v7629
        %7872 = vmatprep.subr.mxu0 %v7632
        %7873 = vmatpush1.msra.mxu0 %v7631
        %7874 = vmatprep.subr.mxu0 %v7634
        %7875 = vmatpush1.msra.mxu0 %v7633
        %7876 = vmatprep.subr.mxu0 %v7636
        %7877 = vmatpush1.msra.mxu0 %v7635
        %7878 = vmatprep.subr.mxu0 %v7638
        %7879 = vmatpush1.msra.mxu0 %v7637
        %7880 = vmatprep.subr.mxu0 0.0
        %7881 = vmatpush1.msra.mxu0 0.0
        %7882 = vmatprep.subr.mxu0 0.0
        %7883 = vmatpush1.msra.mxu0 0.0
        %7884 = vmatprep.subr.mxu0 0.0
        %7885 = vmatpush1.msra.mxu0 0.0
        %7886 = vmatprep.subr.mxu0 0.0
        %7887 = vmatpush1.msra.mxu0 0.0
        %7888 = vmatprep.subr.mxu0 0.0
        %7889 = vmatpush1.msra.mxu0 0.0
        %7890 = vmatprep.subr.mxu0 0.0
        %7891 = vmatpush1.msra.mxu0 0.0
        %7892 = vmatprep.subr.mxu0 0.0
        %7893 = vmatpush1.msra.mxu0 0.0
        %7894 = vmatprep.subr.mxu0 0.0
        %7895 = vmatpush1.msra.mxu0 0.0
        %7896 = vmatprep.subr.mxu0 0.0
        %7897 = vmatpush1.msra.mxu0 0.0
        %7898 = vmatprep.subr.mxu0 0.0
        %7899 = vmatpush1.msra.mxu0 0.0
        %7900 = vmatprep.subr.mxu0 0.0
        %7901 = vmatpush1.msra.mxu0 0.0
        %7902 = vmatprep.subr.mxu0 0.0
        %7903 = vmatpush1.msra.mxu0 0.0
        %7904 = vmatprep.subr.mxu0 0.0
        %7905 = vmatpush1.msra.mxu0 0.0
        %7906 = vmatprep.subr.mxu0 0.0
        %7907 = vmatpush1.msra.mxu0 0.0
        %7908 = vmatprep.subr.mxu0 0.0
        %7909 = vmatpush1.msra.mxu0 0.0
        %7910 = vmatprep.subr.mxu0 0.0
        %7911 = vmatpush1.msra.mxu0 0.0
        %7912 = vmatprep.subr.mxu0 0.0
        %7913 = vmatpush1.msra.mxu0 0.0
        %7914 = vmatprep.mubr.f32.mxu0 0.0
        %7915 = vmatmul.mubr.f32.gmra.mrb[0].mxu0 %v7830
        %v7916 = vpop.f32.mrb[0].mxu0
        %v7917 = vadd.f32 0.0, %v7916
        %v7918 = vpop.f32.mrb[0].mxu0
        %v7919 = vadd.f32 0.0, %v7918
        %7920 = vmatprep.mubr.f32.mxu0 0.0
        %7921 = vmatmul.mubr.f32.gmra.mrb[0].mxu0 %v7833
        %v7922 = vpop.f32.mrb[0].mxu0
        %v7923 = vadd.f32 0.0, %v7922
        %v7924 = vpop.f32.mrb[0].mxu0
        %v7925 = vadd.f32 0.0, %v7924
        %7926 = vmatprep.mubr.f32.mxu0 0.0
        %7927 = vmatmul.mubr.f32.gmra.mrb[0].mxu0 %v7836
        %v7928 = vpop.f32.mrb[0].mxu0
        %v7929 = vadd.f32 0.0, %v7928
        %v7930 = vpop.f32.mrb[0].mxu0
        %v7931 = vadd.f32 0.0, %v7930
        %7932 = vmatprep.mubr.f32.mxu0 0.0
        %7933 = vmatmul.mubr.f32.gmra.mrb[0].mxu0 %v7839
        %v7934 = vpop.f32.mrb[0].mxu0
        %v7935 = vadd.f32 0.0, %v7934
        %v7936 = vpop.f32.mrb[0].mxu0
        %v7937 = vadd.f32 0.0, %v7936
        %7938 = vmatprep.mubr.f32.mxu0 0.0
        %7939 = vmatmul.mubr.f32.gmra.mrb[0].mxu0 %v7842
        %v7940 = vpop.f32.mrb[0].mxu0
        %v7941 = vadd.f32 0.0, %v7940
        %v7942 = vpop.f32.mrb[0].mxu0
        %v7943 = vadd.f32 0.0, %v7942
        %7944 = vmatprep.mubr.f32.mxu0 0.0
        %7945 = vmatmul.mubr.f32.gmra.mrb[0].mxu0 %v7845
        %v7946 = vpop.f32.mrb[0].mxu0
        %v7947 = vadd.f32 0.0, %v7946
        %v7948 = vpop.f32.mrb[0].mxu0
        %v7949 = vadd.f32 0.0, %v7948
        %7950 = vmatprep.mubr.f32.mxu0 0.0
        %7951 = vmatmul.mubr.f32.gmra.mrb[0].mxu0 %v7848
        %v7952 = vpop.f32.mrb[0].mxu0
        %v7953 = vadd.f32 0.0, %v7952
        %v7954 = vpop.f32.mrb[0].mxu0
        %v7955 = vadd.f32 0.0, %v7954
        %7956 = vdwg.mxu0
        %s7957 = scalar_lea.vmem %s8, 368
        %v7958 = vld [vmem:[%s7957] sm:$0xff]
        %v7959 = vld [vmem:[%s7957 + $0x8] sm:$0xff]
        %v7960 = vld [vmem:[%s7957 + $0x10] sm:$0xff]
        %v7961 = vld [vmem:[%s7957 + $0x18] sm:$0xff]
        %v7962 = vld [vmem:[%s7957 + $0x20] sm:$0xff]
        %v7963 = vld [vmem:[%s7957 + $0x28] sm:$0xff]
        %v7964 = vld [vmem:[%s7957 + $0x30] sm:$0xff]
        %v7965 = vld [vmem:[%s7957 + $0x38] sm:$0xff]
        %v7966 = vld [vmem:[%s7957 + $0x40] sm:$0xff]
        %v7967 = vld [vmem:[%s7957 + $0x48] sm:$0xff]
        %v7968 = vld [vmem:[%s7957 + $0x50] sm:$0xff]
        %v7969 = vld [vmem:[%s7957 + $0x58] sm:$0xff]
        %v7970 = vld [vmem:[%s7957 + $0x60] sm:$0xff]
        %v7971 = vld [vmem:[%s7957 + $0x68] sm:$0xff]
        %v7972 = vld [vmem:[%s7957 + $0x70] sm:$0xff]
        %v7973 = vld [vmem:[%s7957 + $0x78] sm:$0xff]
        %v7974 = vld [vmem:[%s7957 + $0x80] sm:$0xff]
        %v7975 = vld [vmem:[%s7957 + $0x88] sm:$0xff]
        %v7976 = vld [vmem:[%s7957 + $0x90] sm:$0xff]
        %v7977 = vld [vmem:[%s7957 + $0x98] sm:$0xff]
        %v7978 = vld [vmem:[%s7957 + $0xa0] sm:$0xff]
        %v7979 = vld [vmem:[%s7957 + $0xa8] sm:$0xff]
        %v7980 = vld [vmem:[%s7957 + $0xb0] sm:$0xff]
        %v7981 = vld [vmem:[%s7957 + $0xb8] sm:$0xff]
        %v7982 = vld [vmem:[%s7957 + $0xc0] sm:$0xff]
        %v7983 = vld [vmem:[%s7957 + $0xc8] sm:$0xff]
        %v7984 = vld [vmem:[%s7957 + $0xd0] sm:$0xff]
        %v7985 = vld [vmem:[%s7957 + $0xd8] sm:$0xff]
        %v7986 = vld [vmem:[%s7957 + $0xe0] sm:$0xff]
        %v7987 = vld [vmem:[%s7957 + $0xe8] sm:$0xff]
        %v7988 = vld [vmem:[%s7957 + $0xf0] sm:$0xff]
        %v7989 = vld [vmem:[%s7957 + $0xf8] sm:$0xff]
        %v7990 = vld [vmem:[%s7957 + $0x100] sm:$0xff]
        %v7991 = vld [vmem:[%s7957 + $0x108] sm:$0xff]
        %v7992 = vld [vmem:[%s7957 + $0x110] sm:$0xff]
        %v7993 = vld [vmem:[%s7957 + $0x118] sm:$0xff]
        %v7994 = vld [vmem:[%s7957 + $0x120] sm:$0xff]
        %v7995 = vld [vmem:[%s7957 + $0x128] sm:$0xff]
        %v7996 = vld [vmem:[%s7957 + $0x130] sm:$0xff]
        %v7997 = vld [vmem:[%s7957 + $0x138] sm:$0xff]
        %v7998 = vld [vmem:[%s7957 + $0x140] sm:$0xff]
        %v7999 = vld [vmem:[%s7957 + $0x148] sm:$0xff]
        %v8000 = vld [vmem:[%s7957 + $0x150] sm:$0xff]
        %v8001 = vld [vmem:[%s7957 + $0x158] sm:$0xff]
        %v8002 = vld [vmem:[%s7957 + $0x160] sm:$0xf]
        %v8003 = vld [vmem:[%s7957 + $0x168] sm:$0xf]
        %vm8004 = vcmask 424960
        %v8006 = vsel %vm8004, %v7919, 0
        %v8009 = vsel %vm8004, %v7925, 0
        %v8012 = vsel %vm8004, %v7931, 0
        %v8015 = vsel %vm8004, %v7937, 0
        %v8018 = vsel %vm8004, %v7943, 0
        %v8021 = vsel %vm8004, %v7949, 0
        %v8024 = vsel %vm8004, %v7955, 0
        %v8027 = vsel %vm1340, %v8002, 0
        %v8030 = vsel %vm1340, %v8003, 0
        %8032 = vmatprep.subr.mxu0 %v7959
        %8033 = vmatpush1.msra.mxu0 %v7958
        %8034 = vmatprep.subr.mxu0 %v7961
        %8035 = vmatpush1.msra.mxu0 %v7960
        %8036 = vmatprep.subr.mxu0 %v7963
        %8037 = vmatpush1.msra.mxu0 %v7962
        %8038 = vmatprep.subr.mxu0 %v7965
        %8039 = vmatpush1.msra.mxu0 %v7964
        %8040 = vmatprep.subr.mxu0 %v7967
        %8041 = vmatpush1.msra.mxu0 %v7966
        %8042 = vmatprep.subr.mxu0 %v7969
        %8043 = vmatpush1.msra.mxu0 %v7968
        %8044 = vmatprep.subr.mxu0 %v7971
        %8045 = vmatpush1.msra.mxu0 %v7970
        %8046 = vmatprep.subr.mxu0 %v7973
        %8047 = vmatpush1.msra.mxu0 %v7972
        %8048 = vmatprep.subr.mxu0 %v7975
        %8049 = vmatpush1.msra.mxu0 %v7974
        %8050 = vmatprep.subr.mxu0 %v7977
        %8051 = vmatpush1.msra.mxu0 %v7976
        %8052 = vmatprep.subr.mxu0 %v7979
        %8053 = vmatpush1.msra.mxu0 %v7978
        %8054 = vmatprep.subr.mxu0 %v7981
        %8055 = vmatpush1.msra.mxu0 %v7980
        %8056 = vmatprep.subr.mxu0 %v7983
        %8057 = vmatpush1.msra.mxu0 %v7982
        %8058 = vmatprep.subr.mxu0 %v7985
        %8059 = vmatpush1.msra.mxu0 %v7984
        %8060 = vmatprep.subr.mxu0 %v7987
        %8061 = vmatpush1.msra.mxu0 %v7986
        %8062 = vmatprep.subr.mxu0 %v7989
        %8063 = vmatpush1.msra.mxu0 %v7988
        %8064 = vmatprep.subr.mxu0 %v7991
        %8065 = vmatpush1.msra.mxu0 %v7990
        %8066 = vmatprep.subr.mxu0 %v7993
        %8067 = vmatpush1.msra.mxu0 %v7992
        %8068 = vmatprep.subr.mxu0 %v7995
        %8069 = vmatpush1.msra.mxu0 %v7994
        %8070 = vmatprep.subr.mxu0 %v7997
        %8071 = vmatpush1.msra.mxu0 %v7996
        %8072 = vmatprep.subr.mxu0 %v7999
        %8073 = vmatpush1.msra.mxu0 %v7998
        %8074 = vmatprep.subr.mxu0 %v8001
        %8075 = vmatpush1.msra.mxu0 %v8000
        %8076 = vmatprep.subr.mxu0 %v8030
        %8077 = vmatpush1.msra.mxu0 %v8027
        %8078 = vmatprep.subr.mxu0 0.0
        %8079 = vmatpush1.msra.mxu0 0.0
        %8080 = vmatprep.subr.mxu0 0.0
        %8081 = vmatpush1.msra.mxu0 0.0
        %8082 = vmatprep.subr.mxu0 0.0
        %8083 = vmatpush1.msra.mxu0 0.0
        %8084 = vmatprep.subr.mxu0 0.0
        %8085 = vmatpush1.msra.mxu0 0.0
        %8086 = vmatprep.subr.mxu0 0.0
        %8087 = vmatpush1.msra.mxu0 0.0
        %8088 = vmatprep.subr.mxu0 0.0
        %8089 = vmatpush1.msra.mxu0 0.0
        %8090 = vmatprep.subr.mxu0 0.0
        %8091 = vmatpush1.msra.mxu0 0.0
        %8092 = vmatprep.subr.mxu0 0.0
        %8093 = vmatpush1.msra.mxu0 0.0
        %8094 = vmatprep.subr.mxu0 0.0
        %8095 = vmatpush1.msra.mxu0 0.0
        %8096 = vmatprep.mubr.f32.mxu0 %v8006
        %8097 = vmatmul.mubr.f32.gmra.mrb[0].mxu0 %v7917
        %v8098 = vpop.f32.mrb[0].mxu0
        %v8099 = vadd.f32 0.0, %v8098
        %v8100 = vpop.f32.mrb[0].mxu0
        %v8101 = vadd.f32 0.0, %v8100
        %8102 = vmatprep.mubr.f32.mxu0 %v8009
        %8103 = vmatmul.mubr.f32.gmra.mrb[0].mxu0 %v7923
        %v8104 = vpop.f32.mrb[0].mxu0
        %v8105 = vadd.f32 0.0, %v8104
        %v8106 = vpop.f32.mrb[0].mxu0
        %v8107 = vadd.f32 0.0, %v8106
        %8108 = vmatprep.mubr.f32.mxu0 %v8012
        %8109 = vmatmul.mubr.f32.gmra.mrb[0].mxu0 %v7929
        %v8110 = vpop.f32.mrb[0].mxu0
        %v8111 = vadd.f32 0.0, %v8110
        %v8112 = vpop.f32.mrb[0].mxu0
        %v8113 = vadd.f32 0.0, %v8112
        %8114 = vmatprep.mubr.f32.mxu0 %v8015
        %8115 = vmatmul.mubr.f32.gmra.mrb[0].mxu0 %v7935
        %v8116 = vpop.f32.mrb[0].mxu0
        %v8117 = vadd.f32 0.0, %v8116
        %v8118 = vpop.f32.mrb[0].mxu0
        %v8119 = vadd.f32 0.0, %v8118
        %8120 = vmatprep.mubr.f32.mxu0 %v8018
        %8121 = vmatmul.mubr.f32.gmra.mrb[0].mxu0 %v7941
        %v8122 = vpop.f32.mrb[0].mxu0
        %v8123 = vadd.f32 0.0, %v8122
        %v8124 = vpop.f32.mrb[0].mxu0
        %v8125 = vadd.f32 0.0, %v8124
        %8126 = vmatprep.mubr.f32.mxu0 %v8021
        %8127 = vmatmul.mubr.f32.gmra.mrb[0].mxu0 %v7947
        %v8128 = vpop.f32.mrb[0].mxu0
        %v8129 = vadd.f32 0.0, %v8128
        %v8130 = vpop.f32.mrb[0].mxu0
        %v8131 = vadd.f32 0.0, %v8130
        %8132 = vmatprep.mubr.f32.mxu0 %v8024
        %8133 = vmatmul.mubr.f32.gmra.mrb[0].mxu0 %v7953
        %v8134 = vpop.f32.mrb[0].mxu0
        %v8135 = vadd.f32 0.0, %v8134
        %v8136 = vpop.f32.mrb[0].mxu0
        %v8137 = vadd.f32 0.0, %v8136
        %8138 = vdwg.mxu0
        %v8140 = vsel %vm8004, %v7737, 0
        %v8143 = vsel %vm8004, %v7743, 0
        %v8146 = vsel %vm8004, %v7749, 0
        %v8149 = vsel %vm8004, %v7755, 0
        %v8152 = vsel %vm8004, %v7761, 0
        %v8155 = vsel %vm8004, %v7767, 0
        %v8158 = vsel %vm8004, %v7773, 0
        %v8161 = vsel %vm1340, %v7819, 0
        %v8164 = vsel %vm1340, %v7820, 0
        %8166 = vmatprep.subr.mxu0 %v7776
        %8167 = vmatpush1.msra.mxu0 %v7775
        %8168 = vmatprep.subr.mxu0 %v7778
        %8169 = vmatpush1.msra.mxu0 %v7777
        %8170 = vmatprep.subr.mxu0 %v7780
        %8171 = vmatpush1.msra.mxu0 %v7779
        %8172 = vmatprep.subr.mxu0 %v7782
        %8173 = vmatpush1.msra.mxu0 %v7781
        %8174 = vmatprep.subr.mxu0 %v7784
        %8175 = vmatpush1.msra.mxu0 %v7783
        %8176 = vmatprep.subr.mxu0 %v7786
        %8177 = vmatpush1.msra.mxu0 %v7785
        %8178 = vmatprep.subr.mxu0 %v7788
        %8179 = vmatpush1.msra.mxu0 %v7787
        %8180 = vmatprep.subr.mxu0 %v7790
        %8181 = vmatpush1.msra.mxu0 %v7789
        %8182 = vmatprep.subr.mxu0 %v7792
        %8183 = vmatpush1.msra.mxu0 %v7791
        %8184 = vmatprep.subr.mxu0 %v7794
        %8185 = vmatpush1.msra.mxu0 %v7793
        %8186 = vmatprep.subr.mxu0 %v7796
        %8187 = vmatpush1.msra.mxu0 %v7795
        %8188 = vmatprep.subr.mxu0 %v7798
        %8189 = vmatpush1.msra.mxu0 %v7797
        %8190 = vmatprep.subr.mxu0 %v7800
        %8191 = vmatpush1.msra.mxu0 %v7799
        %8192 = vmatprep.subr.mxu0 %v7802
        %8193 = vmatpush1.msra.mxu0 %v7801
        %8194 = vmatprep.subr.mxu0 %v7804
        %8195 = vmatpush1.msra.mxu0 %v7803
        %8196 = vmatprep.subr.mxu0 %v7806
        %8197 = vmatpush1.msra.mxu0 %v7805
        %8198 = vmatprep.subr.mxu0 %v7808
        %8199 = vmatpush1.msra.mxu0 %v7807
        %8200 = vmatprep.subr.mxu0 %v7810
        %8201 = vmatpush1.msra.mxu0 %v7809
        %8202 = vmatprep.subr.mxu0 %v7812
        %8203 = vmatpush1.msra.mxu0 %v7811
        %8204 = vmatprep.subr.mxu0 %v7814
        %8205 = vmatpush1.msra.mxu0 %v7813
        %8206 = vmatprep.subr.mxu0 %v7816
        %8207 = vmatpush1.msra.mxu0 %v7815
        %8208 = vmatprep.subr.mxu0 %v7818
        %8209 = vmatpush1.msra.mxu0 %v7817
        %8210 = vmatprep.subr.mxu0 %v8164
        %8211 = vmatpush1.msra.mxu0 %v8161
        %8212 = vmatprep.subr.mxu0 0.0
        %8213 = vmatpush1.msra.mxu0 0.0
        %8214 = vmatprep.subr.mxu0 0.0
        %8215 = vmatpush1.msra.mxu0 0.0
        %8216 = vmatprep.subr.mxu0 0.0
        %8217 = vmatpush1.msra.mxu0 0.0
        %8218 = vmatprep.subr.mxu0 0.0
        %8219 = vmatpush1.msra.mxu0 0.0
        %8220 = vmatprep.subr.mxu0 0.0
        %8221 = vmatpush1.msra.mxu0 0.0
        %8222 = vmatprep.subr.mxu0 0.0
        %8223 = vmatpush1.msra.mxu0 0.0
        %8224 = vmatprep.subr.mxu0 0.0
        %8225 = vmatpush1.msra.mxu0 0.0
        %8226 = vmatprep.subr.mxu0 0.0
        %8227 = vmatpush1.msra.mxu0 0.0
        %8228 = vmatprep.subr.mxu0 0.0
        %8229 = vmatpush1.msra.mxu0 0.0
        %8230 = vmatprep.mubr.f32.mxu0 %v8140
        %8231 = vmatmul.mubr.f32.gmra.mrb[0].mxu0 %v7735
        %v8232 = vpop.f32.mrb[0].mxu0
        %v8233 = vadd.f32 %v8099, %v8232
        %v8234 = vpop.f32.mrb[0].mxu0
        %v8235 = vadd.f32 %v8101, %v8234
        %8236 = vmatprep.mubr.f32.mxu0 %v8143
        %8237 = vmatmul.mubr.f32.gmra.mrb[0].mxu0 %v7741
        %v8238 = vpop.f32.mrb[0].mxu0
        %v8239 = vadd.f32 %v8105, %v8238
        %v8240 = vpop.f32.mrb[0].mxu0
        %v8241 = vadd.f32 %v8107, %v8240
        %8242 = vmatprep.mubr.f32.mxu0 %v8146
        %8243 = vmatmul.mubr.f32.gmra.mrb[0].mxu0 %v7747
        %v8244 = vpop.f32.mrb[0].mxu0
        %v8245 = vadd.f32 %v8111, %v8244
        %v8246 = vpop.f32.mrb[0].mxu0
        %v8247 = vadd.f32 %v8113, %v8246
        %8248 = vmatprep.mubr.f32.mxu0 %v8149
        %8249 = vmatmul.mubr.f32.gmra.mrb[0].mxu0 %v7753
        %v8250 = vpop.f32.mrb[0].mxu0
        %v8251 = vadd.f32 %v8117, %v8250
        %v8252 = vpop.f32.mrb[0].mxu0
        %v8253 = vadd.f32 %v8119, %v8252
        %8254 = vmatprep.mubr.f32.mxu0 %v8152
        %8255 = vmatmul.mubr.f32.gmra.mrb[0].mxu0 %v7759
        %v8256 = vpop.f32.mrb[0].mxu0
        %v8257 = vadd.f32 %v8123, %v8256
        %v8258 = vpop.f32.mrb[0].mxu0
        %v8259 = vadd.f32 %v8125, %v8258
        %8260 = vmatprep.mubr.f32.mxu0 %v8155
        %8261 = vmatmul.mubr.f32.gmra.mrb[0].mxu0 %v7765
        %v8262 = vpop.f32.mrb[0].mxu0
        %v8263 = vadd.f32 %v8129, %v8262
        %v8264 = vpop.f32.mrb[0].mxu0
        %v8265 = vadd.f32 %v8131, %v8264
        %8266 = vmatprep.mubr.f32.mxu0 %v8158
        %8267 = vmatmul.mubr.f32.gmra.mrb[0].mxu0 %v7771
        %v8268 = vpop.f32.mrb[0].mxu0
        %v8269 = vadd.f32 %v8135, %v8268
        %v8270 = vpop.f32.mrb[0].mxu0
        %v8271 = vadd.f32 %v8137, %v8270
        %8272 = vdwg.mxu0
        %s8273 = scalar_lea.vmem %s7, 112
        %v8274 = vld [vmem:[%s8273] sm:$0xff]
        %v8275 = vld [vmem:[%s8273 + $0x8] sm:$0xff]
        %v8276 = vld [vmem:[%s8273 + $0x10] sm:$0xff]
        %v8277 = vld [vmem:[%s8273 + $0x18] sm:$0xff]
        %v8278 = vld [vmem:[%s8273 + $0x20] sm:$0xff]
        %v8279 = vld [vmem:[%s8273 + $0x28] sm:$0xff]
        %v8280 = vld [vmem:[%s8273 + $0x30] sm:$0xff]
        %v8282 = vsel %vm7646, %v8274, 0
        %v8285 = vsel %vm7646, %v8275, 0
        %v8288 = vsel %vm7646, %v8276, 0
        %v8291 = vsel %vm7646, %v8277, 0
        %v8294 = vsel %vm7646, %v8278, 0
        %v8297 = vsel %vm7646, %v8279, 0
        %v8300 = vsel %vm7646, %v8280, 0
        %8302 = vmatprep.subr.mxu0 %v7610
        %8303 = vmatpush1.msra.mxu0 %v7609
        %8304 = vmatprep.subr.mxu0 %v7612
        %8305 = vmatpush1.msra.mxu0 %v7611
        %8306 = vmatprep.subr.mxu0 %v7614
        %8307 = vmatpush1.msra.mxu0 %v7613
        %8308 = vmatprep.subr.mxu0 %v7616
        %8309 = vmatpush1.msra.mxu0 %v7615
        %8310 = vmatprep.subr.mxu0 %v7618
        %8311 = vmatpush1.msra.mxu0 %v7617
        %8312 = vmatprep.subr.mxu0 %v7620
        %8313 = vmatpush1.msra.mxu0 %v7619
        %8314 = vmatprep.subr.mxu0 %v7622
        %8315 = vmatpush1.msra.mxu0 %v7621
        %8316 = vmatprep.subr.mxu0 %v7624
        %8317 = vmatpush1.msra.mxu0 %v7623
        %8318 = vmatprep.subr.mxu0 %v7626
        %8319 = vmatpush1.msra.mxu0 %v7625
        %8320 = vmatprep.subr.mxu0 %v7628
        %8321 = vmatpush1.msra.mxu0 %v7627
        %8322 = vmatprep.subr.mxu0 %v7630
        %8323 = vmatpush1.msra.mxu0 %v7629
        %8324 = vmatprep.subr.mxu0 %v7632
        %8325 = vmatpush1.msra.mxu0 %v7631
        %8326 = vmatprep.subr.mxu0 %v7634
        %8327 = vmatpush1.msra.mxu0 %v7633
        %8328 = vmatprep.subr.mxu0 %v7636
        %8329 = vmatpush1.msra.mxu0 %v7635
        %8330 = vmatprep.subr.mxu0 %v7638
        %8331 = vmatpush1.msra.mxu0 %v7637
        %8332 = vmatprep.subr.mxu0 0.0
        %8333 = vmatpush1.msra.mxu0 0.0
        %8334 = vmatprep.subr.mxu0 0.0
        %8335 = vmatpush1.msra.mxu0 0.0
        %8336 = vmatprep.subr.mxu0 0.0
        %8337 = vmatpush1.msra.mxu0 0.0
        %8338 = vmatprep.subr.mxu0 0.0
        %8339 = vmatpush1.msra.mxu0 0.0
        %8340 = vmatprep.subr.mxu0 0.0
        %8341 = vmatpush1.msra.mxu0 0.0
        %8342 = vmatprep.subr.mxu0 0.0
        %8343 = vmatpush1.msra.mxu0 0.0
        %8344 = vmatprep.subr.mxu0 0.0
        %8345 = vmatpush1.msra.mxu0 0.0
        %8346 = vmatprep.subr.mxu0 0.0
        %8347 = vmatpush1.msra.mxu0 0.0
        %8348 = vmatprep.subr.mxu0 0.0
        %8349 = vmatpush1.msra.mxu0 0.0
        %8350 = vmatprep.subr.mxu0 0.0
        %8351 = vmatpush1.msra.mxu0 0.0
        %8352 = vmatprep.subr.mxu0 0.0
        %8353 = vmatpush1.msra.mxu0 0.0
        %8354 = vmatprep.subr.mxu0 0.0
        %8355 = vmatpush1.msra.mxu0 0.0
        %8356 = vmatprep.subr.mxu0 0.0
        %8357 = vmatpush1.msra.mxu0 0.0
        %8358 = vmatprep.subr.mxu0 0.0
        %8359 = vmatpush1.msra.mxu0 0.0
        %8360 = vmatprep.subr.mxu0 0.0
        %8361 = vmatpush1.msra.mxu0 0.0
        %8362 = vmatprep.subr.mxu0 0.0
        %8363 = vmatpush1.msra.mxu0 0.0
        %8364 = vmatprep.subr.mxu0 0.0
        %8365 = vmatpush1.msra.mxu0 0.0
        %8366 = vmatprep.mubr.f32.mxu0 0.0
        %8367 = vmatmul.mubr.f32.gmra.mrb[0].mxu0 %v8282
        %v8368 = vpop.f32.mrb[0].mxu0
        %v8369 = vadd.f32 0.0, %v8368
        %v8370 = vpop.f32.mrb[0].mxu0
        %v8371 = vadd.f32 0.0, %v8370
        %8372 = vmatprep.mubr.f32.mxu0 0.0
        %8373 = vmatmul.mubr.f32.gmra.mrb[0].mxu0 %v8285
        %v8374 = vpop.f32.mrb[0].mxu0
        %v8375 = vadd.f32 0.0, %v8374
        %v8376 = vpop.f32.mrb[0].mxu0
        %v8377 = vadd.f32 0.0, %v8376
        %8378 = vmatprep.mubr.f32.mxu0 0.0
        %8379 = vmatmul.mubr.f32.gmra.mrb[0].mxu0 %v8288
        %v8380 = vpop.f32.mrb[0].mxu0
        %v8381 = vadd.f32 0.0, %v8380
        %v8382 = vpop.f32.mrb[0].mxu0
        %v8383 = vadd.f32 0.0, %v8382
        %8384 = vmatprep.mubr.f32.mxu0 0.0
        %8385 = vmatmul.mubr.f32.gmra.mrb[0].mxu0 %v8291
        %v8386 = vpop.f32.mrb[0].mxu0
        %v8387 = vadd.f32 0.0, %v8386
        %v8388 = vpop.f32.mrb[0].mxu0
        %v8389 = vadd.f32 0.0, %v8388
        %8390 = vmatprep.mubr.f32.mxu0 0.0
        %8391 = vmatmul.mubr.f32.gmra.mrb[0].mxu0 %v8294
        %v8392 = vpop.f32.mrb[0].mxu0
        %v8393 = vadd.f32 0.0, %v8392
        %v8394 = vpop.f32.mrb[0].mxu0
        %v8395 = vadd.f32 0.0, %v8394
        %8396 = vmatprep.mubr.f32.mxu0 0.0
        %8397 = vmatmul.mubr.f32.gmra.mrb[0].mxu0 %v8297
        %v8398 = vpop.f32.mrb[0].mxu0
        %v8399 = vadd.f32 0.0, %v8398
        %v8400 = vpop.f32.mrb[0].mxu0
        %v8401 = vadd.f32 0.0, %v8400
        %8402 = vmatprep.mubr.f32.mxu0 0.0
        %8403 = vmatmul.mubr.f32.gmra.mrb[0].mxu0 %v8300
        %v8404 = vpop.f32.mrb[0].mxu0
        %v8405 = vadd.f32 0.0, %v8404
        %v8406 = vpop.f32.mrb[0].mxu0
        %v8407 = vadd.f32 0.0, %v8406
        %8408 = vdwg.mxu0
        %s8409 = scalar_lea.vmem %s8, 736
        %v8410 = vld [vmem:[%s8409] sm:$0xff]
        %v8411 = vld [vmem:[%s8409 + $0x8] sm:$0xff]
        %v8412 = vld [vmem:[%s8409 + $0x10] sm:$0xff]
        %v8413 = vld [vmem:[%s8409 + $0x18] sm:$0xff]
        %v8414 = vld [vmem:[%s8409 + $0x20] sm:$0xff]
        %v8415 = vld [vmem:[%s8409 + $0x28] sm:$0xff]
        %v8416 = vld [vmem:[%s8409 + $0x30] sm:$0xff]
        %v8417 = vld [vmem:[%s8409 + $0x38] sm:$0xff]
        %v8418 = vld [vmem:[%s8409 + $0x40] sm:$0xff]
        %v8419 = vld [vmem:[%s8409 + $0x48] sm:$0xff]
        %v8420 = vld [vmem:[%s8409 + $0x50] sm:$0xff]
        %v8421 = vld [vmem:[%s8409 + $0x58] sm:$0xff]
        %v8422 = vld [vmem:[%s8409 + $0x60] sm:$0xff]
        %v8423 = vld [vmem:[%s8409 + $0x68] sm:$0xff]
        %v8424 = vld [vmem:[%s8409 + $0x70] sm:$0xff]
        %v8425 = vld [vmem:[%s8409 + $0x78] sm:$0xff]
        %v8426 = vld [vmem:[%s8409 + $0x80] sm:$0xff]
        %v8427 = vld [vmem:[%s8409 + $0x88] sm:$0xff]
        %v8428 = vld [vmem:[%s8409 + $0x90] sm:$0xff]
        %v8429 = vld [vmem:[%s8409 + $0x98] sm:$0xff]
        %v8430 = vld [vmem:[%s8409 + $0xa0] sm:$0xff]
        %v8431 = vld [vmem:[%s8409 + $0xa8] sm:$0xff]
        %v8432 = vld [vmem:[%s8409 + $0xb0] sm:$0xff]
        %v8433 = vld [vmem:[%s8409 + $0xb8] sm:$0xff]
        %v8434 = vld [vmem:[%s8409 + $0xc0] sm:$0xff]
        %v8435 = vld [vmem:[%s8409 + $0xc8] sm:$0xff]
        %v8436 = vld [vmem:[%s8409 + $0xd0] sm:$0xff]
        %v8437 = vld [vmem:[%s8409 + $0xd8] sm:$0xff]
        %v8438 = vld [vmem:[%s8409 + $0xe0] sm:$0xff]
        %v8439 = vld [vmem:[%s8409 + $0xe8] sm:$0xff]
        %v8440 = vld [vmem:[%s8409 + $0xf0] sm:$0xff]
        %v8441 = vld [vmem:[%s8409 + $0xf8] sm:$0xff]
        %v8442 = vld [vmem:[%s8409 + $0x100] sm:$0xff]
        %v8443 = vld [vmem:[%s8409 + $0x108] sm:$0xff]
        %v8444 = vld [vmem:[%s8409 + $0x110] sm:$0xff]
        %v8445 = vld [vmem:[%s8409 + $0x118] sm:$0xff]
        %v8446 = vld [vmem:[%s8409 + $0x120] sm:$0xff]
        %v8447 = vld [vmem:[%s8409 + $0x128] sm:$0xff]
        %v8448 = vld [vmem:[%s8409 + $0x130] sm:$0xff]
        %v8449 = vld [vmem:[%s8409 + $0x138] sm:$0xff]
        %v8450 = vld [vmem:[%s8409 + $0x140] sm:$0xff]
        %v8451 = vld [vmem:[%s8409 + $0x148] sm:$0xff]
        %v8452 = vld [vmem:[%s8409 + $0x150] sm:$0xff]
        %v8453 = vld [vmem:[%s8409 + $0x158] sm:$0xff]
        %v8454 = vld [vmem:[%s8409 + $0x160] sm:$0xf]
        %v8455 = vld [vmem:[%s8409 + $0x168] sm:$0xf]
        %v8457 = vsel %vm8004, %v8371, 0
        %v8460 = vsel %vm8004, %v8377, 0
        %v8463 = vsel %vm8004, %v8383, 0
        %v8466 = vsel %vm8004, %v8389, 0
        %v8469 = vsel %vm8004, %v8395, 0
        %v8472 = vsel %vm8004, %v8401, 0
        %v8475 = vsel %vm8004, %v8407, 0
        %v8478 = vsel %vm1340, %v8454, 0
        %v8481 = vsel %vm1340, %v8455, 0
        %8483 = vmatprep.subr.mxu0 %v8411
        %8484 = vmatpush1.msra.mxu0 %v8410
        %8485 = vmatprep.subr.mxu0 %v8413
        %8486 = vmatpush1.msra.mxu0 %v8412
        %8487 = vmatprep.subr.mxu0 %v8415
        %8488 = vmatpush1.msra.mxu0 %v8414
        %8489 = vmatprep.subr.mxu0 %v8417
        %8490 = vmatpush1.msra.mxu0 %v8416
        %8491 = vmatprep.subr.mxu0 %v8419
        %8492 = vmatpush1.msra.mxu0 %v8418
        %8493 = vmatprep.subr.mxu0 %v8421
        %8494 = vmatpush1.msra.mxu0 %v8420
        %8495 = vmatprep.subr.mxu0 %v8423
        %8496 = vmatpush1.msra.mxu0 %v8422
        %8497 = vmatprep.subr.mxu0 %v8425
        %8498 = vmatpush1.msra.mxu0 %v8424
        %8499 = vmatprep.subr.mxu0 %v8427
        %8500 = vmatpush1.msra.mxu0 %v8426
        %8501 = vmatprep.subr.mxu0 %v8429
        %8502 = vmatpush1.msra.mxu0 %v8428
        %8503 = vmatprep.subr.mxu0 %v8431
        %8504 = vmatpush1.msra.mxu0 %v8430
        %8505 = vmatprep.subr.mxu0 %v8433
        %8506 = vmatpush1.msra.mxu0 %v8432
        %8507 = vmatprep.subr.mxu0 %v8435
        %8508 = vmatpush1.msra.mxu0 %v8434
        %8509 = vmatprep.subr.mxu0 %v8437
        %8510 = vmatpush1.msra.mxu0 %v8436
        %8511 = vmatprep.subr.mxu0 %v8439
        %8512 = vmatpush1.msra.mxu0 %v8438
        %8513 = vmatprep.subr.mxu0 %v8441
        %8514 = vmatpush1.msra.mxu0 %v8440
        %8515 = vmatprep.subr.mxu0 %v8443
        %8516 = vmatpush1.msra.mxu0 %v8442
        %8517 = vmatprep.subr.mxu0 %v8445
        %8518 = vmatpush1.msra.mxu0 %v8444
        %8519 = vmatprep.subr.mxu0 %v8447
        %8520 = vmatpush1.msra.mxu0 %v8446
        %8521 = vmatprep.subr.mxu0 %v8449
        %8522 = vmatpush1.msra.mxu0 %v8448
        %8523 = vmatprep.subr.mxu0 %v8451
        %8524 = vmatpush1.msra.mxu0 %v8450
        %8525 = vmatprep.subr.mxu0 %v8453
        %8526 = vmatpush1.msra.mxu0 %v8452
        %8527 = vmatprep.subr.mxu0 %v8481
        %8528 = vmatpush1.msra.mxu0 %v8478
        %8529 = vmatprep.subr.mxu0 0.0
        %8530 = vmatpush1.msra.mxu0 0.0
        %8531 = vmatprep.subr.mxu0 0.0
        %8532 = vmatpush1.msra.mxu0 0.0
        %8533 = vmatprep.subr.mxu0 0.0
        %8534 = vmatpush1.msra.mxu0 0.0
        %8535 = vmatprep.subr.mxu0 0.0
        %8536 = vmatpush1.msra.mxu0 0.0
        %8537 = vmatprep.subr.mxu0 0.0
        %8538 = vmatpush1.msra.mxu0 0.0
        %8539 = vmatprep.subr.mxu0 0.0
        %8540 = vmatpush1.msra.mxu0 0.0
        %8541 = vmatprep.subr.mxu0 0.0
        %8542 = vmatpush1.msra.mxu0 0.0
        %8543 = vmatprep.subr.mxu0 0.0
        %8544 = vmatpush1.msra.mxu0 0.0
        %8545 = vmatprep.subr.mxu0 0.0
        %8546 = vmatpush1.msra.mxu0 0.0
        %8547 = vmatprep.mubr.f32.mxu0 %v8457
        %8548 = vmatmul.mubr.f32.gmra.mrb[0].mxu0 %v8369
        %v8549 = vpop.f32.mrb[0].mxu0
        %v8550 = vadd.f32 0.0, %v8549
        %v8551 = vpop.f32.mrb[0].mxu0
        %v8552 = vadd.f32 0.0, %v8551
        %8553 = vmatprep.mubr.f32.mxu0 %v8460
        %8554 = vmatmul.mubr.f32.gmra.mrb[0].mxu0 %v8375
        %v8555 = vpop.f32.mrb[0].mxu0
        %v8556 = vadd.f32 0.0, %v8555
        %v8557 = vpop.f32.mrb[0].mxu0
        %v8558 = vadd.f32 0.0, %v8557
        %8559 = vmatprep.mubr.f32.mxu0 %v8463
        %8560 = vmatmul.mubr.f32.gmra.mrb[0].mxu0 %v8381
        %v8561 = vpop.f32.mrb[0].mxu0
        %v8562 = vadd.f32 0.0, %v8561
        %v8563 = vpop.f32.mrb[0].mxu0
        %v8564 = vadd.f32 0.0, %v8563
        %8565 = vmatprep.mubr.f32.mxu0 %v8466
        %8566 = vmatmul.mubr.f32.gmra.mrb[0].mxu0 %v8387
        %v8567 = vpop.f32.mrb[0].mxu0
        %v8568 = vadd.f32 0.0, %v8567
        %v8569 = vpop.f32.mrb[0].mxu0
        %v8570 = vadd.f32 0.0, %v8569
        %8571 = vmatprep.mubr.f32.mxu0 %v8469
        %8572 = vmatmul.mubr.f32.gmra.mrb[0].mxu0 %v8393
        %v8573 = vpop.f32.mrb[0].mxu0
        %v8574 = vadd.f32 0.0, %v8573
        %v8575 = vpop.f32.mrb[0].mxu0
        %v8576 = vadd.f32 0.0, %v8575
        %8577 = vmatprep.mubr.f32.mxu0 %v8472
        %8578 = vmatmul.mubr.f32.gmra.mrb[0].mxu0 %v8399
        %v8579 = vpop.f32.mrb[0].mxu0
        %v8580 = vadd.f32 0.0, %v8579
        %v8581 = vpop.f32.mrb[0].mxu0
        %v8582 = vadd.f32 0.0, %v8581
        %8583 = vmatprep.mubr.f32.mxu0 %v8475
        %8584 = vmatmul.mubr.f32.gmra.mrb[0].mxu0 %v8405
        %v8585 = vpop.f32.mrb[0].mxu0
        %v8586 = vadd.f32 0.0, %v8585
        %v8587 = vpop.f32.mrb[0].mxu0
        %v8588 = vadd.f32 0.0, %v8587
        %8589 = vdwg.mxu0
        %v8590 = vadd.f32 %v8233, %v8550
        %v8591 = vadd.f32 %v8235, %v8552
        %v8592 = vadd.f32 %v8239, %v8556
        %v8593 = vadd.f32 %v8241, %v8558
        %v8594 = vadd.f32 %v8245, %v8562
        %v8595 = vadd.f32 %v8247, %v8564
        %v8596 = vadd.f32 %v8251, %v8568
        %v8597 = vadd.f32 %v8253, %v8570
        %v8598 = vadd.f32 %v8257, %v8574
        %v8599 = vadd.f32 %v8259, %v8576
        %v8600 = vadd.f32 %v8263, %v8580
        %v8601 = vadd.f32 %v8265, %v8582
        %v8602 = vadd.f32 %v8269, %v8586
        %v8603 = vadd.f32 %v8271, %v8588
        %s8604 = scalar_lea.vmem %s7, 168
        %v8605 = vld [vmem:[%s8604] sm:$0xff]
        %v8606 = vld [vmem:[%s8604 + $0x8] sm:$0xff]
        %v8607 = vld [vmem:[%s8604 + $0x10] sm:$0xff]
        %v8608 = vld [vmem:[%s8604 + $0x18] sm:$0xff]
        %v8609 = vld [vmem:[%s8604 + $0x20] sm:$0xff]
        %v8610 = vld [vmem:[%s8604 + $0x28] sm:$0xff]
        %v8611 = vld [vmem:[%s8604 + $0x30] sm:$0xff]
        %v8613 = vsel %vm7646, %v8605, 0
        %v8616 = vsel %vm7646, %v8606, 0
        %v8619 = vsel %vm7646, %v8607, 0
        %v8622 = vsel %vm7646, %v8608, 0
        %v8625 = vsel %vm7646, %v8609, 0
        %v8628 = vsel %vm7646, %v8610, 0
        %v8631 = vsel %vm7646, %v8611, 0
        %8633 = vmatprep.subr.mxu0 %v7610
        %8634 = vmatpush1.msra.mxu0 %v7609
        %8635 = vmatprep.subr.mxu0 %v7612
        %8636 = vmatpush1.msra.mxu0 %v7611
        %8637 = vmatprep.subr.mxu0 %v7614
        %8638 = vmatpush1.msra.mxu0 %v7613
        %8639 = vmatprep.subr.mxu0 %v7616
        %8640 = vmatpush1.msra.mxu0 %v7615
        %8641 = vmatprep.subr.mxu0 %v7618
        %8642 = vmatpush1.msra.mxu0 %v7617
        %8643 = vmatprep.subr.mxu0 %v7620
        %8644 = vmatpush1.msra.mxu0 %v7619
        %8645 = vmatprep.subr.mxu0 %v7622
        %8646 = vmatpush1.msra.mxu0 %v7621
        %8647 = vmatprep.subr.mxu0 %v7624
        %8648 = vmatpush1.msra.mxu0 %v7623
        %8649 = vmatprep.subr.mxu0 %v7626
        %8650 = vmatpush1.msra.mxu0 %v7625
        %8651 = vmatprep.subr.mxu0 %v7628
        %8652 = vmatpush1.msra.mxu0 %v7627
        %8653 = vmatprep.subr.mxu0 %v7630
        %8654 = vmatpush1.msra.mxu0 %v7629
        %8655 = vmatprep.subr.mxu0 %v7632
        %8656 = vmatpush1.msra.mxu0 %v7631
        %8657 = vmatprep.subr.mxu0 %v7634
        %8658 = vmatpush1.msra.mxu0 %v7633
        %8659 = vmatprep.subr.mxu0 %v7636
        %8660 = vmatpush1.msra.mxu0 %v7635
        %8661 = vmatprep.subr.mxu0 %v7638
        %8662 = vmatpush1.msra.mxu0 %v7637
        %8663 = vmatprep.subr.mxu0 0.0
        %8664 = vmatpush1.msra.mxu0 0.0
        %8665 = vmatprep.subr.mxu0 0.0
        %8666 = vmatpush1.msra.mxu0 0.0
        %8667 = vmatprep.subr.mxu0 0.0
        %8668 = vmatpush1.msra.mxu0 0.0
        %8669 = vmatprep.subr.mxu0 0.0
        %8670 = vmatpush1.msra.mxu0 0.0
        %8671 = vmatprep.subr.mxu0 0.0
        %8672 = vmatpush1.msra.mxu0 0.0
        %8673 = vmatprep.subr.mxu0 0.0
        %8674 = vmatpush1.msra.mxu0 0.0
        %8675 = vmatprep.subr.mxu0 0.0
        %8676 = vmatpush1.msra.mxu0 0.0
        %8677 = vmatprep.subr.mxu0 0.0
        %8678 = vmatpush1.msra.mxu0 0.0
        %8679 = vmatprep.subr.mxu0 0.0
        %8680 = vmatpush1.msra.mxu0 0.0
        %8681 = vmatprep.subr.mxu0 0.0
        %8682 = vmatpush1.msra.mxu0 0.0
        %8683 = vmatprep.subr.mxu0 0.0
        %8684 = vmatpush1.msra.mxu0 0.0
        %8685 = vmatprep.subr.mxu0 0.0
        %8686 = vmatpush1.msra.mxu0 0.0
        %8687 = vmatprep.subr.mxu0 0.0
        %8688 = vmatpush1.msra.mxu0 0.0
        %8689 = vmatprep.subr.mxu0 0.0
        %8690 = vmatpush1.msra.mxu0 0.0
        %8691 = vmatprep.subr.mxu0 0.0
        %8692 = vmatpush1.msra.mxu0 0.0
        %8693 = vmatprep.subr.mxu0 0.0
        %8694 = vmatpush1.msra.mxu0 0.0
        %8695 = vmatprep.subr.mxu0 0.0
        %8696 = vmatpush1.msra.mxu0 0.0
        %8697 = vmatprep.mubr.f32.mxu0 0.0
        %8698 = vmatmul.mubr.f32.gmra.mrb[0].mxu0 %v8613
        %v8699 = vpop.f32.mrb[0].mxu0
        %v8700 = vadd.f32 0.0, %v8699
        %v8701 = vpop.f32.mrb[0].mxu0
        %v8702 = vadd.f32 0.0, %v8701
        %8703 = vmatprep.mubr.f32.mxu0 0.0
        %8704 = vmatmul.mubr.f32.gmra.mrb[0].mxu0 %v8616
        %v8705 = vpop.f32.mrb[0].mxu0
        %v8706 = vadd.f32 0.0, %v8705
        %v8707 = vpop.f32.mrb[0].mxu0
        %v8708 = vadd.f32 0.0, %v8707
        %8709 = vmatprep.mubr.f32.mxu0 0.0
        %8710 = vmatmul.mubr.f32.gmra.mrb[0].mxu0 %v8619
        %v8711 = vpop.f32.mrb[0].mxu0
        %v8712 = vadd.f32 0.0, %v8711
        %v8713 = vpop.f32.mrb[0].mxu0
        %v8714 = vadd.f32 0.0, %v8713
        %8715 = vmatprep.mubr.f32.mxu0 0.0
        %8716 = vmatmul.mubr.f32.gmra.mrb[0].mxu0 %v8622
        %v8717 = vpop.f32.mrb[0].mxu0
        %v8718 = vadd.f32 0.0, %v8717
        %v8719 = vpop.f32.mrb[0].mxu0
        %v8720 = vadd.f32 0.0, %v8719
        %8721 = vmatprep.mubr.f32.mxu0 0.0
        %8722 = vmatmul.mubr.f32.gmra.mrb[0].mxu0 %v8625
        %v8723 = vpop.f32.mrb[0].mxu0
        %v8724 = vadd.f32 0.0, %v8723
        %v8725 = vpop.f32.mrb[0].mxu0
        %v8726 = vadd.f32 0.0, %v8725
        %8727 = vmatprep.mubr.f32.mxu0 0.0
        %8728 = vmatmul.mubr.f32.gmra.mrb[0].mxu0 %v8628
        %v8729 = vpop.f32.mrb[0].mxu0
        %v8730 = vadd.f32 0.0, %v8729
        %v8731 = vpop.f32.mrb[0].mxu0
        %v8732 = vadd.f32 0.0, %v8731
        %8733 = vmatprep.mubr.f32.mxu0 0.0
        %8734 = vmatmul.mubr.f32.gmra.mrb[0].mxu0 %v8631
        %v8735 = vpop.f32.mrb[0].mxu0
        %v8736 = vadd.f32 0.0, %v8735
        %v8737 = vpop.f32.mrb[0].mxu0
        %v8738 = vadd.f32 0.0, %v8737
        %8739 = vdwg.mxu0
        %s8740 = scalar_lea.vmem %s8, 1104
        %v8741 = vld [vmem:[%s8740] sm:$0xff]
        %v8742 = vld [vmem:[%s8740 + $0x8] sm:$0xff]
        %v8743 = vld [vmem:[%s8740 + $0x10] sm:$0xff]
        %v8744 = vld [vmem:[%s8740 + $0x18] sm:$0xff]
        %v8745 = vld [vmem:[%s8740 + $0x20] sm:$0xff]
        %v8746 = vld [vmem:[%s8740 + $0x28] sm:$0xff]
        %v8747 = vld [vmem:[%s8740 + $0x30] sm:$0xff]
        %v8748 = vld [vmem:[%s8740 + $0x38] sm:$0xff]
        %v8749 = vld [vmem:[%s8740 + $0x40] sm:$0xff]
        %v8750 = vld [vmem:[%s8740 + $0x48] sm:$0xff]
        %v8751 = vld [vmem:[%s8740 + $0x50] sm:$0xff]
        %v8752 = vld [vmem:[%s8740 + $0x58] sm:$0xff]
        %v8753 = vld [vmem:[%s8740 + $0x60] sm:$0xff]
        %v8754 = vld [vmem:[%s8740 + $0x68] sm:$0xff]
        %v8755 = vld [vmem:[%s8740 + $0x70] sm:$0xff]
        %v8756 = vld [vmem:[%s8740 + $0x78] sm:$0xff]
        %v8757 = vld [vmem:[%s8740 + $0x80] sm:$0xff]
        %v8758 = vld [vmem:[%s8740 + $0x88] sm:$0xff]
        %v8759 = vld [vmem:[%s8740 + $0x90] sm:$0xff]
        %v8760 = vld [vmem:[%s8740 + $0x98] sm:$0xff]
        %v8761 = vld [vmem:[%s8740 + $0xa0] sm:$0xff]
        %v8762 = vld [vmem:[%s8740 + $0xa8] sm:$0xff]
        %v8763 = vld [vmem:[%s8740 + $0xb0] sm:$0xff]
        %v8764 = vld [vmem:[%s8740 + $0xb8] sm:$0xff]
        %v8765 = vld [vmem:[%s8740 + $0xc0] sm:$0xff]
        %v8766 = vld [vmem:[%s8740 + $0xc8] sm:$0xff]
        %v8767 = vld [vmem:[%s8740 + $0xd0] sm:$0xff]
        %v8768 = vld [vmem:[%s8740 + $0xd8] sm:$0xff]
        %v8769 = vld [vmem:[%s8740 + $0xe0] sm:$0xff]
        %v8770 = vld [vmem:[%s8740 + $0xe8] sm:$0xff]
        %v8771 = vld [vmem:[%s8740 + $0xf0] sm:$0xff]
        %v8772 = vld [vmem:[%s8740 + $0xf8] sm:$0xff]
        %v8773 = vld [vmem:[%s8740 + $0x100] sm:$0xff]
        %v8774 = vld [vmem:[%s8740 + $0x108] sm:$0xff]
        %v8775 = vld [vmem:[%s8740 + $0x110] sm:$0xff]
        %v8776 = vld [vmem:[%s8740 + $0x118] sm:$0xff]
        %v8777 = vld [vmem:[%s8740 + $0x120] sm:$0xff]
        %v8778 = vld [vmem:[%s8740 + $0x128] sm:$0xff]
        %v8779 = vld [vmem:[%s8740 + $0x130] sm:$0xff]
        %v8780 = vld [vmem:[%s8740 + $0x138] sm:$0xff]
        %v8781 = vld [vmem:[%s8740 + $0x140] sm:$0xff]
        %v8782 = vld [vmem:[%s8740 + $0x148] sm:$0xff]
        %v8783 = vld [vmem:[%s8740 + $0x150] sm:$0xff]
        %v8784 = vld [vmem:[%s8740 + $0x158] sm:$0xff]
        %v8785 = vld [vmem:[%s8740 + $0x160] sm:$0xf]
        %v8786 = vld [vmem:[%s8740 + $0x168] sm:$0xf]
        %v8788 = vsel %vm8004, %v8702, 0
        %v8791 = vsel %vm8004, %v8708, 0
        %v8794 = vsel %vm8004, %v8714, 0
        %v8797 = vsel %vm8004, %v8720, 0
        %v8800 = vsel %vm8004, %v8726, 0
        %v8803 = vsel %vm8004, %v8732, 0
        %v8806 = vsel %vm8004, %v8738, 0
        %v8809 = vsel %vm1340, %v8785, 0
        %v8812 = vsel %vm1340, %v8786, 0
        %8814 = vmatprep.subr.mxu0 %v8742
        %8815 = vmatpush1.msra.mxu0 %v8741
        %8816 = vmatprep.subr.mxu0 %v8744
        %8817 = vmatpush1.msra.mxu0 %v8743
        %8818 = vmatprep.subr.mxu0 %v8746
        %8819 = vmatpush1.msra.mxu0 %v8745
        %8820 = vmatprep.subr.mxu0 %v8748
        %8821 = vmatpush1.msra.mxu0 %v8747
        %8822 = vmatprep.subr.mxu0 %v8750
        %8823 = vmatpush1.msra.mxu0 %v8749
        %8824 = vmatprep.subr.mxu0 %v8752
        %8825 = vmatpush1.msra.mxu0 %v8751
        %8826 = vmatprep.subr.mxu0 %v8754
        %8827 = vmatpush1.msra.mxu0 %v8753
        %8828 = vmatprep.subr.mxu0 %v8756
        %8829 = vmatpush1.msra.mxu0 %v8755
        %8830 = vmatprep.subr.mxu0 %v8758
        %8831 = vmatpush1.msra.mxu0 %v8757
        %8832 = vmatprep.subr.mxu0 %v8760
        %8833 = vmatpush1.msra.mxu0 %v8759
        %8834 = vmatprep.subr.mxu0 %v8762
        %8835 = vmatpush1.msra.mxu0 %v8761
        %8836 = vmatprep.subr.mxu0 %v8764
        %8837 = vmatpush1.msra.mxu0 %v8763
        %8838 = vmatprep.subr.mxu0 %v8766
        %8839 = vmatpush1.msra.mxu0 %v8765
        %8840 = vmatprep.subr.mxu0 %v8768
        %8841 = vmatpush1.msra.mxu0 %v8767
        %8842 = vmatprep.subr.mxu0 %v8770
        %8843 = vmatpush1.msra.mxu0 %v8769
        %8844 = vmatprep.subr.mxu0 %v8772
        %8845 = vmatpush1.msra.mxu0 %v8771
        %8846 = vmatprep.subr.mxu0 %v8774
        %8847 = vmatpush1.msra.mxu0 %v8773
        %8848 = vmatprep.subr.mxu0 %v8776
        %8849 = vmatpush1.msra.mxu0 %v8775
        %8850 = vmatprep.subr.mxu0 %v8778
        %8851 = vmatpush1.msra.mxu0 %v8777
        %8852 = vmatprep.subr.mxu0 %v8780
        %8853 = vmatpush1.msra.mxu0 %v8779
        %8854 = vmatprep.subr.mxu0 %v8782
        %8855 = vmatpush1.msra.mxu0 %v8781
        %8856 = vmatprep.subr.mxu0 %v8784
        %8857 = vmatpush1.msra.mxu0 %v8783
        %8858 = vmatprep.subr.mxu0 %v8812
        %8859 = vmatpush1.msra.mxu0 %v8809
        %8860 = vmatprep.subr.mxu0 0.0
        %8861 = vmatpush1.msra.mxu0 0.0
        %8862 = vmatprep.subr.mxu0 0.0
        %8863 = vmatpush1.msra.mxu0 0.0
        %8864 = vmatprep.subr.mxu0 0.0
        %8865 = vmatpush1.msra.mxu0 0.0
        %8866 = vmatprep.subr.mxu0 0.0
        %8867 = vmatpush1.msra.mxu0 0.0
        %8868 = vmatprep.subr.mxu0 0.0
        %8869 = vmatpush1.msra.mxu0 0.0
        %8870 = vmatprep.subr.mxu0 0.0
        %8871 = vmatpush1.msra.mxu0 0.0
        %8872 = vmatprep.subr.mxu0 0.0
        %8873 = vmatpush1.msra.mxu0 0.0
        %8874 = vmatprep.subr.mxu0 0.0
        %8875 = vmatpush1.msra.mxu0 0.0
        %8876 = vmatprep.subr.mxu0 0.0
        %8877 = vmatpush1.msra.mxu0 0.0
        %8878 = vmatprep.mubr.f32.mxu0 %v8788
        %8879 = vmatmul.mubr.f32.gmra.mrb[0].mxu0 %v8700
        %v8880 = vpop.f32.mrb[0].mxu0
        %v8881 = vadd.f32 0.0, %v8880
        %v8882 = vpop.f32.mrb[0].mxu0
        %v8883 = vadd.f32 0.0, %v8882
        %8884 = vmatprep.mubr.f32.mxu0 %v8791
        %8885 = vmatmul.mubr.f32.gmra.mrb[0].mxu0 %v8706
        %v8886 = vpop.f32.mrb[0].mxu0
        %v8887 = vadd.f32 0.0, %v8886
        %v8888 = vpop.f32.mrb[0].mxu0
        %v8889 = vadd.f32 0.0, %v8888
        %8890 = vmatprep.mubr.f32.mxu0 %v8794
        %8891 = vmatmul.mubr.f32.gmra.mrb[0].mxu0 %v8712
        %v8892 = vpop.f32.mrb[0].mxu0
        %v8893 = vadd.f32 0.0, %v8892
        %v8894 = vpop.f32.mrb[0].mxu0
        %v8895 = vadd.f32 0.0, %v8894
        %8896 = vmatprep.mubr.f32.mxu0 %v8797
        %8897 = vmatmul.mubr.f32.gmra.mrb[0].mxu0 %v8718
        %v8898 = vpop.f32.mrb[0].mxu0
        %v8899 = vadd.f32 0.0, %v8898
        %v8900 = vpop.f32.mrb[0].mxu0
        %v8901 = vadd.f32 0.0, %v8900
        %8902 = vmatprep.mubr.f32.mxu0 %v8800
        %8903 = vmatmul.mubr.f32.gmra.mrb[0].mxu0 %v8724
        %v8904 = vpop.f32.mrb[0].mxu0
        %v8905 = vadd.f32 0.0, %v8904
        %v8906 = vpop.f32.mrb[0].mxu0
        %v8907 = vadd.f32 0.0, %v8906
        %8908 = vmatprep.mubr.f32.mxu0 %v8803
        %8909 = vmatmul.mubr.f32.gmra.mrb[0].mxu0 %v8730
        %v8910 = vpop.f32.mrb[0].mxu0
        %v8911 = vadd.f32 0.0, %v8910
        %v8912 = vpop.f32.mrb[0].mxu0
        %v8913 = vadd.f32 0.0, %v8912
        %8914 = vmatprep.mubr.f32.mxu0 %v8806
        %8915 = vmatmul.mubr.f32.gmra.mrb[0].mxu0 %v8736
        %v8916 = vpop.f32.mrb[0].mxu0
        %v8917 = vadd.f32 0.0, %v8916
        %v8918 = vpop.f32.mrb[0].mxu0
        %v8919 = vadd.f32 0.0, %v8918
        %8920 = vdwg.mxu0
        %v8921 = vadd.f32 %v8590, %v8881
        %v8922 = vadd.f32 %v8591, %v8883
        %v8923 = vadd.f32 %v8592, %v8887
        %v8924 = vadd.f32 %v8593, %v8889
        %v8925 = vadd.f32 %v8594, %v8893
        %v8926 = vadd.f32 %v8595, %v8895
        %v8927 = vadd.f32 %v8596, %v8899
        %v8928 = vadd.f32 %v8597, %v8901
        %v8929 = vadd.f32 %v8598, %v8905
        %v8930 = vadd.f32 %v8599, %v8907
        %v8931 = vadd.f32 %v8600, %v8911
        %v8932 = vadd.f32 %v8601, %v8913
        %v8933 = vadd.f32 %v8602, %v8917
        %v8934 = vadd.f32 %v8603, %v8919
        %v8935 = vld [vmem:[%s9] sm:$0x3]
        %v8937 = vlaneseq
        %v8938 = vshrl.u32 %v8937, 7
        %v8939 = vsub.s32 0, %v8938
        %v8940 = vrot.slane %v8935, %v8939
        %v8941 = vlaneseq
        %v8942 = vshrl.u32 %v8941, 7
        %v8943 = vsub.s32 1, %v8942
        %v8944 = vrot.slane %v8935, %v8943
        %v8947 = vadd.f32 %v8921, %v8940
        %v8948 = vadd.f32 %v8922, %v8944
        %v8949 = vadd.f32 %v8923, %v8940
        %v8950 = vadd.f32 %v8924, %v8944
        %v8951 = vadd.f32 %v8925, %v8940
        %v8952 = vadd.f32 %v8926, %v8944
        %v8953 = vadd.f32 %v8927, %v8940
        %v8954 = vadd.f32 %v8928, %v8944
        %v8955 = vadd.f32 %v8929, %v8940
        %v8956 = vadd.f32 %v8930, %v8944
        %v8957 = vadd.f32 %v8931, %v8940
        %v8958 = vadd.f32 %v8932, %v8944
        %v8959 = vadd.f32 %v8933, %v8940
        %v8960 = vadd.f32 %v8934, %v8944
        %v8961 = vmax.f32 %v8947, 0.0
        %v8962 = vmax.f32 %v8948, 0.0
        %v8963 = vmax.f32 %v8949, 0.0
        %v8964 = vmax.f32 %v8950, 0.0
        %v8965 = vmax.f32 %v8951, 0.0
        %v8966 = vmax.f32 %v8952, 0.0
        %v8967 = vmax.f32 %v8953, 0.0
        %v8968 = vmax.f32 %v8954, 0.0
        %v8969 = vmax.f32 %v8955, 0.0
        %v8970 = vmax.f32 %v8956, 0.0
        %v8971 = vmax.f32 %v8957, 0.0
        %v8972 = vmax.f32 %v8958, 0.0
        %v8973 = vmax.f32 %v8959, 0.0
        %v8974 = vmax.f32 %v8960, 0.0
        %v8975 = vld [vmem:[%s10] sm:$0xff]
        %vm8976 = vcmask 457728
        %v8978 = vsel %vm8976, %v8975, 0
        %8980 = vmatprep.subr.mxu0 %v8962
        %8981 = vmatpush1.msra.mxu0 %v8961
        %8982 = vmatprep.subr.mxu0 %v8964
        %8983 = vmatpush1.msra.mxu0 %v8963
        %8984 = vmatprep.subr.mxu0 %v8966
        %8985 = vmatpush1.msra.mxu0 %v8965
        %8986 = vmatprep.subr.mxu0 %v8968
        %8987 = vmatpush1.msra.mxu0 %v8967
        %8988 = vmatprep.subr.mxu0 %v8970
        %8989 = vmatpush1.msra.mxu0 %v8969
        %8990 = vmatprep.subr.mxu0 %v8972
        %8991 = vmatpush1.msra.mxu0 %v8971
        %8992 = vmatprep.subr.mxu0 %v8974
        %8993 = vmatpush1.msra.mxu0 %v8973
        %8994 = vmatprep.subr.mxu0 0.0
        %8995 = vmatpush1.msra.mxu0 0.0
        %8996 = vmatprep.subr.mxu0 0.0
        %8997 = vmatpush1.msra.mxu0 0.0
        %8998 = vmatprep.subr.mxu0 0.0
        %8999 = vmatpush1.msra.mxu0 0.0
        %9000 = vmatprep.subr.mxu0 0.0
        %9001 = vmatpush1.msra.mxu0 0.0
        %9002 = vmatprep.subr.mxu0 0.0
        %9003 = vmatpush1.msra.mxu0 0.0
        %9004 = vmatprep.subr.mxu0 0.0
        %9005 = vmatpush1.msra.mxu0 0.0
        %9006 = vmatprep.subr.mxu0 0.0
        %9007 = vmatpush1.msra.mxu0 0.0
        %9008 = vmatprep.subr.mxu0 0.0
        %9009 = vmatpush1.msra.mxu0 0.0
        %9010 = vmatprep.subr.mxu0 0.0
        %9011 = vmatpush1.msra.mxu0 0.0
        %9012 = vmatprep.subr.mxu0 0.0
        %9013 = vmatpush1.msra.mxu0 0.0
        %9014 = vmatprep.subr.mxu0 0.0
        %9015 = vmatpush1.msra.mxu0 0.0
        %9016 = vmatprep.subr.mxu0 0.0
        %9017 = vmatpush1.msra.mxu0 0.0
        %9018 = vmatprep.subr.mxu0 0.0
        %9019 = vmatpush1.msra.mxu0 0.0
        %9020 = vmatprep.subr.mxu0 0.0
        %9021 = vmatpush1.msra.mxu0 0.0
        %9022 = vmatprep.subr.mxu0 0.0
        %9023 = vmatpush1.msra.mxu0 0.0
        %9024 = vmatprep.subr.mxu0 0.0
        %9025 = vmatpush1.msra.mxu0 0.0
        %9026 = vmatprep.subr.mxu0 0.0
        %9027 = vmatpush1.msra.mxu0 0.0
        %9028 = vmatprep.subr.mxu0 0.0
        %9029 = vmatpush1.msra.mxu0 0.0
        %9030 = vmatprep.subr.mxu0 0.0
        %9031 = vmatpush1.msra.mxu0 0.0
        %9032 = vmatprep.subr.mxu0 0.0
        %9033 = vmatpush1.msra.mxu0 0.0
        %9034 = vmatprep.subr.mxu0 0.0
        %9035 = vmatpush1.msra.mxu0 0.0
        %9036 = vmatprep.subr.mxu0 0.0
        %9037 = vmatpush1.msra.mxu0 0.0
        %9038 = vmatprep.subr.mxu0 0.0
        %9039 = vmatpush1.msra.mxu0 0.0
        %9040 = vmatprep.subr.mxu0 0.0
        %9041 = vmatpush1.msra.mxu0 0.0
        %9042 = vmatprep.subr.mxu0 0.0
        %9043 = vmatpush1.msra.mxu0 0.0
        %9044 = vmatprep.mubr.f32.mxu0 0.0
        %9045 = vmatmul.mubr.f32.gmra.mrb[0].mxu0 %v8978
        %v9046 = vpop.f32.mrb[0].mxu0
        %v9047 = vadd.f32 0.0, %v9046
        %v9048 = vpop.f32.mrb[0].mxu0
        %v9049 = vadd.f32 0.0, %v9048
        %9050 = vdwg.mxu0
        %v9051 = vld [vmem:[%s11] sm:$0xff]
        %v9052 = vld [vmem:[%s11 + $0x8] sm:$0xff]
        %v9053 = vld [vmem:[%s11 + $0x10] sm:$0xff]
        %v9054 = vld [vmem:[%s11 + $0x18] sm:$0xff]
        %v9055 = vld [vmem:[%s11 + $0x20] sm:$0xff]
        %v9056 = vld [vmem:[%s11 + $0x28] sm:$0xff]
        %v9057 = vld [vmem:[%s11 + $0x30] sm:$0xff]
        %v9058 = vld [vmem:[%s11 + $0x38] sm:$0xff]
        %v9059 = vld [vmem:[%s11 + $0x40] sm:$0xff]
        %v9060 = vld [vmem:[%s11 + $0x48] sm:$0xff]
        %v9061 = vld [vmem:[%s11 + $0x50] sm:$0xff]
        %v9062 = vld [vmem:[%s11 + $0x58] sm:$0xff]
        %v9063 = vld [vmem:[%s11 + $0x60] sm:$0xff]
        %v9064 = vld [vmem:[%s11 + $0x68] sm:$0xff]
        %v9065 = vld [vmem:[%s11 + $0x70] sm:$0xff]
        %v9066 = vld [vmem:[%s11 + $0x78] sm:$0xff]
        %v9067 = vld [vmem:[%s11 + $0x80] sm:$0xff]
        %v9068 = vld [vmem:[%s11 + $0x88] sm:$0xff]
        %v9069 = vld [vmem:[%s11 + $0x90] sm:$0xff]
        %v9070 = vld [vmem:[%s11 + $0x98] sm:$0xff]
        %v9071 = vld [vmem:[%s11 + $0xa0] sm:$0xff]
        %v9072 = vld [vmem:[%s11 + $0xa8] sm:$0xff]
        %v9073 = vld [vmem:[%s11 + $0xb0] sm:$0xff]
        %v9074 = vld [vmem:[%s11 + $0xb8] sm:$0xff]
        %v9075 = vld [vmem:[%s11 + $0xc0] sm:$0xff]
        %v9076 = vld [vmem:[%s11 + $0xc8] sm:$0xff]
        %v9077 = vld [vmem:[%s11 + $0xd0] sm:$0xff]
        %v9078 = vld [vmem:[%s11 + $0xd8] sm:$0xff]
        %v9079 = vld [vmem:[%s11 + $0xe0] sm:$0xff]
        %v9080 = vld [vmem:[%s11 + $0xe8] sm:$0xff]
        %v9081 = vld [vmem:[%s11 + $0xf0] sm:$0xff]
        %v9082 = vld [vmem:[%s11 + $0xf8] sm:$0xff]
        %v9083 = vld [vmem:[%s11 + $0x100] sm:$0xff]
        %v9084 = vld [vmem:[%s11 + $0x108] sm:$0xff]
        %v9085 = vld [vmem:[%s11 + $0x110] sm:$0xff]
        %v9086 = vld [vmem:[%s11 + $0x118] sm:$0xff]
        %v9087 = vld [vmem:[%s11 + $0x120] sm:$0xff]
        %v9088 = vld [vmem:[%s11 + $0x128] sm:$0xff]
        %v9089 = vld [vmem:[%s11 + $0x130] sm:$0xff]
        %v9090 = vld [vmem:[%s11 + $0x138] sm:$0xff]
        %v9091 = vld [vmem:[%s11 + $0x140] sm:$0xff]
        %v9092 = vld [vmem:[%s11 + $0x148] sm:$0xff]
        %s9093 = scalar_lea.vmem %s10, 8
        %v9094 = vld [vmem:[%s9093] sm:$0xff]
        %v9096 = vsel %vm8976, %v9094, 0
        %9098 = vmatprep.subr.mxu0 %v8962
        %9099 = vmatpush1.msra.mxu0 %v8961
        %9100 = vmatprep.subr.mxu0 %v8964
        %9101 = vmatpush1.msra.mxu0 %v8963
        %9102 = vmatprep.subr.mxu0 %v8966
        %9103 = vmatpush1.msra.mxu0 %v8965
        %9104 = vmatprep.subr.mxu0 %v8968
        %9105 = vmatpush1.msra.mxu0 %v8967
        %9106 = vmatprep.subr.mxu0 %v8970
        %9107 = vmatpush1.msra.mxu0 %v8969
        %9108 = vmatprep.subr.mxu0 %v8972
        %9109 = vmatpush1.msra.mxu0 %v8971
        %9110 = vmatprep.subr.mxu0 %v8974
        %9111 = vmatpush1.msra.mxu0 %v8973
        %9112 = vmatprep.subr.mxu0 0.0
        %9113 = vmatpush1.msra.mxu0 0.0
        %9114 = vmatprep.subr.mxu0 0.0
        %9115 = vmatpush1.msra.mxu0 0.0
        %9116 = vmatprep.subr.mxu0 0.0
        %9117 = vmatpush1.msra.mxu0 0.0
        %9118 = vmatprep.subr.mxu0 0.0
        %9119 = vmatpush1.msra.mxu0 0.0
        %9120 = vmatprep.subr.mxu0 0.0
        %9121 = vmatpush1.msra.mxu0 0.0
        %9122 = vmatprep.subr.mxu0 0.0
        %9123 = vmatpush1.msra.mxu0 0.0
        %9124 = vmatprep.subr.mxu0 0.0
        %9125 = vmatpush1.msra.mxu0 0.0
        %9126 = vmatprep.subr.mxu0 0.0
        %9127 = vmatpush1.msra.mxu0 0.0
        %9128 = vmatprep.subr.mxu0 0.0
        %9129 = vmatpush1.msra.mxu0 0.0
        %9130 = vmatprep.subr.mxu0 0.0
        %9131 = vmatpush1.msra.mxu0 0.0
        %9132 = vmatprep.subr.mxu0 0.0
        %9133 = vmatpush1.msra.mxu0 0.0
        %9134 = vmatprep.subr.mxu0 0.0
        %9135 = vmatpush1.msra.mxu0 0.0
        %9136 = vmatprep.subr.mxu0 0.0
        %9137 = vmatpush1.msra.mxu0 0.0
        %9138 = vmatprep.subr.mxu0 0.0
        %9139 = vmatpush1.msra.mxu0 0.0
        %9140 = vmatprep.subr.mxu0 0.0
        %9141 = vmatpush1.msra.mxu0 0.0
        %9142 = vmatprep.subr.mxu0 0.0
        %9143 = vmatpush1.msra.mxu0 0.0
        %9144 = vmatprep.subr.mxu0 0.0
        %9145 = vmatpush1.msra.mxu0 0.0
        %9146 = vmatprep.subr.mxu0 0.0
        %9147 = vmatpush1.msra.mxu0 0.0
        %9148 = vmatprep.subr.mxu0 0.0
        %9149 = vmatpush1.msra.mxu0 0.0
        %9150 = vmatprep.subr.mxu0 0.0
        %9151 = vmatpush1.msra.mxu0 0.0
        %9152 = vmatprep.subr.mxu0 0.0
        %9153 = vmatpush1.msra.mxu0 0.0
        %9154 = vmatprep.subr.mxu0 0.0
        %9155 = vmatpush1.msra.mxu0 0.0
        %9156 = vmatprep.subr.mxu0 0.0
        %9157 = vmatpush1.msra.mxu0 0.0
        %9158 = vmatprep.subr.mxu0 0.0
        %9159 = vmatpush1.msra.mxu0 0.0
        %9160 = vmatprep.subr.mxu0 0.0
        %9161 = vmatpush1.msra.mxu0 0.0
        %9162 = vmatprep.mubr.f32.mxu0 0.0
        %9163 = vmatmul.mubr.f32.gmra.mrb[0].mxu0 %v9096
        %v9164 = vpop.f32.mrb[0].mxu0
        %v9165 = vadd.f32 0.0, %v9164
        %v9166 = vpop.f32.mrb[0].mxu0
        %v9167 = vadd.f32 0.0, %v9166
        %9168 = vdwg.mxu0
        %s9169 = scalar_lea.vmem %s11, 336
        %v9170 = vld [vmem:[%s9169] sm:$0xff]
        %v9171 = vld [vmem:[%s9169 + $0x8] sm:$0xff]
        %v9172 = vld [vmem:[%s9169 + $0x10] sm:$0xff]
        %v9173 = vld [vmem:[%s9169 + $0x18] sm:$0xff]
        %v9174 = vld [vmem:[%s9169 + $0x20] sm:$0xff]
        %v9175 = vld [vmem:[%s9169 + $0x28] sm:$0xff]
        %v9176 = vld [vmem:[%s9169 + $0x30] sm:$0xff]
        %v9177 = vld [vmem:[%s9169 + $0x38] sm:$0xff]
        %v9178 = vld [vmem:[%s9169 + $0x40] sm:$0xff]
        %v9179 = vld [vmem:[%s9169 + $0x48] sm:$0xff]
        %v9180 = vld [vmem:[%s9169 + $0x50] sm:$0xff]
        %v9181 = vld [vmem:[%s9169 + $0x58] sm:$0xff]
        %v9182 = vld [vmem:[%s9169 + $0x60] sm:$0xff]
        %v9183 = vld [vmem:[%s9169 + $0x68] sm:$0xff]
        %v9184 = vld [vmem:[%s9169 + $0x70] sm:$0xff]
        %v9185 = vld [vmem:[%s9169 + $0x78] sm:$0xff]
        %v9186 = vld [vmem:[%s9169 + $0x80] sm:$0xff]
        %v9187 = vld [vmem:[%s9169 + $0x88] sm:$0xff]
        %v9188 = vld [vmem:[%s9169 + $0x90] sm:$0xff]
        %v9189 = vld [vmem:[%s9169 + $0x98] sm:$0xff]
        %v9190 = vld [vmem:[%s9169 + $0xa0] sm:$0xff]
        %v9191 = vld [vmem:[%s9169 + $0xa8] sm:$0xff]
        %v9192 = vld [vmem:[%s9169 + $0xb0] sm:$0xff]
        %v9193 = vld [vmem:[%s9169 + $0xb8] sm:$0xff]
        %v9194 = vld [vmem:[%s9169 + $0xc0] sm:$0xff]
        %v9195 = vld [vmem:[%s9169 + $0xc8] sm:$0xff]
        %v9196 = vld [vmem:[%s9169 + $0xd0] sm:$0xff]
        %v9197 = vld [vmem:[%s9169 + $0xd8] sm:$0xff]
        %v9198 = vld [vmem:[%s9169 + $0xe0] sm:$0xff]
        %v9199 = vld [vmem:[%s9169 + $0xe8] sm:$0xff]
        %v9200 = vld [vmem:[%s9169 + $0xf0] sm:$0xff]
        %v9201 = vld [vmem:[%s9169 + $0xf8] sm:$0xff]
        %v9202 = vld [vmem:[%s9169 + $0x100] sm:$0xff]
        %v9203 = vld [vmem:[%s9169 + $0x108] sm:$0xff]
        %v9204 = vld [vmem:[%s9169 + $0x110] sm:$0xff]
        %v9205 = vld [vmem:[%s9169 + $0x118] sm:$0xff]
        %v9206 = vld [vmem:[%s9169 + $0x120] sm:$0xff]
        %v9207 = vld [vmem:[%s9169 + $0x128] sm:$0xff]
        %v9208 = vld [vmem:[%s9169 + $0x130] sm:$0xff]
        %v9209 = vld [vmem:[%s9169 + $0x138] sm:$0xff]
        %v9210 = vld [vmem:[%s9169 + $0x140] sm:$0xff]
        %v9211 = vld [vmem:[%s9169 + $0x148] sm:$0xff]
        %vm9212 = vcmask 326656
        %v9214 = vsel %vm9212, %v9167, 0
        %9216 = vmatprep.subr.mxu0 %v9171
        %9217 = vmatpush1.msra.mxu0 %v9170
        %9218 = vmatprep.subr.mxu0 %v9173
        %9219 = vmatpush1.msra.mxu0 %v9172
        %9220 = vmatprep.subr.mxu0 %v9175
        %9221 = vmatpush1.msra.mxu0 %v9174
        %9222 = vmatprep.subr.mxu0 %v9177
        %9223 = vmatpush1.msra.mxu0 %v9176
        %9224 = vmatprep.subr.mxu0 %v9179
        %9225 = vmatpush1.msra.mxu0 %v9178
        %9226 = vmatprep.subr.mxu0 %v9181
        %9227 = vmatpush1.msra.mxu0 %v9180
        %9228 = vmatprep.subr.mxu0 %v9183
        %9229 = vmatpush1.msra.mxu0 %v9182
        %9230 = vmatprep.subr.mxu0 %v9185
        %9231 = vmatpush1.msra.mxu0 %v9184
        %9232 = vmatprep.subr.mxu0 %v9187
        %9233 = vmatpush1.msra.mxu0 %v9186
        %9234 = vmatprep.subr.mxu0 %v9189
        %9235 = vmatpush1.msra.mxu0 %v9188
        %9236 = vmatprep.subr.mxu0 %v9191
        %9237 = vmatpush1.msra.mxu0 %v9190
        %9238 = vmatprep.subr.mxu0 %v9193
        %9239 = vmatpush1.msra.mxu0 %v9192
        %9240 = vmatprep.subr.mxu0 %v9195
        %9241 = vmatpush1.msra.mxu0 %v9194
        %9242 = vmatprep.subr.mxu0 %v9197
        %9243 = vmatpush1.msra.mxu0 %v9196
        %9244 = vmatprep.subr.mxu0 %v9199
        %9245 = vmatpush1.msra.mxu0 %v9198
        %9246 = vmatprep.subr.mxu0 %v9201
        %9247 = vmatpush1.msra.mxu0 %v9200
        %9248 = vmatprep.subr.mxu0 %v9203
        %9249 = vmatpush1.msra.mxu0 %v9202
        %9250 = vmatprep.subr.mxu0 %v9205
        %9251 = vmatpush1.msra.mxu0 %v9204
        %9252 = vmatprep.subr.mxu0 %v9207
        %9253 = vmatpush1.msra.mxu0 %v9206
        %9254 = vmatprep.subr.mxu0 %v9209
        %9255 = vmatpush1.msra.mxu0 %v9208
        %9256 = vmatprep.subr.mxu0 %v9211
        %9257 = vmatpush1.msra.mxu0 %v9210
        %9258 = vmatprep.subr.mxu0 0.0
        %9259 = vmatpush1.msra.mxu0 0.0
        %9260 = vmatprep.subr.mxu0 0.0
        %9261 = vmatpush1.msra.mxu0 0.0
        %9262 = vmatprep.subr.mxu0 0.0
        %9263 = vmatpush1.msra.mxu0 0.0
        %9264 = vmatprep.subr.mxu0 0.0
        %9265 = vmatpush1.msra.mxu0 0.0
        %9266 = vmatprep.subr.mxu0 0.0
        %9267 = vmatpush1.msra.mxu0 0.0
        %9268 = vmatprep.subr.mxu0 0.0
        %9269 = vmatpush1.msra.mxu0 0.0
        %9270 = vmatprep.subr.mxu0 0.0
        %9271 = vmatpush1.msra.mxu0 0.0
        %9272 = vmatprep.subr.mxu0 0.0
        %9273 = vmatpush1.msra.mxu0 0.0
        %9274 = vmatprep.subr.mxu0 0.0
        %9275 = vmatpush1.msra.mxu0 0.0
        %9276 = vmatprep.subr.mxu0 0.0
        %9277 = vmatpush1.msra.mxu0 0.0
        %9278 = vmatprep.subr.mxu0 0.0
        %9279 = vmatpush1.msra.mxu0 0.0
        %9280 = vmatprep.mubr.f32.mxu0 %v9214
        %9281 = vmatmul.mubr.f32.gmra.mrb[0].mxu0 %v9165
        %v9282 = vpop.f32.mrb[0].mxu0
        %v9283 = vadd.f32 0.0, %v9282
        %v9284 = vpop.f32.mrb[0].mxu0
        %v9285 = vadd.f32 0.0, %v9284
        %9286 = vdwg.mxu0
        %v9288 = vsel %vm9212, %v9049, 0
        %9290 = vmatprep.subr.mxu0 %v9052
        %9291 = vmatpush1.msra.mxu0 %v9051
        %9292 = vmatprep.subr.mxu0 %v9054
        %9293 = vmatpush1.msra.mxu0 %v9053
        %9294 = vmatprep.subr.mxu0 %v9056
        %9295 = vmatpush1.msra.mxu0 %v9055
        %9296 = vmatprep.subr.mxu0 %v9058
        %9297 = vmatpush1.msra.mxu0 %v9057
        %9298 = vmatprep.subr.mxu0 %v9060
        %9299 = vmatpush1.msra.mxu0 %v9059
        %9300 = vmatprep.subr.mxu0 %v9062
        %9301 = vmatpush1.msra.mxu0 %v9061
        %9302 = vmatprep.subr.mxu0 %v9064
        %9303 = vmatpush1.msra.mxu0 %v9063
        %9304 = vmatprep.subr.mxu0 %v9066
        %9305 = vmatpush1.msra.mxu0 %v9065
        %9306 = vmatprep.subr.mxu0 %v9068
        %9307 = vmatpush1.msra.mxu0 %v9067
        %9308 = vmatprep.subr.mxu0 %v9070
        %9309 = vmatpush1.msra.mxu0 %v9069
        %9310 = vmatprep.subr.mxu0 %v9072
        %9311 = vmatpush1.msra.mxu0 %v9071
        %9312 = vmatprep.subr.mxu0 %v9074
        %9313 = vmatpush1.msra.mxu0 %v9073
        %9314 = vmatprep.subr.mxu0 %v9076
        %9315 = vmatpush1.msra.mxu0 %v9075
        %9316 = vmatprep.subr.mxu0 %v9078
        %9317 = vmatpush1.msra.mxu0 %v9077
        %9318 = vmatprep.subr.mxu0 %v9080
        %9319 = vmatpush1.msra.mxu0 %v9079
        %9320 = vmatprep.subr.mxu0 %v9082
        %9321 = vmatpush1.msra.mxu0 %v9081
        %9322 = vmatprep.subr.mxu0 %v9084
        %9323 = vmatpush1.msra.mxu0 %v9083
        %9324 = vmatprep.subr.mxu0 %v9086
        %9325 = vmatpush1.msra.mxu0 %v9085
        %9326 = vmatprep.subr.mxu0 %v9088
        %9327 = vmatpush1.msra.mxu0 %v9087
        %9328 = vmatprep.subr.mxu0 %v9090
        %9329 = vmatpush1.msra.mxu0 %v9089
        %9330 = vmatprep.subr.mxu0 %v9092
        %9331 = vmatpush1.msra.mxu0 %v9091
        %9332 = vmatprep.subr.mxu0 0.0
        %9333 = vmatpush1.msra.mxu0 0.0
        %9334 = vmatprep.subr.mxu0 0.0
        %9335 = vmatpush1.msra.mxu0 0.0
        %9336 = vmatprep.subr.mxu0 0.0
        %9337 = vmatpush1.msra.mxu0 0.0
        %9338 = vmatprep.subr.mxu0 0.0
        %9339 = vmatpush1.msra.mxu0 0.0
        %9340 = vmatprep.subr.mxu0 0.0
        %9341 = vmatpush1.msra.mxu0 0.0
        %9342 = vmatprep.subr.mxu0 0.0
        %9343 = vmatpush1.msra.mxu0 0.0
        %9344 = vmatprep.subr.mxu0 0.0
        %9345 = vmatpush1.msra.mxu0 0.0
        %9346 = vmatprep.subr.mxu0 0.0
        %9347 = vmatpush1.msra.mxu0 0.0
        %9348 = vmatprep.subr.mxu0 0.0
        %9349 = vmatpush1.msra.mxu0 0.0
        %9350 = vmatprep.subr.mxu0 0.0
        %9351 = vmatpush1.msra.mxu0 0.0
        %9352 = vmatprep.subr.mxu0 0.0
        %9353 = vmatpush1.msra.mxu0 0.0
        %9354 = vmatprep.mubr.f32.mxu0 %v9288
        %9355 = vmatmul.mubr.f32.gmra.mrb[0].mxu0 %v9047
        %v9356 = vpop.f32.mrb[0].mxu0
        %v9357 = vadd.f32 %v9283, %v9356
        %v9358 = vpop.f32.mrb[0].mxu0
        %v9359 = vadd.f32 %v9285, %v9358
        %9360 = vdwg.mxu0
        %s9361 = scalar_lea.vmem %s10, 16
        %v9362 = vld [vmem:[%s9361] sm:$0xff]
        %v9364 = vsel %vm8976, %v9362, 0
        %9366 = vmatprep.subr.mxu0 %v8962
        %9367 = vmatpush1.msra.mxu0 %v8961
        %9368 = vmatprep.subr.mxu0 %v8964
        %9369 = vmatpush1.msra.mxu0 %v8963
        %9370 = vmatprep.subr.mxu0 %v8966
        %9371 = vmatpush1.msra.mxu0 %v8965
        %9372 = vmatprep.subr.mxu0 %v8968
        %9373 = vmatpush1.msra.mxu0 %v8967
        %9374 = vmatprep.subr.mxu0 %v8970
        %9375 = vmatpush1.msra.mxu0 %v8969
        %9376 = vmatprep.subr.mxu0 %v8972
        %9377 = vmatpush1.msra.mxu0 %v8971
        %9378 = vmatprep.subr.mxu0 %v8974
        %9379 = vmatpush1.msra.mxu0 %v8973
        %9380 = vmatprep.subr.mxu0 0.0
        %9381 = vmatpush1.msra.mxu0 0.0
        %9382 = vmatprep.subr.mxu0 0.0
        %9383 = vmatpush1.msra.mxu0 0.0
        %9384 = vmatprep.subr.mxu0 0.0
        %9385 = vmatpush1.msra.mxu0 0.0
        %9386 = vmatprep.subr.mxu0 0.0
        %9387 = vmatpush1.msra.mxu0 0.0
        %9388 = vmatprep.subr.mxu0 0.0
        %9389 = vmatpush1.msra.mxu0 0.0
        %9390 = vmatprep.subr.mxu0 0.0
        %9391 = vmatpush1.msra.mxu0 0.0
        %9392 = vmatprep.subr.mxu0 0.0
        %9393 = vmatpush1.msra.mxu0 0.0
        %9394 = vmatprep.subr.mxu0 0.0
        %9395 = vmatpush1.msra.mxu0 0.0
        %9396 = vmatprep.subr.mxu0 0.0
        %9397 = vmatpush1.msra.mxu0 0.0
        %9398 = vmatprep.subr.mxu0 0.0
        %9399 = vmatpush1.msra.mxu0 0.0
        %9400 = vmatprep.subr.mxu0 0.0
        %9401 = vmatpush1.msra.mxu0 0.0
        %9402 = vmatprep.subr.mxu0 0.0
        %9403 = vmatpush1.msra.mxu0 0.0
        %9404 = vmatprep.subr.mxu0 0.0
        %9405 = vmatpush1.msra.mxu0 0.0
        %9406 = vmatprep.subr.mxu0 0.0
        %9407 = vmatpush1.msra.mxu0 0.0
        %9408 = vmatprep.subr.mxu0 0.0
        %9409 = vmatpush1.msra.mxu0 0.0
        %9410 = vmatprep.subr.mxu0 0.0
        %9411 = vmatpush1.msra.mxu0 0.0
        %9412 = vmatprep.subr.mxu0 0.0
        %9413 = vmatpush1.msra.mxu0 0.0
        %9414 = vmatprep.subr.mxu0 0.0
        %9415 = vmatpush1.msra.mxu0 0.0
        %9416 = vmatprep.subr.mxu0 0.0
        %9417 = vmatpush1.msra.mxu0 0.0
        %9418 = vmatprep.subr.mxu0 0.0
        %9419 = vmatpush1.msra.mxu0 0.0
        %9420 = vmatprep.subr.mxu0 0.0
        %9421 = vmatpush1.msra.mxu0 0.0
        %9422 = vmatprep.subr.mxu0 0.0
        %9423 = vmatpush1.msra.mxu0 0.0
        %9424 = vmatprep.subr.mxu0 0.0
        %9425 = vmatpush1.msra.mxu0 0.0
        %9426 = vmatprep.subr.mxu0 0.0
        %9427 = vmatpush1.msra.mxu0 0.0
        %9428 = vmatprep.subr.mxu0 0.0
        %9429 = vmatpush1.msra.mxu0 0.0
        %9430 = vmatprep.mubr.f32.mxu0 0.0
        %9431 = vmatmul.mubr.f32.gmra.mrb[0].mxu0 %v9364
        %v9432 = vpop.f32.mrb[0].mxu0
        %v9433 = vadd.f32 0.0, %v9432
        %v9434 = vpop.f32.mrb[0].mxu0
        %v9435 = vadd.f32 0.0, %v9434
        %9436 = vdwg.mxu0
        %s9437 = scalar_lea.vmem %s11, 672
        %v9438 = vld [vmem:[%s9437] sm:$0xff]
        %v9439 = vld [vmem:[%s9437 + $0x8] sm:$0xff]
        %v9440 = vld [vmem:[%s9437 + $0x10] sm:$0xff]
        %v9441 = vld [vmem:[%s9437 + $0x18] sm:$0xff]
        %v9442 = vld [vmem:[%s9437 + $0x20] sm:$0xff]
        %v9443 = vld [vmem:[%s9437 + $0x28] sm:$0xff]
        %v9444 = vld [vmem:[%s9437 + $0x30] sm:$0xff]
        %v9445 = vld [vmem:[%s9437 + $0x38] sm:$0xff]
        %v9446 = vld [vmem:[%s9437 + $0x40] sm:$0xff]
        %v9447 = vld [vmem:[%s9437 + $0x48] sm:$0xff]
        %v9448 = vld [vmem:[%s9437 + $0x50] sm:$0xff]
        %v9449 = vld [vmem:[%s9437 + $0x58] sm:$0xff]
        %v9450 = vld [vmem:[%s9437 + $0x60] sm:$0xff]
        %v9451 = vld [vmem:[%s9437 + $0x68] sm:$0xff]
        %v9452 = vld [vmem:[%s9437 + $0x70] sm:$0xff]
        %v9453 = vld [vmem:[%s9437 + $0x78] sm:$0xff]
        %v9454 = vld [vmem:[%s9437 + $0x80] sm:$0xff]
        %v9455 = vld [vmem:[%s9437 + $0x88] sm:$0xff]
        %v9456 = vld [vmem:[%s9437 + $0x90] sm:$0xff]
        %v9457 = vld [vmem:[%s9437 + $0x98] sm:$0xff]
        %v9458 = vld [vmem:[%s9437 + $0xa0] sm:$0xff]
        %v9459 = vld [vmem:[%s9437 + $0xa8] sm:$0xff]
        %v9460 = vld [vmem:[%s9437 + $0xb0] sm:$0xff]
        %v9461 = vld [vmem:[%s9437 + $0xb8] sm:$0xff]
        %v9462 = vld [vmem:[%s9437 + $0xc0] sm:$0xff]
        %v9463 = vld [vmem:[%s9437 + $0xc8] sm:$0xff]
        %v9464 = vld [vmem:[%s9437 + $0xd0] sm:$0xff]
        %v9465 = vld [vmem:[%s9437 + $0xd8] sm:$0xff]
        %v9466 = vld [vmem:[%s9437 + $0xe0] sm:$0xff]
        %v9467 = vld [vmem:[%s9437 + $0xe8] sm:$0xff]
        %v9468 = vld [vmem:[%s9437 + $0xf0] sm:$0xff]
        %v9469 = vld [vmem:[%s9437 + $0xf8] sm:$0xff]
        %v9470 = vld [vmem:[%s9437 + $0x100] sm:$0xff]
        %v9471 = vld [vmem:[%s9437 + $0x108] sm:$0xff]
        %v9472 = vld [vmem:[%s9437 + $0x110] sm:$0xff]
        %v9473 = vld [vmem:[%s9437 + $0x118] sm:$0xff]
        %v9474 = vld [vmem:[%s9437 + $0x120] sm:$0xff]
        %v9475 = vld [vmem:[%s9437 + $0x128] sm:$0xff]
        %v9476 = vld [vmem:[%s9437 + $0x130] sm:$0xff]
        %v9477 = vld [vmem:[%s9437 + $0x138] sm:$0xff]
        %v9478 = vld [vmem:[%s9437 + $0x140] sm:$0xff]
        %v9479 = vld [vmem:[%s9437 + $0x148] sm:$0xff]
        %v9481 = vsel %vm9212, %v9435, 0
        %9483 = vmatprep.subr.mxu0 %v9439
        %9484 = vmatpush1.msra.mxu0 %v9438
        %9485 = vmatprep.subr.mxu0 %v9441
        %9486 = vmatpush1.msra.mxu0 %v9440
        %9487 = vmatprep.subr.mxu0 %v9443
        %9488 = vmatpush1.msra.mxu0 %v9442
        %9489 = vmatprep.subr.mxu0 %v9445
        %9490 = vmatpush1.msra.mxu0 %v9444
        %9491 = vmatprep.subr.mxu0 %v9447
        %9492 = vmatpush1.msra.mxu0 %v9446
        %9493 = vmatprep.subr.mxu0 %v9449
        %9494 = vmatpush1.msra.mxu0 %v9448
        %9495 = vmatprep.subr.mxu0 %v9451
        %9496 = vmatpush1.msra.mxu0 %v9450
        %9497 = vmatprep.subr.mxu0 %v9453
        %9498 = vmatpush1.msra.mxu0 %v9452
        %9499 = vmatprep.subr.mxu0 %v9455
        %9500 = vmatpush1.msra.mxu0 %v9454
        %9501 = vmatprep.subr.mxu0 %v9457
        %9502 = vmatpush1.msra.mxu0 %v9456
        %9503 = vmatprep.subr.mxu0 %v9459
        %9504 = vmatpush1.msra.mxu0 %v9458
        %9505 = vmatprep.subr.mxu0 %v9461
        %9506 = vmatpush1.msra.mxu0 %v9460
        %9507 = vmatprep.subr.mxu0 %v9463
        %9508 = vmatpush1.msra.mxu0 %v9462
        %9509 = vmatprep.subr.mxu0 %v9465
        %9510 = vmatpush1.msra.mxu0 %v9464
        %9511 = vmatprep.subr.mxu0 %v9467
        %9512 = vmatpush1.msra.mxu0 %v9466
        %9513 = vmatprep.subr.mxu0 %v9469
        %9514 = vmatpush1.msra.mxu0 %v9468
        %9515 = vmatprep.subr.mxu0 %v9471
        %9516 = vmatpush1.msra.mxu0 %v9470
        %9517 = vmatprep.subr.mxu0 %v9473
        %9518 = vmatpush1.msra.mxu0 %v9472
        %9519 = vmatprep.subr.mxu0 %v9475
        %9520 = vmatpush1.msra.mxu0 %v9474
        %9521 = vmatprep.subr.mxu0 %v9477
        %9522 = vmatpush1.msra.mxu0 %v9476
        %9523 = vmatprep.subr.mxu0 %v9479
        %9524 = vmatpush1.msra.mxu0 %v9478
        %9525 = vmatprep.subr.mxu0 0.0
        %9526 = vmatpush1.msra.mxu0 0.0
        %9527 = vmatprep.subr.mxu0 0.0
        %9528 = vmatpush1.msra.mxu0 0.0
        %9529 = vmatprep.subr.mxu0 0.0
        %9530 = vmatpush1.msra.mxu0 0.0
        %9531 = vmatprep.subr.mxu0 0.0
        %9532 = vmatpush1.msra.mxu0 0.0
        %9533 = vmatprep.subr.mxu0 0.0
        %9534 = vmatpush1.msra.mxu0 0.0
        %9535 = vmatprep.subr.mxu0 0.0
        %9536 = vmatpush1.msra.mxu0 0.0
        %9537 = vmatprep.subr.mxu0 0.0
        %9538 = vmatpush1.msra.mxu0 0.0
        %9539 = vmatprep.subr.mxu0 0.0
        %9540 = vmatpush1.msra.mxu0 0.0
        %9541 = vmatprep.subr.mxu0 0.0
        %9542 = vmatpush1.msra.mxu0 0.0
        %9543 = vmatprep.subr.mxu0 0.0
        %9544 = vmatpush1.msra.mxu0 0.0
        %9545 = vmatprep.subr.mxu0 0.0
        %9546 = vmatpush1.msra.mxu0 0.0
        %9547 = vmatprep.mubr.f32.mxu0 %v9481
        %9548 = vmatmul.mubr.f32.gmra.mrb[0].mxu0 %v9433
        %v9549 = vpop.f32.mrb[0].mxu0
        %v9550 = vadd.f32 0.0, %v9549
        %v9551 = vpop.f32.mrb[0].mxu0
        %v9552 = vadd.f32 0.0, %v9551
        %9553 = vdwg.mxu0
        %v9554 = vadd.f32 %v9357, %v9550
        %v9555 = vadd.f32 %v9359, %v9552
        %s9556 = scalar_lea.vmem %s10, 24
        %v9557 = vld [vmem:[%s9556] sm:$0xff]
        %v9559 = vsel %vm8976, %v9557, 0
        %9561 = vmatprep.subr.mxu0 %v8962
        %9562 = vmatpush1.msra.mxu0 %v8961
        %9563 = vmatprep.subr.mxu0 %v8964
        %9564 = vmatpush1.msra.mxu0 %v8963
        %9565 = vmatprep.subr.mxu0 %v8966
        %9566 = vmatpush1.msra.mxu0 %v8965
        %9567 = vmatprep.subr.mxu0 %v8968
        %9568 = vmatpush1.msra.mxu0 %v8967
        %9569 = vmatprep.subr.mxu0 %v8970
        %9570 = vmatpush1.msra.mxu0 %v8969
        %9571 = vmatprep.subr.mxu0 %v8972
        %9572 = vmatpush1.msra.mxu0 %v8971
        %9573 = vmatprep.subr.mxu0 %v8974
        %9574 = vmatpush1.msra.mxu0 %v8973
        %9575 = vmatprep.subr.mxu0 0.0
        %9576 = vmatpush1.msra.mxu0 0.0
        %9577 = vmatprep.subr.mxu0 0.0
        %9578 = vmatpush1.msra.mxu0 0.0
        %9579 = vmatprep.subr.mxu0 0.0
        %9580 = vmatpush1.msra.mxu0 0.0
        %9581 = vmatprep.subr.mxu0 0.0
        %9582 = vmatpush1.msra.mxu0 0.0
        %9583 = vmatprep.subr.mxu0 0.0
        %9584 = vmatpush1.msra.mxu0 0.0
        %9585 = vmatprep.subr.mxu0 0.0
        %9586 = vmatpush1.msra.mxu0 0.0
        %9587 = vmatprep.subr.mxu0 0.0
        %9588 = vmatpush1.msra.mxu0 0.0
        %9589 = vmatprep.subr.mxu0 0.0
        %9590 = vmatpush1.msra.mxu0 0.0
        %9591 = vmatprep.subr.mxu0 0.0
        %9592 = vmatpush1.msra.mxu0 0.0
        %9593 = vmatprep.subr.mxu0 0.0
        %9594 = vmatpush1.msra.mxu0 0.0
        %9595 = vmatprep.subr.mxu0 0.0
        %9596 = vmatpush1.msra.mxu0 0.0
        %9597 = vmatprep.subr.mxu0 0.0
        %9598 = vmatpush1.msra.mxu0 0.0
        %9599 = vmatprep.subr.mxu0 0.0
        %9600 = vmatpush1.msra.mxu0 0.0
        %9601 = vmatprep.subr.mxu0 0.0
        %9602 = vmatpush1.msra.mxu0 0.0
        %9603 = vmatprep.subr.mxu0 0.0
        %9604 = vmatpush1.msra.mxu0 0.0
        %9605 = vmatprep.subr.mxu0 0.0
        %9606 = vmatpush1.msra.mxu0 0.0
        %9607 = vmatprep.subr.mxu0 0.0
        %9608 = vmatpush1.msra.mxu0 0.0
        %9609 = vmatprep.subr.mxu0 0.0
        %9610 = vmatpush1.msra.mxu0 0.0
        %9611 = vmatprep.subr.mxu0 0.0
        %9612 = vmatpush1.msra.mxu0 0.0
        %9613 = vmatprep.subr.mxu0 0.0
        %9614 = vmatpush1.msra.mxu0 0.0
        %9615 = vmatprep.subr.mxu0 0.0
        %9616 = vmatpush1.msra.mxu0 0.0
        %9617 = vmatprep.subr.mxu0 0.0
        %9618 = vmatpush1.msra.mxu0 0.0
        %9619 = vmatprep.subr.mxu0 0.0
        %9620 = vmatpush1.msra.mxu0 0.0
        %9621 = vmatprep.subr.mxu0 0.0
        %9622 = vmatpush1.msra.mxu0 0.0
        %9623 = vmatprep.subr.mxu0 0.0
        %9624 = vmatpush1.msra.mxu0 0.0
        %9625 = vmatprep.mubr.f32.mxu0 0.0
        %9626 = vmatmul.mubr.f32.gmra.mrb[0].mxu0 %v9559
        %v9627 = vpop.f32.mrb[0].mxu0
        %v9628 = vadd.f32 0.0, %v9627
        %v9629 = vpop.f32.mrb[0].mxu0
        %v9630 = vadd.f32 0.0, %v9629
        %9631 = vdwg.mxu0
        %s9632 = scalar_lea.vmem %s11, 1008
        %v9633 = vld [vmem:[%s9632] sm:$0xff]
        %v9634 = vld [vmem:[%s9632 + $0x8] sm:$0xff]
        %v9635 = vld [vmem:[%s9632 + $0x10] sm:$0xff]
        %v9636 = vld [vmem:[%s9632 + $0x18] sm:$0xff]
        %v9637 = vld [vmem:[%s9632 + $0x20] sm:$0xff]
        %v9638 = vld [vmem:[%s9632 + $0x28] sm:$0xff]
        %v9639 = vld [vmem:[%s9632 + $0x30] sm:$0xff]
        %v9640 = vld [vmem:[%s9632 + $0x38] sm:$0xff]
        %v9641 = vld [vmem:[%s9632 + $0x40] sm:$0xff]
        %v9642 = vld [vmem:[%s9632 + $0x48] sm:$0xff]
        %v9643 = vld [vmem:[%s9632 + $0x50] sm:$0xff]
        %v9644 = vld [vmem:[%s9632 + $0x58] sm:$0xff]
        %v9645 = vld [vmem:[%s9632 + $0x60] sm:$0xff]
        %v9646 = vld [vmem:[%s9632 + $0x68] sm:$0xff]
        %v9647 = vld [vmem:[%s9632 + $0x70] sm:$0xff]
        %v9648 = vld [vmem:[%s9632 + $0x78] sm:$0xff]
        %v9649 = vld [vmem:[%s9632 + $0x80] sm:$0xff]
        %v9650 = vld [vmem:[%s9632 + $0x88] sm:$0xff]
        %v9651 = vld [vmem:[%s9632 + $0x90] sm:$0xff]
        %v9652 = vld [vmem:[%s9632 + $0x98] sm:$0xff]
        %v9653 = vld [vmem:[%s9632 + $0xa0] sm:$0xff]
        %v9654 = vld [vmem:[%s9632 + $0xa8] sm:$0xff]
        %v9655 = vld [vmem:[%s9632 + $0xb0] sm:$0xff]
        %v9656 = vld [vmem:[%s9632 + $0xb8] sm:$0xff]
        %v9657 = vld [vmem:[%s9632 + $0xc0] sm:$0xff]
        %v9658 = vld [vmem:[%s9632 + $0xc8] sm:$0xff]
        %v9659 = vld [vmem:[%s9632 + $0xd0] sm:$0xff]
        %v9660 = vld [vmem:[%s9632 + $0xd8] sm:$0xff]
        %v9661 = vld [vmem:[%s9632 + $0xe0] sm:$0xff]
        %v9662 = vld [vmem:[%s9632 + $0xe8] sm:$0xff]
        %v9663 = vld [vmem:[%s9632 + $0xf0] sm:$0xff]
        %v9664 = vld [vmem:[%s9632 + $0xf8] sm:$0xff]
        %v9665 = vld [vmem:[%s9632 + $0x100] sm:$0xff]
        %v9666 = vld [vmem:[%s9632 + $0x108] sm:$0xff]
        %v9667 = vld [vmem:[%s9632 + $0x110] sm:$0xff]
        %v9668 = vld [vmem:[%s9632 + $0x118] sm:$0xff]
        %v9669 = vld [vmem:[%s9632 + $0x120] sm:$0xff]
        %v9670 = vld [vmem:[%s9632 + $0x128] sm:$0xff]
        %v9671 = vld [vmem:[%s9632 + $0x130] sm:$0xff]
        %v9672 = vld [vmem:[%s9632 + $0x138] sm:$0xff]
        %v9673 = vld [vmem:[%s9632 + $0x140] sm:$0xff]
        %v9674 = vld [vmem:[%s9632 + $0x148] sm:$0xff]
        %v9676 = vsel %vm9212, %v9630, 0
        %9678 = vmatprep.subr.mxu0 %v9634
        %9679 = vmatpush1.msra.mxu0 %v9633
        %9680 = vmatprep.subr.mxu0 %v9636
        %9681 = vmatpush1.msra.mxu0 %v9635
        %9682 = vmatprep.subr.mxu0 %v9638
        %9683 = vmatpush1.msra.mxu0 %v9637
        %9684 = vmatprep.subr.mxu0 %v9640
        %9685 = vmatpush1.msra.mxu0 %v9639
        %9686 = vmatprep.subr.mxu0 %v9642
        %9687 = vmatpush1.msra.mxu0 %v9641
        %9688 = vmatprep.subr.mxu0 %v9644
        %9689 = vmatpush1.msra.mxu0 %v9643
        %9690 = vmatprep.subr.mxu0 %v9646
        %9691 = vmatpush1.msra.mxu0 %v9645
        %9692 = vmatprep.subr.mxu0 %v9648
        %9693 = vmatpush1.msra.mxu0 %v9647
        %9694 = vmatprep.subr.mxu0 %v9650
        %9695 = vmatpush1.msra.mxu0 %v9649
        %9696 = vmatprep.subr.mxu0 %v9652
        %9697 = vmatpush1.msra.mxu0 %v9651
        %9698 = vmatprep.subr.mxu0 %v9654
        %9699 = vmatpush1.msra.mxu0 %v9653
        %9700 = vmatprep.subr.mxu0 %v9656
        %9701 = vmatpush1.msra.mxu0 %v9655
        %9702 = vmatprep.subr.mxu0 %v9658
        %9703 = vmatpush1.msra.mxu0 %v9657
        %9704 = vmatprep.subr.mxu0 %v9660
        %9705 = vmatpush1.msra.mxu0 %v9659
        %9706 = vmatprep.subr.mxu0 %v9662
        %9707 = vmatpush1.msra.mxu0 %v9661
        %9708 = vmatprep.subr.mxu0 %v9664
        %9709 = vmatpush1.msra.mxu0 %v9663
        %9710 = vmatprep.subr.mxu0 %v9666
        %9711 = vmatpush1.msra.mxu0 %v9665
        %9712 = vmatprep.subr.mxu0 %v9668
        %9713 = vmatpush1.msra.mxu0 %v9667
        %9714 = vmatprep.subr.mxu0 %v9670
        %9715 = vmatpush1.msra.mxu0 %v9669
        %9716 = vmatprep.subr.mxu0 %v9672
        %9717 = vmatpush1.msra.mxu0 %v9671
        %9718 = vmatprep.subr.mxu0 %v9674
        %9719 = vmatpush1.msra.mxu0 %v9673
        %9720 = vmatprep.subr.mxu0 0.0
        %9721 = vmatpush1.msra.mxu0 0.0
        %9722 = vmatprep.subr.mxu0 0.0
        %9723 = vmatpush1.msra.mxu0 0.0
        %9724 = vmatprep.subr.mxu0 0.0
        %9725 = vmatpush1.msra.mxu0 0.0
        %9726 = vmatprep.subr.mxu0 0.0
        %9727 = vmatpush1.msra.mxu0 0.0
        %9728 = vmatprep.subr.mxu0 0.0
        %9729 = vmatpush1.msra.mxu0 0.0
        %9730 = vmatprep.subr.mxu0 0.0
        %9731 = vmatpush1.msra.mxu0 0.0
        %9732 = vmatprep.subr.mxu0 0.0
        %9733 = vmatpush1.msra.mxu0 0.0
        %9734 = vmatprep.subr.mxu0 0.0
        %9735 = vmatpush1.msra.mxu0 0.0
        %9736 = vmatprep.subr.mxu0 0.0
        %9737 = vmatpush1.msra.mxu0 0.0
        %9738 = vmatprep.subr.mxu0 0.0
        %9739 = vmatpush1.msra.mxu0 0.0
        %9740 = vmatprep.subr.mxu0 0.0
        %9741 = vmatpush1.msra.mxu0 0.0
        %9742 = vmatprep.mubr.f32.mxu0 %v9676
        %9743 = vmatmul.mubr.f32.gmra.mrb[0].mxu0 %v9628
        %v9744 = vpop.f32.mrb[0].mxu0
        %v9745 = vadd.f32 0.0, %v9744
        %v9746 = vpop.f32.mrb[0].mxu0
        %v9747 = vadd.f32 0.0, %v9746
        %9748 = vdwg.mxu0
        %v9749 = vadd.f32 %v9554, %v9745
        %v9750 = vadd.f32 %v9555, %v9747
        %s9751 = scalar_lea.vmem %s10, 32
        %v9752 = vld [vmem:[%s9751] sm:$0xff]
        %v9754 = vsel %vm8976, %v9752, 0
        %9756 = vmatprep.subr.mxu0 %v8962
        %9757 = vmatpush1.msra.mxu0 %v8961
        %9758 = vmatprep.subr.mxu0 %v8964
        %9759 = vmatpush1.msra.mxu0 %v8963
        %9760 = vmatprep.subr.mxu0 %v8966
        %9761 = vmatpush1.msra.mxu0 %v8965
        %9762 = vmatprep.subr.mxu0 %v8968
        %9763 = vmatpush1.msra.mxu0 %v8967
        %9764 = vmatprep.subr.mxu0 %v8970
        %9765 = vmatpush1.msra.mxu0 %v8969
        %9766 = vmatprep.subr.mxu0 %v8972
        %9767 = vmatpush1.msra.mxu0 %v8971
        %9768 = vmatprep.subr.mxu0 %v8974
        %9769 = vmatpush1.msra.mxu0 %v8973
        %9770 = vmatprep.subr.mxu0 0.0
        %9771 = vmatpush1.msra.mxu0 0.0
        %9772 = vmatprep.subr.mxu0 0.0
        %9773 = vmatpush1.msra.mxu0 0.0
        %9774 = vmatprep.subr.mxu0 0.0
        %9775 = vmatpush1.msra.mxu0 0.0
        %9776 = vmatprep.subr.mxu0 0.0
        %9777 = vmatpush1.msra.mxu0 0.0
        %9778 = vmatprep.subr.mxu0 0.0
        %9779 = vmatpush1.msra.mxu0 0.0
        %9780 = vmatprep.subr.mxu0 0.0
        %9781 = vmatpush1.msra.mxu0 0.0
        %9782 = vmatprep.subr.mxu0 0.0
        %9783 = vmatpush1.msra.mxu0 0.0
        %9784 = vmatprep.subr.mxu0 0.0
        %9785 = vmatpush1.msra.mxu0 0.0
        %9786 = vmatprep.subr.mxu0 0.0
        %9787 = vmatpush1.msra.mxu0 0.0
        %9788 = vmatprep.subr.mxu0 0.0
        %9789 = vmatpush1.msra.mxu0 0.0
        %9790 = vmatprep.subr.mxu0 0.0
        %9791 = vmatpush1.msra.mxu0 0.0
        %9792 = vmatprep.subr.mxu0 0.0
        %9793 = vmatpush1.msra.mxu0 0.0
        %9794 = vmatprep.subr.mxu0 0.0
        %9795 = vmatpush1.msra.mxu0 0.0
        %9796 = vmatprep.subr.mxu0 0.0
        %9797 = vmatpush1.msra.mxu0 0.0
        %9798 = vmatprep.subr.mxu0 0.0
        %9799 = vmatpush1.msra.mxu0 0.0
        %9800 = vmatprep.subr.mxu0 0.0
        %9801 = vmatpush1.msra.mxu0 0.0
        %9802 = vmatprep.subr.mxu0 0.0
        %9803 = vmatpush1.msra.mxu0 0.0
        %9804 = vmatprep.subr.mxu0 0.0
        %9805 = vmatpush1.msra.mxu0 0.0
        %9806 = vmatprep.subr.mxu0 0.0
        %9807 = vmatpush1.msra.mxu0 0.0
        %9808 = vmatprep.subr.mxu0 0.0
        %9809 = vmatpush1.msra.mxu0 0.0
        %9810 = vmatprep.subr.mxu0 0.0
        %9811 = vmatpush1.msra.mxu0 0.0
        %9812 = vmatprep.subr.mxu0 0.0
        %9813 = vmatpush1.msra.mxu0 0.0
        %9814 = vmatprep.subr.mxu0 0.0
        %9815 = vmatpush1.msra.mxu0 0.0
        %9816 = vmatprep.subr.mxu0 0.0
        %9817 = vmatpush1.msra.mxu0 0.0
        %9818 = vmatprep.subr.mxu0 0.0
        %9819 = vmatpush1.msra.mxu0 0.0
        %9820 = vmatprep.mubr.f32.mxu0 0.0
        %9821 = vmatmul.mubr.f32.gmra.mrb[0].mxu0 %v9754
        %v9822 = vpop.f32.mrb[0].mxu0
        %v9823 = vadd.f32 0.0, %v9822
        %v9824 = vpop.f32.mrb[0].mxu0
        %v9825 = vadd.f32 0.0, %v9824
        %9826 = vdwg.mxu0
        %s9827 = scalar_lea.vmem %s11, 1344
        %v9828 = vld [vmem:[%s9827] sm:$0xff]
        %v9829 = vld [vmem:[%s9827 + $0x8] sm:$0xff]
        %v9830 = vld [vmem:[%s9827 + $0x10] sm:$0xff]
        %v9831 = vld [vmem:[%s9827 + $0x18] sm:$0xff]
        %v9832 = vld [vmem:[%s9827 + $0x20] sm:$0xff]
        %v9833 = vld [vmem:[%s9827 + $0x28] sm:$0xff]
        %v9834 = vld [vmem:[%s9827 + $0x30] sm:$0xff]
        %v9835 = vld [vmem:[%s9827 + $0x38] sm:$0xff]
        %v9836 = vld [vmem:[%s9827 + $0x40] sm:$0xff]
        %v9837 = vld [vmem:[%s9827 + $0x48] sm:$0xff]
        %v9838 = vld [vmem:[%s9827 + $0x50] sm:$0xff]
        %v9839 = vld [vmem:[%s9827 + $0x58] sm:$0xff]
        %v9840 = vld [vmem:[%s9827 + $0x60] sm:$0xff]
        %v9841 = vld [vmem:[%s9827 + $0x68] sm:$0xff]
        %v9842 = vld [vmem:[%s9827 + $0x70] sm:$0xff]
        %v9843 = vld [vmem:[%s9827 + $0x78] sm:$0xff]
        %v9844 = vld [vmem:[%s9827 + $0x80] sm:$0xff]
        %v9845 = vld [vmem:[%s9827 + $0x88] sm:$0xff]
        %v9846 = vld [vmem:[%s9827 + $0x90] sm:$0xff]
        %v9847 = vld [vmem:[%s9827 + $0x98] sm:$0xff]
        %v9848 = vld [vmem:[%s9827 + $0xa0] sm:$0xff]
        %v9849 = vld [vmem:[%s9827 + $0xa8] sm:$0xff]
        %v9850 = vld [vmem:[%s9827 + $0xb0] sm:$0xff]
        %v9851 = vld [vmem:[%s9827 + $0xb8] sm:$0xff]
        %v9852 = vld [vmem:[%s9827 + $0xc0] sm:$0xff]
        %v9853 = vld [vmem:[%s9827 + $0xc8] sm:$0xff]
        %v9854 = vld [vmem:[%s9827 + $0xd0] sm:$0xff]
        %v9855 = vld [vmem:[%s9827 + $0xd8] sm:$0xff]
        %v9856 = vld [vmem:[%s9827 + $0xe0] sm:$0xff]
        %v9857 = vld [vmem:[%s9827 + $0xe8] sm:$0xff]
        %v9858 = vld [vmem:[%s9827 + $0xf0] sm:$0xff]
        %v9859 = vld [vmem:[%s9827 + $0xf8] sm:$0xff]
        %v9860 = vld [vmem:[%s9827 + $0x100] sm:$0xff]
        %v9861 = vld [vmem:[%s9827 + $0x108] sm:$0xff]
        %v9862 = vld [vmem:[%s9827 + $0x110] sm:$0xff]
        %v9863 = vld [vmem:[%s9827 + $0x118] sm:$0xff]
        %v9864 = vld [vmem:[%s9827 + $0x120] sm:$0xff]
        %v9865 = vld [vmem:[%s9827 + $0x128] sm:$0xff]
        %v9866 = vld [vmem:[%s9827 + $0x130] sm:$0xff]
        %v9867 = vld [vmem:[%s9827 + $0x138] sm:$0xff]
        %v9868 = vld [vmem:[%s9827 + $0x140] sm:$0xff]
        %v9869 = vld [vmem:[%s9827 + $0x148] sm:$0xff]
        %v9871 = vsel %vm9212, %v9825, 0
        %9873 = vmatprep.subr.mxu0 %v9829
        %9874 = vmatpush1.msra.mxu0 %v9828
        %9875 = vmatprep.subr.mxu0 %v9831
        %9876 = vmatpush1.msra.mxu0 %v9830
        %9877 = vmatprep.subr.mxu0 %v9833
        %9878 = vmatpush1.msra.mxu0 %v9832
        %9879 = vmatprep.subr.mxu0 %v9835
        %9880 = vmatpush1.msra.mxu0 %v9834
        %9881 = vmatprep.subr.mxu0 %v9837
        %9882 = vmatpush1.msra.mxu0 %v9836
        %9883 = vmatprep.subr.mxu0 %v9839
        %9884 = vmatpush1.msra.mxu0 %v9838
        %9885 = vmatprep.subr.mxu0 %v9841
        %9886 = vmatpush1.msra.mxu0 %v9840
        %9887 = vmatprep.subr.mxu0 %v9843
        %9888 = vmatpush1.msra.mxu0 %v9842
        %9889 = vmatprep.subr.mxu0 %v9845
        %9890 = vmatpush1.msra.mxu0 %v9844
        %9891 = vmatprep.subr.mxu0 %v9847
        %9892 = vmatpush1.msra.mxu0 %v9846
        %9893 = vmatprep.subr.mxu0 %v9849
        %9894 = vmatpush1.msra.mxu0 %v9848
        %9895 = vmatprep.subr.mxu0 %v9851
        %9896 = vmatpush1.msra.mxu0 %v9850
        %9897 = vmatprep.subr.mxu0 %v9853
        %9898 = vmatpush1.msra.mxu0 %v9852
        %9899 = vmatprep.subr.mxu0 %v9855
        %9900 = vmatpush1.msra.mxu0 %v9854
        %9901 = vmatprep.subr.mxu0 %v9857
        %9902 = vmatpush1.msra.mxu0 %v9856
        %9903 = vmatprep.subr.mxu0 %v9859
        %9904 = vmatpush1.msra.mxu0 %v9858
        %9905 = vmatprep.subr.mxu0 %v9861
        %9906 = vmatpush1.msra.mxu0 %v9860
        %9907 = vmatprep.subr.mxu0 %v9863
        %9908 = vmatpush1.msra.mxu0 %v9862
        %9909 = vmatprep.subr.mxu0 %v9865
        %9910 = vmatpush1.msra.mxu0 %v9864
        %9911 = vmatprep.subr.mxu0 %v9867
        %9912 = vmatpush1.msra.mxu0 %v9866
        %9913 = vmatprep.subr.mxu0 %v9869
        %9914 = vmatpush1.msra.mxu0 %v9868
        %9915 = vmatprep.subr.mxu0 0.0
        %9916 = vmatpush1.msra.mxu0 0.0
        %9917 = vmatprep.subr.mxu0 0.0
        %9918 = vmatpush1.msra.mxu0 0.0
        %9919 = vmatprep.subr.mxu0 0.0
        %9920 = vmatpush1.msra.mxu0 0.0
        %9921 = vmatprep.subr.mxu0 0.0
        %9922 = vmatpush1.msra.mxu0 0.0
        %9923 = vmatprep.subr.mxu0 0.0
        %9924 = vmatpush1.msra.mxu0 0.0
        %9925 = vmatprep.subr.mxu0 0.0
        %9926 = vmatpush1.msra.mxu0 0.0
        %9927 = vmatprep.subr.mxu0 0.0
        %9928 = vmatpush1.msra.mxu0 0.0
        %9929 = vmatprep.subr.mxu0 0.0
        %9930 = vmatpush1.msra.mxu0 0.0
        %9931 = vmatprep.subr.mxu0 0.0
        %9932 = vmatpush1.msra.mxu0 0.0
        %9933 = vmatprep.subr.mxu0 0.0
        %9934 = vmatpush1.msra.mxu0 0.0
        %9935 = vmatprep.subr.mxu0 0.0
        %9936 = vmatpush1.msra.mxu0 0.0
        %9937 = vmatprep.mubr.f32.mxu0 %v9871
        %9938 = vmatmul.mubr.f32.gmra.mrb[0].mxu0 %v9823
        %v9939 = vpop.f32.mrb[0].mxu0
        %v9940 = vadd.f32 0.0, %v9939
        %v9941 = vpop.f32.mrb[0].mxu0
        %v9942 = vadd.f32 0.0, %v9941
        %9943 = vdwg.mxu0
        %v9944 = vadd.f32 %v9749, %v9940
        %v9945 = vadd.f32 %v9750, %v9942
        %s9946 = scalar_lea.vmem %s10, 40
        %v9947 = vld [vmem:[%s9946] sm:$0xff]
        %v9949 = vsel %vm8976, %v9947, 0
        %9951 = vmatprep.subr.mxu0 %v8962
        %9952 = vmatpush1.msra.mxu0 %v8961
        %9953 = vmatprep.subr.mxu0 %v8964
        %9954 = vmatpush1.msra.mxu0 %v8963
        %9955 = vmatprep.subr.mxu0 %v8966
        %9956 = vmatpush1.msra.mxu0 %v8965
        %9957 = vmatprep.subr.mxu0 %v8968
        %9958 = vmatpush1.msra.mxu0 %v8967
        %9959 = vmatprep.subr.mxu0 %v8970
        %9960 = vmatpush1.msra.mxu0 %v8969
        %9961 = vmatprep.subr.mxu0 %v8972
        %9962 = vmatpush1.msra.mxu0 %v8971
        %9963 = vmatprep.subr.mxu0 %v8974
        %9964 = vmatpush1.msra.mxu0 %v8973
        %9965 = vmatprep.subr.mxu0 0.0
        %9966 = vmatpush1.msra.mxu0 0.0
        %9967 = vmatprep.subr.mxu0 0.0
        %9968 = vmatpush1.msra.mxu0 0.0
        %9969 = vmatprep.subr.mxu0 0.0
        %9970 = vmatpush1.msra.mxu0 0.0
        %9971 = vmatprep.subr.mxu0 0.0
        %9972 = vmatpush1.msra.mxu0 0.0
        %9973 = vmatprep.subr.mxu0 0.0
        %9974 = vmatpush1.msra.mxu0 0.0
        %9975 = vmatprep.subr.mxu0 0.0
        %9976 = vmatpush1.msra.mxu0 0.0
        %9977 = vmatprep.subr.mxu0 0.0
        %9978 = vmatpush1.msra.mxu0 0.0
        %9979 = vmatprep.subr.mxu0 0.0
        %9980 = vmatpush1.msra.mxu0 0.0
        %9981 = vmatprep.subr.mxu0 0.0
        %9982 = vmatpush1.msra.mxu0 0.0
        %9983 = vmatprep.subr.mxu0 0.0
        %9984 = vmatpush1.msra.mxu0 0.0
        %9985 = vmatprep.subr.mxu0 0.0
        %9986 = vmatpush1.msra.mxu0 0.0
        %9987 = vmatprep.subr.mxu0 0.0
        %9988 = vmatpush1.msra.mxu0 0.0
        %9989 = vmatprep.subr.mxu0 0.0
        %9990 = vmatpush1.msra.mxu0 0.0
        %9991 = vmatprep.subr.mxu0 0.0
        %9992 = vmatpush1.msra.mxu0 0.0
        %9993 = vmatprep.subr.mxu0 0.0
        %9994 = vmatpush1.msra.mxu0 0.0
        %9995 = vmatprep.subr.mxu0 0.0
        %9996 = vmatpush1.msra.mxu0 0.0
        %9997 = vmatprep.subr.mxu0 0.0
        %9998 = vmatpush1.msra.mxu0 0.0
        %9999 = vmatprep.subr.mxu0 0.0
        %10000 = vmatpush1.msra.mxu0 0.0
        %10001 = vmatprep.subr.mxu0 0.0
        %10002 = vmatpush1.msra.mxu0 0.0
        %10003 = vmatprep.subr.mxu0 0.0
        %10004 = vmatpush1.msra.mxu0 0.0
        %10005 = vmatprep.subr.mxu0 0.0
        %10006 = vmatpush1.msra.mxu0 0.0
        %10007 = vmatprep.subr.mxu0 0.0
        %10008 = vmatpush1.msra.mxu0 0.0
        %10009 = vmatprep.subr.mxu0 0.0
        %10010 = vmatpush1.msra.mxu0 0.0
        %10011 = vmatprep.subr.mxu0 0.0
        %10012 = vmatpush1.msra.mxu0 0.0
        %10013 = vmatprep.subr.mxu0 0.0
        %10014 = vmatpush1.msra.mxu0 0.0
        %10015 = vmatprep.mubr.f32.mxu0 0.0
        %10016 = vmatmul.mubr.f32.gmra.mrb[0].mxu0 %v9949
        %v10017 = vpop.f32.mrb[0].mxu0
        %v10018 = vadd.f32 0.0, %v10017
        %v10019 = vpop.f32.mrb[0].mxu0
        %v10020 = vadd.f32 0.0, %v10019
        %10021 = vdwg.mxu0
        %s10022 = scalar_lea.vmem %s11, 1680
        %v10023 = vld [vmem:[%s10022] sm:$0xff]
        %v10024 = vld [vmem:[%s10022 + $0x8] sm:$0xff]
        %v10025 = vld [vmem:[%s10022 + $0x10] sm:$0xff]
        %v10026 = vld [vmem:[%s10022 + $0x18] sm:$0xff]
        %v10027 = vld [vmem:[%s10022 + $0x20] sm:$0xff]
        %v10028 = vld [vmem:[%s10022 + $0x28] sm:$0xff]
        %v10029 = vld [vmem:[%s10022 + $0x30] sm:$0xff]
        %v10030 = vld [vmem:[%s10022 + $0x38] sm:$0xff]
        %v10031 = vld [vmem:[%s10022 + $0x40] sm:$0xff]
        %v10032 = vld [vmem:[%s10022 + $0x48] sm:$0xff]
        %v10033 = vld [vmem:[%s10022 + $0x50] sm:$0xff]
        %v10034 = vld [vmem:[%s10022 + $0x58] sm:$0xff]
        %v10035 = vld [vmem:[%s10022 + $0x60] sm:$0xff]
        %v10036 = vld [vmem:[%s10022 + $0x68] sm:$0xff]
        %v10037 = vld [vmem:[%s10022 + $0x70] sm:$0xff]
        %v10038 = vld [vmem:[%s10022 + $0x78] sm:$0xff]
        %v10039 = vld [vmem:[%s10022 + $0x80] sm:$0xff]
        %v10040 = vld [vmem:[%s10022 + $0x88] sm:$0xff]
        %v10041 = vld [vmem:[%s10022 + $0x90] sm:$0xff]
        %v10042 = vld [vmem:[%s10022 + $0x98] sm:$0xff]
        %v10043 = vld [vmem:[%s10022 + $0xa0] sm:$0xff]
        %v10044 = vld [vmem:[%s10022 + $0xa8] sm:$0xff]
        %v10045 = vld [vmem:[%s10022 + $0xb0] sm:$0xff]
        %v10046 = vld [vmem:[%s10022 + $0xb8] sm:$0xff]
        %v10047 = vld [vmem:[%s10022 + $0xc0] sm:$0xff]
        %v10048 = vld [vmem:[%s10022 + $0xc8] sm:$0xff]
        %v10049 = vld [vmem:[%s10022 + $0xd0] sm:$0xff]
        %v10050 = vld [vmem:[%s10022 + $0xd8] sm:$0xff]
        %v10051 = vld [vmem:[%s10022 + $0xe0] sm:$0xff]
        %v10052 = vld [vmem:[%s10022 + $0xe8] sm:$0xff]
        %v10053 = vld [vmem:[%s10022 + $0xf0] sm:$0xff]
        %v10054 = vld [vmem:[%s10022 + $0xf8] sm:$0xff]
        %v10055 = vld [vmem:[%s10022 + $0x100] sm:$0xff]
        %v10056 = vld [vmem:[%s10022 + $0x108] sm:$0xff]
        %v10057 = vld [vmem:[%s10022 + $0x110] sm:$0xff]
        %v10058 = vld [vmem:[%s10022 + $0x118] sm:$0xff]
        %v10059 = vld [vmem:[%s10022 + $0x120] sm:$0xff]
        %v10060 = vld [vmem:[%s10022 + $0x128] sm:$0xff]
        %v10061 = vld [vmem:[%s10022 + $0x130] sm:$0xff]
        %v10062 = vld [vmem:[%s10022 + $0x138] sm:$0xff]
        %v10063 = vld [vmem:[%s10022 + $0x140] sm:$0xff]
        %v10064 = vld [vmem:[%s10022 + $0x148] sm:$0xff]
        %v10066 = vsel %vm9212, %v10020, 0
        %10068 = vmatprep.subr.mxu0 %v10024
        %10069 = vmatpush1.msra.mxu0 %v10023
        %10070 = vmatprep.subr.mxu0 %v10026
        %10071 = vmatpush1.msra.mxu0 %v10025
        %10072 = vmatprep.subr.mxu0 %v10028
        %10073 = vmatpush1.msra.mxu0 %v10027
        %10074 = vmatprep.subr.mxu0 %v10030
        %10075 = vmatpush1.msra.mxu0 %v10029
        %10076 = vmatprep.subr.mxu0 %v10032
        %10077 = vmatpush1.msra.mxu0 %v10031
        %10078 = vmatprep.subr.mxu0 %v10034
        %10079 = vmatpush1.msra.mxu0 %v10033
        %10080 = vmatprep.subr.mxu0 %v10036
        %10081 = vmatpush1.msra.mxu0 %v10035
        %10082 = vmatprep.subr.mxu0 %v10038
        %10083 = vmatpush1.msra.mxu0 %v10037
        %10084 = vmatprep.subr.mxu0 %v10040
        %10085 = vmatpush1.msra.mxu0 %v10039
        %10086 = vmatprep.subr.mxu0 %v10042
        %10087 = vmatpush1.msra.mxu0 %v10041
        %10088 = vmatprep.subr.mxu0 %v10044
        %10089 = vmatpush1.msra.mxu0 %v10043
        %10090 = vmatprep.subr.mxu0 %v10046
        %10091 = vmatpush1.msra.mxu0 %v10045
        %10092 = vmatprep.subr.mxu0 %v10048
        %10093 = vmatpush1.msra.mxu0 %v10047
        %10094 = vmatprep.subr.mxu0 %v10050
        %10095 = vmatpush1.msra.mxu0 %v10049
        %10096 = vmatprep.subr.mxu0 %v10052
        %10097 = vmatpush1.msra.mxu0 %v10051
        %10098 = vmatprep.subr.mxu0 %v10054
        %10099 = vmatpush1.msra.mxu0 %v10053
        %10100 = vmatprep.subr.mxu0 %v10056
        %10101 = vmatpush1.msra.mxu0 %v10055
        %10102 = vmatprep.subr.mxu0 %v10058
        %10103 = vmatpush1.msra.mxu0 %v10057
        %10104 = vmatprep.subr.mxu0 %v10060
        %10105 = vmatpush1.msra.mxu0 %v10059
        %10106 = vmatprep.subr.mxu0 %v10062
        %10107 = vmatpush1.msra.mxu0 %v10061
        %10108 = vmatprep.subr.mxu0 %v10064
        %10109 = vmatpush1.msra.mxu0 %v10063
        %10110 = vmatprep.subr.mxu0 0.0
        %10111 = vmatpush1.msra.mxu0 0.0
        %10112 = vmatprep.subr.mxu0 0.0
        %10113 = vmatpush1.msra.mxu0 0.0
        %10114 = vmatprep.subr.mxu0 0.0
        %10115 = vmatpush1.msra.mxu0 0.0
        %10116 = vmatprep.subr.mxu0 0.0
        %10117 = vmatpush1.msra.mxu0 0.0
        %10118 = vmatprep.subr.mxu0 0.0
        %10119 = vmatpush1.msra.mxu0 0.0
        %10120 = vmatprep.subr.mxu0 0.0
        %10121 = vmatpush1.msra.mxu0 0.0
        %10122 = vmatprep.subr.mxu0 0.0
        %10123 = vmatpush1.msra.mxu0 0.0
        %10124 = vmatprep.subr.mxu0 0.0
        %10125 = vmatpush1.msra.mxu0 0.0
        %10126 = vmatprep.subr.mxu0 0.0
        %10127 = vmatpush1.msra.mxu0 0.0
        %10128 = vmatprep.subr.mxu0 0.0
        %10129 = vmatpush1.msra.mxu0 0.0
        %10130 = vmatprep.subr.mxu0 0.0
        %10131 = vmatpush1.msra.mxu0 0.0
        %10132 = vmatprep.mubr.f32.mxu0 %v10066
        %10133 = vmatmul.mubr.f32.gmra.mrb[0].mxu0 %v10018
        %v10134 = vpop.f32.mrb[0].mxu0
        %v10135 = vadd.f32 0.0, %v10134
        %v10136 = vpop.f32.mrb[0].mxu0
        %v10137 = vadd.f32 0.0, %v10136
        %10138 = vdwg.mxu0
        %v10139 = vadd.f32 %v9944, %v10135
        %v10140 = vadd.f32 %v9945, %v10137
        %s10141 = scalar_lea.vmem %s10, 48
        %v10142 = vld [vmem:[%s10141] sm:$0xff]
        %v10144 = vsel %vm8976, %v10142, 0
        %10146 = vmatprep.subr.mxu0 %v8962
        %10147 = vmatpush1.msra.mxu0 %v8961
        %10148 = vmatprep.subr.mxu0 %v8964
        %10149 = vmatpush1.msra.mxu0 %v8963
        %10150 = vmatprep.subr.mxu0 %v8966
        %10151 = vmatpush1.msra.mxu0 %v8965
        %10152 = vmatprep.subr.mxu0 %v8968
        %10153 = vmatpush1.msra.mxu0 %v8967
        %10154 = vmatprep.subr.mxu0 %v8970
        %10155 = vmatpush1.msra.mxu0 %v8969
        %10156 = vmatprep.subr.mxu0 %v8972
        %10157 = vmatpush1.msra.mxu0 %v8971
        %10158 = vmatprep.subr.mxu0 %v8974
        %10159 = vmatpush1.msra.mxu0 %v8973
        %10160 = vmatprep.subr.mxu0 0.0
        %10161 = vmatpush1.msra.mxu0 0.0
        %10162 = vmatprep.subr.mxu0 0.0
        %10163 = vmatpush1.msra.mxu0 0.0
        %10164 = vmatprep.subr.mxu0 0.0
        %10165 = vmatpush1.msra.mxu0 0.0
        %10166 = vmatprep.subr.mxu0 0.0
        %10167 = vmatpush1.msra.mxu0 0.0
        %10168 = vmatprep.subr.mxu0 0.0
        %10169 = vmatpush1.msra.mxu0 0.0
        %10170 = vmatprep.subr.mxu0 0.0
        %10171 = vmatpush1.msra.mxu0 0.0
        %10172 = vmatprep.subr.mxu0 0.0
        %10173 = vmatpush1.msra.mxu0 0.0
        %10174 = vmatprep.subr.mxu0 0.0
        %10175 = vmatpush1.msra.mxu0 0.0
        %10176 = vmatprep.subr.mxu0 0.0
        %10177 = vmatpush1.msra.mxu0 0.0
        %10178 = vmatprep.subr.mxu0 0.0
        %10179 = vmatpush1.msra.mxu0 0.0
        %10180 = vmatprep.subr.mxu0 0.0
        %10181 = vmatpush1.msra.mxu0 0.0
        %10182 = vmatprep.subr.mxu0 0.0
        %10183 = vmatpush1.msra.mxu0 0.0
        %10184 = vmatprep.subr.mxu0 0.0
        %10185 = vmatpush1.msra.mxu0 0.0
        %10186 = vmatprep.subr.mxu0 0.0
        %10187 = vmatpush1.msra.mxu0 0.0
        %10188 = vmatprep.subr.mxu0 0.0
        %10189 = vmatpush1.msra.mxu0 0.0
        %10190 = vmatprep.subr.mxu0 0.0
        %10191 = vmatpush1.msra.mxu0 0.0
        %10192 = vmatprep.subr.mxu0 0.0
        %10193 = vmatpush1.msra.mxu0 0.0
        %10194 = vmatprep.subr.mxu0 0.0
        %10195 = vmatpush1.msra.mxu0 0.0
        %10196 = vmatprep.subr.mxu0 0.0
        %10197 = vmatpush1.msra.mxu0 0.0
        %10198 = vmatprep.subr.mxu0 0.0
        %10199 = vmatpush1.msra.mxu0 0.0
        %10200 = vmatprep.subr.mxu0 0.0
        %10201 = vmatpush1.msra.mxu0 0.0
        %10202 = vmatprep.subr.mxu0 0.0
        %10203 = vmatpush1.msra.mxu0 0.0
        %10204 = vmatprep.subr.mxu0 0.0
        %10205 = vmatpush1.msra.mxu0 0.0
        %10206 = vmatprep.subr.mxu0 0.0
        %10207 = vmatpush1.msra.mxu0 0.0
        %10208 = vmatprep.subr.mxu0 0.0
        %10209 = vmatpush1.msra.mxu0 0.0
        %10210 = vmatprep.mubr.f32.mxu0 0.0
        %10211 = vmatmul.mubr.f32.gmra.mrb[0].mxu0 %v10144
        %v10212 = vpop.f32.mrb[0].mxu0
        %v10213 = vadd.f32 0.0, %v10212
        %v10214 = vpop.f32.mrb[0].mxu0
        %v10215 = vadd.f32 0.0, %v10214
        %10216 = vdwg.mxu0
        %s10217 = scalar_lea.vmem %s11, 2016
        %v10218 = vld [vmem:[%s10217] sm:$0xff]
        %v10219 = vld [vmem:[%s10217 + $0x8] sm:$0xff]
        %v10220 = vld [vmem:[%s10217 + $0x10] sm:$0xff]
        %v10221 = vld [vmem:[%s10217 + $0x18] sm:$0xff]
        %v10222 = vld [vmem:[%s10217 + $0x20] sm:$0xff]
        %v10223 = vld [vmem:[%s10217 + $0x28] sm:$0xff]
        %v10224 = vld [vmem:[%s10217 + $0x30] sm:$0xff]
        %v10225 = vld [vmem:[%s10217 + $0x38] sm:$0xff]
        %v10226 = vld [vmem:[%s10217 + $0x40] sm:$0xff]
        %v10227 = vld [vmem:[%s10217 + $0x48] sm:$0xff]
        %v10228 = vld [vmem:[%s10217 + $0x50] sm:$0xff]
        %v10229 = vld [vmem:[%s10217 + $0x58] sm:$0xff]
        %v10230 = vld [vmem:[%s10217 + $0x60] sm:$0xff]
        %v10231 = vld [vmem:[%s10217 + $0x68] sm:$0xff]
        %v10232 = vld [vmem:[%s10217 + $0x70] sm:$0xff]
        %v10233 = vld [vmem:[%s10217 + $0x78] sm:$0xff]
        %v10234 = vld [vmem:[%s10217 + $0x80] sm:$0xff]
        %v10235 = vld [vmem:[%s10217 + $0x88] sm:$0xff]
        %v10236 = vld [vmem:[%s10217 + $0x90] sm:$0xff]
        %v10237 = vld [vmem:[%s10217 + $0x98] sm:$0xff]
        %v10238 = vld [vmem:[%s10217 + $0xa0] sm:$0xff]
        %v10239 = vld [vmem:[%s10217 + $0xa8] sm:$0xff]
        %v10240 = vld [vmem:[%s10217 + $0xb0] sm:$0xff]
        %v10241 = vld [vmem:[%s10217 + $0xb8] sm:$0xff]
        %v10242 = vld [vmem:[%s10217 + $0xc0] sm:$0xff]
        %v10243 = vld [vmem:[%s10217 + $0xc8] sm:$0xff]
        %v10244 = vld [vmem:[%s10217 + $0xd0] sm:$0xff]
        %v10245 = vld [vmem:[%s10217 + $0xd8] sm:$0xff]
        %v10246 = vld [vmem:[%s10217 + $0xe0] sm:$0xff]
        %v10247 = vld [vmem:[%s10217 + $0xe8] sm:$0xff]
        %v10248 = vld [vmem:[%s10217 + $0xf0] sm:$0xff]
        %v10249 = vld [vmem:[%s10217 + $0xf8] sm:$0xff]
        %v10250 = vld [vmem:[%s10217 + $0x100] sm:$0xff]
        %v10251 = vld [vmem:[%s10217 + $0x108] sm:$0xff]
        %v10252 = vld [vmem:[%s10217 + $0x110] sm:$0xff]
        %v10253 = vld [vmem:[%s10217 + $0x118] sm:$0xff]
        %v10254 = vld [vmem:[%s10217 + $0x120] sm:$0xff]
        %v10255 = vld [vmem:[%s10217 + $0x128] sm:$0xff]
        %v10256 = vld [vmem:[%s10217 + $0x130] sm:$0xff]
        %v10257 = vld [vmem:[%s10217 + $0x138] sm:$0xff]
        %v10258 = vld [vmem:[%s10217 + $0x140] sm:$0xff]
        %v10259 = vld [vmem:[%s10217 + $0x148] sm:$0xff]
        %v10261 = vsel %vm9212, %v10215, 0
        %10263 = vmatprep.subr.mxu0 %v10219
        %10264 = vmatpush1.msra.mxu0 %v10218
        %10265 = vmatprep.subr.mxu0 %v10221
        %10266 = vmatpush1.msra.mxu0 %v10220
        %10267 = vmatprep.subr.mxu0 %v10223
        %10268 = vmatpush1.msra.mxu0 %v10222
        %10269 = vmatprep.subr.mxu0 %v10225
        %10270 = vmatpush1.msra.mxu0 %v10224
        %10271 = vmatprep.subr.mxu0 %v10227
        %10272 = vmatpush1.msra.mxu0 %v10226
        %10273 = vmatprep.subr.mxu0 %v10229
        %10274 = vmatpush1.msra.mxu0 %v10228
        %10275 = vmatprep.subr.mxu0 %v10231
        %10276 = vmatpush1.msra.mxu0 %v10230
        %10277 = vmatprep.subr.mxu0 %v10233
        %10278 = vmatpush1.msra.mxu0 %v10232
        %10279 = vmatprep.subr.mxu0 %v10235
        %10280 = vmatpush1.msra.mxu0 %v10234
        %10281 = vmatprep.subr.mxu0 %v10237
        %10282 = vmatpush1.msra.mxu0 %v10236
        %10283 = vmatprep.subr.mxu0 %v10239
        %10284 = vmatpush1.msra.mxu0 %v10238
        %10285 = vmatprep.subr.mxu0 %v10241
        %10286 = vmatpush1.msra.mxu0 %v10240
        %10287 = vmatprep.subr.mxu0 %v10243
        %10288 = vmatpush1.msra.mxu0 %v10242
        %10289 = vmatprep.subr.mxu0 %v10245
        %10290 = vmatpush1.msra.mxu0 %v10244
        %10291 = vmatprep.subr.mxu0 %v10247
        %10292 = vmatpush1.msra.mxu0 %v10246
        %10293 = vmatprep.subr.mxu0 %v10249
        %10294 = vmatpush1.msra.mxu0 %v10248
        %10295 = vmatprep.subr.mxu0 %v10251
        %10296 = vmatpush1.msra.mxu0 %v10250
        %10297 = vmatprep.subr.mxu0 %v10253
        %10298 = vmatpush1.msra.mxu0 %v10252
        %10299 = vmatprep.subr.mxu0 %v10255
        %10300 = vmatpush1.msra.mxu0 %v10254
        %10301 = vmatprep.subr.mxu0 %v10257
        %10302 = vmatpush1.msra.mxu0 %v10256
        %10303 = vmatprep.subr.mxu0 %v10259
        %10304 = vmatpush1.msra.mxu0 %v10258
        %10305 = vmatprep.subr.mxu0 0.0
        %10306 = vmatpush1.msra.mxu0 0.0
        %10307 = vmatprep.subr.mxu0 0.0
        %10308 = vmatpush1.msra.mxu0 0.0
        %10309 = vmatprep.subr.mxu0 0.0
        %10310 = vmatpush1.msra.mxu0 0.0
        %10311 = vmatprep.subr.mxu0 0.0
        %10312 = vmatpush1.msra.mxu0 0.0
        %10313 = vmatprep.subr.mxu0 0.0
        %10314 = vmatpush1.msra.mxu0 0.0
        %10315 = vmatprep.subr.mxu0 0.0
        %10316 = vmatpush1.msra.mxu0 0.0
        %10317 = vmatprep.subr.mxu0 0.0
        %10318 = vmatpush1.msra.mxu0 0.0
        %10319 = vmatprep.subr.mxu0 0.0
        %10320 = vmatpush1.msra.mxu0 0.0
        %10321 = vmatprep.subr.mxu0 0.0
        %10322 = vmatpush1.msra.mxu0 0.0
        %10323 = vmatprep.subr.mxu0 0.0
        %10324 = vmatpush1.msra.mxu0 0.0
        %10325 = vmatprep.subr.mxu0 0.0
        %10326 = vmatpush1.msra.mxu0 0.0
        %10327 = vmatprep.mubr.f32.mxu0 %v10261
        %10328 = vmatmul.mubr.f32.gmra.mrb[0].mxu0 %v10213
        %v10329 = vpop.f32.mrb[0].mxu0
        %v10330 = vadd.f32 0.0, %v10329
        %v10331 = vpop.f32.mrb[0].mxu0
        %v10332 = vadd.f32 0.0, %v10331
        %10333 = vdwg.mxu0
        %v10334 = vadd.f32 %v10139, %v10330
        %v10335 = vadd.f32 %v10140, %v10332
        %v10336 = vld [vmem:[%s12] sm:$0x3]
        %v10338 = vlaneseq
        %v10339 = vshrl.u32 %v10338, 7
        %v10340 = vsub.s32 0, %v10339
        %v10341 = vrot.slane %v10336, %v10340
        %v10342 = vlaneseq
        %v10343 = vshrl.u32 %v10342, 7
        %v10344 = vsub.s32 1, %v10343
        %v10345 = vrot.slane %v10336, %v10344
        %v10348 = vadd.f32 %v10334, %v10341
        %v10349 = vadd.f32 %v10335, %v10345
        %v10350 = vmax.f32 %v10348, 0.0
        %v10351 = vmax.f32 %v10349, 0.0
        %v10352 = vld [vmem:[%s13] sm:$0xff]
        %v10353 = vld [vmem:[%s13 + $0x8] sm:$0xff]
        %v10354 = vld [vmem:[%s13 + $0x10] sm:$0xff]
        %v10355 = vld [vmem:[%s13 + $0x18] sm:$0xff]
        %v10356 = vld [vmem:[%s13 + $0x20] sm:$0xff]
        %v10357 = vld [vmem:[%s13 + $0x28] sm:$0xff]
        %v10358 = vld [vmem:[%s13 + $0x30] sm:$0xff]
        %v10359 = vld [vmem:[%s13 + $0x38] sm:$0xff]
        %v10360 = vld [vmem:[%s13 + $0x40] sm:$0xff]
        %v10361 = vld [vmem:[%s13 + $0x48] sm:$0xff]
        %v10362 = vld [vmem:[%s13 + $0x50] sm:$0xff]
        %v10363 = vld [vmem:[%s13 + $0x58] sm:$0xff]
        %v10364 = vld [vmem:[%s13 + $0x60] sm:$0xff]
        %v10365 = vld [vmem:[%s13 + $0x68] sm:$0xff]
        %v10366 = vld [vmem:[%s13 + $0x70] sm:$0xff]
        %v10367 = vld [vmem:[%s13 + $0x78] sm:$0xff]
        %v10368 = vld [vmem:[%s13 + $0x80] sm:$0xff]
        %v10369 = vld [vmem:[%s13 + $0x88] sm:$0xff]
        %v10370 = vld [vmem:[%s13 + $0x90] sm:$0xff]
        %v10371 = vld [vmem:[%s13 + $0x98] sm:$0xff]
        %v10372 = vld [vmem:[%s13 + $0xa0] sm:$0xff]
        %v10373 = vld [vmem:[%s13 + $0xa8] sm:$0xff]
        %v10374 = vld [vmem:[%s13 + $0xb0] sm:$0xff]
        %v10375 = vld [vmem:[%s13 + $0xb8] sm:$0xff]
        %v10376 = vld [vmem:[%s13 + $0xc0] sm:$0xff]
        %v10377 = vld [vmem:[%s13 + $0xc8] sm:$0xff]
        %v10378 = vld [vmem:[%s13 + $0xd0] sm:$0xff]
        %v10379 = vld [vmem:[%s13 + $0xd8] sm:$0xff]
        %v10380 = vld [vmem:[%s13 + $0xe0] sm:$0xff]
        %v10381 = vld [vmem:[%s13 + $0xe8] sm:$0xff]
        %v10382 = vld [vmem:[%s13 + $0xf0] sm:$0xff]
        %v10383 = vld [vmem:[%s13 + $0xf8] sm:$0xff]
        %v10384 = vld [vmem:[%s14] sm:$0x1]
        %v10386 = vlaneseq
        %v10387 = vshrl.u32 %v10386, 7
        %v10388 = vsub.s32 0, %v10387
        %v10389 = vrot.slane %v10384, %v10388
        %10391 = vmatprep.subr.mxu0 0.0
        %10392 = vmatpush1.msra.mxu0 %v10352
        %10393 = vmatprep.subr.mxu0 0.0
        %10394 = vmatpush1.msra.mxu0 %v10353
        %10395 = vmatprep.subr.mxu0 0.0
        %10396 = vmatpush1.msra.mxu0 %v10354
        %10397 = vmatprep.subr.mxu0 0.0
        %10398 = vmatpush1.msra.mxu0 %v10355
        %10399 = vmatprep.subr.mxu0 0.0
        %10400 = vmatpush1.msra.mxu0 %v10356
        %10401 = vmatprep.subr.mxu0 0.0
        %10402 = vmatpush1.msra.mxu0 %v10357
        %10403 = vmatprep.subr.mxu0 0.0
        %10404 = vmatpush1.msra.mxu0 %v10358
        %10405 = vmatprep.subr.mxu0 0.0
        %10406 = vmatpush1.msra.mxu0 %v10359
        %10407 = vmatprep.subr.mxu0 0.0
        %10408 = vmatpush1.msra.mxu0 %v10360
        %10409 = vmatprep.subr.mxu0 0.0
        %10410 = vmatpush1.msra.mxu0 %v10361
        %10411 = vmatprep.subr.mxu0 0.0
        %10412 = vmatpush1.msra.mxu0 %v10362
        %10413 = vmatprep.subr.mxu0 0.0
        %10414 = vmatpush1.msra.mxu0 %v10363
        %10415 = vmatprep.subr.mxu0 0.0
        %10416 = vmatpush1.msra.mxu0 %v10364
        %10417 = vmatprep.subr.mxu0 0.0
        %10418 = vmatpush1.msra.mxu0 %v10365
        %10419 = vmatprep.subr.mxu0 0.0
        %10420 = vmatpush1.msra.mxu0 %v10366
        %10421 = vmatprep.subr.mxu0 0.0
        %10422 = vmatpush1.msra.mxu0 %v10367
        %10423 = vmatprep.subr.mxu0 0.0
        %10424 = vmatpush1.msra.mxu0 %v10368
        %10425 = vmatprep.subr.mxu0 0.0
        %10426 = vmatpush1.msra.mxu0 %v10369
        %10427 = vmatprep.subr.mxu0 0.0
        %10428 = vmatpush1.msra.mxu0 %v10370
        %10429 = vmatprep.subr.mxu0 0.0
        %10430 = vmatpush1.msra.mxu0 %v10371
        %10431 = vmatprep.subr.mxu0 0.0
        %10432 = vmatpush1.msra.mxu0 %v10372
        %10433 = vmatprep.subr.mxu0 0.0
        %10434 = vmatpush1.msra.mxu0 %v10373
        %10435 = vmatprep.subr.mxu0 0.0
        %10436 = vmatpush1.msra.mxu0 %v10374
        %10437 = vmatprep.subr.mxu0 0.0
        %10438 = vmatpush1.msra.mxu0 %v10375
        %10439 = vmatprep.subr.mxu0 0.0
        %10440 = vmatpush1.msra.mxu0 %v10376
        %10441 = vmatprep.subr.mxu0 0.0
        %10442 = vmatpush1.msra.mxu0 %v10377
        %10443 = vmatprep.subr.mxu0 0.0
        %10444 = vmatpush1.msra.mxu0 %v10378
        %10445 = vmatprep.subr.mxu0 0.0
        %10446 = vmatpush1.msra.mxu0 %v10379
        %10447 = vmatprep.subr.mxu0 0.0
        %10448 = vmatpush1.msra.mxu0 %v10380
        %10449 = vmatprep.subr.mxu0 0.0
        %10450 = vmatpush1.msra.mxu0 %v10381
        %10451 = vmatprep.subr.mxu0 0.0
        %10452 = vmatpush1.msra.mxu0 %v10382
        %10453 = vmatprep.subr.mxu0 0.0
        %10454 = vmatpush1.msra.mxu0 %v10383
        %10455 = vmatprep.mubr.f32.mxu0 %v10351
        %10456 = vmatmul.mubr.f32.gmra.mrb[0].mxu0 %v10350
        %v10457 = vpop.f32.mrb[0].mxu0
        %v10458 = vadd.f32 %v10389, %v10457
        %v10459 = vpop.f32.mrb[0].mxu0
        %10460 = vdwg.mxu0
        %10461 = vmax.xlane.f32.xlu0 %v10458
        %v10462 = vpop.xlane.xlu0 %10461
        %v10463 = vsub.f32 %v10458, %v10462
        %v10464 = vmul.f32 %v10463, 1.442695
        %v10465 = vpow.pop %v10464
        %10466 = vadd.xlane.f32.xlu0 %v10465
        %v10467 = vpop.xlane.xlu0 %10466
        %v10468 = vrcp.pop %v10467
        %v10469 = vmul.f32 %v10465, %v10468
        %10470 = vst [vmem:[%s488] sm:$0xff] %v10469
        %s10471 = sand.u32 %s357, 1
        %s10472 = scalar_lea.sflag [#allocation3], %s10471
        %s10473 = sand.u32 %s357, 1
        %s10474 = smul.addr %s10473, 8
        %s10475 = scalar_lea.vmem [#allocation2], %s10474
        // Predicated region
        $region81: #{cnn_forward.1} parent=79 // pred_check
          %p10476 = pneg %p367
        $region82: #{cnn_forward.1} parent=79 // pred_check_branch
          %10478 = sbr.rel (%p10476) target = $region84
        $region83: #{cnn_forward.1} parent=79 // pred_region
          %s10480 = ssub.s32 128, 128
          %10481 = vsyncadd %s10472, %s10480
          %s10482 = smul.addr %s29, 128
          %s10483 = scalar_lea.hbm %s15, %s10482
          %s10485 = sshll.u32 %s10475, 4
          %s10486 = int_to_ptr.vmem [resolvable:$true] %s10485
          %10488 = dma.vmem_to_hbm [thread:$0]  %s10486, 128, %s10483, %s10472
        $region84: #{cnn_forward.1} parent=79 // pred_fallthru
          _
      $region80: #{cnn_forward.1} parent=5 // pred_fallthru
        _
      %p10489 = scmp.le.s32.totalorder 2, %s24
      // Predicated region
      $region85: #{cnn_forward.1} parent=5 // pred_check
        %p10490 = pneg %p10489
      $region86: #{cnn_forward.1} parent=5 // pred_check_branch
        %10492 = sbr.rel (%p10490) target = $region88
      $region87: #{cnn_forward.1} parent=5 // pred_region
        %s10493 = ssub.s32 %s24, 2
        // Predicated region
        $region89: #{cnn_forward.1} parent=87 // pred_check
          %p10494 = pneg %p373
        $region90: #{cnn_forward.1} parent=87 // pred_check_branch
          %10496 = sbr.rel (%p10494) target = $region92
        $region91: #{cnn_forward.1} parent=87 // pred_region
          %s10497 = sand.u32 %s358, 1
          %s10498 = scalar_lea.sflag [#allocation3], %s10497
          %s10499 = sand.u32 %s358, 1
          %s10500 = smul.addr %s10499, 8
          %s10501 = scalar_lea.vmem [#allocation2], %s10500
          %10502 = dma.done %s10498, 128
        $region92: #{cnn_forward.1} parent=87 // pred_fallthru
          _
      $region88: #{cnn_forward.1} parent=5 // pred_fallthru
        _
    $region6: #{cnn_forward.1} parent=1 // loop_footer
      %s28 = sadd.s32 1, %s24
    $region7: #{cnn_forward.1} parent=1 // loop_footer_branch
      %23 = sbr.rel target = $region3
    $region8: #{cnn_forward.1} parent=1 // loop_exit
      _
    %10503 = vsyncpa [#allocation3], 1
    %s10504 = scalar_lea.sflag [#allocation3], 1
    %10505 = vsyncpa %s10504, 1

</llo_original>
